<compile_context>
chip_gen: v6e
topology: v6e:2x2x1
jax: 0.10.0
libtpu: 0.0.40
codegen_flags: <defaults>
</compile_context>

<pallas_src>
import numpy as np
import jax
import jax.numpy as jnp
from jax.experimental import pallas as pl
from jax.experimental.pallas import tpu as pltpu

FANIN = 72
FANIN_PAD = 128
HIDDEN = 1000
HIDDEN_PAD = 1024
OUT_DIM = 24
TAIL_PAD = 128
NUM_ENC = 5
NUM_HIDDEN = 3          # hidden layers 2..4 (layer 1 has fan-in 72)
HEAD_H1 = 512
HEAD_H2 = 256
BN_EPS = 1e-3


# ----------------------------------------------------------------------------
# Fused kernel.  grid = (encoder e = 5,)  ["arbitrary" — t/val carry across e]
#   every step e : full encoder e  ->  out_e (value), key_e, attention logits
#   last step    : softmax over electrodes, value weighting, MLP head
# ----------------------------------------------------------------------------
def _fused_kernel(x_ref, w1_ref, sb1_ref, wh_ref, sbh_ref, wo_ref, sbo_ref,
                  wk_ref, sbk_ref, wqk_ref, bqk_ref, wh1_ref, bh1_ref,
                  wh2_ref, bh2_ref, wout_ref, bout_ref,
                  out_ref, flat_ref, act_ref, val_ref, t_ref):
    e = pl.program_id(0)
    B = x_ref.shape[1]

    @pl.when(e == 0)
    def _init():
        t_ref[...] = jnp.zeros_like(t_ref)

    # ---------------- encoder e: layer 1 (Linear + folded BN + ReLU) --------
    sb = sb1_ref[0]                                              # [2, 1024]
    h = jnp.dot(x_ref[0].astype(jnp.bfloat16),
                w1_ref[0].astype(jnp.bfloat16),                  # int8 -> bf16 (VPU)
                preferred_element_type=jnp.float32)
    act_ref[...] = jnp.maximum(h * sb[0:1, :] + sb[1:2, :], 0.0)

    # ---------------- hidden layers 2..4 (Dropout = identity in eval) -------
    for i in range(NUM_HIDDEN):                                  # static unroll
        sb = sbh_ref[0, i]                                       # [2, 1024]
        h = jnp.dot(act_ref[...].astype(jnp.bfloat16),
                    wh_ref[0, i].astype(jnp.bfloat16),
                    preferred_element_type=jnp.float32)
        act_ref[...] = jnp.maximum(h * sb[0:1, :] + sb[1:2, :], 0.0)

    # ---------------- encoder tail: output_ (value) and key -----------------
    sb = sbo_ref[0]                                              # [2, 128]
    out = jnp.dot(act_ref[...].astype(jnp.bfloat16),
                  wo_ref[0].astype(jnp.bfloat16),
                  preferred_element_type=jnp.float32) * sb[0:1, :] + sb[1:2, :]
    val_ref[e] = out                                             # [B,128]; cols>=24 are 0

    lk = jnp.where(out >= 0.0, out, 0.01 * out)                  # LeakyReLU(0.01)
    sb = sbk_ref[0]
    key = jax.nn.sigmoid(
        jnp.dot(lk.astype(jnp.bfloat16), wk_ref[0].astype(jnp.bfloat16),
                preferred_element_type=jnp.float32) * sb[0:1, :] + sb[1:2, :])
    # Zero padded key lanes (sigmoid(0)=0.5) so the fused Ql/Kl matmul is robust
    lane = jax.lax.broadcasted_iota(jnp.int32, key.shape, 1)
    key = jnp.where(lane < OUT_DIM, key, 0.0)

    # ------------- attention scores: Ql (cols 0..4) & Kl (col 5) fused ------
    # LeakyReLU on the (sigmoid) key is an exact identity and is dropped.
    qk = jax.nn.sigmoid(
        jnp.dot(key.astype(jnp.bfloat16), wqk_ref[...],
                preferred_element_type=jnp.float32) + bqk_ref[...])     # [B, 128]
    t_ref[...] += qk[:, :NUM_ENC] * qk[:, NUM_ENC:NUM_ENC + 1]          # [B,5]*[B,1]

    # ------------- last electrode: softmax + value weighting + MLP head -----
    @pl.when(e == pl.num_programs(0) - 1)
    def _head():
        t = t_ref[...] * (1.0 / np.sqrt(5.0))                    # [B, 5]
        t = t - jnp.max(t, axis=1, keepdims=True)
        et = jnp.exp(t)
        att = et / jnp.sum(et, axis=1, keepdims=True)            # exact divide (tiny)

        h1 = jnp.zeros((B, HEAD_H1), jnp.float32)
        for j in range(NUM_ENC):                                 # static unroll
            v = val_ref[j] * att[:, j:j + 1]                     # [B, 128]
            flat_ref[j] = v                                      # padded flatten slab
            h1 = h1 + jnp.dot(v.astype(jnp.bfloat16), wh1_ref[j],
                              preferred_element_type=jnp.float32)
        h1 = jnp.maximum(h1 + bh1_ref[...], 0.0)
        h2 = jnp.maximum(
            jnp.dot(h1.astype(jnp.bfloat16), wh2_ref[...],
                    preferred_element_type=jnp.float32) + bh2_ref[...], 0.0)
        out_ref[...] = jnp.dot(h2.astype(jnp.bfloat16), wout_ref[...],
                               preferred_element_type=jnp.float32) + bout_ref[...]


def fused_forward(p, x_pad):
    """x_pad: [5, B, 128] f32 -> (out_pad [B,128], flat_slab [5,B,128]) f32."""
    B = x_pad.shape[1]
    enc3 = lambda e: (e, 0, 0)
    enc4 = lambda e: (e, 0, 0, 0)
    const2 = lambda e: (0, 0)
    const3 = lambda e: (0, 0, 0)

    nbytes = lambda a: int(a.size) * jnp.dtype(a.dtype).itemsize
    weight_args = (p['enc_w1'], p['enc_sb1'], p['enc_wh'], p['enc_sbh'],
                   p['enc_wo'], p['enc_sbo'], p['enc_wk'], p['enc_sbk'],
                   p['wqk'], p['bqk'], p['wh1'], p['bh1'],
                   p['wh2'], p['bh2'], p['wout'], p['bout'])
    flops = NUM_ENC * 2 * B * (FANIN_PAD * HIDDEN_PAD
                               + NUM_HIDDEN * HIDDEN_PAD * HIDDEN_PAD
                               + HIDDEN_PAD * TAIL_PAD
                               + 2 * TAIL_PAD * TAIL_PAD
                               + TAIL_PAD * HEAD_H1)
    flops += 2 * B * (HEAD_H1 * HEAD_H2 + HEAD_H2 * TAIL_PAD)
    bytes_accessed = (sum(nbytes(a) for a in weight_args) + nbytes(x_pad)
                      + (NUM_ENC + 1) * B * TAIL_PAD * 4)
    transcendentals = NUM_ENC * B * 2 * TAIL_PAD + B * NUM_ENC

    return pl.pallas_call(
        _fused_kernel,
        out_shape=(jax.ShapeDtypeStruct((B, TAIL_PAD), jnp.float32),
                   jax.ShapeDtypeStruct((NUM_ENC, B, TAIL_PAD), jnp.float32)),
        grid_spec=pltpu.PrefetchScalarGridSpec(
            num_scalar_prefetch=0,
            grid=(NUM_ENC,),
            in_specs=[
                pl.BlockSpec((1, B, FANIN_PAD), enc3),                        # x
                pl.BlockSpec((1, FANIN_PAD, HIDDEN_PAD), enc3),               # W1 (int8)
                pl.BlockSpec((1, 2, HIDDEN_PAD), enc3),                       # scale/bias 1
                pl.BlockSpec((1, NUM_HIDDEN, HIDDEN_PAD, HIDDEN_PAD), enc4),  # W2..4 (int8)
                pl.BlockSpec((1, NUM_HIDDEN, 2, HIDDEN_PAD), enc4),           # scale/bias 2..4
                pl.BlockSpec((1, HIDDEN_PAD, TAIL_PAD), enc3),                # Wo (int8)
                pl.BlockSpec((1, 2, TAIL_PAD), enc3),                         # scale/bias o
                pl.BlockSpec((1, TAIL_PAD, TAIL_PAD), enc3),                  # Wkey (int8)
                pl.BlockSpec((1, 2, TAIL_PAD), enc3),                         # scale/bias key
                pl.BlockSpec((TAIL_PAD, TAIL_PAD), const2),                   # Wqk (bf16)
                pl.BlockSpec((1, TAIL_PAD), const2),                          # bqk
                pl.BlockSpec((NUM_ENC, TAIL_PAD, HEAD_H1), const3),           # Wh1 (bf16)
                pl.BlockSpec((1, HEAD_H1), const2),                           # bh1
                pl.BlockSpec((HEAD_H1, HEAD_H2), const2),                     # Wh2 (bf16)
                pl.BlockSpec((1, HEAD_H2), const2),                           # bh2
                pl.BlockSpec((HEAD_H2, TAIL_PAD), const2),                    # Wout (bf16)
                pl.BlockSpec((1, TAIL_PAD), const2),                          # bout
            ],
            out_specs=(pl.BlockSpec((B, TAIL_PAD), const2),
                       pl.BlockSpec((NUM_ENC, B, TAIL_PAD), const3)),
            scratch_shapes=[pltpu.VMEM((B, HIDDEN_PAD), jnp.float32),         # activation
                            pltpu.VMEM((NUM_ENC, B, TAIL_PAD), jnp.float32),  # value slab
                            pltpu.VMEM((B, NUM_ENC), jnp.float32)],           # attn logits
        ),
        compiler_params=pltpu.CompilerParams(
            dimension_semantics=("arbitrary",),
            vmem_limit_bytes=28 << 20),
        cost_estimate=pl.CostEstimate(flops=int(flops),
                                      transcendentals=int(transcendentals),
                                      bytes_accessed=int(bytes_accessed)),
    )(x_pad, p['enc_w1'], p['enc_sb1'], p['enc_wh'], p['enc_sbh'],
      p['enc_wo'], p['enc_sbo'], p['enc_wk'], p['enc_sbk'],
      p['wqk'], p['bqk'], p['wh1'], p['bh1'], p['wh2'], p['bh2'],
      p['wout'], p['bout'])


# ----------------------------------------------------------------------------
# Parameter init (PyTorch-Linear-like uniform; BN at fresh running stats) and
# kernel-ready prep (BN fold + padding + per-encoder stacking + int8 quant).
# ----------------------------------------------------------------------------
def init_params(key):
    keys = jax.random.split(key, 40)
    it = iter(keys)

    def lin(fan_in, fan_out):
        k1, k2 = jax.random.split(next(it))
        bound = 1.0 / np.sqrt(fan_in)
        w = jax.random.uniform(k1, (fan_in, fan_out), jnp.float32, -bound, bound)
        b = jax.random.uniform(k2, (1, fan_out), jnp.float32, -bound, bound)
        return w, b

    encoders = []
    for _ in range(NUM_ENC):
        layers = []
        for fan_in in (FANIN, HIDDEN, HIDDEN, HIDDEN):
            w, b = lin(fan_in, HIDDEN)
            layers.append(dict(
                w=w, b=b,
                gamma=jnp.ones((1, HIDDEN), jnp.float32),
                beta=jnp.zeros((1, HIDDEN), jnp.float32),
                mean=jnp.zeros((1, HIDDEN), jnp.float32),
                var=jnp.ones((1, HIDDEN), jnp.float32)))
        wo, bo = lin(HIDDEN, OUT_DIM)
        wkey, bkey = lin(OUT_DIM, OUT_DIM)
        encoders.append(dict(layers=layers, wo=wo, bo=bo, wkey=wkey, bkey=bkey))

    wq, bq = lin(OUT_DIM, NUM_ENC)      # Ql
    wk, bk = lin(OUT_DIM, 1)            # Kl
    wh1, bh1 = lin(NUM_ENC * OUT_DIM, HEAD_H1)
    wh2, bh2 = lin(HEAD_H1, HEAD_H2)
    wout, bout = lin(HEAD_H2, OUT_DIM)
    return dict(encoders=encoders, wq=wq, bq=bq, wk=wk, bk=bk,
                wh1=wh1, bh1=bh1, wh2=wh2, bh2=bh2, wout=wout, bout=bout)


def _fold_bn(w, b, lp, eps=BN_EPS):
    scale = lp['gamma'] / jnp.sqrt(lp['var'] + eps)
    return w * scale, (b - lp['mean']) * scale + lp['beta']


def _pad_to(a, shape):
    return jnp.pad(a, [(0, s - d) for d, s in zip(a.shape, shape)])


def _quantize_cols(w, quantize):
    """Symmetric per-output-channel int8 quantization (scale applied post-matmul)."""
    if not quantize:
        return w.astype(jnp.bfloat16), jnp.ones((1, w.shape[1]), jnp.float32)
    amax = jnp.max(jnp.abs(w), axis=0, keepdims=True)
    scale = jnp.where(amax > 0.0, amax / 127.0, 1.0).astype(jnp.float32)
    wq = jnp.clip(jnp.round(w / scale), -127.0, 127.0).astype(jnp.int8)
    return wq, scale


def prepare_params(params, quantize=True):
    w1s, sb1s, whs, sbhs, wos, sbos, wks, sbks = ([] for _ in range(8))
    for enc in params['encoders']:
        fw, fb = [], []
        for lp in enc['layers']:
            w, b = _fold_bn(lp['w'], lp['b'], lp)
            fw.append(w)
            fb.append(b)

        w1q, s1 = _quantize_cols(_pad_to(fw[0], (FANIN_PAD, HIDDEN_PAD)), quantize)
        w1s.append(w1q)
        sb1s.append(jnp.concatenate([s1, _pad_to(fb[0], (1, HIDDEN_PAD))], axis=0))

        wq_l, sb_l = [], []
        for w, b in zip(fw[1:], fb[1:]):
            wqq, s = _quantize_cols(_pad_to(w, (HIDDEN_PAD, HIDDEN_PAD)), quantize)
            wq_l.append(wqq)
            sb_l.append(jnp.concatenate([s, _pad_to(b, (1, HIDDEN_PAD))], axis=0))
        whs.append(jnp.stack(wq_l))
        sbhs.append(jnp.stack(sb_l))

        woq, so = _quantize_cols(_pad_to(enc['wo'], (HIDDEN_PAD, TAIL_PAD)), quantize)
        wos.append(woq)
        sbos.append(jnp.concatenate([so, _pad_to(enc['bo'], (1, TAIL_PAD))], axis=0))

        wkq, sk = _quantize_cols(_pad_to(enc['wkey'], (TAIL_PAD, TAIL_PAD)), quantize)
        wks.append(wkq)
        sbks.append(jnp.concatenate([sk, _pad_to(enc['bkey'], (1, TAIL_PAD))], axis=0))

    # Ql (24->5) and Kl (24->1) fused into one [128,128] weight: cols 0..4 = Ql, col 5 = Kl.
    wqk = jnp.zeros((TAIL_PAD, TAIL_PAD), jnp.float32)
    wqk = wqk.at[:OUT_DIM, :NUM_ENC].set(params['wq'])
    wqk = wqk.at[:OUT_DIM, NUM_ENC:NUM_ENC + 1].set(params['wk'])
    bqk = jnp.zeros((1, TAIL_PAD), jnp.float32)
    bqk = bqk.at[:, :NUM_ENC].set(params['bq'])
    bqk = bqk.at[:, NUM_ENC:NUM_ENC + 1].set(params['bk'])

    # Head MLP: wh1 split per electrode (rows e*24+j -> [e, j]) and row-padded 24->128.
    wh1 = _pad_to(params['wh1'].reshape(NUM_ENC, OUT_DIM, HEAD_H1),
                  (NUM_ENC, TAIL_PAD, HEAD_H1)).astype(jnp.bfloat16)

    return dict(
        enc_w1=jnp.stack(w1s), enc_sb1=jnp.stack(sb1s),     # [5,128,1024] i8, [5,2,1024] f32
        enc_wh=jnp.stack(whs), enc_sbh=jnp.stack(sbhs),     # [5,3,1024,1024] i8, [5,3,2,1024]
        enc_wo=jnp.stack(wos), enc_sbo=jnp.stack(sbos),     # [5,1024,128] i8, [5,2,128]
        enc_wk=jnp.stack(wks), enc_sbk=jnp.stack(sbks),     # [5,128,128] i8, [5,2,128]
        wqk=wqk.astype(jnp.bfloat16), bqk=bqk,
        wh1=wh1, bh1=params['bh1'],
        wh2=params['wh2'].astype(jnp.bfloat16), bh2=params['bh2'],
        wout=_pad_to(params['wout'], (HEAD_H2, TAIL_PAD)).astype(jnp.bfloat16),
        bout=_pad_to(params['bout'], (1, TAIL_PAD)),
    )


# ----------------------------------------------------------------------------
# Forward pass (single Pallas kernel + trivial XLA layout glue).
# ----------------------------------------------------------------------------
def attention_model_forward(p, features):
    B = features.shape[0]
    x = jnp.transpose(features, (2, 0, 1))                       # [5, B, 72]
    x = jnp.pad(x, ((0, 0), (0, 0), (0, FANIN_PAD - FANIN)))     # fan-in 72 -> 128
    out_pad, flat_slab = fused_forward(p, x)                     # [B,128], [5,B,128]
    output = out_pad[:, :OUT_DIM]                                # [B, 24]
    flatten = jnp.transpose(flat_slab, (1, 0, 2))[:, :, :OUT_DIM].reshape(B, NUM_ENC * OUT_DIM)
    return output, flatten


if __name__ == "__main__":
    B = 8
    root = jax.random.PRNGKey(0)
    kf, kp = jax.random.split(root)
    features = jax.random.normal(kf, (B, FANIN, NUM_ENC), jnp.float32)

    raw = init_params(kp)
    params = prepare_params(raw, quantize=True)   # quantize=False -> bf16 weight fallback

    fwd = jax.jit(attention_model_forward)
    output, flatten = fwd(params, features)
    jax.block_until_ready((output, flatten))

    assert output.shape == (B, OUT_DIM), output.shape
    assert flatten.shape == (B, NUM_ENC * OUT_DIM), flatten.shape
    assert bool(jnp.all(jnp.isfinite(output))) and bool(jnp.all(jnp.isfinite(flatten)))
    print("KERNEL_OK")
</pallas_src>

<mosaic_0001>
module attributes {stable_mosaic.version = 11 : i64} {
  func.func @_fused_kernel(%arg0: i32, %arg1: memref<1x8x128xf32, #tpu.memory_space<vmem>>, %arg2: memref<1x128x1024xi8, #tpu.memory_space<vmem>>, %arg3: memref<1x2x1024xf32, #tpu.memory_space<vmem>>, %arg4: memref<1x3x1024x1024xi8, #tpu.memory_space<vmem>>, %arg5: memref<1x3x2x1024xf32, #tpu.memory_space<vmem>>, %arg6: memref<1x1024x128xi8, #tpu.memory_space<vmem>>, %arg7: memref<1x2x128xf32, #tpu.memory_space<vmem>>, %arg8: memref<1x128x128xi8, #tpu.memory_space<vmem>>, %arg9: memref<1x2x128xf32, #tpu.memory_space<vmem>>, %arg10: memref<128x128xbf16, #tpu.memory_space<vmem>>, %arg11: memref<1x128xf32, #tpu.memory_space<vmem>>, %arg12: memref<5x128x512xbf16, #tpu.memory_space<vmem>>, %arg13: memref<1x512xf32, #tpu.memory_space<vmem>>, %arg14: memref<512x256xbf16, #tpu.memory_space<vmem>>, %arg15: memref<1x256xf32, #tpu.memory_space<vmem>>, %arg16: memref<256x128xbf16, #tpu.memory_space<vmem>>, %arg17: memref<1x128xf32, #tpu.memory_space<vmem>>, %arg18: memref<8x128xf32, #tpu.memory_space<vmem>>, %arg19: memref<5x8x128xf32, #tpu.memory_space<vmem>>, %arg20: memref<8x1024xf32, #tpu.memory_space<vmem>>, %arg21: memref<5x8x128xf32, #tpu.memory_space<vmem>>, %arg22: memref<8x5xf32, #tpu.memory_space<vmem>>) attributes {dimension_semantics = [#tpu.dimension_semantics<arbitrary>], iteration_bounds = array<i64: 5>, scalar_prefetch = 0 : i64, scratch_operands = 3 : i64, tpu.core_type = #tpu.core_type<tc>, window_params = [{transform_indices = @transform_0, window_bounds = array<i64: 1, 8, 128>}, {transform_indices = @transform_1, window_bounds = array<i64: 1, 128, 1024>}, {transform_indices = @transform_2, window_bounds = array<i64: 1, 2, 1024>}, {transform_indices = @transform_3, window_bounds = array<i64: 1, 3, 1024, 1024>}, {transform_indices = @transform_4, window_bounds = array<i64: 1, 3, 2, 1024>}, {transform_indices = @transform_5, window_bounds = array<i64: 1, 1024, 128>}, {transform_indices = @transform_6, window_bounds = array<i64: 1, 2, 128>}, {transform_indices = @transform_7, window_bounds = array<i64: 1, 128, 128>}, {transform_indices = @transform_8, window_bounds = array<i64: 1, 2, 128>}, {pipeline_mode = #tpu.pipeline_mode<synchronous>, transform_indices = @transform_9, window_bounds = array<i64: 128, 128>}, {pipeline_mode = #tpu.pipeline_mode<synchronous>, transform_indices = @transform_10, window_bounds = array<i64: 1, 128>}, {pipeline_mode = #tpu.pipeline_mode<synchronous>, transform_indices = @transform_11, window_bounds = array<i64: 5, 128, 512>}, {pipeline_mode = #tpu.pipeline_mode<synchronous>, transform_indices = @transform_12, window_bounds = array<i64: 1, 512>}, {pipeline_mode = #tpu.pipeline_mode<synchronous>, transform_indices = @transform_13, window_bounds = array<i64: 512, 256>}, {pipeline_mode = #tpu.pipeline_mode<synchronous>, transform_indices = @transform_14, window_bounds = array<i64: 1, 256>}, {pipeline_mode = #tpu.pipeline_mode<synchronous>, transform_indices = @transform_15, window_bounds = array<i64: 256, 128>}, {pipeline_mode = #tpu.pipeline_mode<synchronous>, transform_indices = @transform_16, window_bounds = array<i64: 1, 128>}, {pipeline_mode = #tpu.pipeline_mode<synchronous>, transform_indices = @transform_17, window_bounds = array<i64: 8, 128>}, {pipeline_mode = #tpu.pipeline_mode<synchronous>, transform_indices = @transform_18, window_bounds = array<i64: 5, 8, 128>}]} {
    %c0_i32 = arith.constant 0 : i32
    %0 = arith.cmpi eq, %arg0, %c0_i32 : i32
    %1 = arith.extui %0 : i1 to i32
    %c0_i32_0 = arith.constant 0 : i32
    %2 = arith.cmpi ne, %1, %c0_i32_0 : i32
    scf.if %2 {
      %cst_85 = arith.constant 0.000000e+00 : f32
      %139 = vector.broadcast %cst_85 : f32 to vector<8x5xf32>
      %c0_86 = arith.constant 0 : index
      %c0_87 = arith.constant 0 : index
      %140 = vector.load %arg22[%c0_86, %c0_87] : memref<8x5xf32, #tpu.memory_space<vmem>>, vector<8x5xf32>
      tpu.vector_store %arg22[%c0_86, %c0_87], %139 {strides = array<i32>} : memref<8x5xf32, #tpu.memory_space<vmem>>, vector<8x5xf32>,
    } else {
    }
    %c0 = arith.constant 0 : index
    %c0_1 = arith.constant 0 : index
    %c0_2 = arith.constant 0 : index
    %3 = vector.load %arg3[%c0, %c0_1, %c0_2] : memref<1x2x1024xf32, #tpu.memory_space<vmem>>, vector<1x2x1024xf32>
    %4 = vector.shape_cast %3 : vector<1x2x1024xf32> to vector<2x1024xf32>
    %c0_3 = arith.constant 0 : index
    %c0_4 = arith.constant 0 : index
    %c0_5 = arith.constant 0 : index
    %5 = vector.load %arg1[%c0_3, %c0_4, %c0_5] : memref<1x8x128xf32, #tpu.memory_space<vmem>>, vector<1x8x128xf32>
    %6 = vector.shape_cast %5 : vector<1x8x128xf32> to vector<8x128xf32>
    %7 = arith.truncf %6 : vector<8x128xf32> to vector<8x128xbf16>
    %c0_6 = arith.constant 0 : index
    %c0_7 = arith.constant 0 : index
    %c0_8 = arith.constant 0 : index
    %8 = vector.load %arg2[%c0_6, %c0_7, %c0_8] : memref<1x128x1024xi8, #tpu.memory_space<vmem>>, vector<1x128x1024xi8>
    %9 = vector.shape_cast %8 : vector<1x128x1024xi8> to vector<128x1024xi8>
    %10 = arith.sitofp %9 : vector<128x1024xi8> to vector<128x1024xbf16>
    %cst = arith.constant dense<0.000000e+00> : vector<8x1024xf32>
    %11 = tpu.matmul %7, %10, %cst {dimension_numbers = #tpu.dot_dimension_numbers<[1], [0], [0], [1], [0, 0, 1, 1], [], []>} : vector<8x128xbf16>, vector<128x1024xbf16>, vector<8x1024xf32> -> vector<8x1024xf32>
    %12 = vector.extract_strided_slice %4 {offsets = [0, 0], sizes = [1, 1024], strides = [1, 1]} : vector<2x1024xf32> to vector<1x1024xf32>
    %13 = vector.broadcast %12 : vector<1x1024xf32> to vector<8x1024xf32>
    %14 = arith.mulf %11, %13 : vector<8x1024xf32>
    %15 = vector.extract_strided_slice %4 {offsets = [1, 0], sizes = [1, 1024], strides = [1, 1]} : vector<2x1024xf32> to vector<1x1024xf32>
    %16 = vector.broadcast %15 : vector<1x1024xf32> to vector<8x1024xf32>
    %17 = arith.addf %14, %16 : vector<8x1024xf32>
    %cst_9 = arith.constant 0.000000e+00 : f32
    %18 = vector.broadcast %cst_9 : f32 to vector<8x1024xf32>
    %19 = arith.maximumf %17, %18 : vector<8x1024xf32>
    %c0_10 = arith.constant 0 : index
    %c0_11 = arith.constant 0 : index
    %20 = vector.load %arg20[%c0_10, %c0_11] : memref<8x1024xf32, #tpu.memory_space<vmem>>, vector<8x1024xf32>
    tpu.vector_store %arg20[%c0_10, %c0_11], %19 {strides = array<i32>} : memref<8x1024xf32, #tpu.memory_space<vmem>>, vector<8x1024xf32>,
    %c0_12 = arith.constant 0 : index
    %c0_13 = arith.constant 0 : index
    %c0_14 = arith.constant 0 : index
    %c0_15 = arith.constant 0 : index
    %21 = vector.load %arg5[%c0_12, %c0_13, %c0_14, %c0_15] : memref<1x3x2x1024xf32, #tpu.memory_space<vmem>>, vector<1x1x2x1024xf32>
    %22 = vector.shape_cast %21 : vector<1x1x2x1024xf32> to vector<2x1024xf32>
    %c0_16 = arith.constant 0 : index
    %c0_17 = arith.constant 0 : index
    %23 = vector.load %arg20[%c0_16, %c0_17] : memref<8x1024xf32, #tpu.memory_space<vmem>>, vector<8x1024xf32>
    %24 = arith.truncf %23 : vector<8x1024xf32> to vector<8x1024xbf16>
    %c0_18 = arith.constant 0 : index
    %c0_19 = arith.constant 0 : index
    %c0_20 = arith.constant 0 : index
    %c0_21 = arith.constant 0 : index
    %25 = vector.load %arg4[%c0_18, %c0_19, %c0_20, %c0_21] : memref<1x3x1024x1024xi8, #tpu.memory_space<vmem>>, vector<1x1x1024x1024xi8>
    %26 = vector.shape_cast %25 : vector<1x1x1024x1024xi8> to vector<1024x1024xi8>
    %27 = arith.sitofp %26 : vector<1024x1024xi8> to vector<1024x1024xbf16>
    %cst_22 = arith.constant dense<0.000000e+00> : vector<8x1024xf32>
    %28 = tpu.matmul %24, %27, %cst_22 {dimension_numbers = #tpu.dot_dimension_numbers<[1], [0], [0], [1], [0, 0, 1, 1], [], []>} : vector<8x1024xbf16>, vector<1024x1024xbf16>, vector<8x1024xf32> -> vector<8x1024xf32>
    %29 = vector.extract_strided_slice %22 {offsets = [0, 0], sizes = [1, 1024], strides = [1, 1]} : vector<2x1024xf32> to vector<1x1024xf32>
    %30 = vector.broadcast %29 : vector<1x1024xf32> to vector<8x1024xf32>
    %31 = arith.mulf %28, %30 : vector<8x1024xf32>
    %32 = vector.extract_strided_slice %22 {offsets = [1, 0], sizes = [1, 1024], strides = [1, 1]} : vector<2x1024xf32> to vector<1x1024xf32>
    %33 = vector.broadcast %32 : vector<1x1024xf32> to vector<8x1024xf32>
    %34 = arith.addf %31, %33 : vector<8x1024xf32>
    %cst_23 = arith.constant 0.000000e+00 : f32
    %35 = vector.broadcast %cst_23 : f32 to vector<8x1024xf32>
    %36 = arith.maximumf %34, %35 : vector<8x1024xf32>
    %c0_24 = arith.constant 0 : index
    %c0_25 = arith.constant 0 : index
    %37 = vector.load %arg20[%c0_24, %c0_25] : memref<8x1024xf32, #tpu.memory_space<vmem>>, vector<8x1024xf32>
    tpu.vector_store %arg20[%c0_24, %c0_25], %36 {strides = array<i32>} : memref<8x1024xf32, #tpu.memory_space<vmem>>, vector<8x1024xf32>,
    %c0_26 = arith.constant 0 : index
    %c1 = arith.constant 1 : index
    %c0_27 = arith.constant 0 : index
    %c0_28 = arith.constant 0 : index
    %38 = vector.load %arg5[%c0_26, %c1, %c0_27, %c0_28] : memref<1x3x2x1024xf32, #tpu.memory_space<vmem>>, vector<1x1x2x1024xf32>
    %39 = vector.shape_cast %38 : vector<1x1x2x1024xf32> to vector<2x1024xf32>
    %c0_29 = arith.constant 0 : index
    %c0_30 = arith.constant 0 : index
    %40 = vector.load %arg20[%c0_29, %c0_30] : memref<8x1024xf32, #tpu.memory_space<vmem>>, vector<8x1024xf32>
    %41 = arith.truncf %40 : vector<8x1024xf32> to vector<8x1024xbf16>
    %c0_31 = arith.constant 0 : index
    %c1_32 = arith.constant 1 : index
    %c0_33 = arith.constant 0 : index
    %c0_34 = arith.constant 0 : index
    %42 = vector.load %arg4[%c0_31, %c1_32, %c0_33, %c0_34] : memref<1x3x1024x1024xi8, #tpu.memory_space<vmem>>, vector<1x1x1024x1024xi8>
    %43 = vector.shape_cast %42 : vector<1x1x1024x1024xi8> to vector<1024x1024xi8>
    %44 = arith.sitofp %43 : vector<1024x1024xi8> to vector<1024x1024xbf16>
    %cst_35 = arith.constant dense<0.000000e+00> : vector<8x1024xf32>
    %45 = tpu.matmul %41, %44, %cst_35 {dimension_numbers = #tpu.dot_dimension_numbers<[1], [0], [0], [1], [0, 0, 1, 1], [], []>} : vector<8x1024xbf16>, vector<1024x1024xbf16>, vector<8x1024xf32> -> vector<8x1024xf32>
    %46 = vector.extract_strided_slice %39 {offsets = [0, 0], sizes = [1, 1024], strides = [1, 1]} : vector<2x1024xf32> to vector<1x1024xf32>
    %47 = vector.broadcast %46 : vector<1x1024xf32> to vector<8x1024xf32>
    %48 = arith.mulf %45, %47 : vector<8x1024xf32>
    %49 = vector.extract_strided_slice %39 {offsets = [1, 0], sizes = [1, 1024], strides = [1, 1]} : vector<2x1024xf32> to vector<1x1024xf32>
    %50 = vector.broadcast %49 : vector<1x1024xf32> to vector<8x1024xf32>
    %51 = arith.addf %48, %50 : vector<8x1024xf32>
    %cst_36 = arith.constant 0.000000e+00 : f32
    %52 = vector.broadcast %cst_36 : f32 to vector<8x1024xf32>
    %53 = arith.maximumf %51, %52 : vector<8x1024xf32>
    %c0_37 = arith.constant 0 : index
    %c0_38 = arith.constant 0 : index
    %54 = vector.load %arg20[%c0_37, %c0_38] : memref<8x1024xf32, #tpu.memory_space<vmem>>, vector<8x1024xf32>
    tpu.vector_store %arg20[%c0_37, %c0_38], %53 {strides = array<i32>} : memref<8x1024xf32, #tpu.memory_space<vmem>>, vector<8x1024xf32>,
    %c0_39 = arith.constant 0 : index
    %c2 = arith.constant 2 : index
    %c0_40 = arith.constant 0 : index
    %c0_41 = arith.constant 0 : index
    %55 = vector.load %arg5[%c0_39, %c2, %c0_40, %c0_41] : memref<1x3x2x1024xf32, #tpu.memory_space<vmem>>, vector<1x1x2x1024xf32>
    %56 = vector.shape_cast %55 : vector<1x1x2x1024xf32> to vector<2x1024xf32>
    %c0_42 = arith.constant 0 : index
    %c0_43 = arith.constant 0 : index
    %57 = vector.load %arg20[%c0_42, %c0_43] : memref<8x1024xf32, #tpu.memory_space<vmem>>, vector<8x1024xf32>
    %58 = arith.truncf %57 : vector<8x1024xf32> to vector<8x1024xbf16>
    %c0_44 = arith.constant 0 : index
    %c2_45 = arith.constant 2 : index
    %c0_46 = arith.constant 0 : index
    %c0_47 = arith.constant 0 : index
    %59 = vector.load %arg4[%c0_44, %c2_45, %c0_46, %c0_47] : memref<1x3x1024x1024xi8, #tpu.memory_space<vmem>>, vector<1x1x1024x1024xi8>
    %60 = vector.shape_cast %59 : vector<1x1x1024x1024xi8> to vector<1024x1024xi8>
    %61 = arith.sitofp %60 : vector<1024x1024xi8> to vector<1024x1024xbf16>
    %cst_48 = arith.constant dense<0.000000e+00> : vector<8x1024xf32>
    %62 = tpu.matmul %58, %61, %cst_48 {dimension_numbers = #tpu.dot_dimension_numbers<[1], [0], [0], [1], [0, 0, 1, 1], [], []>} : vector<8x1024xbf16>, vector<1024x1024xbf16>, vector<8x1024xf32> -> vector<8x1024xf32>
    %63 = vector.extract_strided_slice %56 {offsets = [0, 0], sizes = [1, 1024], strides = [1, 1]} : vector<2x1024xf32> to vector<1x1024xf32>
    %64 = vector.broadcast %63 : vector<1x1024xf32> to vector<8x1024xf32>
    %65 = arith.mulf %62, %64 : vector<8x1024xf32>
    %66 = vector.extract_strided_slice %56 {offsets = [1, 0], sizes = [1, 1024], strides = [1, 1]} : vector<2x1024xf32> to vector<1x1024xf32>
    %67 = vector.broadcast %66 : vector<1x1024xf32> to vector<8x1024xf32>
    %68 = arith.addf %65, %67 : vector<8x1024xf32>
    %cst_49 = arith.constant 0.000000e+00 : f32
    %69 = vector.broadcast %cst_49 : f32 to vector<8x1024xf32>
    %70 = arith.maximumf %68, %69 : vector<8x1024xf32>
    %c0_50 = arith.constant 0 : index
    %c0_51 = arith.constant 0 : index
    %71 = vector.load %arg20[%c0_50, %c0_51] : memref<8x1024xf32, #tpu.memory_space<vmem>>, vector<8x1024xf32>
    tpu.vector_store %arg20[%c0_50, %c0_51], %70 {strides = array<i32>} : memref<8x1024xf32, #tpu.memory_space<vmem>>, vector<8x1024xf32>,
    %c0_52 = arith.constant 0 : index
    %c0_53 = arith.constant 0 : index
    %c0_54 = arith.constant 0 : index
    %72 = vector.load %arg7[%c0_52, %c0_53, %c0_54] : memref<1x2x128xf32, #tpu.memory_space<vmem>>, vector<1x2x128xf32>
    %73 = vector.shape_cast %72 : vector<1x2x128xf32> to vector<2x128xf32>
    %c0_55 = arith.constant 0 : index
    %c0_56 = arith.constant 0 : index
    %74 = vector.load %arg20[%c0_55, %c0_56] : memref<8x1024xf32, #tpu.memory_space<vmem>>, vector<8x1024xf32>
    %75 = arith.truncf %74 : vector<8x1024xf32> to vector<8x1024xbf16>
    %c0_57 = arith.constant 0 : index
    %c0_58 = arith.constant 0 : index
    %c0_59 = arith.constant 0 : index
    %76 = vector.load %arg6[%c0_57, %c0_58, %c0_59] : memref<1x1024x128xi8, #tpu.memory_space<vmem>>, vector<1x1024x128xi8>
    %77 = vector.shape_cast %76 : vector<1x1024x128xi8> to vector<1024x128xi8>
    %78 = arith.sitofp %77 : vector<1024x128xi8> to vector<1024x128xbf16>
    %cst_60 = arith.constant dense<0.000000e+00> : vector<8x128xf32>
    %79 = tpu.matmul %75, %78, %cst_60 {dimension_numbers = #tpu.dot_dimension_numbers<[1], [0], [0], [1], [0, 0, 1, 1], [], []>} : vector<8x1024xbf16>, vector<1024x128xbf16>, vector<8x128xf32> -> vector<8x128xf32>
    %80 = vector.extract_strided_slice %73 {offsets = [0, 0], sizes = [1, 128], strides = [1, 1]} : vector<2x128xf32> to vector<1x128xf32>
    %81 = vector.broadcast %80 : vector<1x128xf32> to vector<8x128xf32>
    %82 = arith.mulf %79, %81 : vector<8x128xf32>
    %83 = vector.extract_strided_slice %73 {offsets = [1, 0], sizes = [1, 128], strides = [1, 1]} : vector<2x128xf32> to vector<1x128xf32>
    %84 = vector.broadcast %83 : vector<1x128xf32> to vector<8x128xf32>
    %85 = arith.addf %82, %84 : vector<8x128xf32>
    %86 = arith.index_cast %arg0 : i32 to index
    %c0_61 = arith.constant 0 : index
    %c0_62 = arith.constant 0 : index
    %87 = vector.load %arg21[%86, %c0_61, %c0_62] : memref<5x8x128xf32, #tpu.memory_space<vmem>>, vector<1x8x128xf32>
    %88 = vector.shape_cast %87 : vector<1x8x128xf32> to vector<8x128xf32>
    %89 = vector.shape_cast %85 : vector<8x128xf32> to vector<1x8x128xf32>
    tpu.vector_store %arg21[%86, %c0_61, %c0_62], %89 {strides = array<i32>} : memref<5x8x128xf32, #tpu.memory_space<vmem>>, vector<1x8x128xf32>,
    %cst_63 = arith.constant 0.000000e+00 : f32
    %90 = vector.broadcast %cst_63 : f32 to vector<8x128xf32>
    %91 = arith.cmpf oge, %85, %90 : vector<8x128xf32>
    %cst_64 = arith.constant 0.00999999977 : f32
    %92 = vector.broadcast %cst_64 : f32 to vector<8x128xf32>
    %93 = arith.mulf %92, %85 : vector<8x128xf32>
    %94 = arith.select %91, %85, %93 : vector<8x128xi1>, vector<8x128xf32>
    %c0_65 = arith.constant 0 : index
    %c0_66 = arith.constant 0 : index
    %c0_67 = arith.constant 0 : index
    %95 = vector.load %arg9[%c0_65, %c0_66, %c0_67] : memref<1x2x128xf32, #tpu.memory_space<vmem>>, vector<1x2x128xf32>
    %96 = vector.shape_cast %95 : vector<1x2x128xf32> to vector<2x128xf32>
    %97 = arith.truncf %94 : vector<8x128xf32> to vector<8x128xbf16>
    %c0_68 = arith.constant 0 : index
    %c0_69 = arith.constant 0 : index
    %c0_70 = arith.constant 0 : index
    %98 = vector.load %arg8[%c0_68, %c0_69, %c0_70] : memref<1x128x128xi8, #tpu.memory_space<vmem>>, vector<1x128x128xi8>
    %99 = vector.shape_cast %98 : vector<1x128x128xi8> to vector<128x128xi8>
    %100 = arith.sitofp %99 : vector<128x128xi8> to vector<128x128xbf16>
    %cst_71 = arith.constant dense<0.000000e+00> : vector<8x128xf32>
    %101 = tpu.matmul %97, %100, %cst_71 {dimension_numbers = #tpu.dot_dimension_numbers<[1], [0], [0], [1], [0, 0, 1, 1], [], []>} : vector<8x128xbf16>, vector<128x128xbf16>, vector<8x128xf32> -> vector<8x128xf32>
    %102 = vector.extract_strided_slice %96 {offsets = [0, 0], sizes = [1, 128], strides = [1, 1]} : vector<2x128xf32> to vector<1x128xf32>
    %103 = vector.broadcast %102 : vector<1x128xf32> to vector<8x128xf32>
    %104 = arith.mulf %101, %103 : vector<8x128xf32>
    %105 = vector.extract_strided_slice %96 {offsets = [1, 0], sizes = [1, 128], strides = [1, 1]} : vector<2x128xf32> to vector<1x128xf32>
    %106 = vector.broadcast %105 : vector<1x128xf32> to vector<8x128xf32>
    %107 = arith.addf %104, %106 : vector<8x128xf32>
    %108 = arith.negf %107 : vector<8x128xf32>
    %109 = math.exp %108 : vector<8x128xf32>
    %cst_72 = arith.constant 1.000000e+00 : f32
    %110 = vector.broadcast %cst_72 : f32 to vector<8x128xf32>
    %111 = arith.addf %110, %109 : vector<8x128xf32>
    %112 = arith.divf %110, %111 : vector<8x128xf32>
    %113 = tpu.iota {dimensions = array<i32: 1>} : vector<8x128xi32>
    %c24_i32 = arith.constant 24 : i32
    %114 = vector.broadcast %c24_i32 : i32 to vector<8x128xi32>
    %115 = arith.cmpi slt, %113, %114 : vector<8x128xi32>
    %cst_73 = arith.constant 0.000000e+00 : f32
    %116 = vector.broadcast %cst_73 : f32 to vector<8x128xf32>
    %117 = arith.select %115, %112, %116 : vector<8x128xi1>, vector<8x128xf32>
    %118 = arith.truncf %117 : vector<8x128xf32> to vector<8x128xbf16>
    %c0_74 = arith.constant 0 : index
    %c0_75 = arith.constant 0 : index
    %119 = vector.load %arg10[%c0_74, %c0_75] : memref<128x128xbf16, #tpu.memory_space<vmem>>, vector<128x128xbf16>
    %cst_76 = arith.constant dense<0.000000e+00> : vector<8x128xf32>
    %120 = tpu.matmul %118, %119, %cst_76 {dimension_numbers = #tpu.dot_dimension_numbers<[1], [0], [0], [1], [0, 0, 1, 1], [], []>} : vector<8x128xbf16>, vector<128x128xbf16>, vector<8x128xf32> -> vector<8x128xf32>
    %c0_77 = arith.constant 0 : index
    %c0_78 = arith.constant 0 : index
    %121 = vector.load %arg11[%c0_77, %c0_78] : memref<1x128xf32, #tpu.memory_space<vmem>>, vector<1x128xf32>
    %122 = vector.broadcast %121 : vector<1x128xf32> to vector<8x128xf32>
    %123 = arith.addf %120, %122 : vector<8x128xf32>
    %124 = arith.negf %123 : vector<8x128xf32>
    %125 = math.exp %124 : vector<8x128xf32>
    %cst_79 = arith.constant 1.000000e+00 : f32
    %126 = vector.broadcast %cst_79 : f32 to vector<8x128xf32>
    %127 = arith.addf %126, %125 : vector<8x128xf32>
    %128 = arith.divf %126, %127 : vector<8x128xf32>
    %c0_80 = arith.constant 0 : index
    %c0_81 = arith.constant 0 : index
    %129 = vector.load %arg22[%c0_80, %c0_81] : memref<8x5xf32, #tpu.memory_space<vmem>>, vector<8x5xf32>
    %130 = vector.extract_strided_slice %128 {offsets = [0, 0], sizes = [8, 5], strides = [1, 1]} : vector<8x128xf32> to vector<8x5xf32>
    %131 = vector.extract_strided_slice %128 {offsets = [0, 5], sizes = [8, 1], strides = [1, 1]} : vector<8x128xf32> to vector<8x1xf32>
    %132 = vector.broadcast %131 : vector<8x1xf32> to vector<8x5xf32>
    %133 = arith.mulf %130, %132 : vector<8x5xf32>
    %134 = arith.addf %129, %133 : vector<8x5xf32>
    %c0_82 = arith.constant 0 : index
    %c0_83 = arith.constant 0 : index
    %135 = vector.load %arg22[%c0_82, %c0_83] : memref<8x5xf32, #tpu.memory_space<vmem>>, vector<8x5xf32>
    tpu.vector_store %arg22[%c0_82, %c0_83], %134 {strides = array<i32>} : memref<8x5xf32, #tpu.memory_space<vmem>>, vector<8x5xf32>,
    %c4_i32 = arith.constant 4 : i32
    %136 = arith.cmpi eq, %arg0, %c4_i32 : i32
    %137 = arith.extui %136 : i1 to i32
    %c0_i32_84 = arith.constant 0 : i32
    %138 = arith.cmpi ne, %137, %c0_i32_84 : i32
    scf.if %138 {
      %c0_85 = arith.constant 0 : index
      %c0_86 = arith.constant 0 : index
      %139 = vector.load %arg22[%c0_85, %c0_86] : memref<8x5xf32, #tpu.memory_space<vmem>>, vector<8x5xf32>
      %cst_87 = arith.constant 0.44721359 : f32
      %140 = vector.broadcast %cst_87 : f32 to vector<8x5xf32>
      %141 = arith.mulf %139, %140 : vector<8x5xf32>
      %cst_88 = arith.constant dense<0xFF800000> : vector<8xf32>
      %142 = vector.multi_reduction <maximumf>, %141, %cst_88 [1] : vector<8x5xf32> to vector<8xf32>
      %143 = vector.shape_cast %142 : vector<8xf32> to vector<8x1xf32>
      %144 = vector.broadcast %143 : vector<8x1xf32> to vector<8x5xf32>
      %145 = arith.subf %141, %144 : vector<8x5xf32>
      %146 = math.exp %145 : vector<8x5xf32>
      %cst_89 = arith.constant dense<0.000000e+00> : vector<8xf32>
      %147 = vector.multi_reduction <add>, %146, %cst_89 [1] : vector<8x5xf32> to vector<8xf32>
      %148 = vector.shape_cast %147 : vector<8xf32> to vector<8x1xf32>
      %149 = vector.broadcast %148 : vector<8x1xf32> to vector<8x5xf32>
      %150 = arith.divf %146, %149 : vector<8x5xf32>
      %cst_90 = arith.constant 0.000000e+00 : f32
      %151 = vector.broadcast %cst_90 : f32 to vector<8x512xf32>
      %c0_91 = arith.constant 0 : index
      %c0_92 = arith.constant 0 : index
      %c0_93 = arith.constant 0 : index
      %152 = vector.load %arg21[%c0_91, %c0_92, %c0_93] : memref<5x8x128xf32, #tpu.memory_space<vmem>>, vector<1x8x128xf32>
      %153 = vector.shape_cast %152 : vector<1x8x128xf32> to vector<8x128xf32>
      %154 = vector.extract_strided_slice %150 {offsets = [0, 0], sizes = [8, 1], strides = [1, 1]} : vector<8x5xf32> to vector<8x1xf32>
      %155 = vector.broadcast %154 : vector<8x1xf32> to vector<8x128xf32>
      %156 = arith.mulf %153, %155 : vector<8x128xf32>
      %c0_94 = arith.constant 0 : index
      %c0_95 = arith.constant 0 : index
      %c0_96 = arith.constant 0 : index
      %157 = vector.load %arg19[%c0_94, %c0_95, %c0_96] : memref<5x8x128xf32, #tpu.memory_space<vmem>>, vector<1x8x128xf32>
      %158 = vector.shape_cast %157 : vector<1x8x128xf32> to vector<8x128xf32>
      %159 = vector.shape_cast %156 : vector<8x128xf32> to vector<1x8x128xf32>
      tpu.vector_store %arg19[%c0_94, %c0_95, %c0_96], %159 {strides = array<i32>} : memref<5x8x128xf32, #tpu.memory_space<vmem>>, vector<1x8x128xf32>,
      %160 = arith.truncf %156 : vector<8x128xf32> to vector<8x128xbf16>
      %c0_97 = arith.constant 0 : index
      %c0_98 = arith.constant 0 : index
      %c0_99 = arith.constant 0 : index
      %161 = vector.load %arg12[%c0_97, %c0_98, %c0_99] : memref<5x128x512xbf16, #tpu.memory_space<vmem>>, vector<1x128x512xbf16>
      %162 = vector.shape_cast %161 : vector<1x128x512xbf16> to vector<128x512xbf16>
      %cst_100 = arith.constant dense<0.000000e+00> : vector<8x512xf32>
      %163 = tpu.matmul %160, %162, %cst_100 {dimension_numbers = #tpu.dot_dimension_numbers<[1], [0], [0], [1], [0, 0, 1, 1], [], []>} : vector<8x128xbf16>, vector<128x512xbf16>, vector<8x512xf32> -> vector<8x512xf32>
      %164 = arith.addf %151, %163 : vector<8x512xf32>
      %c1_101 = arith.constant 1 : index
      %c0_102 = arith.constant 0 : index
      %c0_103 = arith.constant 0 : index
      %165 = vector.load %arg21[%c1_101, %c0_102, %c0_103] : memref<5x8x128xf32, #tpu.memory_space<vmem>>, vector<1x8x128xf32>
      %166 = vector.shape_cast %165 : vector<1x8x128xf32> to vector<8x128xf32>
      %167 = vector.extract_strided_slice %150 {offsets = [0, 1], sizes = [8, 1], strides = [1, 1]} : vector<8x5xf32> to vector<8x1xf32>
      %168 = vector.broadcast %167 : vector<8x1xf32> to vector<8x128xf32>
      %169 = arith.mulf %166, %168 : vector<8x128xf32>
      %c1_104 = arith.constant 1 : index
      %c0_105 = arith.constant 0 : index
      %c0_106 = arith.constant 0 : index
      %170 = vector.load %arg19[%c1_104, %c0_105, %c0_106] : memref<5x8x128xf32, #tpu.memory_space<vmem>>, vector<1x8x128xf32>
      %171 = vector.shape_cast %170 : vector<1x8x128xf32> to vector<8x128xf32>
      %172 = vector.shape_cast %169 : vector<8x128xf32> to vector<1x8x128xf32>
      tpu.vector_store %arg19[%c1_104, %c0_105, %c0_106], %172 {strides = array<i32>} : memref<5x8x128xf32, #tpu.memory_space<vmem>>, vector<1x8x128xf32>,
      %173 = arith.truncf %169 : vector<8x128xf32> to vector<8x128xbf16>
      %c1_107 = arith.constant 1 : index
      %c0_108 = arith.constant 0 : index
      %c0_109 = arith.constant 0 : index
      %174 = vector.load %arg12[%c1_107, %c0_108, %c0_109] : memref<5x128x512xbf16, #tpu.memory_space<vmem>>, vector<1x128x512xbf16>
      %175 = vector.shape_cast %174 : vector<1x128x512xbf16> to vector<128x512xbf16>
      %cst_110 = arith.constant dense<0.000000e+00> : vector<8x512xf32>
      %176 = tpu.matmul %173, %175, %cst_110 {dimension_numbers = #tpu.dot_dimension_numbers<[1], [0], [0], [1], [0, 0, 1, 1], [], []>} : vector<8x128xbf16>, vector<128x512xbf16>, vector<8x512xf32> -> vector<8x512xf32>
      %177 = arith.addf %164, %176 : vector<8x512xf32>
      %c2_111 = arith.constant 2 : index
      %c0_112 = arith.constant 0 : index
      %c0_113 = arith.constant 0 : index
      %178 = vector.load %arg21[%c2_111, %c0_112, %c0_113] : memref<5x8x128xf32, #tpu.memory_space<vmem>>, vector<1x8x128xf32>
      %179 = vector.shape_cast %178 : vector<1x8x128xf32> to vector<8x128xf32>
      %180 = vector.extract_strided_slice %150 {offsets = [0, 2], sizes = [8, 1], strides = [1, 1]} : vector<8x5xf32> to vector<8x1xf32>
      %181 = vector.broadcast %180 : vector<8x1xf32> to vector<8x128xf32>
      %182 = arith.mulf %179, %181 : vector<8x128xf32>
      %c2_114 = arith.constant 2 : index
      %c0_115 = arith.constant 0 : index
      %c0_116 = arith.constant 0 : index
      %183 = vector.load %arg19[%c2_114, %c0_115, %c0_116] : memref<5x8x128xf32, #tpu.memory_space<vmem>>, vector<1x8x128xf32>
      %184 = vector.shape_cast %183 : vector<1x8x128xf32> to vector<8x128xf32>
      %185 = vector.shape_cast %182 : vector<8x128xf32> to vector<1x8x128xf32>
      tpu.vector_store %arg19[%c2_114, %c0_115, %c0_116], %185 {strides = array<i32>} : memref<5x8x128xf32, #tpu.memory_space<vmem>>, vector<1x8x128xf32>,
      %186 = arith.truncf %182 : vector<8x128xf32> to vector<8x128xbf16>
      %c2_117 = arith.constant 2 : index
      %c0_118 = arith.constant 0 : index
      %c0_119 = arith.constant 0 : index
      %187 = vector.load %arg12[%c2_117, %c0_118, %c0_119] : memref<5x128x512xbf16, #tpu.memory_space<vmem>>, vector<1x128x512xbf16>
      %188 = vector.shape_cast %187 : vector<1x128x512xbf16> to vector<128x512xbf16>
      %cst_120 = arith.constant dense<0.000000e+00> : vector<8x512xf32>
      %189 = tpu.matmul %186, %188, %cst_120 {dimension_numbers = #tpu.dot_dimension_numbers<[1], [0], [0], [1], [0, 0, 1, 1], [], []>} : vector<8x128xbf16>, vector<128x512xbf16>, vector<8x512xf32> -> vector<8x512xf32>
      %190 = arith.addf %177, %189 : vector<8x512xf32>
      %c3 = arith.constant 3 : index
      %c0_121 = arith.constant 0 : index
      %c0_122 = arith.constant 0 : index
      %191 = vector.load %arg21[%c3, %c0_121, %c0_122] : memref<5x8x128xf32, #tpu.memory_space<vmem>>, vector<1x8x128xf32>
      %192 = vector.shape_cast %191 : vector<1x8x128xf32> to vector<8x128xf32>
      %193 = vector.extract_strided_slice %150 {offsets = [0, 3], sizes = [8, 1], strides = [1, 1]} : vector<8x5xf32> to vector<8x1xf32>
      %194 = vector.broadcast %193 : vector<8x1xf32> to vector<8x128xf32>
      %195 = arith.mulf %192, %194 : vector<8x128xf32>
      %c3_123 = arith.constant 3 : index
      %c0_124 = arith.constant 0 : index
      %c0_125 = arith.constant 0 : index
      %196 = vector.load %arg19[%c3_123, %c0_124, %c0_125] : memref<5x8x128xf32, #tpu.memory_space<vmem>>, vector<1x8x128xf32>
      %197 = vector.shape_cast %196 : vector<1x8x128xf32> to vector<8x128xf32>
      %198 = vector.shape_cast %195 : vector<8x128xf32> to vector<1x8x128xf32>
      tpu.vector_store %arg19[%c3_123, %c0_124, %c0_125], %198 {strides = array<i32>} : memref<5x8x128xf32, #tpu.memory_space<vmem>>, vector<1x8x128xf32>,
      %199 = arith.truncf %195 : vector<8x128xf32> to vector<8x128xbf16>
      %c3_126 = arith.constant 3 : index
      %c0_127 = arith.constant 0 : index
      %c0_128 = arith.constant 0 : index
      %200 = vector.load %arg12[%c3_126, %c0_127, %c0_128] : memref<5x128x512xbf16, #tpu.memory_space<vmem>>, vector<1x128x512xbf16>
      %201 = vector.shape_cast %200 : vector<1x128x512xbf16> to vector<128x512xbf16>
      %cst_129 = arith.constant dense<0.000000e+00> : vector<8x512xf32>
      %202 = tpu.matmul %199, %201, %cst_129 {dimension_numbers = #tpu.dot_dimension_numbers<[1], [0], [0], [1], [0, 0, 1, 1], [], []>} : vector<8x128xbf16>, vector<128x512xbf16>, vector<8x512xf32> -> vector<8x512xf32>
      %203 = arith.addf %190, %202 : vector<8x512xf32>
      %c4 = arith.constant 4 : index
      %c0_130 = arith.constant 0 : index
      %c0_131 = arith.constant 0 : index
      %204 = vector.load %arg21[%c4, %c0_130, %c0_131] : memref<5x8x128xf32, #tpu.memory_space<vmem>>, vector<1x8x128xf32>
      %205 = vector.shape_cast %204 : vector<1x8x128xf32> to vector<8x128xf32>
      %206 = vector.extract_strided_slice %150 {offsets = [0, 4], sizes = [8, 1], strides = [1, 1]} : vector<8x5xf32> to vector<8x1xf32>
      %207 = vector.broadcast %206 : vector<8x1xf32> to vector<8x128xf32>
      %208 = arith.mulf %205, %207 : vector<8x128xf32>
      %c4_132 = arith.constant 4 : index
      %c0_133 = arith.constant 0 : index
      %c0_134 = arith.constant 0 : index
      %209 = vector.load %arg19[%c4_132, %c0_133, %c0_134] : memref<5x8x128xf32, #tpu.memory_space<vmem>>, vector<1x8x128xf32>
      %210 = vector.shape_cast %209 : vector<1x8x128xf32> to vector<8x128xf32>
      %211 = vector.shape_cast %208 : vector<8x128xf32> to vector<1x8x128xf32>
      tpu.vector_store %arg19[%c4_132, %c0_133, %c0_134], %211 {strides = array<i32>} : memref<5x8x128xf32, #tpu.memory_space<vmem>>, vector<1x8x128xf32>,
      %212 = arith.truncf %208 : vector<8x128xf32> to vector<8x128xbf16>
      %c4_135 = arith.constant 4 : index
      %c0_136 = arith.constant 0 : index
      %c0_137 = arith.constant 0 : index
      %213 = vector.load %arg12[%c4_135, %c0_136, %c0_137] : memref<5x128x512xbf16, #tpu.memory_space<vmem>>, vector<1x128x512xbf16>
      %214 = vector.shape_cast %213 : vector<1x128x512xbf16> to vector<128x512xbf16>
      %cst_138 = arith.constant dense<0.000000e+00> : vector<8x512xf32>
      %215 = tpu.matmul %212, %214, %cst_138 {dimension_numbers = #tpu.dot_dimension_numbers<[1], [0], [0], [1], [0, 0, 1, 1], [], []>} : vector<8x128xbf16>, vector<128x512xbf16>, vector<8x512xf32> -> vector<8x512xf32>
      %216 = arith.addf %203, %215 : vector<8x512xf32>
      %c0_139 = arith.constant 0 : index
      %c0_140 = arith.constant 0 : index
      %217 = vector.load %arg13[%c0_139, %c0_140] : memref<1x512xf32, #tpu.memory_space<vmem>>, vector<1x512xf32>
      %218 = vector.broadcast %217 : vector<1x512xf32> to vector<8x512xf32>
      %219 = arith.addf %216, %218 : vector<8x512xf32>
      %cst_141 = arith.constant 0.000000e+00 : f32
      %220 = vector.broadcast %cst_141 : f32 to vector<8x512xf32>
      %221 = arith.maximumf %219, %220 : vector<8x512xf32>
      %222 = arith.truncf %221 : vector<8x512xf32> to vector<8x512xbf16>
      %c0_142 = arith.constant 0 : index
      %c0_143 = arith.constant 0 : index
      %223 = vector.load %arg14[%c0_142, %c0_143] : memref<512x256xbf16, #tpu.memory_space<vmem>>, vector<512x256xbf16>
      %cst_144 = arith.constant dense<0.000000e+00> : vector<8x256xf32>
      %224 = tpu.matmul %222, %223, %cst_144 {dimension_numbers = #tpu.dot_dimension_numbers<[1], [0], [0], [1], [0, 0, 1, 1], [], []>} : vector<8x512xbf16>, vector<512x256xbf16>, vector<8x256xf32> -> vector<8x256xf32>
      %c0_145 = arith.constant 0 : index
      %c0_146 = arith.constant 0 : index
      %225 = vector.load %arg15[%c0_145, %c0_146] : memref<1x256xf32, #tpu.memory_space<vmem>>, vector<1x256xf32>
      %226 = vector.broadcast %225 : vector<1x256xf32> to vector<8x256xf32>
      %227 = arith.addf %224, %226 : vector<8x256xf32>
      %cst_147 = arith.constant 0.000000e+00 : f32
      %228 = vector.broadcast %cst_147 : f32 to vector<8x256xf32>
      %229 = arith.maximumf %227, %228 : vector<8x256xf32>
      %230 = arith.truncf %229 : vector<8x256xf32> to vector<8x256xbf16>
      %c0_148 = arith.constant 0 : index
      %c0_149 = arith.constant 0 : index
      %231 = vector.load %arg16[%c0_148, %c0_149] : memref<256x128xbf16, #tpu.memory_space<vmem>>, vector<256x128xbf16>
      %cst_150 = arith.constant dense<0.000000e+00> : vector<8x128xf32>
      %232 = tpu.matmul %230, %231, %cst_150 {dimension_numbers = #tpu.dot_dimension_numbers<[1], [0], [0], [1], [0, 0, 1, 1], [], []>} : vector<8x256xbf16>, vector<256x128xbf16>, vector<8x128xf32> -> vector<8x128xf32>
      %c0_151 = arith.constant 0 : index
      %c0_152 = arith.constant 0 : index
      %233 = vector.load %arg17[%c0_151, %c0_152] : memref<1x128xf32, #tpu.memory_space<vmem>>, vector<1x128xf32>
      %234 = vector.broadcast %233 : vector<1x128xf32> to vector<8x128xf32>
      %235 = arith.addf %232, %234 : vector<8x128xf32>
      %c0_153 = arith.constant 0 : index
      %c0_154 = arith.constant 0 : index
      %236 = vector.load %arg18[%c0_153, %c0_154] : memref<8x128xf32, #tpu.memory_space<vmem>>, vector<8x128xf32>
      tpu.vector_store %arg18[%c0_153, %c0_154], %235 {strides = array<i32>} : memref<8x128xf32, #tpu.memory_space<vmem>>, vector<8x128xf32>,
    } else {
    }
    return
  }
  func.func @transform_0(%arg0: i32) -> (i32, i32, i32) {
    %c0_i32 = arith.constant 0 : i32
    %c0_i32_0 = arith.constant 0 : i32
    %c0_i32_1 = arith.constant 0 : i32
    return %arg0, %c0_i32, %c0_i32_0 : i32, i32, i32
  }
  func.func @transform_1(%arg0: i32) -> (i32, i32, i32) {
    %c0_i32 = arith.constant 0 : i32
    %c0_i32_0 = arith.constant 0 : i32
    %c0_i32_1 = arith.constant 0 : i32
    return %arg0, %c0_i32, %c0_i32_0 : i32, i32, i32
  }
  func.func @transform_2(%arg0: i32) -> (i32, i32, i32) {
    %c0_i32 = arith.constant 0 : i32
    %c0_i32_0 = arith.constant 0 : i32
    %c0_i32_1 = arith.constant 0 : i32
    return %arg0, %c0_i32, %c0_i32_0 : i32, i32, i32
  }
  func.func @transform_3(%arg0: i32) -> (i32, i32, i32, i32) {
    %c0_i32 = arith.constant 0 : i32
    %c0_i32_0 = arith.constant 0 : i32
    %c0_i32_1 = arith.constant 0 : i32
    %c0_i32_2 = arith.constant 0 : i32
    return %arg0, %c0_i32, %c0_i32_0, %c0_i32_1 : i32, i32, i32, i32
  }
  func.func @transform_4(%arg0: i32) -> (i32, i32, i32, i32) {
    %c0_i32 = arith.constant 0 : i32
    %c0_i32_0 = arith.constant 0 : i32
    %c0_i32_1 = arith.constant 0 : i32
    %c0_i32_2 = arith.constant 0 : i32
    return %arg0, %c0_i32, %c0_i32_0, %c0_i32_1 : i32, i32, i32, i32
  }
  func.func @transform_5(%arg0: i32) -> (i32, i32, i32) {
    %c0_i32 = arith.constant 0 : i32
    %c0_i32_0 = arith.constant 0 : i32
    %c0_i32_1 = arith.constant 0 : i32
    return %arg0, %c0_i32, %c0_i32_0 : i32, i32, i32
  }
  func.func @transform_6(%arg0: i32) -> (i32, i32, i32) {
    %c0_i32 = arith.constant 0 : i32
    %c0_i32_0 = arith.constant 0 : i32
    %c0_i32_1 = arith.constant 0 : i32
    return %arg0, %c0_i32, %c0_i32_0 : i32, i32, i32
  }
  func.func @transform_7(%arg0: i32) -> (i32, i32, i32) {
    %c0_i32 = arith.constant 0 : i32
    %c0_i32_0 = arith.constant 0 : i32
    %c0_i32_1 = arith.constant 0 : i32
    return %arg0, %c0_i32, %c0_i32_0 : i32, i32, i32
  }
  func.func @transform_8(%arg0: i32) -> (i32, i32, i32) {
    %c0_i32 = arith.constant 0 : i32
    %c0_i32_0 = arith.constant 0 : i32
    %c0_i32_1 = arith.constant 0 : i32
    return %arg0, %c0_i32, %c0_i32_0 : i32, i32, i32
  }
  func.func @transform_9(%arg0: i32) -> (i32, i32) {
    %c0_i32 = arith.constant 0 : i32
    %c0_i32_0 = arith.constant 0 : i32
    %c0_i32_1 = arith.constant 0 : i32
    return %c0_i32, %c0_i32_0 : i32, i32
  }
  func.func @transform_10(%arg0: i32) -> (i32, i32) {
    %c0_i32 = arith.constant 0 : i32
    %c0_i32_0 = arith.constant 0 : i32
    %c0_i32_1 = arith.constant 0 : i32
    return %c0_i32, %c0_i32_0 : i32, i32
  }
  func.func @transform_11(%arg0: i32) -> (i32, i32, i32) {
    %c0_i32 = arith.constant 0 : i32
    %c0_i32_0 = arith.constant 0 : i32
    %c0_i32_1 = arith.constant 0 : i32
    %c0_i32_2 = arith.constant 0 : i32
    return %c0_i32, %c0_i32_0, %c0_i32_1 : i32, i32, i32
  }
  func.func @transform_12(%arg0: i32) -> (i32, i32) {
    %c0_i32 = arith.constant 0 : i32
    %c0_i32_0 = arith.constant 0 : i32
    %c0_i32_1 = arith.constant 0 : i32
    return %c0_i32, %c0_i32_0 : i32, i32
  }
  func.func @transform_13(%arg0: i32) -> (i32, i32) {
    %c0_i32 = arith.constant 0 : i32
    %c0_i32_0 = arith.constant 0 : i32
    %c0_i32_1 = arith.constant 0 : i32
    return %c0_i32, %c0_i32_0 : i32, i32
  }
  func.func @transform_14(%arg0: i32) -> (i32, i32) {
    %c0_i32 = arith.constant 0 : i32
    %c0_i32_0 = arith.constant 0 : i32
    %c0_i32_1 = arith.constant 0 : i32
    return %c0_i32, %c0_i32_0 : i32, i32
  }
  func.func @transform_15(%arg0: i32) -> (i32, i32) {
    %c0_i32 = arith.constant 0 : i32
    %c0_i32_0 = arith.constant 0 : i32
    %c0_i32_1 = arith.constant 0 : i32
    return %c0_i32, %c0_i32_0 : i32, i32
  }
  func.func @transform_16(%arg0: i32) -> (i32, i32) {
    %c0_i32 = arith.constant 0 : i32
    %c0_i32_0 = arith.constant 0 : i32
    %c0_i32_1 = arith.constant 0 : i32
    return %c0_i32, %c0_i32_0 : i32, i32
  }
  func.func @transform_17(%arg0: i32) -> (i32, i32) {
    %c0_i32 = arith.constant 0 : i32
    %c0_i32_0 = arith.constant 0 : i32
    %c0_i32_1 = arith.constant 0 : i32
    return %c0_i32, %c0_i32_0 : i32, i32
  }
  func.func @transform_18(%arg0: i32) -> (i32, i32, i32) {
    %c0_i32 = arith.constant 0 : i32
    %c0_i32_0 = arith.constant 0 : i32
    %c0_i32_1 = arith.constant 0 : i32
    %c0_i32_2 = arith.constant 0 : i32
    return %c0_i32, %c0_i32_0, %c0_i32_1 : i32, i32, i32
  }
}

</mosaic_0001>

<llo_original>
// kernel: attention_model_forward.1
$region0: #{attention_model_forward.1}
  #allocation0 [shape = 'u32[]', space=smem, size = 0x4, offset = 0x4, fixed_abs, tag = 'smem constant byte address 0x4 - core index']
  #allocation1 [shape = 'u32[144,128]{1,0:T(1,128)}', space=vmem, size = 0x12000, scoped, tag = 'internal scratch']
  #allocation2 [shape = 'f32[8,1024]{1,0:T(8,128)}', space=vmem, size = 0x8000, scoped, tag = 'scratch operand']
  #allocation3 [shape = 'f32[5,8,128]{2,1,0:T(8,128)}', space=vmem, size = 0x5000, scoped, tag = 'scratch operand']
  #allocation4 [shape = 'f32[8,5]{1,0:T(8,128)}', space=vmem, size = 0x1000, scoped, tag = 'scratch operand']
  %s0 = inlined_call_operand.vmem [shape: f32[5,8,128], index: 0, kind: input, shape index: {}]
  %s1 = inlined_call_operand.hbm [shape: s8[5,128,1024], index: 1, kind: input, shape index: {}]
  %s2 = inlined_call_operand.hbm [shape: f32[5,2,1024], index: 2, kind: input, shape index: {}]
  %s3 = inlined_call_operand.hbm [shape: s8[5,3,1024,1024], index: 3, kind: input, shape index: {}]
  %s4 = inlined_call_operand.hbm [shape: f32[5,3,2,1024], index: 4, kind: input, shape index: {}]
  %s5 = inlined_call_operand.hbm [shape: s8[5,1024,128], index: 5, kind: input, shape index: {}]
  %s6 = inlined_call_operand.hbm [shape: f32[5,2,128], index: 6, kind: input, shape index: {}]
  %s7 = inlined_call_operand.hbm [shape: s8[5,128,128], index: 7, kind: input, shape index: {}]
  %s8 = inlined_call_operand.hbm [shape: f32[5,2,128], index: 8, kind: input, shape index: {}]
  %s9 = inlined_call_operand.hbm [shape: bf16[128,128], index: 9, kind: input, shape index: {}]
  %s10 = inlined_call_operand.hbm [shape: f32[1,128], index: 10, kind: input, shape index: {}]
  %s11 = inlined_call_operand.hbm [shape: bf16[5,128,512], index: 11, kind: input, shape index: {}]
  %s12 = inlined_call_operand.hbm [shape: f32[1,512], index: 12, kind: input, shape index: {}]
  %s13 = inlined_call_operand.hbm [shape: bf16[512,256], index: 13, kind: input, shape index: {}]
  %s14 = inlined_call_operand.hbm [shape: f32[1,256], index: 14, kind: input, shape index: {}]
  %s15 = inlined_call_operand.hbm [shape: bf16[256,128], index: 15, kind: input, shape index: {}]
  %s16 = inlined_call_operand.hbm [shape: f32[1,128], index: 16, kind: input, shape index: {}]
  %s17 = inlined_call_operand.hbm [shape: f32[8,128], index: 17, kind: output, shape index: {0}]
  %s18 = inlined_call_operand.vmem [shape: f32[5,8,128], index: 18, kind: output, shape index: {1}]
  %19 = xla_tuple %s17, %s18
  %s20 = sld [smem:[#allocation0]]
  $region181: #{attention_model_forward.1} parent=0
    _
  %s22 = ssub.s32 1, %s20
  %s23 = scalar_select 0, %s22, %s20
  $region1: #{attention_model_forward.1} parent=0
    #allocation5 [shape = 'u8[262144]{0}', space=vmem, size = 0x40000, scoped, tag = 'input window, operand 1']
    #allocation6 [shape = 's32[2]{0}', space=sflag, size = 0x8, scoped, tag = 'scoped memory for attention_model_forward.1']
    #allocation7 [shape = 's32[2]{0}', space=sflag, size = 0x8, scoped, tag = 'scoped memory for attention_model_forward.1']
    #allocation8 [shape = 'u8[16384]{0}', space=vmem, size = 0x4000, scoped, tag = 'input window, operand 2']
    #allocation9 [shape = 's32[2]{0}', space=sflag, size = 0x8, scoped, tag = 'scoped memory for attention_model_forward.1']
    #allocation10 [shape = 'u8[6291456]{0}', space=vmem, size = 0x600000, scoped, tag = 'input window, operand 3']
    #allocation11 [shape = 'u8[49152]{0}', space=vmem, size = 0xc000, scoped, tag = 'input window, operand 4']
    #allocation12 [shape = 's32[2]{0}', space=sflag, size = 0x8, scoped, tag = 'scoped memory for attention_model_forward.1']
    #allocation13 [shape = 'u8[262144]{0}', space=vmem, size = 0x40000, scoped, tag = 'input window, operand 5']
    #allocation14 [shape = 'u8[2048]{0}', space=vmem, size = 0x800, scoped, tag = 'input window, operand 6']
    #allocation15 [shape = 's32[2]{0}', space=sflag, size = 0x8, scoped, tag = 'scoped memory for attention_model_forward.1']
    #allocation16 [shape = 'u8[32768]{0}', space=vmem, size = 0x8000, scoped, tag = 'input window, operand 7']
    #allocation17 [shape = 'u8[2048]{0}', space=vmem, size = 0x800, scoped, tag = 'input window, operand 8']
    #allocation18 [shape = 's32[2]{0}', space=sflag, size = 0x8, scoped, tag = 'scoped memory for attention_model_forward.1']
    #allocation19 [shape = 'u8[32768]{0}', space=vmem, size = 0x8000, scoped, tag = 'input window, operand 9, single buffered']
    #allocation20 [shape = 'u8[512]{0}', space=vmem, size = 0x400, scoped, tag = 'input window, operand 10, single buffered']
    #allocation21 [shape = 's32[1]{0}', space=sflag, size = 0x4, scoped, tag = 'scoped memory for attention_model_forward.1']
    #allocation22 [shape = 'u8[655360]{0}', space=vmem, size = 0xa0000, scoped, tag = 'input window, operand 11, single buffered']
    #allocation23 [shape = 'u8[2048]{0}', space=vmem, size = 0x800, scoped, tag = 'input window, operand 12, single buffered']
    #allocation24 [shape = 's32[1]{0}', space=sflag, size = 0x4, scoped, tag = 'scoped memory for attention_model_forward.1']
    #allocation25 [shape = 'u8[262144]{0}', space=vmem, size = 0x40000, scoped, tag = 'input window, operand 13, single buffered']
    #allocation26 [shape = 'u8[1024]{0}', space=vmem, size = 0x400, scoped, tag = 'input window, operand 14, single buffered']
    #allocation27 [shape = 's32[1]{0}', space=sflag, size = 0x4, scoped, tag = 'scoped memory for attention_model_forward.1']
    #allocation28 [shape = 'u8[65536]{0}', space=vmem, size = 0x10000, scoped, tag = 'input window, operand 15, single buffered']
    #allocation29 [shape = 'u8[512]{0}', space=vmem, size = 0x400, scoped, tag = 'input window, operand 16, single buffered']
    #allocation30 [shape = 's32[1]{0}', space=sflag, size = 0x4, scoped, tag = 'scoped memory for attention_model_forward.1']
    #allocation31 [shape = 'u8[4096]{0}', space=vmem, size = 0x1000, scoped, tag = 'output window, operand 0, single buffered']
    %24 = vsyncpa [#allocation6], 0
    %s25 = scalar_lea.sflag [#allocation6], 1
    %26 = vsyncpa %s25, 0
    %27 = vsyncpa [#allocation9], 0
    %s28 = scalar_lea.sflag [#allocation9], 1
    %29 = vsyncpa %s28, 0
    %30 = vsyncpa [#allocation12], 0
    %s31 = scalar_lea.sflag [#allocation12], 1
    %32 = vsyncpa %s31, 0
    %33 = vsyncpa [#allocation15], 0
    %s34 = scalar_lea.sflag [#allocation15], 1
    %35 = vsyncpa %s34, 0
    %36 = vsyncpa [#allocation18], 0
    %s37 = scalar_lea.sflag [#allocation18], 1
    %38 = vsyncpa %s37, 0
    %39 = vsyncpa [#allocation21], 0
    %40 = vsyncpa [#allocation24], 0
    %41 = vsyncpa [#allocation27], 0
    %42 = vsyncpa [#allocation30], 0
    %43 = vsyncpa [#allocation7], 0
    loop: start=0, step=1, limit=7
    $region2: #{attention_model_forward.1} parent=1 // loop_pre_header
      _
    $region3: #{attention_model_forward.1} parent=1 // loop_header
      %s45 = sphi 0, %s49
      %p46 = scmp.ge.s32.totalorder %s45, 7
      %s55 = sphi 0, %s57
      %s58 = sphi 0, %s55
      %s59 = sphi 0, %s58
      %s75 = sphi 0, %s59
      %s81 = sphi 0, %s83
      %s84 = sphi 0, %s81
      %s85 = sphi 0, %s84
      %s101 = sphi 0, %s85
      %s107 = sphi 0, %s109
      %s110 = sphi 0, %s107
      %s111 = sphi 0, %s110
      %s127 = sphi 0, %s111
      %s133 = sphi 0, %s135
      %s136 = sphi 0, %s133
      %s137 = sphi 0, %s136
      %s153 = sphi 0, %s137
      %s159 = sphi 0, %s161
      %s162 = sphi 0, %s159
      %s163 = sphi 0, %s162
      %s179 = sphi 0, %s163
      %s185 = sphi 0, %s187
      %s188 = sphi 0, %s185
      %s189 = sphi 0, %s188
      %s205 = sphi 0, %s189
      %s211 = sphi 0, %s213
      %s214 = sphi 0, %s211
      %s215 = sphi 0, %s214
      %s231 = sphi 0, %s215
      %s237 = sphi 0, %s239
      %s240 = sphi 0, %s237
      %s241 = sphi 0, %s240
      %s257 = sphi 0, %s241
      %s263 = sphi 0, %s265
      %s266 = sphi 0, %s263
      %s267 = sphi 0, %s266
      %s283 = sphi 0, %s267
      %s287 = sphi 0, %s287
      %s289 = sphi 0, %s287
      %s290 = sphi 0, %s289
      %s304 = sphi 0, %s290
      %s308 = sphi 0, %s308
      %s310 = sphi 0, %s308
      %s311 = sphi 0, %s310
      %s325 = sphi 0, %s311
      %s329 = sphi 0, %s329
      %s331 = sphi 0, %s329
      %s332 = sphi 0, %s331
      %s346 = sphi 0, %s332
      %s350 = sphi 0, %s350
      %s352 = sphi 0, %s350
      %s353 = sphi 0, %s352
      %s367 = sphi 0, %s353
      %s371 = sphi 0, %s371
      %s373 = sphi 0, %s371
      %s374 = sphi 0, %s373
      %s388 = sphi 0, %s374
      %s392 = sphi 0, %s392
      %s394 = sphi 0, %s392
      %s395 = sphi 0, %s394
      %s409 = sphi 0, %s395
      %s413 = sphi 0, %s413
      %s415 = sphi 0, %s413
      %s416 = sphi 0, %s415
      %s430 = sphi 0, %s416
      %s434 = sphi 0, %s434
      %s436 = sphi 0, %s434
      %s437 = sphi 0, %s436
      %s451 = sphi 0, %s437
      %s455 = sphi 0, %s455
      %s457 = sphi 0, %s455
      %s458 = sphi 0, %s457
      %s472 = sphi 0, %s458
      %s476 = sphi 0, %s476
      %s478 = sphi 0, %s476
      %s479 = sphi 0, %s478
      %s493 = sphi 0, %s479
    $region4: #{attention_model_forward.1} parent=1 // loop_header_branch
      %48 = sbr.rel (%p46) target = $region8
    $region5: #{attention_model_forward.1} parent=1 // loop_body
      %s50 = ssub.s32 %s45, 1
      %s51 = ssub.s32 %s45, 2
      %s52 = sadd.s32 %s45, 1
      %s53 = ssub.s32 %s45, %s52
      %p54 = scmp.eq.s32.totalorder %s53, 0
      %s56 = sadd.s32 %s55, 1
      %s57 = scalar_select %p54, %s55, %s56
      %p60 = pneg %p54
      %p61 = scmp.eq.s32.totalorder %s45, 4
      %p62 = por %p60, %p61
      %p63 = scmp.ne.s32.totalorder %s55, %s58
      %p64 = scmp.eq.s32.totalorder %s45, 0
      %p65 = por %p63, %p64
      %p66 = scmp.ne.s32.totalorder %s55, %s58
      %p67 = scmp.eq.s32.totalorder %s50, 4
      %p68 = por %p66, %p67
      %p69 = scmp.ne.s32.totalorder %s58, %s59
      %p70 = scmp.eq.s32.totalorder %s50, 0
      %p71 = por %p69, %p70
      %p72 = scmp.ne.s32.totalorder %s58, %s59
      %p73 = scmp.eq.s32.totalorder %s51, 4
      %p74 = por %p72, %p73
      %p76 = scmp.ne.s32.totalorder %s59, %s75
      %p77 = scmp.eq.s32.totalorder %s51, 0
      %p78 = por %p76, %p77
      %s79 = ssub.s32 %s45, %s52
      %p80 = scmp.eq.s32.totalorder %s79, 0
      %s82 = sadd.s32 %s81, 1
      %s83 = scalar_select %p80, %s81, %s82
      %p86 = pneg %p80
      %p87 = scmp.eq.s32.totalorder %s45, 4
      %p88 = por %p86, %p87
      %p89 = scmp.ne.s32.totalorder %s81, %s84
      %p90 = scmp.eq.s32.totalorder %s45, 0
      %p91 = por %p89, %p90
      %p92 = scmp.ne.s32.totalorder %s81, %s84
      %p93 = scmp.eq.s32.totalorder %s50, 4
      %p94 = por %p92, %p93
      %p95 = scmp.ne.s32.totalorder %s84, %s85
      %p96 = scmp.eq.s32.totalorder %s50, 0
      %p97 = por %p95, %p96
      %p98 = scmp.ne.s32.totalorder %s84, %s85
      %p99 = scmp.eq.s32.totalorder %s51, 4
      %p100 = por %p98, %p99
      %p102 = scmp.ne.s32.totalorder %s85, %s101
      %p103 = scmp.eq.s32.totalorder %s51, 0
      %p104 = por %p102, %p103
      %s105 = ssub.s32 %s45, %s52
      %p106 = scmp.eq.s32.totalorder %s105, 0
      %s108 = sadd.s32 %s107, 1
      %s109 = scalar_select %p106, %s107, %s108
      %p112 = pneg %p106
      %p113 = scmp.eq.s32.totalorder %s45, 4
      %p114 = por %p112, %p113
      %p115 = scmp.ne.s32.totalorder %s107, %s110
      %p116 = scmp.eq.s32.totalorder %s45, 0
      %p117 = por %p115, %p116
      %p118 = scmp.ne.s32.totalorder %s107, %s110
      %p119 = scmp.eq.s32.totalorder %s50, 4
      %p120 = por %p118, %p119
      %p121 = scmp.ne.s32.totalorder %s110, %s111
      %p122 = scmp.eq.s32.totalorder %s50, 0
      %p123 = por %p121, %p122
      %p124 = scmp.ne.s32.totalorder %s110, %s111
      %p125 = scmp.eq.s32.totalorder %s51, 4
      %p126 = por %p124, %p125
      %p128 = scmp.ne.s32.totalorder %s111, %s127
      %p129 = scmp.eq.s32.totalorder %s51, 0
      %p130 = por %p128, %p129
      %s131 = ssub.s32 %s45, %s52
      %p132 = scmp.eq.s32.totalorder %s131, 0
      %s134 = sadd.s32 %s133, 1
      %s135 = scalar_select %p132, %s133, %s134
      %p138 = pneg %p132
      %p139 = scmp.eq.s32.totalorder %s45, 4
      %p140 = por %p138, %p139
      %p141 = scmp.ne.s32.totalorder %s133, %s136
      %p142 = scmp.eq.s32.totalorder %s45, 0
      %p143 = por %p141, %p142
      %p144 = scmp.ne.s32.totalorder %s133, %s136
      %p145 = scmp.eq.s32.totalorder %s50, 4
      %p146 = por %p144, %p145
      %p147 = scmp.ne.s32.totalorder %s136, %s137
      %p148 = scmp.eq.s32.totalorder %s50, 0
      %p149 = por %p147, %p148
      %p150 = scmp.ne.s32.totalorder %s136, %s137
      %p151 = scmp.eq.s32.totalorder %s51, 4
      %p152 = por %p150, %p151
      %p154 = scmp.ne.s32.totalorder %s137, %s153
      %p155 = scmp.eq.s32.totalorder %s51, 0
      %p156 = por %p154, %p155
      %s157 = ssub.s32 %s45, %s52
      %p158 = scmp.eq.s32.totalorder %s157, 0
      %s160 = sadd.s32 %s159, 1
      %s161 = scalar_select %p158, %s159, %s160
      %p164 = pneg %p158
      %p165 = scmp.eq.s32.totalorder %s45, 4
      %p166 = por %p164, %p165
      %p167 = scmp.ne.s32.totalorder %s159, %s162
      %p168 = scmp.eq.s32.totalorder %s45, 0
      %p169 = por %p167, %p168
      %p170 = scmp.ne.s32.totalorder %s159, %s162
      %p171 = scmp.eq.s32.totalorder %s50, 4
      %p172 = por %p170, %p171
      %p173 = scmp.ne.s32.totalorder %s162, %s163
      %p174 = scmp.eq.s32.totalorder %s50, 0
      %p175 = por %p173, %p174
      %p176 = scmp.ne.s32.totalorder %s162, %s163
      %p177 = scmp.eq.s32.totalorder %s51, 4
      %p178 = por %p176, %p177
      %p180 = scmp.ne.s32.totalorder %s163, %s179
      %p181 = scmp.eq.s32.totalorder %s51, 0
      %p182 = por %p180, %p181
      %s183 = ssub.s32 %s45, %s52
      %p184 = scmp.eq.s32.totalorder %s183, 0
      %s186 = sadd.s32 %s185, 1
      %s187 = scalar_select %p184, %s185, %s186
      %p190 = pneg %p184
      %p191 = scmp.eq.s32.totalorder %s45, 4
      %p192 = por %p190, %p191
      %p193 = scmp.ne.s32.totalorder %s185, %s188
      %p194 = scmp.eq.s32.totalorder %s45, 0
      %p195 = por %p193, %p194
      %p196 = scmp.ne.s32.totalorder %s185, %s188
      %p197 = scmp.eq.s32.totalorder %s50, 4
      %p198 = por %p196, %p197
      %p199 = scmp.ne.s32.totalorder %s188, %s189
      %p200 = scmp.eq.s32.totalorder %s50, 0
      %p201 = por %p199, %p200
      %p202 = scmp.ne.s32.totalorder %s188, %s189
      %p203 = scmp.eq.s32.totalorder %s51, 4
      %p204 = por %p202, %p203
      %p206 = scmp.ne.s32.totalorder %s189, %s205
      %p207 = scmp.eq.s32.totalorder %s51, 0
      %p208 = por %p206, %p207
      %s209 = ssub.s32 %s45, %s52
      %p210 = scmp.eq.s32.totalorder %s209, 0
      %s212 = sadd.s32 %s211, 1
      %s213 = scalar_select %p210, %s211, %s212
      %p216 = pneg %p210
      %p217 = scmp.eq.s32.totalorder %s45, 4
      %p218 = por %p216, %p217
      %p219 = scmp.ne.s32.totalorder %s211, %s214
      %p220 = scmp.eq.s32.totalorder %s45, 0
      %p221 = por %p219, %p220
      %p222 = scmp.ne.s32.totalorder %s211, %s214
      %p223 = scmp.eq.s32.totalorder %s50, 4
      %p224 = por %p222, %p223
      %p225 = scmp.ne.s32.totalorder %s214, %s215
      %p226 = scmp.eq.s32.totalorder %s50, 0
      %p227 = por %p225, %p226
      %p228 = scmp.ne.s32.totalorder %s214, %s215
      %p229 = scmp.eq.s32.totalorder %s51, 4
      %p230 = por %p228, %p229
      %p232 = scmp.ne.s32.totalorder %s215, %s231
      %p233 = scmp.eq.s32.totalorder %s51, 0
      %p234 = por %p232, %p233
      %s235 = ssub.s32 %s45, %s52
      %p236 = scmp.eq.s32.totalorder %s235, 0
      %s238 = sadd.s32 %s237, 1
      %s239 = scalar_select %p236, %s237, %s238
      %p242 = pneg %p236
      %p243 = scmp.eq.s32.totalorder %s45, 4
      %p244 = por %p242, %p243
      %p245 = scmp.ne.s32.totalorder %s237, %s240
      %p246 = scmp.eq.s32.totalorder %s45, 0
      %p247 = por %p245, %p246
      %p248 = scmp.ne.s32.totalorder %s237, %s240
      %p249 = scmp.eq.s32.totalorder %s50, 4
      %p250 = por %p248, %p249
      %p251 = scmp.ne.s32.totalorder %s240, %s241
      %p252 = scmp.eq.s32.totalorder %s50, 0
      %p253 = por %p251, %p252
      %p254 = scmp.ne.s32.totalorder %s240, %s241
      %p255 = scmp.eq.s32.totalorder %s51, 4
      %p256 = por %p254, %p255
      %p258 = scmp.ne.s32.totalorder %s241, %s257
      %p259 = scmp.eq.s32.totalorder %s51, 0
      %p260 = por %p258, %p259
      %s261 = ssub.s32 %s45, %s52
      %p262 = scmp.eq.s32.totalorder %s261, 0
      %s264 = sadd.s32 %s263, 1
      %s265 = scalar_select %p262, %s263, %s264
      %p268 = pneg %p262
      %p269 = scmp.eq.s32.totalorder %s45, 4
      %p270 = por %p268, %p269
      %p271 = scmp.ne.s32.totalorder %s263, %s266
      %p272 = scmp.eq.s32.totalorder %s45, 0
      %p273 = por %p271, %p272
      %p274 = scmp.ne.s32.totalorder %s263, %s266
      %p275 = scmp.eq.s32.totalorder %s50, 4
      %p276 = por %p274, %p275
      %p277 = scmp.ne.s32.totalorder %s266, %s267
      %p278 = scmp.eq.s32.totalorder %s50, 0
      %p279 = por %p277, %p278
      %p280 = scmp.ne.s32.totalorder %s266, %s267
      %p281 = scmp.eq.s32.totalorder %s51, 4
      %p282 = por %p280, %p281
      %p284 = scmp.ne.s32.totalorder %s267, %s283
      %p285 = scmp.eq.s32.totalorder %s51, 0
      %p286 = por %p284, %p285
      %s288 = sadd.s32 %s287, 1
      %p291 = scmp.eq.s32.totalorder %s45, 4
      %p292 = scmp.ne.s32.totalorder %s287, %s289
      %p293 = scmp.eq.s32.totalorder %s45, 0
      %p294 = por %p292, %p293
      %p295 = scmp.ne.s32.totalorder %s287, %s289
      %p296 = scmp.eq.s32.totalorder %s50, 4
      %p297 = por %p295, %p296
      %p298 = scmp.ne.s32.totalorder %s289, %s290
      %p299 = scmp.eq.s32.totalorder %s50, 0
      %p300 = por %p298, %p299
      %p301 = scmp.ne.s32.totalorder %s289, %s290
      %p302 = scmp.eq.s32.totalorder %s51, 4
      %p303 = por %p301, %p302
      %p305 = scmp.ne.s32.totalorder %s290, %s304
      %p306 = scmp.eq.s32.totalorder %s51, 0
      %p307 = por %p305, %p306
      %s309 = sadd.s32 %s308, 1
      %p312 = scmp.eq.s32.totalorder %s45, 4
      %p313 = scmp.ne.s32.totalorder %s308, %s310
      %p314 = scmp.eq.s32.totalorder %s45, 0
      %p315 = por %p313, %p314
      %p316 = scmp.ne.s32.totalorder %s308, %s310
      %p317 = scmp.eq.s32.totalorder %s50, 4
      %p318 = por %p316, %p317
      %p319 = scmp.ne.s32.totalorder %s310, %s311
      %p320 = scmp.eq.s32.totalorder %s50, 0
      %p321 = por %p319, %p320
      %p322 = scmp.ne.s32.totalorder %s310, %s311
      %p323 = scmp.eq.s32.totalorder %s51, 4
      %p324 = por %p322, %p323
      %p326 = scmp.ne.s32.totalorder %s311, %s325
      %p327 = scmp.eq.s32.totalorder %s51, 0
      %p328 = por %p326, %p327
      %s330 = sadd.s32 %s329, 1
      %p333 = scmp.eq.s32.totalorder %s45, 4
      %p334 = scmp.ne.s32.totalorder %s329, %s331
      %p335 = scmp.eq.s32.totalorder %s45, 0
      %p336 = por %p334, %p335
      %p337 = scmp.ne.s32.totalorder %s329, %s331
      %p338 = scmp.eq.s32.totalorder %s50, 4
      %p339 = por %p337, %p338
      %p340 = scmp.ne.s32.totalorder %s331, %s332
      %p341 = scmp.eq.s32.totalorder %s50, 0
      %p342 = por %p340, %p341
      %p343 = scmp.ne.s32.totalorder %s331, %s332
      %p344 = scmp.eq.s32.totalorder %s51, 4
      %p345 = por %p343, %p344
      %p347 = scmp.ne.s32.totalorder %s332, %s346
      %p348 = scmp.eq.s32.totalorder %s51, 0
      %p349 = por %p347, %p348
      %s351 = sadd.s32 %s350, 1
      %p354 = scmp.eq.s32.totalorder %s45, 4
      %p355 = scmp.ne.s32.totalorder %s350, %s352
      %p356 = scmp.eq.s32.totalorder %s45, 0
      %p357 = por %p355, %p356
      %p358 = scmp.ne.s32.totalorder %s350, %s352
      %p359 = scmp.eq.s32.totalorder %s50, 4
      %p360 = por %p358, %p359
      %p361 = scmp.ne.s32.totalorder %s352, %s353
      %p362 = scmp.eq.s32.totalorder %s50, 0
      %p363 = por %p361, %p362
      %p364 = scmp.ne.s32.totalorder %s352, %s353
      %p365 = scmp.eq.s32.totalorder %s51, 4
      %p366 = por %p364, %p365
      %p368 = scmp.ne.s32.totalorder %s353, %s367
      %p369 = scmp.eq.s32.totalorder %s51, 0
      %p370 = por %p368, %p369
      %s372 = sadd.s32 %s371, 1
      %p375 = scmp.eq.s32.totalorder %s45, 4
      %p376 = scmp.ne.s32.totalorder %s371, %s373
      %p377 = scmp.eq.s32.totalorder %s45, 0
      %p378 = por %p376, %p377
      %p379 = scmp.ne.s32.totalorder %s371, %s373
      %p380 = scmp.eq.s32.totalorder %s50, 4
      %p381 = por %p379, %p380
      %p382 = scmp.ne.s32.totalorder %s373, %s374
      %p383 = scmp.eq.s32.totalorder %s50, 0
      %p384 = por %p382, %p383
      %p385 = scmp.ne.s32.totalorder %s373, %s374
      %p386 = scmp.eq.s32.totalorder %s51, 4
      %p387 = por %p385, %p386
      %p389 = scmp.ne.s32.totalorder %s374, %s388
      %p390 = scmp.eq.s32.totalorder %s51, 0
      %p391 = por %p389, %p390
      %s393 = sadd.s32 %s392, 1
      %p396 = scmp.eq.s32.totalorder %s45, 4
      %p397 = scmp.ne.s32.totalorder %s392, %s394
      %p398 = scmp.eq.s32.totalorder %s45, 0
      %p399 = por %p397, %p398
      %p400 = scmp.ne.s32.totalorder %s392, %s394
      %p401 = scmp.eq.s32.totalorder %s50, 4
      %p402 = por %p400, %p401
      %p403 = scmp.ne.s32.totalorder %s394, %s395
      %p404 = scmp.eq.s32.totalorder %s50, 0
      %p405 = por %p403, %p404
      %p406 = scmp.ne.s32.totalorder %s394, %s395
      %p407 = scmp.eq.s32.totalorder %s51, 4
      %p408 = por %p406, %p407
      %p410 = scmp.ne.s32.totalorder %s395, %s409
      %p411 = scmp.eq.s32.totalorder %s51, 0
      %p412 = por %p410, %p411
      %s414 = sadd.s32 %s413, 1
      %p417 = scmp.eq.s32.totalorder %s45, 4
      %p418 = scmp.ne.s32.totalorder %s413, %s415
      %p419 = scmp.eq.s32.totalorder %s45, 0
      %p420 = por %p418, %p419
      %p421 = scmp.ne.s32.totalorder %s413, %s415
      %p422 = scmp.eq.s32.totalorder %s50, 4
      %p423 = por %p421, %p422
      %p424 = scmp.ne.s32.totalorder %s415, %s416
      %p425 = scmp.eq.s32.totalorder %s50, 0
      %p426 = por %p424, %p425
      %p427 = scmp.ne.s32.totalorder %s415, %s416
      %p428 = scmp.eq.s32.totalorder %s51, 4
      %p429 = por %p427, %p428
      %p431 = scmp.ne.s32.totalorder %s416, %s430
      %p432 = scmp.eq.s32.totalorder %s51, 0
      %p433 = por %p431, %p432
      %s435 = sadd.s32 %s434, 1
      %p438 = scmp.eq.s32.totalorder %s45, 4
      %p439 = scmp.ne.s32.totalorder %s434, %s436
      %p440 = scmp.eq.s32.totalorder %s45, 0
      %p441 = por %p439, %p440
      %p442 = scmp.ne.s32.totalorder %s434, %s436
      %p443 = scmp.eq.s32.totalorder %s50, 4
      %p444 = por %p442, %p443
      %p445 = scmp.ne.s32.totalorder %s436, %s437
      %p446 = scmp.eq.s32.totalorder %s50, 0
      %p447 = por %p445, %p446
      %p448 = scmp.ne.s32.totalorder %s436, %s437
      %p449 = scmp.eq.s32.totalorder %s51, 4
      %p450 = por %p448, %p449
      %p452 = scmp.ne.s32.totalorder %s437, %s451
      %p453 = scmp.eq.s32.totalorder %s51, 0
      %p454 = por %p452, %p453
      %s456 = sadd.s32 %s455, 1
      %p459 = scmp.eq.s32.totalorder %s45, 4
      %p460 = scmp.ne.s32.totalorder %s455, %s457
      %p461 = scmp.eq.s32.totalorder %s45, 0
      %p462 = por %p460, %p461
      %p463 = scmp.ne.s32.totalorder %s455, %s457
      %p464 = scmp.eq.s32.totalorder %s50, 4
      %p465 = por %p463, %p464
      %p466 = scmp.ne.s32.totalorder %s457, %s458
      %p467 = scmp.eq.s32.totalorder %s50, 0
      %p468 = por %p466, %p467
      %p469 = scmp.ne.s32.totalorder %s457, %s458
      %p470 = scmp.eq.s32.totalorder %s51, 4
      %p471 = por %p469, %p470
      %p473 = scmp.ne.s32.totalorder %s458, %s472
      %p474 = scmp.eq.s32.totalorder %s51, 0
      %p475 = por %p473, %p474
      %s477 = sadd.s32 %s476, 1
      %p480 = scmp.eq.s32.totalorder %s45, 4
      %p481 = scmp.ne.s32.totalorder %s476, %s478
      %p482 = scmp.eq.s32.totalorder %s45, 0
      %p483 = por %p481, %p482
      %p484 = scmp.ne.s32.totalorder %s476, %s478
      %p485 = scmp.eq.s32.totalorder %s50, 4
      %p486 = por %p484, %p485
      %p487 = scmp.ne.s32.totalorder %s478, %s479
      %p488 = scmp.eq.s32.totalorder %s50, 0
      %p489 = por %p487, %p488
      %p490 = scmp.ne.s32.totalorder %s478, %s479
      %p491 = scmp.eq.s32.totalorder %s51, 4
      %p492 = por %p490, %p491
      %p494 = scmp.ne.s32.totalorder %s479, %s493
      %p495 = scmp.eq.s32.totalorder %s51, 0
      %p496 = por %p494, %p495
      %p497 = scmp.le.s32.totalorder 1, %s45
      %p498 = scmp.lt.s32.totalorder %s45, 6
      %p499 = pnand %p497, %p498
      %p500 = pneg %p499
      // Predicated region
      $region9: #{attention_model_forward.1} parent=5 // pred_check
        _
      $region10: #{attention_model_forward.1} parent=5 // pred_check_branch
        %502 = sbr.rel (%p499) target = $region12
      $region11: #{attention_model_forward.1} parent=5 // pred_region
        %s503 = ssub.s32 %s45, 1
        // Predicated region
        $region13: #{attention_model_forward.1} parent=11 // pred_check
          %p504 = pneg %p300
        $region14: #{attention_model_forward.1} parent=11 // pred_check_branch
          %506 = sbr.rel (%p504) target = $region16
        $region15: #{attention_model_forward.1} parent=11 // pred_region
          %s508 = ssub.s32 1024, 1024
          %509 = vsyncadd [#allocation18], %s508
          %s510 = sshll.u32 [#allocation19], 4
          %s511 = int_to_ptr.vmem [resolvable:$true] %s510
          %516 = dma.hbm_to_vmem [thread:$0]  %s9, 1024, %s511, [#allocation18], 64, 64, 4
        $region16: #{attention_model_forward.1} parent=11 // pred_fallthru
          _
        // Predicated region
        $region17: #{attention_model_forward.1} parent=11 // pred_check
          %p517 = pneg %p321
        $region18: #{attention_model_forward.1} parent=11 // pred_check_branch
          %519 = sbr.rel (%p517) target = $region20
        $region19: #{attention_model_forward.1} parent=11 // pred_region
          %s521 = ssub.s32 16, 16
          %522 = vsyncadd [#allocation21], %s521
          %s524 = sshll.u32 [#allocation20], 4
          %s525 = int_to_ptr.vmem [resolvable:$true] %s524
          %527 = dma.hbm_to_vmem [thread:$0]  %s10, 16, %s525, [#allocation21]
        $region20: #{attention_model_forward.1} parent=11 // pred_fallthru
          _
        // Predicated region
        $region21: #{attention_model_forward.1} parent=11 // pred_check
          %p528 = pneg %p342
        $region22: #{attention_model_forward.1} parent=11 // pred_check_branch
          %530 = sbr.rel (%p528) target = $region24
        $region23: #{attention_model_forward.1} parent=11 // pred_region
          %s532 = ssub.s32 20480, 20480
          %533 = vsyncadd [#allocation21], %s532
          %s534 = sshll.u32 [#allocation22], 4
          %s535 = int_to_ptr.vmem [resolvable:$true] %s534
          %540 = dma.hbm_to_vmem [thread:$0]  %s11, 20480, %s535, [#allocation21], 256, 256, 16
        $region24: #{attention_model_forward.1} parent=11 // pred_fallthru
          _
        // Predicated region
        $region25: #{attention_model_forward.1} parent=11 // pred_check
          %p541 = pneg %p363
        $region26: #{attention_model_forward.1} parent=11 // pred_check_branch
          %543 = sbr.rel (%p541) target = $region28
        $region27: #{attention_model_forward.1} parent=11 // pred_region
          %s545 = ssub.s32 64, 64
          %546 = vsyncadd [#allocation24], %s545
          %s548 = sshll.u32 [#allocation23], 4
          %s549 = int_to_ptr.vmem [resolvable:$true] %s548
          %551 = dma.hbm_to_vmem [thread:$0]  %s12, 64, %s549, [#allocation24]
        $region28: #{attention_model_forward.1} parent=11 // pred_fallthru
          _
        // Predicated region
        $region29: #{attention_model_forward.1} parent=11 // pred_check
          %p552 = pneg %p384
        $region30: #{attention_model_forward.1} parent=11 // pred_check_branch
          %554 = sbr.rel (%p552) target = $region32
        $region31: #{attention_model_forward.1} parent=11 // pred_region
          %s556 = ssub.s32 8192, 8192
          %557 = vsyncadd [#allocation24], %s556
          %s558 = sshll.u32 [#allocation25], 4
          %s559 = int_to_ptr.vmem [resolvable:$true] %s558
          %564 = dma.hbm_to_vmem [thread:$0]  %s13, 8192, %s559, [#allocation24], 128, 128, 8
        $region32: #{attention_model_forward.1} parent=11 // pred_fallthru
          _
        // Predicated region
        $region33: #{attention_model_forward.1} parent=11 // pred_check
          %p565 = pneg %p405
        $region34: #{attention_model_forward.1} parent=11 // pred_check_branch
          %567 = sbr.rel (%p565) target = $region36
        $region35: #{attention_model_forward.1} parent=11 // pred_region
          %s569 = ssub.s32 32, 32
          %570 = vsyncadd [#allocation27], %s569
          %s572 = sshll.u32 [#allocation26], 4
          %s573 = int_to_ptr.vmem [resolvable:$true] %s572
          %575 = dma.hbm_to_vmem [thread:$0]  %s14, 32, %s573, [#allocation27]
        $region36: #{attention_model_forward.1} parent=11 // pred_fallthru
          _
        // Predicated region
        $region37: #{attention_model_forward.1} parent=11 // pred_check
          %p576 = pneg %p426
        $region38: #{attention_model_forward.1} parent=11 // pred_check_branch
          %578 = sbr.rel (%p576) target = $region40
        $region39: #{attention_model_forward.1} parent=11 // pred_region
          %s580 = ssub.s32 2048, 2048
          %581 = vsyncadd [#allocation27], %s580
          %s582 = sshll.u32 [#allocation28], 4
          %s583 = int_to_ptr.vmem [resolvable:$true] %s582
          %588 = dma.hbm_to_vmem [thread:$0]  %s15, 2048, %s583, [#allocation27], 64, 64, 4
        $region40: #{attention_model_forward.1} parent=11 // pred_fallthru
          _
        // Predicated region
        $region41: #{attention_model_forward.1} parent=11 // pred_check
          %p589 = pneg %p447
        $region42: #{attention_model_forward.1} parent=11 // pred_check_branch
          %591 = sbr.rel (%p589) target = $region44
        $region43: #{attention_model_forward.1} parent=11 // pred_region
          %s593 = ssub.s32 16, 16
          %594 = vsyncadd [#allocation30], %s593
          %s596 = sshll.u32 [#allocation29], 4
          %s597 = int_to_ptr.vmem [resolvable:$true] %s596
          %599 = dma.hbm_to_vmem [thread:$0]  %s16, 16, %s597, [#allocation30]
        $region44: #{attention_model_forward.1} parent=11 // pred_fallthru
          _
      $region12: #{attention_model_forward.1} parent=5 // pred_fallthru
        _
      %p600 = scmp.lt.s32.totalorder %s45, 5
      // Predicated region
      $region45: #{attention_model_forward.1} parent=5 // pred_check
        %p601 = pneg %p600
      $region46: #{attention_model_forward.1} parent=5 // pred_check_branch
        %603 = sbr.rel (%p601) target = $region48
      $region47: #{attention_model_forward.1} parent=5 // pred_region
        // Predicated region
        $region49: #{attention_model_forward.1} parent=47 // pred_check
          %p604 = pneg %p65
        $region50: #{attention_model_forward.1} parent=47 // pred_check_branch
          %606 = sbr.rel (%p604) target = $region52
        $region51: #{attention_model_forward.1} parent=47 // pred_region
          %p607 = scmp.lt.s32.totalorder %s45, 4
          %s608 = scalar_select %p607, %s45, 4
          %s609 = smul.addr %s608, 8
          %s610 = scalar_lea.vmem %s0, %s609
        $region52: #{attention_model_forward.1} parent=47 // pred_fallthru
          _
        // Predicated region
        $region53: #{attention_model_forward.1} parent=47 // pred_check
          %p611 = pneg %p91
        $region54: #{attention_model_forward.1} parent=47 // pred_check_branch
          %613 = sbr.rel (%p611) target = $region56
        $region55: #{attention_model_forward.1} parent=47 // pred_region
          %s614 = sand.u32 %s81, 1
          %s615 = scalar_lea.sflag [#allocation6], %s614
          %s616 = sand.u32 %s81, 1
          %s617 = smul.addr %s616, 256
          %s618 = scalar_lea.vmem [#allocation5], %s617
          %s620 = ssub.s32 4096, 4096
          %621 = vsyncadd %s615, %s620
          %s622 = smul.addr %s45, 32
          %s623 = smul.addr %s622, 128
          %s624 = scalar_lea.hbm %s1, %s623
          %s625 = sshll.u32 %s618, 4
          %s626 = int_to_ptr.vmem [resolvable:$true] %s625
          %631 = dma.hbm_to_vmem [thread:$0]  %s624, 4096, %s626, %s615, 1024, 1024, 64
        $region56: #{attention_model_forward.1} parent=47 // pred_fallthru
          _
        // Predicated region
        $region57: #{attention_model_forward.1} parent=47 // pred_check
          %p632 = pneg %p117
        $region58: #{attention_model_forward.1} parent=47 // pred_check_branch
          %634 = sbr.rel (%p632) target = $region60
        $region59: #{attention_model_forward.1} parent=47 // pred_region
          %s635 = sand.u32 %s45, 1
          %s636 = scalar_lea.sflag [#allocation9], %s635
          %s637 = sand.u32 %s107, 1
          %s638 = smul.addr %s637, 16
          %s639 = scalar_lea.vmem [#allocation8], %s638
          %s641 = ssub.s32 256, 256
          %642 = vsyncadd %s636, %s641
          %s643 = smul.addr %s45, 8
          %s644 = smul.addr %s643, 32
          %s645 = scalar_lea.hbm %s2, %s644
          %s647 = sshll.u32 %s639, 4
          %s648 = int_to_ptr.vmem [resolvable:$true] %s647
          %650 = dma.hbm_to_vmem [thread:$0]  %s645, 256, %s648, %s636
        $region60: #{attention_model_forward.1} parent=47 // pred_fallthru
          _
        // Predicated region
        $region61: #{attention_model_forward.1} parent=47 // pred_check
          %p651 = pneg %p143
        $region62: #{attention_model_forward.1} parent=47 // pred_check_branch
          %653 = sbr.rel (%p651) target = $region64
        $region63: #{attention_model_forward.1} parent=47 // pred_region
          %s654 = sand.u32 %s45, 1
          %s655 = scalar_lea.sflag [#allocation9], %s654
          %s656 = sand.u32 %s133, 1
          %s657 = smul.addr %s656, 6144
          %s658 = scalar_lea.vmem [#allocation10], %s657
          %s660 = ssub.s32 98304, 98304
          %661 = vsyncadd %s655, %s660
          %s662 = smul.addr %s45, 768
          %s663 = smul.addr %s662, 128
          %s664 = scalar_lea.hbm %s3, %s663
          %s665 = sshll.u32 %s658, 4
          %s666 = int_to_ptr.vmem [resolvable:$true] %s665
          %671 = dma.hbm_to_vmem [thread:$0]  %s664, 98304, %s666, %s655, 1024, 1024, 64
        $region64: #{attention_model_forward.1} parent=47 // pred_fallthru
          _
        // Predicated region
        $region65: #{attention_model_forward.1} parent=47 // pred_check
          %p672 = pneg %p169
        $region66: #{attention_model_forward.1} parent=47 // pred_check_branch
          %674 = sbr.rel (%p672) target = $region68
        $region67: #{attention_model_forward.1} parent=47 // pred_region
          %s675 = sand.u32 %s45, 1
          %s676 = scalar_lea.sflag [#allocation12], %s675
          %s677 = sand.u32 %s159, 1
          %s678 = smul.addr %s677, 48
          %s679 = scalar_lea.vmem [#allocation11], %s678
          %s681 = ssub.s32 768, 768
          %682 = vsyncadd %s676, %s681
          %s683 = smul.addr %s45, 24
          %s684 = smul.addr %s683, 32
          %s685 = scalar_lea.hbm %s4, %s684
          %s686 = sshll.u32 %s679, 4
          %s687 = int_to_ptr.vmem [resolvable:$true] %s686
          %692 = dma.hbm_to_vmem [thread:$0]  %s685, 768, %s687, %s676, 256, 256, 16
        $region68: #{attention_model_forward.1} parent=47 // pred_fallthru
          _
        // Predicated region
        $region69: #{attention_model_forward.1} parent=47 // pred_check
          %p693 = pneg %p195
        $region70: #{attention_model_forward.1} parent=47 // pred_check_branch
          %695 = sbr.rel (%p693) target = $region72
        $region71: #{attention_model_forward.1} parent=47 // pred_region
          %s696 = sand.u32 %s45, 1
          %s697 = scalar_lea.sflag [#allocation12], %s696
          %s698 = sand.u32 %s185, 1
          %s699 = smul.addr %s698, 256
          %s700 = scalar_lea.vmem [#allocation13], %s699
          %s702 = ssub.s32 4096, 4096
          %703 = vsyncadd %s697, %s702
          %s704 = smul.addr %s45, 32
          %s705 = smul.addr %s704, 128
          %s706 = scalar_lea.hbm %s5, %s705
          %s707 = sshll.u32 %s700, 4
          %s708 = int_to_ptr.vmem [resolvable:$true] %s707
          %713 = dma.hbm_to_vmem [thread:$0]  %s706, 4096, %s708, %s697, 128, 128, 8
        $region72: #{attention_model_forward.1} parent=47 // pred_fallthru
          _
        // Predicated region
        $region73: #{attention_model_forward.1} parent=47 // pred_check
          %p714 = pneg %p221
        $region74: #{attention_model_forward.1} parent=47 // pred_check_branch
          %716 = sbr.rel (%p714) target = $region76
        $region75: #{attention_model_forward.1} parent=47 // pred_region
          %s717 = sand.u32 %s45, 1
          %s718 = scalar_lea.sflag [#allocation15], %s717
          %s719 = sand.u32 %s211, 1
          %s720 = smul.addr %s719, 2
          %s721 = scalar_lea.vmem [#allocation14], %s720
          %s723 = ssub.s32 32, 32
          %724 = vsyncadd %s718, %s723
          %s725 = smul.addr %s45, 32
          %s726 = scalar_lea.hbm %s6, %s725
          %s728 = sshll.u32 %s721, 4
          %s729 = int_to_ptr.vmem [resolvable:$true] %s728
          %731 = dma.hbm_to_vmem [thread:$0]  %s726, 32, %s729, %s718
        $region76: #{attention_model_forward.1} parent=47 // pred_fallthru
          _
        // Predicated region
        $region77: #{attention_model_forward.1} parent=47 // pred_check
          %p732 = pneg %p247
        $region78: #{attention_model_forward.1} parent=47 // pred_check_branch
          %734 = sbr.rel (%p732) target = $region80
        $region79: #{attention_model_forward.1} parent=47 // pred_region
          %s735 = sand.u32 %s45, 1
          %s736 = scalar_lea.sflag [#allocation15], %s735
          %s737 = sand.u32 %s237, 1
          %s738 = smul.addr %s737, 32
          %s739 = scalar_lea.vmem [#allocation16], %s738
          %s741 = ssub.s32 512, 512
          %742 = vsyncadd %s736, %s741
          %s743 = smul.addr %s45, 4
          %s744 = smul.addr %s743, 128
          %s745 = scalar_lea.hbm %s7, %s744
          %s746 = sshll.u32 %s739, 4
          %s747 = int_to_ptr.vmem [resolvable:$true] %s746
          %752 = dma.hbm_to_vmem [thread:$0]  %s745, 512, %s747, %s736, 128, 128, 8
        $region80: #{attention_model_forward.1} parent=47 // pred_fallthru
          _
        // Predicated region
        $region81: #{attention_model_forward.1} parent=47 // pred_check
          %p753 = pneg %p273
        $region82: #{attention_model_forward.1} parent=47 // pred_check_branch
          %755 = sbr.rel (%p753) target = $region84
        $region83: #{attention_model_forward.1} parent=47 // pred_region
          %s756 = sand.u32 %s45, 1
          %s757 = scalar_lea.sflag [#allocation18], %s756
          %s758 = sand.u32 %s263, 1
          %s759 = smul.addr %s758, 2
          %s760 = scalar_lea.vmem [#allocation17], %s759
          %s762 = ssub.s32 32, 32
          %763 = vsyncadd %s757, %s762
          %s764 = smul.addr %s45, 32
          %s765 = scalar_lea.hbm %s8, %s764
          %s767 = sshll.u32 %s760, 4
          %s768 = int_to_ptr.vmem [resolvable:$true] %s767
          %770 = dma.hbm_to_vmem [thread:$0]  %s765, 32, %s768, %s757
        $region84: #{attention_model_forward.1} parent=47 // pred_fallthru
          _
      $region48: #{attention_model_forward.1} parent=5 // pred_fallthru
        _
      %p771 = scmp.le.s32.totalorder 1, %s45
      %p772 = scmp.lt.s32.totalorder %s45, 6
      %p773 = pnand %p771, %p772
      %p774 = pneg %p773
      // Predicated region
      $region85: #{attention_model_forward.1} parent=5 // pred_check
        _
      $region86: #{attention_model_forward.1} parent=5 // pred_check_branch
        %776 = sbr.rel (%p773) target = $region88
      $region87: #{attention_model_forward.1} parent=5 // pred_region
        %s777 = ssub.s32 %s45, 1
        %s778 = sand.u32 %s84, 1
        %s779 = scalar_lea.sflag [#allocation6], %s778
        %s780 = sand.u32 %s84, 1
        %s781 = smul.addr %s780, 256
        %s782 = scalar_lea.vmem [#allocation5], %s781
        // Predicated region
        $region89: #{attention_model_forward.1} parent=87 // pred_check
          %p783 = pneg %p97
        $region90: #{attention_model_forward.1} parent=87 // pred_check_branch
          %785 = sbr.rel (%p783) target = $region92
        $region91: #{attention_model_forward.1} parent=87 // pred_region
          %786 = dma.done %s779, 4096
        $region92: #{attention_model_forward.1} parent=87 // pred_fallthru
          _
        %s787 = sand.u32 %s50, 1
        %s788 = scalar_lea.sflag [#allocation9], %s787
        %s789 = sand.u32 %s110, 1
        %s790 = smul.addr %s789, 16
        %s791 = scalar_lea.vmem [#allocation8], %s790
        // Predicated region
        $region93: #{attention_model_forward.1} parent=87 // pred_check
          %p792 = pneg %p123
        $region94: #{attention_model_forward.1} parent=87 // pred_check_branch
          %794 = sbr.rel (%p792) target = $region96
        $region95: #{attention_model_forward.1} parent=87 // pred_region
          %795 = dma.done %s788, 256
        $region96: #{attention_model_forward.1} parent=87 // pred_fallthru
          _
        %s796 = sand.u32 %s50, 1
        %s797 = scalar_lea.sflag [#allocation9], %s796
        %s798 = sand.u32 %s136, 1
        %s799 = smul.addr %s798, 6144
        %s800 = scalar_lea.vmem [#allocation10], %s799
        // Predicated region
        $region97: #{attention_model_forward.1} parent=87 // pred_check
          %p801 = pneg %p149
        $region98: #{attention_model_forward.1} parent=87 // pred_check_branch
          %803 = sbr.rel (%p801) target = $region100
        $region99: #{attention_model_forward.1} parent=87 // pred_region
          %804 = dma.done %s797, 98304
        $region100: #{attention_model_forward.1} parent=87 // pred_fallthru
          _
        %s805 = sand.u32 %s50, 1
        %s806 = scalar_lea.sflag [#allocation12], %s805
        %s807 = sand.u32 %s162, 1
        %s808 = smul.addr %s807, 48
        %s809 = scalar_lea.vmem [#allocation11], %s808
        // Predicated region
        $region101: #{attention_model_forward.1} parent=87 // pred_check
          %p810 = pneg %p175
        $region102: #{attention_model_forward.1} parent=87 // pred_check_branch
          %812 = sbr.rel (%p810) target = $region104
        $region103: #{attention_model_forward.1} parent=87 // pred_region
          %813 = dma.done %s806, 768
        $region104: #{attention_model_forward.1} parent=87 // pred_fallthru
          _
        %s814 = sand.u32 %s50, 1
        %s815 = scalar_lea.sflag [#allocation12], %s814
        %s816 = sand.u32 %s188, 1
        %s817 = smul.addr %s816, 256
        %s818 = scalar_lea.vmem [#allocation13], %s817
        // Predicated region
        $region105: #{attention_model_forward.1} parent=87 // pred_check
          %p819 = pneg %p201
        $region106: #{attention_model_forward.1} parent=87 // pred_check_branch
          %821 = sbr.rel (%p819) target = $region108
        $region107: #{attention_model_forward.1} parent=87 // pred_region
          %822 = dma.done %s815, 4096
        $region108: #{attention_model_forward.1} parent=87 // pred_fallthru
          _
        %s823 = sand.u32 %s50, 1
        %s824 = scalar_lea.sflag [#allocation15], %s823
        %s825 = sand.u32 %s214, 1
        %s826 = smul.addr %s825, 2
        %s827 = scalar_lea.vmem [#allocation14], %s826
        // Predicated region
        $region109: #{attention_model_forward.1} parent=87 // pred_check
          %p828 = pneg %p227
        $region110: #{attention_model_forward.1} parent=87 // pred_check_branch
          %830 = sbr.rel (%p828) target = $region112
        $region111: #{attention_model_forward.1} parent=87 // pred_region
          %831 = dma.done %s824, 32
        $region112: #{attention_model_forward.1} parent=87 // pred_fallthru
          _
        %s832 = sand.u32 %s50, 1
        %s833 = scalar_lea.sflag [#allocation15], %s832
        %s834 = sand.u32 %s240, 1
        %s835 = smul.addr %s834, 32
        %s836 = scalar_lea.vmem [#allocation16], %s835
        // Predicated region
        $region113: #{attention_model_forward.1} parent=87 // pred_check
          %p837 = pneg %p253
        $region114: #{attention_model_forward.1} parent=87 // pred_check_branch
          %839 = sbr.rel (%p837) target = $region116
        $region115: #{attention_model_forward.1} parent=87 // pred_region
          %840 = dma.done %s833, 512
        $region116: #{attention_model_forward.1} parent=87 // pred_fallthru
          _
        %s841 = sand.u32 %s50, 1
        %s842 = scalar_lea.sflag [#allocation18], %s841
        %s843 = sand.u32 %s266, 1
        %s844 = smul.addr %s843, 2
        %s845 = scalar_lea.vmem [#allocation17], %s844
        // Predicated region
        $region117: #{attention_model_forward.1} parent=87 // pred_check
          %p846 = pneg %p279
        $region118: #{attention_model_forward.1} parent=87 // pred_check_branch
          %848 = sbr.rel (%p846) target = $region120
        $region119: #{attention_model_forward.1} parent=87 // pred_region
          %849 = dma.done %s842, 32
        $region120: #{attention_model_forward.1} parent=87 // pred_fallthru
          _
        // Predicated region
        $region121: #{attention_model_forward.1} parent=87 // pred_check
          %p850 = pneg %p300
        $region122: #{attention_model_forward.1} parent=87 // pred_check_branch
          %852 = sbr.rel (%p850) target = $region124
        $region123: #{attention_model_forward.1} parent=87 // pred_region
          %853 = dma.done [#allocation18], 1024
        $region124: #{attention_model_forward.1} parent=87 // pred_fallthru
          _
        // Predicated region
        $region125: #{attention_model_forward.1} parent=87 // pred_check
          %p854 = pneg %p321
        $region126: #{attention_model_forward.1} parent=87 // pred_check_branch
          %856 = sbr.rel (%p854) target = $region128
        $region127: #{attention_model_forward.1} parent=87 // pred_region
          %857 = dma.done [#allocation21], 16
        $region128: #{attention_model_forward.1} parent=87 // pred_fallthru
          _
        // Predicated region
        $region129: #{attention_model_forward.1} parent=87 // pred_check
          %p858 = pneg %p342
        $region130: #{attention_model_forward.1} parent=87 // pred_check_branch
          %860 = sbr.rel (%p858) target = $region132
        $region131: #{attention_model_forward.1} parent=87 // pred_region
          %861 = dma.done [#allocation21], 20480
        $region132: #{attention_model_forward.1} parent=87 // pred_fallthru
          _
        // Predicated region
        $region133: #{attention_model_forward.1} parent=87 // pred_check
          %p862 = pneg %p363
        $region134: #{attention_model_forward.1} parent=87 // pred_check_branch
          %864 = sbr.rel (%p862) target = $region136
        $region135: #{attention_model_forward.1} parent=87 // pred_region
          %865 = dma.done [#allocation24], 64
        $region136: #{attention_model_forward.1} parent=87 // pred_fallthru
          _
        // Predicated region
        $region137: #{attention_model_forward.1} parent=87 // pred_check
          %p866 = pneg %p384
        $region138: #{attention_model_forward.1} parent=87 // pred_check_branch
          %868 = sbr.rel (%p866) target = $region140
        $region139: #{attention_model_forward.1} parent=87 // pred_region
          %869 = dma.done [#allocation24], 8192
        $region140: #{attention_model_forward.1} parent=87 // pred_fallthru
          _
        // Predicated region
        $region141: #{attention_model_forward.1} parent=87 // pred_check
          %p870 = pneg %p405
        $region142: #{attention_model_forward.1} parent=87 // pred_check_branch
          %872 = sbr.rel (%p870) target = $region144
        $region143: #{attention_model_forward.1} parent=87 // pred_region
          %873 = dma.done [#allocation27], 32
        $region144: #{attention_model_forward.1} parent=87 // pred_fallthru
          _
        // Predicated region
        $region145: #{attention_model_forward.1} parent=87 // pred_check
          %p874 = pneg %p426
        $region146: #{attention_model_forward.1} parent=87 // pred_check_branch
          %876 = sbr.rel (%p874) target = $region148
        $region147: #{attention_model_forward.1} parent=87 // pred_region
          %877 = dma.done [#allocation27], 2048
        $region148: #{attention_model_forward.1} parent=87 // pred_fallthru
          _
        // Predicated region
        $region149: #{attention_model_forward.1} parent=87 // pred_check
          %p878 = pneg %p447
        $region150: #{attention_model_forward.1} parent=87 // pred_check_branch
          %880 = sbr.rel (%p878) target = $region152
        $region151: #{attention_model_forward.1} parent=87 // pred_region
          %881 = dma.done [#allocation30], 16
        $region152: #{attention_model_forward.1} parent=87 // pred_fallthru
          _
        %p882 = scmp.lt.s32.totalorder %s50, 4
        %s883 = scalar_select %p882, %s50, 4
        %s884 = smul.addr %s883, 8
        %s885 = scalar_lea.vmem %s0, %s884
        %p886 = pneg %p71
        %p887 = pneg %p68
        %s888 = sand.u32 %s84, 1
        %s889 = scalar_lea.sflag [#allocation6], %s888
        %s890 = sand.u32 %s84, 1
        %s891 = smul.addr %s890, 256
        %s892 = scalar_lea.vmem [#allocation5], %s891
        %p893 = pneg %p97
        %p894 = pneg %p94
        %s895 = sand.u32 %s50, 1
        %s896 = scalar_lea.sflag [#allocation9], %s895
        %s897 = sand.u32 %s110, 1
        %s898 = smul.addr %s897, 16
        %s899 = scalar_lea.vmem [#allocation8], %s898
        %p900 = pneg %p123
        %p901 = pneg %p120
        %s902 = sand.u32 %s50, 1
        %s903 = scalar_lea.sflag [#allocation9], %s902
        %s904 = sand.u32 %s136, 1
        %s905 = smul.addr %s904, 6144
        %s906 = scalar_lea.vmem [#allocation10], %s905
        %p907 = pneg %p149
        %p908 = pneg %p146
        %s909 = sand.u32 %s50, 1
        %s910 = scalar_lea.sflag [#allocation12], %s909
        %s911 = sand.u32 %s162, 1
        %s912 = smul.addr %s911, 48
        %s913 = scalar_lea.vmem [#allocation11], %s912
        %p914 = pneg %p175
        %p915 = pneg %p172
        %s916 = sand.u32 %s50, 1
        %s917 = scalar_lea.sflag [#allocation12], %s916
        %s918 = sand.u32 %s188, 1
        %s919 = smul.addr %s918, 256
        %s920 = scalar_lea.vmem [#allocation13], %s919
        %p921 = pneg %p201
        %p922 = pneg %p198
        %s923 = sand.u32 %s50, 1
        %s924 = scalar_lea.sflag [#allocation15], %s923
        %s925 = sand.u32 %s214, 1
        %s926 = smul.addr %s925, 2
        %s927 = scalar_lea.vmem [#allocation14], %s926
        %p928 = pneg %p227
        %p929 = pneg %p224
        %s930 = sand.u32 %s50, 1
        %s931 = scalar_lea.sflag [#allocation15], %s930
        %s932 = sand.u32 %s240, 1
        %s933 = smul.addr %s932, 32
        %s934 = scalar_lea.vmem [#allocation16], %s933
        %p935 = pneg %p253
        %p936 = pneg %p250
        %s937 = sand.u32 %s50, 1
        %s938 = scalar_lea.sflag [#allocation18], %s937
        %s939 = sand.u32 %s266, 1
        %s940 = smul.addr %s939, 2
        %s941 = scalar_lea.vmem [#allocation17], %s940
        %p942 = pneg %p279
        %p943 = pneg %p276
        %p944 = pneg %p300
        %p945 = pneg %p297
        %p946 = pneg %p321
        %p947 = pneg %p318
        %p948 = pneg %p342
        %p949 = pneg %p339
        %p950 = pneg %p363
        %p951 = pneg %p360
        %p952 = pneg %p384
        %p953 = pneg %p381
        %p954 = pneg %p405
        %p955 = pneg %p402
        %p956 = pneg %p426
        %p957 = pneg %p423
        %p958 = pneg %p447
        %p959 = pneg %p444
        %p960 = pneg %p468
        %p961 = pneg %p465
        %p962 = pneg %p489
        %p963 = pneg %p486
        %p964 = scmp.lt.s32.totalorder %s50, 4
        %s965 = scalar_select %p964, %s50, 4
        %s966 = smul.addr %s965, 8
        %s967 = scalar_lea.vmem %s0, %s966
        %p969 = scmp.eq.s32.totalorder %s50, 0
        // Predicated region
        $region153: #{attention_model_forward.1} parent=87 // pred_check
          %p970 = pneg %p969
        $region154: #{attention_model_forward.1} parent=87 // pred_check_branch
          %972 = sbr.rel (%p970) target = $region156
        $region155: #{attention_model_forward.1} parent=87 // pred_region
          %vm973 = vcmask 39936
          %974 = vst.msk [vmem:[#allocation4] sm:$0xff] %vm973, 0.0
        $region156: #{attention_model_forward.1} parent=87 // pred_fallthru
          _
        %v975 = vld [vmem:[%s791] sm:$0xff]
        %v976 = vld [vmem:[%s791 + $0x8] sm:$0xff]
        %v977 = vld [vmem:[%s967] sm:$0xff]
        %v978 = vpack.c.bf16 %v977, %v977
        %v979 = vld [vmem:[%s782] sm:$0xff]
        %v980 = vld [vmem:[%s782 + $0x8] sm:$0xff]
        %v981 = vld [vmem:[%s782 + $0x10] sm:$0xff]
        %v982 = vld [vmem:[%s782 + $0x18] sm:$0xff]
        %v983 = vld [vmem:[%s782 + $0x20] sm:$0xff]
        %v984 = vld [vmem:[%s782 + $0x28] sm:$0xff]
        %v985 = vld [vmem:[%s782 + $0x30] sm:$0xff]
        %v986 = vld [vmem:[%s782 + $0x38] sm:$0xff]
        %v987 = vld [vmem:[%s782 + $0x40] sm:$0xff]
        %v988 = vld [vmem:[%s782 + $0x48] sm:$0xff]
        %v989 = vld [vmem:[%s782 + $0x50] sm:$0xff]
        %v990 = vld [vmem:[%s782 + $0x58] sm:$0xff]
        %v991 = vld [vmem:[%s782 + $0x60] sm:$0xff]
        %v992 = vld [vmem:[%s782 + $0x68] sm:$0xff]
        %v993 = vld [vmem:[%s782 + $0x70] sm:$0xff]
        %v994 = vld [vmem:[%s782 + $0x78] sm:$0xff]
        %v995 = vld [vmem:[%s782 + $0x80] sm:$0xff]
        %v996 = vld [vmem:[%s782 + $0x88] sm:$0xff]
        %v997 = vld [vmem:[%s782 + $0x90] sm:$0xff]
        %v998 = vld [vmem:[%s782 + $0x98] sm:$0xff]
        %v999 = vld [vmem:[%s782 + $0xa0] sm:$0xff]
        %v1000 = vld [vmem:[%s782 + $0xa8] sm:$0xff]
        %v1001 = vld [vmem:[%s782 + $0xb0] sm:$0xff]
        %v1002 = vld [vmem:[%s782 + $0xb8] sm:$0xff]
        %v1003 = vld [vmem:[%s782 + $0xc0] sm:$0xff]
        %v1004 = vld [vmem:[%s782 + $0xc8] sm:$0xff]
        %v1005 = vld [vmem:[%s782 + $0xd0] sm:$0xff]
        %v1006 = vld [vmem:[%s782 + $0xd8] sm:$0xff]
        %v1007 = vld [vmem:[%s782 + $0xe0] sm:$0xff]
        %v1008 = vld [vmem:[%s782 + $0xe8] sm:$0xff]
        %v1009 = vld [vmem:[%s782 + $0xf0] sm:$0xff]
        %v1010 = vld [vmem:[%s782 + $0xf8] sm:$0xff]
        %v1011 = vunpack.c.l.s8.bf16 %v979
        %v1012 = vunpack.c.l.s8.bf16 %v980
        %v1013 = vunpack.c.l.s8.bf16 %v981
        %v1014 = vunpack.c.l.s8.bf16 %v982
        %v1015 = vunpack.c.l.s8.bf16 %v983
        %v1016 = vunpack.c.l.s8.bf16 %v984
        %v1017 = vunpack.c.l.s8.bf16 %v985
        %v1018 = vunpack.c.l.s8.bf16 %v986
        %v1019 = vunpack.c.h.s8.bf16 %v979
        %v1020 = vunpack.c.h.s8.bf16 %v980
        %v1021 = vunpack.c.h.s8.bf16 %v981
        %v1022 = vunpack.c.h.s8.bf16 %v982
        %v1023 = vunpack.c.h.s8.bf16 %v983
        %v1024 = vunpack.c.h.s8.bf16 %v984
        %v1025 = vunpack.c.h.s8.bf16 %v985
        %v1026 = vunpack.c.h.s8.bf16 %v986
        %v1027 = vunpack.c.l.s8.bf16 %v987
        %v1028 = vunpack.c.l.s8.bf16 %v988
        %v1029 = vunpack.c.l.s8.bf16 %v989
        %v1030 = vunpack.c.l.s8.bf16 %v990
        %v1031 = vunpack.c.l.s8.bf16 %v991
        %v1032 = vunpack.c.l.s8.bf16 %v992
        %v1033 = vunpack.c.l.s8.bf16 %v993
        %v1034 = vunpack.c.l.s8.bf16 %v994
        %v1035 = vunpack.c.h.s8.bf16 %v987
        %v1036 = vunpack.c.h.s8.bf16 %v988
        %v1037 = vunpack.c.h.s8.bf16 %v989
        %v1038 = vunpack.c.h.s8.bf16 %v990
        %v1039 = vunpack.c.h.s8.bf16 %v991
        %v1040 = vunpack.c.h.s8.bf16 %v992
        %v1041 = vunpack.c.h.s8.bf16 %v993
        %v1042 = vunpack.c.h.s8.bf16 %v994
        %v1043 = vunpack.c.l.s8.bf16 %v995
        %v1044 = vunpack.c.l.s8.bf16 %v996
        %v1045 = vunpack.c.l.s8.bf16 %v997
        %v1046 = vunpack.c.l.s8.bf16 %v998
        %v1047 = vunpack.c.l.s8.bf16 %v999
        %v1048 = vunpack.c.l.s8.bf16 %v1000
        %v1049 = vunpack.c.l.s8.bf16 %v1001
        %v1050 = vunpack.c.l.s8.bf16 %v1002
        %v1051 = vunpack.c.h.s8.bf16 %v995
        %v1052 = vunpack.c.h.s8.bf16 %v996
        %v1053 = vunpack.c.h.s8.bf16 %v997
        %v1054 = vunpack.c.h.s8.bf16 %v998
        %v1055 = vunpack.c.h.s8.bf16 %v999
        %v1056 = vunpack.c.h.s8.bf16 %v1000
        %v1057 = vunpack.c.h.s8.bf16 %v1001
        %v1058 = vunpack.c.h.s8.bf16 %v1002
        %v1059 = vunpack.c.l.s8.bf16 %v1003
        %v1060 = vunpack.c.l.s8.bf16 %v1004
        %v1061 = vunpack.c.l.s8.bf16 %v1005
        %v1062 = vunpack.c.l.s8.bf16 %v1006
        %v1063 = vunpack.c.l.s8.bf16 %v1007
        %v1064 = vunpack.c.l.s8.bf16 %v1008
        %v1065 = vunpack.c.l.s8.bf16 %v1009
        %v1066 = vunpack.c.l.s8.bf16 %v1010
        %v1067 = vunpack.c.h.s8.bf16 %v1003
        %v1068 = vunpack.c.h.s8.bf16 %v1004
        %v1069 = vunpack.c.h.s8.bf16 %v1005
        %v1070 = vunpack.c.h.s8.bf16 %v1006
        %v1071 = vunpack.c.h.s8.bf16 %v1007
        %v1072 = vunpack.c.h.s8.bf16 %v1008
        %v1073 = vunpack.c.h.s8.bf16 %v1009
        %v1074 = vunpack.c.h.s8.bf16 %v1010
        %1075 = vmatprep.subr.bf16.mxu0 %v1068
        %1076 = vmatpush1.bf16.msra.mxu0 %v1067
        %1077 = vmatprep.subr.bf16.mxu0 %v1060
        %1078 = vmatpush1.bf16.msra.mxu0 %v1059
        %1079 = vmatprep.subr.bf16.mxu0 %v1052
        %1080 = vmatpush1.bf16.msra.mxu0 %v1051
        %1081 = vmatprep.subr.bf16.mxu0 %v1044
        %1082 = vmatpush1.bf16.msra.mxu0 %v1043
        %1083 = vmatprep.subr.bf16.mxu0 %v1036
        %1084 = vmatpush1.bf16.msra.mxu0 %v1035
        %1085 = vmatprep.subr.bf16.mxu0 %v1028
        %1086 = vmatpush1.bf16.msra.mxu0 %v1027
        %1087 = vmatprep.subr.bf16.mxu0 %v1020
        %1088 = vmatpush1.bf16.msra.mxu0 %v1019
        %1089 = vmatprep.subr.bf16.mxu0 %v1012
        %1090 = vmatpush1.bf16.msra.mxu0 %v1011
        %1091 = vmatprep.subr.bf16.mxu0 0
        %1092 = vmatpush2.bf16.msra.mxu0 0
        %1093 = vmatprep.subr.bf16.mxu0 0
        %1094 = vmatpush2.bf16.msra.mxu0 0
        %1095 = vmatprep.subr.bf16.mxu0 0
        %1096 = vmatpush2.bf16.msra.mxu0 0
        %1097 = vmatprep.subr.bf16.mxu0 0
        %1098 = vmatpush2.bf16.msra.mxu0 0
        %1099 = vmatprep.subr.bf16.mxu0 0
        %1100 = vmatpush2.bf16.msra.mxu0 0
        %1101 = vmatprep.subr.bf16.mxu0 0
        %1102 = vmatpush2.bf16.msra.mxu0 0
        %1103 = vmatprep.subr.bf16.mxu0 0
        %1104 = vmatpush2.bf16.msra.mxu0 0
        %1105 = vmatprep.subr.bf16.mxu0 0
        %1106 = vmatpush2.bf16.msra.mxu0 0
        %1107 = vmatprep.mubr.bf16.mxu0 0
        %1108 = vmatmul.mubr.bf16.gmra.mxu0 %v978
        %v1109 = vpop.f32.mrf.mxu0
        %v1110 = vadd.f32 0.0, %v1109
        %v1111 = vpop.f32.mrf.mxu0
        %v1112 = vadd.f32 0.0, %v1111
        %v1113 = vpop.f32.mrf.mxu0
        %v1114 = vpop.f32.mrf.mxu0
        %1115 = vdwg.mxu0
        %1116 = vmatprep.subr.bf16.mxu0 %v1070
        %1117 = vmatpush1.bf16.msra.mxu0 %v1069
        %1118 = vmatprep.subr.bf16.mxu0 %v1062
        %1119 = vmatpush1.bf16.msra.mxu0 %v1061
        %1120 = vmatprep.subr.bf16.mxu0 %v1054
        %1121 = vmatpush1.bf16.msra.mxu0 %v1053
        %1122 = vmatprep.subr.bf16.mxu0 %v1046
        %1123 = vmatpush1.bf16.msra.mxu0 %v1045
        %1124 = vmatprep.subr.bf16.mxu0 %v1038
        %1125 = vmatpush1.bf16.msra.mxu0 %v1037
        %1126 = vmatprep.subr.bf16.mxu0 %v1030
        %1127 = vmatpush1.bf16.msra.mxu0 %v1029
        %1128 = vmatprep.subr.bf16.mxu0 %v1022
        %1129 = vmatpush1.bf16.msra.mxu0 %v1021
        %1130 = vmatprep.subr.bf16.mxu0 %v1014
        %1131 = vmatpush1.bf16.msra.mxu0 %v1013
        %1132 = vmatprep.subr.bf16.mxu0 0
        %1133 = vmatpush2.bf16.msra.mxu0 0
        %1134 = vmatprep.subr.bf16.mxu0 0
        %1135 = vmatpush2.bf16.msra.mxu0 0
        %1136 = vmatprep.subr.bf16.mxu0 0
        %1137 = vmatpush2.bf16.msra.mxu0 0
        %1138 = vmatprep.subr.bf16.mxu0 0
        %1139 = vmatpush2.bf16.msra.mxu0 0
        %1140 = vmatprep.subr.bf16.mxu0 0
        %1141 = vmatpush2.bf16.msra.mxu0 0
        %1142 = vmatprep.subr.bf16.mxu0 0
        %1143 = vmatpush2.bf16.msra.mxu0 0
        %1144 = vmatprep.subr.bf16.mxu0 0
        %1145 = vmatpush2.bf16.msra.mxu0 0
        %1146 = vmatprep.subr.bf16.mxu0 0
        %1147 = vmatpush2.bf16.msra.mxu0 0
        %1148 = vmatprep.mubr.bf16.mxu0 0
        %1149 = vmatmul.mubr.bf16.gmra.mxu0 %v978
        %v1150 = vpop.f32.mrf.mxu0
        %v1151 = vadd.f32 0.0, %v1150
        %v1152 = vpop.f32.mrf.mxu0
        %v1153 = vadd.f32 0.0, %v1152
        %v1154 = vpop.f32.mrf.mxu0
        %v1155 = vpop.f32.mrf.mxu0
        %1156 = vdwg.mxu0
        %1157 = vmatprep.subr.bf16.mxu0 %v1072
        %1158 = vmatpush1.bf16.msra.mxu0 %v1071
        %1159 = vmatprep.subr.bf16.mxu0 %v1064
        %1160 = vmatpush1.bf16.msra.mxu0 %v1063
        %1161 = vmatprep.subr.bf16.mxu0 %v1056
        %1162 = vmatpush1.bf16.msra.mxu0 %v1055
        %1163 = vmatprep.subr.bf16.mxu0 %v1048
        %1164 = vmatpush1.bf16.msra.mxu0 %v1047
        %1165 = vmatprep.subr.bf16.mxu0 %v1040
        %1166 = vmatpush1.bf16.msra.mxu0 %v1039
        %1167 = vmatprep.subr.bf16.mxu0 %v1032
        %1168 = vmatpush1.bf16.msra.mxu0 %v1031
        %1169 = vmatprep.subr.bf16.mxu0 %v1024
        %1170 = vmatpush1.bf16.msra.mxu0 %v1023
        %1171 = vmatprep.subr.bf16.mxu0 %v1016
        %1172 = vmatpush1.bf16.msra.mxu0 %v1015
        %1173 = vmatprep.subr.bf16.mxu0 0
        %1174 = vmatpush2.bf16.msra.mxu0 0
        %1175 = vmatprep.subr.bf16.mxu0 0
        %1176 = vmatpush2.bf16.msra.mxu0 0
        %1177 = vmatprep.subr.bf16.mxu0 0
        %1178 = vmatpush2.bf16.msra.mxu0 0
        %1179 = vmatprep.subr.bf16.mxu0 0
        %1180 = vmatpush2.bf16.msra.mxu0 0
        %1181 = vmatprep.subr.bf16.mxu0 0
        %1182 = vmatpush2.bf16.msra.mxu0 0
        %1183 = vmatprep.subr.bf16.mxu0 0
        %1184 = vmatpush2.bf16.msra.mxu0 0
        %1185 = vmatprep.subr.bf16.mxu0 0
        %1186 = vmatpush2.bf16.msra.mxu0 0
        %1187 = vmatprep.subr.bf16.mxu0 0
        %1188 = vmatpush2.bf16.msra.mxu0 0
        %1189 = vmatprep.mubr.bf16.mxu0 0
        %1190 = vmatmul.mubr.bf16.gmra.mxu0 %v978
        %v1191 = vpop.f32.mrf.mxu0
        %v1192 = vadd.f32 0.0, %v1191
        %v1193 = vpop.f32.mrf.mxu0
        %v1194 = vadd.f32 0.0, %v1193
        %v1195 = vpop.f32.mrf.mxu0
        %v1196 = vpop.f32.mrf.mxu0
        %1197 = vdwg.mxu0
        %1198 = vmatprep.subr.bf16.mxu0 %v1074
        %1199 = vmatpush1.bf16.msra.mxu0 %v1073
        %1200 = vmatprep.subr.bf16.mxu0 %v1066
        %1201 = vmatpush1.bf16.msra.mxu0 %v1065
        %1202 = vmatprep.subr.bf16.mxu0 %v1058
        %1203 = vmatpush1.bf16.msra.mxu0 %v1057
        %1204 = vmatprep.subr.bf16.mxu0 %v1050
        %1205 = vmatpush1.bf16.msra.mxu0 %v1049
        %1206 = vmatprep.subr.bf16.mxu0 %v1042
        %1207 = vmatpush1.bf16.msra.mxu0 %v1041
        %1208 = vmatprep.subr.bf16.mxu0 %v1034
        %1209 = vmatpush1.bf16.msra.mxu0 %v1033
        %1210 = vmatprep.subr.bf16.mxu0 %v1026
        %1211 = vmatpush1.bf16.msra.mxu0 %v1025
        %1212 = vmatprep.subr.bf16.mxu0 %v1018
        %1213 = vmatpush1.bf16.msra.mxu0 %v1017
        %1214 = vmatprep.subr.bf16.mxu0 0
        %1215 = vmatpush2.bf16.msra.mxu0 0
        %1216 = vmatprep.subr.bf16.mxu0 0
        %1217 = vmatpush2.bf16.msra.mxu0 0
        %1218 = vmatprep.subr.bf16.mxu0 0
        %1219 = vmatpush2.bf16.msra.mxu0 0
        %1220 = vmatprep.subr.bf16.mxu0 0
        %1221 = vmatpush2.bf16.msra.mxu0 0
        %1222 = vmatprep.subr.bf16.mxu0 0
        %1223 = vmatpush2.bf16.msra.mxu0 0
        %1224 = vmatprep.subr.bf16.mxu0 0
        %1225 = vmatpush2.bf16.msra.mxu0 0
        %1226 = vmatprep.subr.bf16.mxu0 0
        %1227 = vmatpush2.bf16.msra.mxu0 0
        %1228 = vmatprep.subr.bf16.mxu0 0
        %1229 = vmatpush2.bf16.msra.mxu0 0
        %1230 = vmatprep.mubr.bf16.mxu0 0
        %1231 = vmatmul.mubr.bf16.gmra.mxu0 %v978
        %v1232 = vpop.f32.mrf.mxu0
        %v1233 = vadd.f32 0.0, %v1232
        %v1234 = vpop.f32.mrf.mxu0
        %v1235 = vadd.f32 0.0, %v1234
        %v1236 = vpop.f32.mrf.mxu0
        %v1237 = vpop.f32.mrf.mxu0
        %1238 = vdwg.mxu0
        %v1241 = vlaneseq
        %v1242 = vshrl.u32 %v1241, 7
        %v1243 = vsub.s32 0, %v1242
        %v1244 = vrot.slane %v975, %v1243
        %v1245 = vlaneseq
        %v1246 = vshrl.u32 %v1245, 7
        %v1247 = vsub.s32 2, %v1246
        %v1248 = vrot.slane %v975, %v1247
        %v1249 = vlaneseq
        %v1250 = vshrl.u32 %v1249, 7
        %v1251 = vsub.s32 4, %v1250
        %v1252 = vrot.slane %v975, %v1251
        %v1253 = vlaneseq
        %v1254 = vshrl.u32 %v1253, 7
        %v1255 = vsub.s32 6, %v1254
        %v1256 = vrot.slane %v975, %v1255
        %v1257 = vlaneseq
        %v1258 = vshrl.u32 %v1257, 7
        %v1259 = vsub.s32 0, %v1258
        %v1260 = vrot.slane %v976, %v1259
        %v1261 = vlaneseq
        %v1262 = vshrl.u32 %v1261, 7
        %v1263 = vsub.s32 2, %v1262
        %v1264 = vrot.slane %v976, %v1263
        %v1265 = vlaneseq
        %v1266 = vshrl.u32 %v1265, 7
        %v1267 = vsub.s32 4, %v1266
        %v1268 = vrot.slane %v976, %v1267
        %v1269 = vlaneseq
        %v1270 = vshrl.u32 %v1269, 7
        %v1271 = vsub.s32 6, %v1270
        %v1272 = vrot.slane %v976, %v1271
        %v1281 = vlaneseq
        %v1282 = vshrl.u32 %v1281, 7
        %v1283 = vsub.s32 0, %v1282
        %v1284 = vrot.slane %v1244, %v1283
        %v1285 = vlaneseq
        %v1286 = vshrl.u32 %v1285, 7
        %v1287 = vsub.s32 0, %v1286
        %v1288 = vrot.slane %v1248, %v1287
        %v1289 = vlaneseq
        %v1290 = vshrl.u32 %v1289, 7
        %v1291 = vsub.s32 0, %v1290
        %v1292 = vrot.slane %v1252, %v1291
        %v1293 = vlaneseq
        %v1294 = vshrl.u32 %v1293, 7
        %v1295 = vsub.s32 0, %v1294
        %v1296 = vrot.slane %v1256, %v1295
        %v1297 = vlaneseq
        %v1298 = vshrl.u32 %v1297, 7
        %v1299 = vsub.s32 0, %v1298
        %v1300 = vrot.slane %v1260, %v1299
        %v1301 = vlaneseq
        %v1302 = vshrl.u32 %v1301, 7
        %v1303 = vsub.s32 0, %v1302
        %v1304 = vrot.slane %v1264, %v1303
        %v1305 = vlaneseq
        %v1306 = vshrl.u32 %v1305, 7
        %v1307 = vsub.s32 0, %v1306
        %v1308 = vrot.slane %v1268, %v1307
        %v1309 = vlaneseq
        %v1310 = vshrl.u32 %v1309, 7
        %v1311 = vsub.s32 0, %v1310
        %v1312 = vrot.slane %v1272, %v1311
        %v1313 = vmul.f32 %v1110, %v1284
        %v1314 = vmul.f32 %v1112, %v1288
        %v1315 = vmul.f32 %v1151, %v1292
        %v1316 = vmul.f32 %v1153, %v1296
        %v1317 = vmul.f32 %v1192, %v1300
        %v1318 = vmul.f32 %v1194, %v1304
        %v1319 = vmul.f32 %v1233, %v1308
        %v1320 = vmul.f32 %v1235, %v1312
        %v1321 = vlaneseq
        %v1322 = vshrl.u32 %v1321, 7
        %v1323 = vsub.s32 1, %v1322
        %v1324 = vrot.slane %v975, %v1323
        %v1325 = vlaneseq
        %v1326 = vshrl.u32 %v1325, 7
        %v1327 = vsub.s32 3, %v1326
        %v1328 = vrot.slane %v975, %v1327
        %v1329 = vlaneseq
        %v1330 = vshrl.u32 %v1329, 7
        %v1331 = vsub.s32 5, %v1330
        %v1332 = vrot.slane %v975, %v1331
        %v1333 = vlaneseq
        %v1334 = vshrl.u32 %v1333, 7
        %v1335 = vsub.s32 7, %v1334
        %v1336 = vrot.slane %v975, %v1335
        %v1337 = vlaneseq
        %v1338 = vshrl.u32 %v1337, 7
        %v1339 = vsub.s32 1, %v1338
        %v1340 = vrot.slane %v976, %v1339
        %v1341 = vlaneseq
        %v1342 = vshrl.u32 %v1341, 7
        %v1343 = vsub.s32 3, %v1342
        %v1344 = vrot.slane %v976, %v1343
        %v1345 = vlaneseq
        %v1346 = vshrl.u32 %v1345, 7
        %v1347 = vsub.s32 5, %v1346
        %v1348 = vrot.slane %v976, %v1347
        %v1349 = vlaneseq
        %v1350 = vshrl.u32 %v1349, 7
        %v1351 = vsub.s32 7, %v1350
        %v1352 = vrot.slane %v976, %v1351
        %v1361 = vlaneseq
        %v1362 = vshrl.u32 %v1361, 7
        %v1363 = vsub.s32 1, %v1362
        %v1364 = vrot.slane %v1324, %v1363
        %v1365 = vlaneseq
        %v1366 = vshrl.u32 %v1365, 7
        %v1367 = vsub.s32 1, %v1366
        %v1368 = vrot.slane %v1328, %v1367
        %v1369 = vlaneseq
        %v1370 = vshrl.u32 %v1369, 7
        %v1371 = vsub.s32 1, %v1370
        %v1372 = vrot.slane %v1332, %v1371
        %v1373 = vlaneseq
        %v1374 = vshrl.u32 %v1373, 7
        %v1375 = vsub.s32 1, %v1374
        %v1376 = vrot.slane %v1336, %v1375
        %v1377 = vlaneseq
        %v1378 = vshrl.u32 %v1377, 7
        %v1379 = vsub.s32 1, %v1378
        %v1380 = vrot.slane %v1340, %v1379
        %v1381 = vlaneseq
        %v1382 = vshrl.u32 %v1381, 7
        %v1383 = vsub.s32 1, %v1382
        %v1384 = vrot.slane %v1344, %v1383
        %v1385 = vlaneseq
        %v1386 = vshrl.u32 %v1385, 7
        %v1387 = vsub.s32 1, %v1386
        %v1388 = vrot.slane %v1348, %v1387
        %v1389 = vlaneseq
        %v1390 = vshrl.u32 %v1389, 7
        %v1391 = vsub.s32 1, %v1390
        %v1392 = vrot.slane %v1352, %v1391
        %v1393 = vadd.f32 %v1313, %v1364
        %v1394 = vadd.f32 %v1314, %v1368
        %v1395 = vadd.f32 %v1315, %v1372
        %v1396 = vadd.f32 %v1316, %v1376
        %v1397 = vadd.f32 %v1317, %v1380
        %v1398 = vadd.f32 %v1318, %v1384
        %v1399 = vadd.f32 %v1319, %v1388
        %v1400 = vadd.f32 %v1320, %v1392
        %v1401 = vmax.f32 %v1393, 0.0
        %v1402 = vmax.f32 %v1394, 0.0
        %v1403 = vmax.f32 %v1395, 0.0
        %v1404 = vmax.f32 %v1396, 0.0
        %v1405 = vmax.f32 %v1397, 0.0
        %v1406 = vmax.f32 %v1398, 0.0
        %v1407 = vmax.f32 %v1399, 0.0
        %v1408 = vmax.f32 %v1400, 0.0
        %1409 = vst [vmem:[#allocation2] sm:$0xff] %v1401
        %1410 = vst [vmem:[#allocation2 + $0x8] sm:$0xff] %v1402
        %1411 = vst [vmem:[#allocation2 + $0x10] sm:$0xff] %v1403
        %1412 = vst [vmem:[#allocation2 + $0x18] sm:$0xff] %v1404
        %1413 = vst [vmem:[#allocation2 + $0x20] sm:$0xff] %v1405
        %1414 = vst [vmem:[#allocation2 + $0x28] sm:$0xff] %v1406
        %1415 = vst [vmem:[#allocation2 + $0x30] sm:$0xff] %v1407
        %1416 = vst [vmem:[#allocation2 + $0x38] sm:$0xff] %v1408
        %v1417 = vld [vmem:[%s809] sm:$0xff]
        %v1418 = vld [vmem:[%s809 + $0x8] sm:$0xff]
        %v1419 = vld [vmem:[#allocation2] sm:$0xff]
        %v1420 = vld [vmem:[#allocation2 + $0x8] sm:$0xff]
        %v1421 = vld [vmem:[#allocation2 + $0x10] sm:$0xff]
        %v1422 = vld [vmem:[#allocation2 + $0x18] sm:$0xff]
        %v1423 = vld [vmem:[#allocation2 + $0x20] sm:$0xff]
        %v1424 = vld [vmem:[#allocation2 + $0x28] sm:$0xff]
        %v1425 = vld [vmem:[#allocation2 + $0x30] sm:$0xff]
        %v1426 = vld [vmem:[#allocation2 + $0x38] sm:$0xff]
        %v1427 = vpack.c.bf16 %v1419, %v1419
        %v1428 = vpack.c.bf16 %v1420, %v1420
        %v1429 = vpack.c.bf16 %v1421, %v1421
        %v1430 = vpack.c.bf16 %v1422, %v1422
        %v1431 = vpack.c.bf16 %v1423, %v1423
        %v1432 = vpack.c.bf16 %v1424, %v1424
        %v1433 = vpack.c.bf16 %v1425, %v1425
        %v1434 = vpack.c.bf16 %v1426, %v1426
        %v1435 = vld [vmem:[%s800] sm:$0xff]
        %v1436 = vld [vmem:[%s800 + $0x8] sm:$0xff]
        %v1437 = vld [vmem:[%s800 + $0x10] sm:$0xff]
        %v1438 = vld [vmem:[%s800 + $0x18] sm:$0xff]
        %v1439 = vld [vmem:[%s800 + $0x20] sm:$0xff]
        %v1440 = vld [vmem:[%s800 + $0x28] sm:$0xff]
        %v1441 = vld [vmem:[%s800 + $0x30] sm:$0xff]
        %v1442 = vld [vmem:[%s800 + $0x38] sm:$0xff]
        %v1443 = vld [vmem:[%s800 + $0x40] sm:$0xff]
        %v1444 = vld [vmem:[%s800 + $0x48] sm:$0xff]
        %v1445 = vld [vmem:[%s800 + $0x50] sm:$0xff]
        %v1446 = vld [vmem:[%s800 + $0x58] sm:$0xff]
        %v1447 = vld [vmem:[%s800 + $0x60] sm:$0xff]
        %v1448 = vld [vmem:[%s800 + $0x68] sm:$0xff]
        %v1449 = vld [vmem:[%s800 + $0x70] sm:$0xff]
        %v1450 = vld [vmem:[%s800 + $0x78] sm:$0xff]
        %v1451 = vld [vmem:[%s800 + $0x80] sm:$0xff]
        %v1452 = vld [vmem:[%s800 + $0x88] sm:$0xff]
        %v1453 = vld [vmem:[%s800 + $0x90] sm:$0xff]
        %v1454 = vld [vmem:[%s800 + $0x98] sm:$0xff]
        %v1455 = vld [vmem:[%s800 + $0xa0] sm:$0xff]
        %v1456 = vld [vmem:[%s800 + $0xa8] sm:$0xff]
        %v1457 = vld [vmem:[%s800 + $0xb0] sm:$0xff]
        %v1458 = vld [vmem:[%s800 + $0xb8] sm:$0xff]
        %v1459 = vld [vmem:[%s800 + $0xc0] sm:$0xff]
        %v1460 = vld [vmem:[%s800 + $0xc8] sm:$0xff]
        %v1461 = vld [vmem:[%s800 + $0xd0] sm:$0xff]
        %v1462 = vld [vmem:[%s800 + $0xd8] sm:$0xff]
        %v1463 = vld [vmem:[%s800 + $0xe0] sm:$0xff]
        %v1464 = vld [vmem:[%s800 + $0xe8] sm:$0xff]
        %v1465 = vld [vmem:[%s800 + $0xf0] sm:$0xff]
        %v1466 = vld [vmem:[%s800 + $0xf8] sm:$0xff]
        %v1467 = vld [vmem:[%s800 + $0x100] sm:$0xff]
        %v1468 = vld [vmem:[%s800 + $0x108] sm:$0xff]
        %v1469 = vld [vmem:[%s800 + $0x110] sm:$0xff]
        %v1470 = vld [vmem:[%s800 + $0x118] sm:$0xff]
        %v1471 = vld [vmem:[%s800 + $0x120] sm:$0xff]
        %v1472 = vld [vmem:[%s800 + $0x128] sm:$0xff]
        %v1473 = vld [vmem:[%s800 + $0x130] sm:$0xff]
        %v1474 = vld [vmem:[%s800 + $0x138] sm:$0xff]
        %v1475 = vld [vmem:[%s800 + $0x140] sm:$0xff]
        %v1476 = vld [vmem:[%s800 + $0x148] sm:$0xff]
        %v1477 = vld [vmem:[%s800 + $0x150] sm:$0xff]
        %v1478 = vld [vmem:[%s800 + $0x158] sm:$0xff]
        %v1479 = vld [vmem:[%s800 + $0x160] sm:$0xff]
        %v1480 = vld [vmem:[%s800 + $0x168] sm:$0xff]
        %v1481 = vld [vmem:[%s800 + $0x170] sm:$0xff]
        %v1482 = vld [vmem:[%s800 + $0x178] sm:$0xff]
        %v1483 = vld [vmem:[%s800 + $0x180] sm:$0xff]
        %v1484 = vld [vmem:[%s800 + $0x188] sm:$0xff]
        %v1485 = vld [vmem:[%s800 + $0x190] sm:$0xff]
        %v1486 = vld [vmem:[%s800 + $0x198] sm:$0xff]
        %v1487 = vld [vmem:[%s800 + $0x1a0] sm:$0xff]
        %v1488 = vld [vmem:[%s800 + $0x1a8] sm:$0xff]
        %v1489 = vld [vmem:[%s800 + $0x1b0] sm:$0xff]
        %v1490 = vld [vmem:[%s800 + $0x1b8] sm:$0xff]
        %v1491 = vld [vmem:[%s800 + $0x1c0] sm:$0xff]
        %v1492 = vld [vmem:[%s800 + $0x1c8] sm:$0xff]
        %v1493 = vld [vmem:[%s800 + $0x1d0] sm:$0xff]
        %v1494 = vld [vmem:[%s800 + $0x1d8] sm:$0xff]
        %v1495 = vld [vmem:[%s800 + $0x1e0] sm:$0xff]
        %v1496 = vld [vmem:[%s800 + $0x1e8] sm:$0xff]
        %v1497 = vld [vmem:[%s800 + $0x1f0] sm:$0xff]
        %v1498 = vld [vmem:[%s800 + $0x1f8] sm:$0xff]
        %v1499 = vld [vmem:[%s800 + $0x200] sm:$0xff]
        %v1500 = vld [vmem:[%s800 + $0x208] sm:$0xff]
        %v1501 = vld [vmem:[%s800 + $0x210] sm:$0xff]
        %v1502 = vld [vmem:[%s800 + $0x218] sm:$0xff]
        %v1503 = vld [vmem:[%s800 + $0x220] sm:$0xff]
        %v1504 = vld [vmem:[%s800 + $0x228] sm:$0xff]
        %v1505 = vld [vmem:[%s800 + $0x230] sm:$0xff]
        %v1506 = vld [vmem:[%s800 + $0x238] sm:$0xff]
        %v1507 = vld [vmem:[%s800 + $0x240] sm:$0xff]
        %v1508 = vld [vmem:[%s800 + $0x248] sm:$0xff]
        %v1509 = vld [vmem:[%s800 + $0x250] sm:$0xff]
        %v1510 = vld [vmem:[%s800 + $0x258] sm:$0xff]
        %v1511 = vld [vmem:[%s800 + $0x260] sm:$0xff]
        %v1512 = vld [vmem:[%s800 + $0x268] sm:$0xff]
        %v1513 = vld [vmem:[%s800 + $0x270] sm:$0xff]
        %v1514 = vld [vmem:[%s800 + $0x278] sm:$0xff]
        %v1515 = vld [vmem:[%s800 + $0x280] sm:$0xff]
        %v1516 = vld [vmem:[%s800 + $0x288] sm:$0xff]
        %v1517 = vld [vmem:[%s800 + $0x290] sm:$0xff]
        %v1518 = vld [vmem:[%s800 + $0x298] sm:$0xff]
        %v1519 = vld [vmem:[%s800 + $0x2a0] sm:$0xff]
        %v1520 = vld [vmem:[%s800 + $0x2a8] sm:$0xff]
        %v1521 = vld [vmem:[%s800 + $0x2b0] sm:$0xff]
        %v1522 = vld [vmem:[%s800 + $0x2b8] sm:$0xff]
        %v1523 = vld [vmem:[%s800 + $0x2c0] sm:$0xff]
        %v1524 = vld [vmem:[%s800 + $0x2c8] sm:$0xff]
        %v1525 = vld [vmem:[%s800 + $0x2d0] sm:$0xff]
        %v1526 = vld [vmem:[%s800 + $0x2d8] sm:$0xff]
        %v1527 = vld [vmem:[%s800 + $0x2e0] sm:$0xff]
        %v1528 = vld [vmem:[%s800 + $0x2e8] sm:$0xff]
        %v1529 = vld [vmem:[%s800 + $0x2f0] sm:$0xff]
        %v1530 = vld [vmem:[%s800 + $0x2f8] sm:$0xff]
        %v1531 = vld [vmem:[%s800 + $0x300] sm:$0xff]
        %v1532 = vld [vmem:[%s800 + $0x308] sm:$0xff]
        %v1533 = vld [vmem:[%s800 + $0x310] sm:$0xff]
        %v1534 = vld [vmem:[%s800 + $0x318] sm:$0xff]
        %v1535 = vld [vmem:[%s800 + $0x320] sm:$0xff]
        %v1536 = vld [vmem:[%s800 + $0x328] sm:$0xff]
        %v1537 = vld [vmem:[%s800 + $0x330] sm:$0xff]
        %v1538 = vld [vmem:[%s800 + $0x338] sm:$0xff]
        %v1539 = vld [vmem:[%s800 + $0x340] sm:$0xff]
        %v1540 = vld [vmem:[%s800 + $0x348] sm:$0xff]
        %v1541 = vld [vmem:[%s800 + $0x350] sm:$0xff]
        %v1542 = vld [vmem:[%s800 + $0x358] sm:$0xff]
        %v1543 = vld [vmem:[%s800 + $0x360] sm:$0xff]
        %v1544 = vld [vmem:[%s800 + $0x368] sm:$0xff]
        %v1545 = vld [vmem:[%s800 + $0x370] sm:$0xff]
        %v1546 = vld [vmem:[%s800 + $0x378] sm:$0xff]
        %v1547 = vld [vmem:[%s800 + $0x380] sm:$0xff]
        %v1548 = vld [vmem:[%s800 + $0x388] sm:$0xff]
        %v1549 = vld [vmem:[%s800 + $0x390] sm:$0xff]
        %v1550 = vld [vmem:[%s800 + $0x398] sm:$0xff]
        %v1551 = vld [vmem:[%s800 + $0x3a0] sm:$0xff]
        %v1552 = vld [vmem:[%s800 + $0x3a8] sm:$0xff]
        %v1553 = vld [vmem:[%s800 + $0x3b0] sm:$0xff]
        %v1554 = vld [vmem:[%s800 + $0x3b8] sm:$0xff]
        %v1555 = vld [vmem:[%s800 + $0x3c0] sm:$0xff]
        %v1556 = vld [vmem:[%s800 + $0x3c8] sm:$0xff]
        %v1557 = vld [vmem:[%s800 + $0x3d0] sm:$0xff]
        %v1558 = vld [vmem:[%s800 + $0x3d8] sm:$0xff]
        %v1559 = vld [vmem:[%s800 + $0x3e0] sm:$0xff]
        %v1560 = vld [vmem:[%s800 + $0x3e8] sm:$0xff]
        %v1561 = vld [vmem:[%s800 + $0x3f0] sm:$0xff]
        %v1562 = vld [vmem:[%s800 + $0x3f8] sm:$0xff]
        %v1563 = vld [vmem:[%s800 + $0x400] sm:$0xff]
        %v1564 = vld [vmem:[%s800 + $0x408] sm:$0xff]
        %v1565 = vld [vmem:[%s800 + $0x410] sm:$0xff]
        %v1566 = vld [vmem:[%s800 + $0x418] sm:$0xff]
        %v1567 = vld [vmem:[%s800 + $0x420] sm:$0xff]
        %v1568 = vld [vmem:[%s800 + $0x428] sm:$0xff]
        %v1569 = vld [vmem:[%s800 + $0x430] sm:$0xff]
        %v1570 = vld [vmem:[%s800 + $0x438] sm:$0xff]
        %v1571 = vld [vmem:[%s800 + $0x440] sm:$0xff]
        %v1572 = vld [vmem:[%s800 + $0x448] sm:$0xff]
        %v1573 = vld [vmem:[%s800 + $0x450] sm:$0xff]
        %v1574 = vld [vmem:[%s800 + $0x458] sm:$0xff]
        %v1575 = vld [vmem:[%s800 + $0x460] sm:$0xff]
        %v1576 = vld [vmem:[%s800 + $0x468] sm:$0xff]
        %v1577 = vld [vmem:[%s800 + $0x470] sm:$0xff]
        %v1578 = vld [vmem:[%s800 + $0x478] sm:$0xff]
        %v1579 = vld [vmem:[%s800 + $0x480] sm:$0xff]
        %v1580 = vld [vmem:[%s800 + $0x488] sm:$0xff]
        %v1581 = vld [vmem:[%s800 + $0x490] sm:$0xff]
        %v1582 = vld [vmem:[%s800 + $0x498] sm:$0xff]
        %v1583 = vld [vmem:[%s800 + $0x4a0] sm:$0xff]
        %v1584 = vld [vmem:[%s800 + $0x4a8] sm:$0xff]
        %v1585 = vld [vmem:[%s800 + $0x4b0] sm:$0xff]
        %v1586 = vld [vmem:[%s800 + $0x4b8] sm:$0xff]
        %v1587 = vld [vmem:[%s800 + $0x4c0] sm:$0xff]
        %v1588 = vld [vmem:[%s800 + $0x4c8] sm:$0xff]
        %v1589 = vld [vmem:[%s800 + $0x4d0] sm:$0xff]
        %v1590 = vld [vmem:[%s800 + $0x4d8] sm:$0xff]
        %v1591 = vld [vmem:[%s800 + $0x4e0] sm:$0xff]
        %v1592 = vld [vmem:[%s800 + $0x4e8] sm:$0xff]
        %v1593 = vld [vmem:[%s800 + $0x4f0] sm:$0xff]
        %v1594 = vld [vmem:[%s800 + $0x4f8] sm:$0xff]
        %v1595 = vld [vmem:[%s800 + $0x500] sm:$0xff]
        %v1596 = vld [vmem:[%s800 + $0x508] sm:$0xff]
        %v1597 = vld [vmem:[%s800 + $0x510] sm:$0xff]
        %v1598 = vld [vmem:[%s800 + $0x518] sm:$0xff]
        %v1599 = vld [vmem:[%s800 + $0x520] sm:$0xff]
        %v1600 = vld [vmem:[%s800 + $0x528] sm:$0xff]
        %v1601 = vld [vmem:[%s800 + $0x530] sm:$0xff]
        %v1602 = vld [vmem:[%s800 + $0x538] sm:$0xff]
        %v1603 = vld [vmem:[%s800 + $0x540] sm:$0xff]
        %v1604 = vld [vmem:[%s800 + $0x548] sm:$0xff]
        %v1605 = vld [vmem:[%s800 + $0x550] sm:$0xff]
        %v1606 = vld [vmem:[%s800 + $0x558] sm:$0xff]
        %v1607 = vld [vmem:[%s800 + $0x560] sm:$0xff]
        %v1608 = vld [vmem:[%s800 + $0x568] sm:$0xff]
        %v1609 = vld [vmem:[%s800 + $0x570] sm:$0xff]
        %v1610 = vld [vmem:[%s800 + $0x578] sm:$0xff]
        %v1611 = vld [vmem:[%s800 + $0x580] sm:$0xff]
        %v1612 = vld [vmem:[%s800 + $0x588] sm:$0xff]
        %v1613 = vld [vmem:[%s800 + $0x590] sm:$0xff]
        %v1614 = vld [vmem:[%s800 + $0x598] sm:$0xff]
        %v1615 = vld [vmem:[%s800 + $0x5a0] sm:$0xff]
        %v1616 = vld [vmem:[%s800 + $0x5a8] sm:$0xff]
        %v1617 = vld [vmem:[%s800 + $0x5b0] sm:$0xff]
        %v1618 = vld [vmem:[%s800 + $0x5b8] sm:$0xff]
        %v1619 = vld [vmem:[%s800 + $0x5c0] sm:$0xff]
        %v1620 = vld [vmem:[%s800 + $0x5c8] sm:$0xff]
        %v1621 = vld [vmem:[%s800 + $0x5d0] sm:$0xff]
        %v1622 = vld [vmem:[%s800 + $0x5d8] sm:$0xff]
        %v1623 = vld [vmem:[%s800 + $0x5e0] sm:$0xff]
        %v1624 = vld [vmem:[%s800 + $0x5e8] sm:$0xff]
        %v1625 = vld [vmem:[%s800 + $0x5f0] sm:$0xff]
        %v1626 = vld [vmem:[%s800 + $0x5f8] sm:$0xff]
        %v1627 = vld [vmem:[%s800 + $0x600] sm:$0xff]
        %v1628 = vld [vmem:[%s800 + $0x608] sm:$0xff]
        %v1629 = vld [vmem:[%s800 + $0x610] sm:$0xff]
        %v1630 = vld [vmem:[%s800 + $0x618] sm:$0xff]
        %v1631 = vld [vmem:[%s800 + $0x620] sm:$0xff]
        %v1632 = vld [vmem:[%s800 + $0x628] sm:$0xff]
        %v1633 = vld [vmem:[%s800 + $0x630] sm:$0xff]
        %v1634 = vld [vmem:[%s800 + $0x638] sm:$0xff]
        %v1635 = vld [vmem:[%s800 + $0x640] sm:$0xff]
        %v1636 = vld [vmem:[%s800 + $0x648] sm:$0xff]
        %v1637 = vld [vmem:[%s800 + $0x650] sm:$0xff]
        %v1638 = vld [vmem:[%s800 + $0x658] sm:$0xff]
        %v1639 = vld [vmem:[%s800 + $0x660] sm:$0xff]
        %v1640 = vld [vmem:[%s800 + $0x668] sm:$0xff]
        %v1641 = vld [vmem:[%s800 + $0x670] sm:$0xff]
        %v1642 = vld [vmem:[%s800 + $0x678] sm:$0xff]
        %v1643 = vld [vmem:[%s800 + $0x680] sm:$0xff]
        %v1644 = vld [vmem:[%s800 + $0x688] sm:$0xff]
        %v1645 = vld [vmem:[%s800 + $0x690] sm:$0xff]
        %v1646 = vld [vmem:[%s800 + $0x698] sm:$0xff]
        %v1647 = vld [vmem:[%s800 + $0x6a0] sm:$0xff]
        %v1648 = vld [vmem:[%s800 + $0x6a8] sm:$0xff]
        %v1649 = vld [vmem:[%s800 + $0x6b0] sm:$0xff]
        %v1650 = vld [vmem:[%s800 + $0x6b8] sm:$0xff]
        %v1651 = vld [vmem:[%s800 + $0x6c0] sm:$0xff]
        %v1652 = vld [vmem:[%s800 + $0x6c8] sm:$0xff]
        %v1653 = vld [vmem:[%s800 + $0x6d0] sm:$0xff]
        %v1654 = vld [vmem:[%s800 + $0x6d8] sm:$0xff]
        %v1655 = vld [vmem:[%s800 + $0x6e0] sm:$0xff]
        %v1656 = vld [vmem:[%s800 + $0x6e8] sm:$0xff]
        %v1657 = vld [vmem:[%s800 + $0x6f0] sm:$0xff]
        %v1658 = vld [vmem:[%s800 + $0x6f8] sm:$0xff]
        %v1659 = vld [vmem:[%s800 + $0x700] sm:$0xff]
        %v1660 = vld [vmem:[%s800 + $0x708] sm:$0xff]
        %v1661 = vld [vmem:[%s800 + $0x710] sm:$0xff]
        %v1662 = vld [vmem:[%s800 + $0x718] sm:$0xff]
        %v1663 = vld [vmem:[%s800 + $0x720] sm:$0xff]
        %v1664 = vld [vmem:[%s800 + $0x728] sm:$0xff]
        %v1665 = vld [vmem:[%s800 + $0x730] sm:$0xff]
        %v1666 = vld [vmem:[%s800 + $0x738] sm:$0xff]
        %v1667 = vld [vmem:[%s800 + $0x740] sm:$0xff]
        %v1668 = vld [vmem:[%s800 + $0x748] sm:$0xff]
        %v1669 = vld [vmem:[%s800 + $0x750] sm:$0xff]
        %v1670 = vld [vmem:[%s800 + $0x758] sm:$0xff]
        %v1671 = vld [vmem:[%s800 + $0x760] sm:$0xff]
        %v1672 = vld [vmem:[%s800 + $0x768] sm:$0xff]
        %v1673 = vld [vmem:[%s800 + $0x770] sm:$0xff]
        %v1674 = vld [vmem:[%s800 + $0x778] sm:$0xff]
        %v1675 = vld [vmem:[%s800 + $0x780] sm:$0xff]
        %v1676 = vld [vmem:[%s800 + $0x788] sm:$0xff]
        %v1677 = vld [vmem:[%s800 + $0x790] sm:$0xff]
        %v1678 = vld [vmem:[%s800 + $0x798] sm:$0xff]
        %v1679 = vld [vmem:[%s800 + $0x7a0] sm:$0xff]
        %v1680 = vld [vmem:[%s800 + $0x7a8] sm:$0xff]
        %v1681 = vld [vmem:[%s800 + $0x7b0] sm:$0xff]
        %v1682 = vld [vmem:[%s800 + $0x7b8] sm:$0xff]
        %v1683 = vld [vmem:[%s800 + $0x7c0] sm:$0xff]
        %v1684 = vld [vmem:[%s800 + $0x7c8] sm:$0xff]
        %v1685 = vld [vmem:[%s800 + $0x7d0] sm:$0xff]
        %v1686 = vld [vmem:[%s800 + $0x7d8] sm:$0xff]
        %v1687 = vld [vmem:[%s800 + $0x7e0] sm:$0xff]
        %v1688 = vld [vmem:[%s800 + $0x7e8] sm:$0xff]
        %v1689 = vld [vmem:[%s800 + $0x7f0] sm:$0xff]
        %v1690 = vld [vmem:[%s800 + $0x7f8] sm:$0xff]
        %v1691 = vunpack.c.l.s8.bf16 %v1435
        %v1692 = vunpack.c.l.s8.bf16 %v1436
        %v1693 = vunpack.c.l.s8.bf16 %v1437
        %v1694 = vunpack.c.l.s8.bf16 %v1438
        %v1695 = vunpack.c.l.s8.bf16 %v1439
        %v1696 = vunpack.c.l.s8.bf16 %v1440
        %v1697 = vunpack.c.l.s8.bf16 %v1441
        %v1698 = vunpack.c.l.s8.bf16 %v1442
        %v1699 = vunpack.c.h.s8.bf16 %v1435
        %v1700 = vunpack.c.h.s8.bf16 %v1436
        %v1701 = vunpack.c.h.s8.bf16 %v1437
        %v1702 = vunpack.c.h.s8.bf16 %v1438
        %v1703 = vunpack.c.h.s8.bf16 %v1439
        %v1704 = vunpack.c.h.s8.bf16 %v1440
        %v1705 = vunpack.c.h.s8.bf16 %v1441
        %v1706 = vunpack.c.h.s8.bf16 %v1442
        %v1707 = vunpack.c.l.s8.bf16 %v1443
        %v1708 = vunpack.c.l.s8.bf16 %v1444
        %v1709 = vunpack.c.l.s8.bf16 %v1445
        %v1710 = vunpack.c.l.s8.bf16 %v1446
        %v1711 = vunpack.c.l.s8.bf16 %v1447
        %v1712 = vunpack.c.l.s8.bf16 %v1448
        %v1713 = vunpack.c.l.s8.bf16 %v1449
        %v1714 = vunpack.c.l.s8.bf16 %v1450
        %v1715 = vunpack.c.h.s8.bf16 %v1443
        %v1716 = vunpack.c.h.s8.bf16 %v1444
        %v1717 = vunpack.c.h.s8.bf16 %v1445
        %v1718 = vunpack.c.h.s8.bf16 %v1446
        %v1719 = vunpack.c.h.s8.bf16 %v1447
        %v1720 = vunpack.c.h.s8.bf16 %v1448
        %v1721 = vunpack.c.h.s8.bf16 %v1449
        %v1722 = vunpack.c.h.s8.bf16 %v1450
        %v1723 = vunpack.c.l.s8.bf16 %v1451
        %v1724 = vunpack.c.l.s8.bf16 %v1452
        %v1725 = vunpack.c.l.s8.bf16 %v1453
        %v1726 = vunpack.c.l.s8.bf16 %v1454
        %v1727 = vunpack.c.l.s8.bf16 %v1455
        %v1728 = vunpack.c.l.s8.bf16 %v1456
        %v1729 = vunpack.c.l.s8.bf16 %v1457
        %v1730 = vunpack.c.l.s8.bf16 %v1458
        %v1731 = vunpack.c.h.s8.bf16 %v1451
        %v1732 = vunpack.c.h.s8.bf16 %v1452
        %v1733 = vunpack.c.h.s8.bf16 %v1453
        %v1734 = vunpack.c.h.s8.bf16 %v1454
        %v1735 = vunpack.c.h.s8.bf16 %v1455
        %v1736 = vunpack.c.h.s8.bf16 %v1456
        %v1737 = vunpack.c.h.s8.bf16 %v1457
        %v1738 = vunpack.c.h.s8.bf16 %v1458
        %v1739 = vunpack.c.l.s8.bf16 %v1459
        %v1740 = vunpack.c.l.s8.bf16 %v1460
        %v1741 = vunpack.c.l.s8.bf16 %v1461
        %v1742 = vunpack.c.l.s8.bf16 %v1462
        %v1743 = vunpack.c.l.s8.bf16 %v1463
        %v1744 = vunpack.c.l.s8.bf16 %v1464
        %v1745 = vunpack.c.l.s8.bf16 %v1465
        %v1746 = vunpack.c.l.s8.bf16 %v1466
        %v1747 = vunpack.c.h.s8.bf16 %v1459
        %v1748 = vunpack.c.h.s8.bf16 %v1460
        %v1749 = vunpack.c.h.s8.bf16 %v1461
        %v1750 = vunpack.c.h.s8.bf16 %v1462
        %v1751 = vunpack.c.h.s8.bf16 %v1463
        %v1752 = vunpack.c.h.s8.bf16 %v1464
        %v1753 = vunpack.c.h.s8.bf16 %v1465
        %v1754 = vunpack.c.h.s8.bf16 %v1466
        %v1755 = vunpack.c.l.s8.bf16 %v1467
        %v1756 = vunpack.c.l.s8.bf16 %v1468
        %v1757 = vunpack.c.l.s8.bf16 %v1469
        %v1758 = vunpack.c.l.s8.bf16 %v1470
        %v1759 = vunpack.c.l.s8.bf16 %v1471
        %v1760 = vunpack.c.l.s8.bf16 %v1472
        %v1761 = vunpack.c.l.s8.bf16 %v1473
        %v1762 = vunpack.c.l.s8.bf16 %v1474
        %v1763 = vunpack.c.h.s8.bf16 %v1467
        %v1764 = vunpack.c.h.s8.bf16 %v1468
        %v1765 = vunpack.c.h.s8.bf16 %v1469
        %v1766 = vunpack.c.h.s8.bf16 %v1470
        %v1767 = vunpack.c.h.s8.bf16 %v1471
        %v1768 = vunpack.c.h.s8.bf16 %v1472
        %v1769 = vunpack.c.h.s8.bf16 %v1473
        %v1770 = vunpack.c.h.s8.bf16 %v1474
        %v1771 = vunpack.c.l.s8.bf16 %v1475
        %v1772 = vunpack.c.l.s8.bf16 %v1476
        %v1773 = vunpack.c.l.s8.bf16 %v1477
        %v1774 = vunpack.c.l.s8.bf16 %v1478
        %v1775 = vunpack.c.l.s8.bf16 %v1479
        %v1776 = vunpack.c.l.s8.bf16 %v1480
        %v1777 = vunpack.c.l.s8.bf16 %v1481
        %v1778 = vunpack.c.l.s8.bf16 %v1482
        %v1779 = vunpack.c.h.s8.bf16 %v1475
        %v1780 = vunpack.c.h.s8.bf16 %v1476
        %v1781 = vunpack.c.h.s8.bf16 %v1477
        %v1782 = vunpack.c.h.s8.bf16 %v1478
        %v1783 = vunpack.c.h.s8.bf16 %v1479
        %v1784 = vunpack.c.h.s8.bf16 %v1480
        %v1785 = vunpack.c.h.s8.bf16 %v1481
        %v1786 = vunpack.c.h.s8.bf16 %v1482
        %v1787 = vunpack.c.l.s8.bf16 %v1483
        %v1788 = vunpack.c.l.s8.bf16 %v1484
        %v1789 = vunpack.c.l.s8.bf16 %v1485
        %v1790 = vunpack.c.l.s8.bf16 %v1486
        %v1791 = vunpack.c.l.s8.bf16 %v1487
        %v1792 = vunpack.c.l.s8.bf16 %v1488
        %v1793 = vunpack.c.l.s8.bf16 %v1489
        %v1794 = vunpack.c.l.s8.bf16 %v1490
        %v1795 = vunpack.c.h.s8.bf16 %v1483
        %v1796 = vunpack.c.h.s8.bf16 %v1484
        %v1797 = vunpack.c.h.s8.bf16 %v1485
        %v1798 = vunpack.c.h.s8.bf16 %v1486
        %v1799 = vunpack.c.h.s8.bf16 %v1487
        %v1800 = vunpack.c.h.s8.bf16 %v1488
        %v1801 = vunpack.c.h.s8.bf16 %v1489
        %v1802 = vunpack.c.h.s8.bf16 %v1490
        %v1803 = vunpack.c.l.s8.bf16 %v1491
        %v1804 = vunpack.c.l.s8.bf16 %v1492
        %v1805 = vunpack.c.l.s8.bf16 %v1493
        %v1806 = vunpack.c.l.s8.bf16 %v1494
        %v1807 = vunpack.c.l.s8.bf16 %v1495
        %v1808 = vunpack.c.l.s8.bf16 %v1496
        %v1809 = vunpack.c.l.s8.bf16 %v1497
        %v1810 = vunpack.c.l.s8.bf16 %v1498
        %v1811 = vunpack.c.h.s8.bf16 %v1491
        %v1812 = vunpack.c.h.s8.bf16 %v1492
        %v1813 = vunpack.c.h.s8.bf16 %v1493
        %v1814 = vunpack.c.h.s8.bf16 %v1494
        %v1815 = vunpack.c.h.s8.bf16 %v1495
        %v1816 = vunpack.c.h.s8.bf16 %v1496
        %v1817 = vunpack.c.h.s8.bf16 %v1497
        %v1818 = vunpack.c.h.s8.bf16 %v1498
        %v1819 = vunpack.c.l.s8.bf16 %v1499
        %v1820 = vunpack.c.l.s8.bf16 %v1500
        %v1821 = vunpack.c.l.s8.bf16 %v1501
        %v1822 = vunpack.c.l.s8.bf16 %v1502
        %v1823 = vunpack.c.l.s8.bf16 %v1503
        %v1824 = vunpack.c.l.s8.bf16 %v1504
        %v1825 = vunpack.c.l.s8.bf16 %v1505
        %v1826 = vunpack.c.l.s8.bf16 %v1506
        %v1827 = vunpack.c.h.s8.bf16 %v1499
        %v1828 = vunpack.c.h.s8.bf16 %v1500
        %v1829 = vunpack.c.h.s8.bf16 %v1501
        %v1830 = vunpack.c.h.s8.bf16 %v1502
        %v1831 = vunpack.c.h.s8.bf16 %v1503
        %v1832 = vunpack.c.h.s8.bf16 %v1504
        %v1833 = vunpack.c.h.s8.bf16 %v1505
        %v1834 = vunpack.c.h.s8.bf16 %v1506
        %v1835 = vunpack.c.l.s8.bf16 %v1507
        %v1836 = vunpack.c.l.s8.bf16 %v1508
        %v1837 = vunpack.c.l.s8.bf16 %v1509
        %v1838 = vunpack.c.l.s8.bf16 %v1510
        %v1839 = vunpack.c.l.s8.bf16 %v1511
        %v1840 = vunpack.c.l.s8.bf16 %v1512
        %v1841 = vunpack.c.l.s8.bf16 %v1513
        %v1842 = vunpack.c.l.s8.bf16 %v1514
        %v1843 = vunpack.c.h.s8.bf16 %v1507
        %v1844 = vunpack.c.h.s8.bf16 %v1508
        %v1845 = vunpack.c.h.s8.bf16 %v1509
        %v1846 = vunpack.c.h.s8.bf16 %v1510
        %v1847 = vunpack.c.h.s8.bf16 %v1511
        %v1848 = vunpack.c.h.s8.bf16 %v1512
        %v1849 = vunpack.c.h.s8.bf16 %v1513
        %v1850 = vunpack.c.h.s8.bf16 %v1514
        %v1851 = vunpack.c.l.s8.bf16 %v1515
        %v1852 = vunpack.c.l.s8.bf16 %v1516
        %v1853 = vunpack.c.l.s8.bf16 %v1517
        %v1854 = vunpack.c.l.s8.bf16 %v1518
        %v1855 = vunpack.c.l.s8.bf16 %v1519
        %v1856 = vunpack.c.l.s8.bf16 %v1520
        %v1857 = vunpack.c.l.s8.bf16 %v1521
        %v1858 = vunpack.c.l.s8.bf16 %v1522
        %v1859 = vunpack.c.h.s8.bf16 %v1515
        %v1860 = vunpack.c.h.s8.bf16 %v1516
        %v1861 = vunpack.c.h.s8.bf16 %v1517
        %v1862 = vunpack.c.h.s8.bf16 %v1518
        %v1863 = vunpack.c.h.s8.bf16 %v1519
        %v1864 = vunpack.c.h.s8.bf16 %v1520
        %v1865 = vunpack.c.h.s8.bf16 %v1521
        %v1866 = vunpack.c.h.s8.bf16 %v1522
        %v1867 = vunpack.c.l.s8.bf16 %v1523
        %v1868 = vunpack.c.l.s8.bf16 %v1524
        %v1869 = vunpack.c.l.s8.bf16 %v1525
        %v1870 = vunpack.c.l.s8.bf16 %v1526
        %v1871 = vunpack.c.l.s8.bf16 %v1527
        %v1872 = vunpack.c.l.s8.bf16 %v1528
        %v1873 = vunpack.c.l.s8.bf16 %v1529
        %v1874 = vunpack.c.l.s8.bf16 %v1530
        %v1875 = vunpack.c.h.s8.bf16 %v1523
        %v1876 = vunpack.c.h.s8.bf16 %v1524
        %v1877 = vunpack.c.h.s8.bf16 %v1525
        %v1878 = vunpack.c.h.s8.bf16 %v1526
        %v1879 = vunpack.c.h.s8.bf16 %v1527
        %v1880 = vunpack.c.h.s8.bf16 %v1528
        %v1881 = vunpack.c.h.s8.bf16 %v1529
        %v1882 = vunpack.c.h.s8.bf16 %v1530
        %v1883 = vunpack.c.l.s8.bf16 %v1531
        %v1884 = vunpack.c.l.s8.bf16 %v1532
        %v1885 = vunpack.c.l.s8.bf16 %v1533
        %v1886 = vunpack.c.l.s8.bf16 %v1534
        %v1887 = vunpack.c.l.s8.bf16 %v1535
        %v1888 = vunpack.c.l.s8.bf16 %v1536
        %v1889 = vunpack.c.l.s8.bf16 %v1537
        %v1890 = vunpack.c.l.s8.bf16 %v1538
        %v1891 = vunpack.c.h.s8.bf16 %v1531
        %v1892 = vunpack.c.h.s8.bf16 %v1532
        %v1893 = vunpack.c.h.s8.bf16 %v1533
        %v1894 = vunpack.c.h.s8.bf16 %v1534
        %v1895 = vunpack.c.h.s8.bf16 %v1535
        %v1896 = vunpack.c.h.s8.bf16 %v1536
        %v1897 = vunpack.c.h.s8.bf16 %v1537
        %v1898 = vunpack.c.h.s8.bf16 %v1538
        %v1899 = vunpack.c.l.s8.bf16 %v1539
        %v1900 = vunpack.c.l.s8.bf16 %v1540
        %v1901 = vunpack.c.l.s8.bf16 %v1541
        %v1902 = vunpack.c.l.s8.bf16 %v1542
        %v1903 = vunpack.c.l.s8.bf16 %v1543
        %v1904 = vunpack.c.l.s8.bf16 %v1544
        %v1905 = vunpack.c.l.s8.bf16 %v1545
        %v1906 = vunpack.c.l.s8.bf16 %v1546
        %v1907 = vunpack.c.h.s8.bf16 %v1539
        %v1908 = vunpack.c.h.s8.bf16 %v1540
        %v1909 = vunpack.c.h.s8.bf16 %v1541
        %v1910 = vunpack.c.h.s8.bf16 %v1542
        %v1911 = vunpack.c.h.s8.bf16 %v1543
        %v1912 = vunpack.c.h.s8.bf16 %v1544
        %v1913 = vunpack.c.h.s8.bf16 %v1545
        %v1914 = vunpack.c.h.s8.bf16 %v1546
        %v1915 = vunpack.c.l.s8.bf16 %v1547
        %v1916 = vunpack.c.l.s8.bf16 %v1548
        %v1917 = vunpack.c.l.s8.bf16 %v1549
        %v1918 = vunpack.c.l.s8.bf16 %v1550
        %v1919 = vunpack.c.l.s8.bf16 %v1551
        %v1920 = vunpack.c.l.s8.bf16 %v1552
        %v1921 = vunpack.c.l.s8.bf16 %v1553
        %v1922 = vunpack.c.l.s8.bf16 %v1554
        %v1923 = vunpack.c.h.s8.bf16 %v1547
        %v1924 = vunpack.c.h.s8.bf16 %v1548
        %v1925 = vunpack.c.h.s8.bf16 %v1549
        %v1926 = vunpack.c.h.s8.bf16 %v1550
        %v1927 = vunpack.c.h.s8.bf16 %v1551
        %v1928 = vunpack.c.h.s8.bf16 %v1552
        %v1929 = vunpack.c.h.s8.bf16 %v1553
        %v1930 = vunpack.c.h.s8.bf16 %v1554
        %v1931 = vunpack.c.l.s8.bf16 %v1555
        %v1932 = vunpack.c.l.s8.bf16 %v1556
        %v1933 = vunpack.c.l.s8.bf16 %v1557
        %v1934 = vunpack.c.l.s8.bf16 %v1558
        %v1935 = vunpack.c.l.s8.bf16 %v1559
        %v1936 = vunpack.c.l.s8.bf16 %v1560
        %v1937 = vunpack.c.l.s8.bf16 %v1561
        %v1938 = vunpack.c.l.s8.bf16 %v1562
        %v1939 = vunpack.c.h.s8.bf16 %v1555
        %v1940 = vunpack.c.h.s8.bf16 %v1556
        %v1941 = vunpack.c.h.s8.bf16 %v1557
        %v1942 = vunpack.c.h.s8.bf16 %v1558
        %v1943 = vunpack.c.h.s8.bf16 %v1559
        %v1944 = vunpack.c.h.s8.bf16 %v1560
        %v1945 = vunpack.c.h.s8.bf16 %v1561
        %v1946 = vunpack.c.h.s8.bf16 %v1562
        %v1947 = vunpack.c.l.s8.bf16 %v1563
        %v1948 = vunpack.c.l.s8.bf16 %v1564
        %v1949 = vunpack.c.l.s8.bf16 %v1565
        %v1950 = vunpack.c.l.s8.bf16 %v1566
        %v1951 = vunpack.c.l.s8.bf16 %v1567
        %v1952 = vunpack.c.l.s8.bf16 %v1568
        %v1953 = vunpack.c.l.s8.bf16 %v1569
        %v1954 = vunpack.c.l.s8.bf16 %v1570
        %v1955 = vunpack.c.h.s8.bf16 %v1563
        %v1956 = vunpack.c.h.s8.bf16 %v1564
        %v1957 = vunpack.c.h.s8.bf16 %v1565
        %v1958 = vunpack.c.h.s8.bf16 %v1566
        %v1959 = vunpack.c.h.s8.bf16 %v1567
        %v1960 = vunpack.c.h.s8.bf16 %v1568
        %v1961 = vunpack.c.h.s8.bf16 %v1569
        %v1962 = vunpack.c.h.s8.bf16 %v1570
        %v1963 = vunpack.c.l.s8.bf16 %v1571
        %v1964 = vunpack.c.l.s8.bf16 %v1572
        %v1965 = vunpack.c.l.s8.bf16 %v1573
        %v1966 = vunpack.c.l.s8.bf16 %v1574
        %v1967 = vunpack.c.l.s8.bf16 %v1575
        %v1968 = vunpack.c.l.s8.bf16 %v1576
        %v1969 = vunpack.c.l.s8.bf16 %v1577
        %v1970 = vunpack.c.l.s8.bf16 %v1578
        %v1971 = vunpack.c.h.s8.bf16 %v1571
        %v1972 = vunpack.c.h.s8.bf16 %v1572
        %v1973 = vunpack.c.h.s8.bf16 %v1573
        %v1974 = vunpack.c.h.s8.bf16 %v1574
        %v1975 = vunpack.c.h.s8.bf16 %v1575
        %v1976 = vunpack.c.h.s8.bf16 %v1576
        %v1977 = vunpack.c.h.s8.bf16 %v1577
        %v1978 = vunpack.c.h.s8.bf16 %v1578
        %v1979 = vunpack.c.l.s8.bf16 %v1579
        %v1980 = vunpack.c.l.s8.bf16 %v1580
        %v1981 = vunpack.c.l.s8.bf16 %v1581
        %v1982 = vunpack.c.l.s8.bf16 %v1582
        %v1983 = vunpack.c.l.s8.bf16 %v1583
        %v1984 = vunpack.c.l.s8.bf16 %v1584
        %v1985 = vunpack.c.l.s8.bf16 %v1585
        %v1986 = vunpack.c.l.s8.bf16 %v1586
        %v1987 = vunpack.c.h.s8.bf16 %v1579
        %v1988 = vunpack.c.h.s8.bf16 %v1580
        %v1989 = vunpack.c.h.s8.bf16 %v1581
        %v1990 = vunpack.c.h.s8.bf16 %v1582
        %v1991 = vunpack.c.h.s8.bf16 %v1583
        %v1992 = vunpack.c.h.s8.bf16 %v1584
        %v1993 = vunpack.c.h.s8.bf16 %v1585
        %v1994 = vunpack.c.h.s8.bf16 %v1586
        %v1995 = vunpack.c.l.s8.bf16 %v1587
        %v1996 = vunpack.c.l.s8.bf16 %v1588
        %v1997 = vunpack.c.l.s8.bf16 %v1589
        %v1998 = vunpack.c.l.s8.bf16 %v1590
        %v1999 = vunpack.c.l.s8.bf16 %v1591
        %v2000 = vunpack.c.l.s8.bf16 %v1592
        %v2001 = vunpack.c.l.s8.bf16 %v1593
        %v2002 = vunpack.c.l.s8.bf16 %v1594
        %v2003 = vunpack.c.h.s8.bf16 %v1587
        %v2004 = vunpack.c.h.s8.bf16 %v1588
        %v2005 = vunpack.c.h.s8.bf16 %v1589
        %v2006 = vunpack.c.h.s8.bf16 %v1590
        %v2007 = vunpack.c.h.s8.bf16 %v1591
        %v2008 = vunpack.c.h.s8.bf16 %v1592
        %v2009 = vunpack.c.h.s8.bf16 %v1593
        %v2010 = vunpack.c.h.s8.bf16 %v1594
        %v2011 = vunpack.c.l.s8.bf16 %v1595
        %v2012 = vunpack.c.l.s8.bf16 %v1596
        %v2013 = vunpack.c.l.s8.bf16 %v1597
        %v2014 = vunpack.c.l.s8.bf16 %v1598
        %v2015 = vunpack.c.l.s8.bf16 %v1599
        %v2016 = vunpack.c.l.s8.bf16 %v1600
        %v2017 = vunpack.c.l.s8.bf16 %v1601
        %v2018 = vunpack.c.l.s8.bf16 %v1602
        %v2019 = vunpack.c.h.s8.bf16 %v1595
        %v2020 = vunpack.c.h.s8.bf16 %v1596
        %v2021 = vunpack.c.h.s8.bf16 %v1597
        %v2022 = vunpack.c.h.s8.bf16 %v1598
        %v2023 = vunpack.c.h.s8.bf16 %v1599
        %v2024 = vunpack.c.h.s8.bf16 %v1600
        %v2025 = vunpack.c.h.s8.bf16 %v1601
        %v2026 = vunpack.c.h.s8.bf16 %v1602
        %v2027 = vunpack.c.l.s8.bf16 %v1603
        %v2028 = vunpack.c.l.s8.bf16 %v1604
        %v2029 = vunpack.c.l.s8.bf16 %v1605
        %v2030 = vunpack.c.l.s8.bf16 %v1606
        %v2031 = vunpack.c.l.s8.bf16 %v1607
        %v2032 = vunpack.c.l.s8.bf16 %v1608
        %v2033 = vunpack.c.l.s8.bf16 %v1609
        %v2034 = vunpack.c.l.s8.bf16 %v1610
        %v2035 = vunpack.c.h.s8.bf16 %v1603
        %v2036 = vunpack.c.h.s8.bf16 %v1604
        %v2037 = vunpack.c.h.s8.bf16 %v1605
        %v2038 = vunpack.c.h.s8.bf16 %v1606
        %v2039 = vunpack.c.h.s8.bf16 %v1607
        %v2040 = vunpack.c.h.s8.bf16 %v1608
        %v2041 = vunpack.c.h.s8.bf16 %v1609
        %v2042 = vunpack.c.h.s8.bf16 %v1610
        %v2043 = vunpack.c.l.s8.bf16 %v1611
        %v2044 = vunpack.c.l.s8.bf16 %v1612
        %v2045 = vunpack.c.l.s8.bf16 %v1613
        %v2046 = vunpack.c.l.s8.bf16 %v1614
        %v2047 = vunpack.c.l.s8.bf16 %v1615
        %v2048 = vunpack.c.l.s8.bf16 %v1616
        %v2049 = vunpack.c.l.s8.bf16 %v1617
        %v2050 = vunpack.c.l.s8.bf16 %v1618
        %v2051 = vunpack.c.h.s8.bf16 %v1611
        %v2052 = vunpack.c.h.s8.bf16 %v1612
        %v2053 = vunpack.c.h.s8.bf16 %v1613
        %v2054 = vunpack.c.h.s8.bf16 %v1614
        %v2055 = vunpack.c.h.s8.bf16 %v1615
        %v2056 = vunpack.c.h.s8.bf16 %v1616
        %v2057 = vunpack.c.h.s8.bf16 %v1617
        %v2058 = vunpack.c.h.s8.bf16 %v1618
        %v2059 = vunpack.c.l.s8.bf16 %v1619
        %v2060 = vunpack.c.l.s8.bf16 %v1620
        %v2061 = vunpack.c.l.s8.bf16 %v1621
        %v2062 = vunpack.c.l.s8.bf16 %v1622
        %v2063 = vunpack.c.l.s8.bf16 %v1623
        %v2064 = vunpack.c.l.s8.bf16 %v1624
        %v2065 = vunpack.c.l.s8.bf16 %v1625
        %v2066 = vunpack.c.l.s8.bf16 %v1626
        %v2067 = vunpack.c.h.s8.bf16 %v1619
        %v2068 = vunpack.c.h.s8.bf16 %v1620
        %v2069 = vunpack.c.h.s8.bf16 %v1621
        %v2070 = vunpack.c.h.s8.bf16 %v1622
        %v2071 = vunpack.c.h.s8.bf16 %v1623
        %v2072 = vunpack.c.h.s8.bf16 %v1624
        %v2073 = vunpack.c.h.s8.bf16 %v1625
        %v2074 = vunpack.c.h.s8.bf16 %v1626
        %v2075 = vunpack.c.l.s8.bf16 %v1627
        %v2076 = vunpack.c.l.s8.bf16 %v1628
        %v2077 = vunpack.c.l.s8.bf16 %v1629
        %v2078 = vunpack.c.l.s8.bf16 %v1630
        %v2079 = vunpack.c.l.s8.bf16 %v1631
        %v2080 = vunpack.c.l.s8.bf16 %v1632
        %v2081 = vunpack.c.l.s8.bf16 %v1633
        %v2082 = vunpack.c.l.s8.bf16 %v1634
        %v2083 = vunpack.c.h.s8.bf16 %v1627
        %v2084 = vunpack.c.h.s8.bf16 %v1628
        %v2085 = vunpack.c.h.s8.bf16 %v1629
        %v2086 = vunpack.c.h.s8.bf16 %v1630
        %v2087 = vunpack.c.h.s8.bf16 %v1631
        %v2088 = vunpack.c.h.s8.bf16 %v1632
        %v2089 = vunpack.c.h.s8.bf16 %v1633
        %v2090 = vunpack.c.h.s8.bf16 %v1634
        %v2091 = vunpack.c.l.s8.bf16 %v1635
        %v2092 = vunpack.c.l.s8.bf16 %v1636
        %v2093 = vunpack.c.l.s8.bf16 %v1637
        %v2094 = vunpack.c.l.s8.bf16 %v1638
        %v2095 = vunpack.c.l.s8.bf16 %v1639
        %v2096 = vunpack.c.l.s8.bf16 %v1640
        %v2097 = vunpack.c.l.s8.bf16 %v1641
        %v2098 = vunpack.c.l.s8.bf16 %v1642
        %v2099 = vunpack.c.h.s8.bf16 %v1635
        %v2100 = vunpack.c.h.s8.bf16 %v1636
        %v2101 = vunpack.c.h.s8.bf16 %v1637
        %v2102 = vunpack.c.h.s8.bf16 %v1638
        %v2103 = vunpack.c.h.s8.bf16 %v1639
        %v2104 = vunpack.c.h.s8.bf16 %v1640
        %v2105 = vunpack.c.h.s8.bf16 %v1641
        %v2106 = vunpack.c.h.s8.bf16 %v1642
        %v2107 = vunpack.c.l.s8.bf16 %v1643
        %v2108 = vunpack.c.l.s8.bf16 %v1644
        %v2109 = vunpack.c.l.s8.bf16 %v1645
        %v2110 = vunpack.c.l.s8.bf16 %v1646
        %v2111 = vunpack.c.l.s8.bf16 %v1647
        %v2112 = vunpack.c.l.s8.bf16 %v1648
        %v2113 = vunpack.c.l.s8.bf16 %v1649
        %v2114 = vunpack.c.l.s8.bf16 %v1650
        %v2115 = vunpack.c.h.s8.bf16 %v1643
        %v2116 = vunpack.c.h.s8.bf16 %v1644
        %v2117 = vunpack.c.h.s8.bf16 %v1645
        %v2118 = vunpack.c.h.s8.bf16 %v1646
        %v2119 = vunpack.c.h.s8.bf16 %v1647
        %v2120 = vunpack.c.h.s8.bf16 %v1648
        %v2121 = vunpack.c.h.s8.bf16 %v1649
        %v2122 = vunpack.c.h.s8.bf16 %v1650
        %v2123 = vunpack.c.l.s8.bf16 %v1651
        %v2124 = vunpack.c.l.s8.bf16 %v1652
        %v2125 = vunpack.c.l.s8.bf16 %v1653
        %v2126 = vunpack.c.l.s8.bf16 %v1654
        %v2127 = vunpack.c.l.s8.bf16 %v1655
        %v2128 = vunpack.c.l.s8.bf16 %v1656
        %v2129 = vunpack.c.l.s8.bf16 %v1657
        %v2130 = vunpack.c.l.s8.bf16 %v1658
        %v2131 = vunpack.c.h.s8.bf16 %v1651
        %v2132 = vunpack.c.h.s8.bf16 %v1652
        %v2133 = vunpack.c.h.s8.bf16 %v1653
        %v2134 = vunpack.c.h.s8.bf16 %v1654
        %v2135 = vunpack.c.h.s8.bf16 %v1655
        %v2136 = vunpack.c.h.s8.bf16 %v1656
        %v2137 = vunpack.c.h.s8.bf16 %v1657
        %v2138 = vunpack.c.h.s8.bf16 %v1658
        %v2139 = vunpack.c.l.s8.bf16 %v1659
        %v2140 = vunpack.c.l.s8.bf16 %v1660
        %v2141 = vunpack.c.l.s8.bf16 %v1661
        %v2142 = vunpack.c.l.s8.bf16 %v1662
        %v2143 = vunpack.c.l.s8.bf16 %v1663
        %v2144 = vunpack.c.l.s8.bf16 %v1664
        %v2145 = vunpack.c.l.s8.bf16 %v1665
        %v2146 = vunpack.c.l.s8.bf16 %v1666
        %v2147 = vunpack.c.h.s8.bf16 %v1659
        %v2148 = vunpack.c.h.s8.bf16 %v1660
        %v2149 = vunpack.c.h.s8.bf16 %v1661
        %v2150 = vunpack.c.h.s8.bf16 %v1662
        %v2151 = vunpack.c.h.s8.bf16 %v1663
        %v2152 = vunpack.c.h.s8.bf16 %v1664
        %v2153 = vunpack.c.h.s8.bf16 %v1665
        %v2154 = vunpack.c.h.s8.bf16 %v1666
        %v2155 = vunpack.c.l.s8.bf16 %v1667
        %v2156 = vunpack.c.l.s8.bf16 %v1668
        %v2157 = vunpack.c.l.s8.bf16 %v1669
        %v2158 = vunpack.c.l.s8.bf16 %v1670
        %v2159 = vunpack.c.l.s8.bf16 %v1671
        %v2160 = vunpack.c.l.s8.bf16 %v1672
        %v2161 = vunpack.c.l.s8.bf16 %v1673
        %v2162 = vunpack.c.l.s8.bf16 %v1674
        %v2163 = vunpack.c.h.s8.bf16 %v1667
        %v2164 = vunpack.c.h.s8.bf16 %v1668
        %v2165 = vunpack.c.h.s8.bf16 %v1669
        %v2166 = vunpack.c.h.s8.bf16 %v1670
        %v2167 = vunpack.c.h.s8.bf16 %v1671
        %v2168 = vunpack.c.h.s8.bf16 %v1672
        %v2169 = vunpack.c.h.s8.bf16 %v1673
        %v2170 = vunpack.c.h.s8.bf16 %v1674
        %v2171 = vunpack.c.l.s8.bf16 %v1675
        %v2172 = vunpack.c.l.s8.bf16 %v1676
        %v2173 = vunpack.c.l.s8.bf16 %v1677
        %v2174 = vunpack.c.l.s8.bf16 %v1678
        %v2175 = vunpack.c.l.s8.bf16 %v1679
        %v2176 = vunpack.c.l.s8.bf16 %v1680
        %v2177 = vunpack.c.l.s8.bf16 %v1681
        %v2178 = vunpack.c.l.s8.bf16 %v1682
        %v2179 = vunpack.c.h.s8.bf16 %v1675
        %v2180 = vunpack.c.h.s8.bf16 %v1676
        %v2181 = vunpack.c.h.s8.bf16 %v1677
        %v2182 = vunpack.c.h.s8.bf16 %v1678
        %v2183 = vunpack.c.h.s8.bf16 %v1679
        %v2184 = vunpack.c.h.s8.bf16 %v1680
        %v2185 = vunpack.c.h.s8.bf16 %v1681
        %v2186 = vunpack.c.h.s8.bf16 %v1682
        %v2187 = vunpack.c.l.s8.bf16 %v1683
        %v2188 = vunpack.c.l.s8.bf16 %v1684
        %v2189 = vunpack.c.l.s8.bf16 %v1685
        %v2190 = vunpack.c.l.s8.bf16 %v1686
        %v2191 = vunpack.c.l.s8.bf16 %v1687
        %v2192 = vunpack.c.l.s8.bf16 %v1688
        %v2193 = vunpack.c.l.s8.bf16 %v1689
        %v2194 = vunpack.c.l.s8.bf16 %v1690
        %v2195 = vunpack.c.h.s8.bf16 %v1683
        %v2196 = vunpack.c.h.s8.bf16 %v1684
        %v2197 = vunpack.c.h.s8.bf16 %v1685
        %v2198 = vunpack.c.h.s8.bf16 %v1686
        %v2199 = vunpack.c.h.s8.bf16 %v1687
        %v2200 = vunpack.c.h.s8.bf16 %v1688
        %v2201 = vunpack.c.h.s8.bf16 %v1689
        %v2202 = vunpack.c.h.s8.bf16 %v1690
        %2203 = vmatprep.subr.bf16.mxu0 %v1748
        %2204 = vmatpush1.bf16.msra.mxu0 %v1747
        %2205 = vmatprep.subr.bf16.mxu0 %v1740
        %2206 = vmatpush1.bf16.msra.mxu0 %v1739
        %2207 = vmatprep.subr.bf16.mxu0 %v1732
        %2208 = vmatpush1.bf16.msra.mxu0 %v1731
        %2209 = vmatprep.subr.bf16.mxu0 %v1724
        %2210 = vmatpush1.bf16.msra.mxu0 %v1723
        %2211 = vmatprep.subr.bf16.mxu0 %v1716
        %2212 = vmatpush1.bf16.msra.mxu0 %v1715
        %2213 = vmatprep.subr.bf16.mxu0 %v1708
        %2214 = vmatpush1.bf16.msra.mxu0 %v1707
        %2215 = vmatprep.subr.bf16.mxu0 %v1700
        %2216 = vmatpush1.bf16.msra.mxu0 %v1699
        %2217 = vmatprep.subr.bf16.mxu0 %v1692
        %2218 = vmatpush1.bf16.msra.mxu0 %v1691
        %2219 = vmatprep.subr.bf16.mxu0 %v1812
        %2220 = vmatpush2.bf16.msra.mxu0 %v1811
        %2221 = vmatprep.subr.bf16.mxu0 %v1804
        %2222 = vmatpush2.bf16.msra.mxu0 %v1803
        %2223 = vmatprep.subr.bf16.mxu0 %v1796
        %2224 = vmatpush2.bf16.msra.mxu0 %v1795
        %2225 = vmatprep.subr.bf16.mxu0 %v1788
        %2226 = vmatpush2.bf16.msra.mxu0 %v1787
        %2227 = vmatprep.subr.bf16.mxu0 %v1780
        %2228 = vmatpush2.bf16.msra.mxu0 %v1779
        %2229 = vmatprep.subr.bf16.mxu0 %v1772
        %2230 = vmatpush2.bf16.msra.mxu0 %v1771
        %2231 = vmatprep.subr.bf16.mxu0 %v1764
        %2232 = vmatpush2.bf16.msra.mxu0 %v1763
        %2233 = vmatprep.subr.bf16.mxu0 %v1756
        %2234 = vmatpush2.bf16.msra.mxu0 %v1755
        %2235 = vmatprep.mubr.bf16.mxu0 %v1428
        %2236 = vmatmul.mubr.bf16.gmra.mxu0 %v1427
        %v2237 = vpop.f32.mrf.mxu0
        %v2238 = vadd.f32 0.0, %v2237
        %v2239 = vpop.f32.mrf.mxu0
        %v2240 = vadd.f32 0.0, %v2239
        %v2241 = vpop.f32.mrf.mxu0
        %v2242 = vpop.f32.mrf.mxu0
        %2243 = vdwg.mxu0
        %2244 = vmatprep.subr.bf16.mxu0 %v1876
        %2245 = vmatpush1.bf16.msra.mxu0 %v1875
        %2246 = vmatprep.subr.bf16.mxu0 %v1868
        %2247 = vmatpush1.bf16.msra.mxu0 %v1867
        %2248 = vmatprep.subr.bf16.mxu0 %v1860
        %2249 = vmatpush1.bf16.msra.mxu0 %v1859
        %2250 = vmatprep.subr.bf16.mxu0 %v1852
        %2251 = vmatpush1.bf16.msra.mxu0 %v1851
        %2252 = vmatprep.subr.bf16.mxu0 %v1844
        %2253 = vmatpush1.bf16.msra.mxu0 %v1843
        %2254 = vmatprep.subr.bf16.mxu0 %v1836
        %2255 = vmatpush1.bf16.msra.mxu0 %v1835
        %2256 = vmatprep.subr.bf16.mxu0 %v1828
        %2257 = vmatpush1.bf16.msra.mxu0 %v1827
        %2258 = vmatprep.subr.bf16.mxu0 %v1820
        %2259 = vmatpush1.bf16.msra.mxu0 %v1819
        %2260 = vmatprep.subr.bf16.mxu0 %v1940
        %2261 = vmatpush2.bf16.msra.mxu0 %v1939
        %2262 = vmatprep.subr.bf16.mxu0 %v1932
        %2263 = vmatpush2.bf16.msra.mxu0 %v1931
        %2264 = vmatprep.subr.bf16.mxu0 %v1924
        %2265 = vmatpush2.bf16.msra.mxu0 %v1923
        %2266 = vmatprep.subr.bf16.mxu0 %v1916
        %2267 = vmatpush2.bf16.msra.mxu0 %v1915
        %2268 = vmatprep.subr.bf16.mxu0 %v1908
        %2269 = vmatpush2.bf16.msra.mxu0 %v1907
        %2270 = vmatprep.subr.bf16.mxu0 %v1900
        %2271 = vmatpush2.bf16.msra.mxu0 %v1899
        %2272 = vmatprep.subr.bf16.mxu0 %v1892
        %2273 = vmatpush2.bf16.msra.mxu0 %v1891
        %2274 = vmatprep.subr.bf16.mxu0 %v1884
        %2275 = vmatpush2.bf16.msra.mxu0 %v1883
        %2276 = vmatprep.mubr.bf16.mxu0 %v1430
        %2277 = vmatmul.mubr.bf16.gmra.mxu0 %v1429
        %v2278 = vpop.f32.mrf.mxu0
        %v2279 = vadd.f32 %v2238, %v2278
        %v2280 = vpop.f32.mrf.mxu0
        %v2281 = vadd.f32 %v2240, %v2280
        %v2282 = vpop.f32.mrf.mxu0
        %v2283 = vpop.f32.mrf.mxu0
        %2284 = vdwg.mxu0
        %2285 = vmatprep.subr.bf16.mxu0 %v2004
        %2286 = vmatpush1.bf16.msra.mxu0 %v2003
        %2287 = vmatprep.subr.bf16.mxu0 %v1996
        %2288 = vmatpush1.bf16.msra.mxu0 %v1995
        %2289 = vmatprep.subr.bf16.mxu0 %v1988
        %2290 = vmatpush1.bf16.msra.mxu0 %v1987
        %2291 = vmatprep.subr.bf16.mxu0 %v1980
        %2292 = vmatpush1.bf16.msra.mxu0 %v1979
        %2293 = vmatprep.subr.bf16.mxu0 %v1972
        %2294 = vmatpush1.bf16.msra.mxu0 %v1971
        %2295 = vmatprep.subr.bf16.mxu0 %v1964
        %2296 = vmatpush1.bf16.msra.mxu0 %v1963
        %2297 = vmatprep.subr.bf16.mxu0 %v1956
        %2298 = vmatpush1.bf16.msra.mxu0 %v1955
        %2299 = vmatprep.subr.bf16.mxu0 %v1948
        %2300 = vmatpush1.bf16.msra.mxu0 %v1947
        %2301 = vmatprep.subr.bf16.mxu0 %v2068
        %2302 = vmatpush2.bf16.msra.mxu0 %v2067
        %2303 = vmatprep.subr.bf16.mxu0 %v2060
        %2304 = vmatpush2.bf16.msra.mxu0 %v2059
        %2305 = vmatprep.subr.bf16.mxu0 %v2052
        %2306 = vmatpush2.bf16.msra.mxu0 %v2051
        %2307 = vmatprep.subr.bf16.mxu0 %v2044
        %2308 = vmatpush2.bf16.msra.mxu0 %v2043
        %2309 = vmatprep.subr.bf16.mxu0 %v2036
        %2310 = vmatpush2.bf16.msra.mxu0 %v2035
        %2311 = vmatprep.subr.bf16.mxu0 %v2028
        %2312 = vmatpush2.bf16.msra.mxu0 %v2027
        %2313 = vmatprep.subr.bf16.mxu0 %v2020
        %2314 = vmatpush2.bf16.msra.mxu0 %v2019
        %2315 = vmatprep.subr.bf16.mxu0 %v2012
        %2316 = vmatpush2.bf16.msra.mxu0 %v2011
        %2317 = vmatprep.mubr.bf16.mxu0 %v1432
        %2318 = vmatmul.mubr.bf16.gmra.mxu0 %v1431
        %v2319 = vpop.f32.mrf.mxu0
        %v2320 = vadd.f32 %v2279, %v2319
        %v2321 = vpop.f32.mrf.mxu0
        %v2322 = vadd.f32 %v2281, %v2321
        %v2323 = vpop.f32.mrf.mxu0
        %v2324 = vpop.f32.mrf.mxu0
        %2325 = vdwg.mxu0
        %2326 = vmatprep.subr.bf16.mxu0 %v2132
        %2327 = vmatpush1.bf16.msra.mxu0 %v2131
        %2328 = vmatprep.subr.bf16.mxu0 %v2124
        %2329 = vmatpush1.bf16.msra.mxu0 %v2123
        %2330 = vmatprep.subr.bf16.mxu0 %v2116
        %2331 = vmatpush1.bf16.msra.mxu0 %v2115
        %2332 = vmatprep.subr.bf16.mxu0 %v2108
        %2333 = vmatpush1.bf16.msra.mxu0 %v2107
        %2334 = vmatprep.subr.bf16.mxu0 %v2100
        %2335 = vmatpush1.bf16.msra.mxu0 %v2099
        %2336 = vmatprep.subr.bf16.mxu0 %v2092
        %2337 = vmatpush1.bf16.msra.mxu0 %v2091
        %2338 = vmatprep.subr.bf16.mxu0 %v2084
        %2339 = vmatpush1.bf16.msra.mxu0 %v2083
        %2340 = vmatprep.subr.bf16.mxu0 %v2076
        %2341 = vmatpush1.bf16.msra.mxu0 %v2075
        %2342 = vmatprep.subr.bf16.mxu0 %v2196
        %2343 = vmatpush2.bf16.msra.mxu0 %v2195
        %2344 = vmatprep.subr.bf16.mxu0 %v2188
        %2345 = vmatpush2.bf16.msra.mxu0 %v2187
        %2346 = vmatprep.subr.bf16.mxu0 %v2180
        %2347 = vmatpush2.bf16.msra.mxu0 %v2179
        %2348 = vmatprep.subr.bf16.mxu0 %v2172
        %2349 = vmatpush2.bf16.msra.mxu0 %v2171
        %2350 = vmatprep.subr.bf16.mxu0 %v2164
        %2351 = vmatpush2.bf16.msra.mxu0 %v2163
        %2352 = vmatprep.subr.bf16.mxu0 %v2156
        %2353 = vmatpush2.bf16.msra.mxu0 %v2155
        %2354 = vmatprep.subr.bf16.mxu0 %v2148
        %2355 = vmatpush2.bf16.msra.mxu0 %v2147
        %2356 = vmatprep.subr.bf16.mxu0 %v2140
        %2357 = vmatpush2.bf16.msra.mxu0 %v2139
        %2358 = vmatprep.mubr.bf16.mxu0 %v1434
        %2359 = vmatmul.mubr.bf16.gmra.mxu0 %v1433
        %v2360 = vpop.f32.mrf.mxu0
        %v2361 = vadd.f32 %v2320, %v2360
        %v2362 = vpop.f32.mrf.mxu0
        %v2363 = vadd.f32 %v2322, %v2362
        %v2364 = vpop.f32.mrf.mxu0
        %v2365 = vpop.f32.mrf.mxu0
        %2366 = vdwg.mxu0
        %2367 = vmatprep.subr.bf16.mxu0 %v1750
        %2368 = vmatpush1.bf16.msra.mxu0 %v1749
        %2369 = vmatprep.subr.bf16.mxu0 %v1742
        %2370 = vmatpush1.bf16.msra.mxu0 %v1741
        %2371 = vmatprep.subr.bf16.mxu0 %v1734
        %2372 = vmatpush1.bf16.msra.mxu0 %v1733
        %2373 = vmatprep.subr.bf16.mxu0 %v1726
        %2374 = vmatpush1.bf16.msra.mxu0 %v1725
        %2375 = vmatprep.subr.bf16.mxu0 %v1718
        %2376 = vmatpush1.bf16.msra.mxu0 %v1717
        %2377 = vmatprep.subr.bf16.mxu0 %v1710
        %2378 = vmatpush1.bf16.msra.mxu0 %v1709
        %2379 = vmatprep.subr.bf16.mxu0 %v1702
        %2380 = vmatpush1.bf16.msra.mxu0 %v1701
        %2381 = vmatprep.subr.bf16.mxu0 %v1694
        %2382 = vmatpush1.bf16.msra.mxu0 %v1693
        %2383 = vmatprep.subr.bf16.mxu0 %v1814
        %2384 = vmatpush2.bf16.msra.mxu0 %v1813
        %2385 = vmatprep.subr.bf16.mxu0 %v1806
        %2386 = vmatpush2.bf16.msra.mxu0 %v1805
        %2387 = vmatprep.subr.bf16.mxu0 %v1798
        %2388 = vmatpush2.bf16.msra.mxu0 %v1797
        %2389 = vmatprep.subr.bf16.mxu0 %v1790
        %2390 = vmatpush2.bf16.msra.mxu0 %v1789
        %2391 = vmatprep.subr.bf16.mxu0 %v1782
        %2392 = vmatpush2.bf16.msra.mxu0 %v1781
        %2393 = vmatprep.subr.bf16.mxu0 %v1774
        %2394 = vmatpush2.bf16.msra.mxu0 %v1773
        %2395 = vmatprep.subr.bf16.mxu0 %v1766
        %2396 = vmatpush2.bf16.msra.mxu0 %v1765
        %2397 = vmatprep.subr.bf16.mxu0 %v1758
        %2398 = vmatpush2.bf16.msra.mxu0 %v1757
        %2399 = vmatprep.mubr.bf16.mxu0 %v1428
        %2400 = vmatmul.mubr.bf16.gmra.mxu0 %v1427
        %v2401 = vpop.f32.mrf.mxu0
        %v2402 = vadd.f32 0.0, %v2401
        %v2403 = vpop.f32.mrf.mxu0
        %v2404 = vadd.f32 0.0, %v2403
        %v2405 = vpop.f32.mrf.mxu0
        %v2406 = vpop.f32.mrf.mxu0
        %2407 = vdwg.mxu0
        %2408 = vmatprep.subr.bf16.mxu0 %v1878
        %2409 = vmatpush1.bf16.msra.mxu0 %v1877
        %2410 = vmatprep.subr.bf16.mxu0 %v1870
        %2411 = vmatpush1.bf16.msra.mxu0 %v1869
        %2412 = vmatprep.subr.bf16.mxu0 %v1862
        %2413 = vmatpush1.bf16.msra.mxu0 %v1861
        %2414 = vmatprep.subr.bf16.mxu0 %v1854
        %2415 = vmatpush1.bf16.msra.mxu0 %v1853
        %2416 = vmatprep.subr.bf16.mxu0 %v1846
        %2417 = vmatpush1.bf16.msra.mxu0 %v1845
        %2418 = vmatprep.subr.bf16.mxu0 %v1838
        %2419 = vmatpush1.bf16.msra.mxu0 %v1837
        %2420 = vmatprep.subr.bf16.mxu0 %v1830
        %2421 = vmatpush1.bf16.msra.mxu0 %v1829
        %2422 = vmatprep.subr.bf16.mxu0 %v1822
        %2423 = vmatpush1.bf16.msra.mxu0 %v1821
        %2424 = vmatprep.subr.bf16.mxu0 %v1942
        %2425 = vmatpush2.bf16.msra.mxu0 %v1941
        %2426 = vmatprep.subr.bf16.mxu0 %v1934
        %2427 = vmatpush2.bf16.msra.mxu0 %v1933
        %2428 = vmatprep.subr.bf16.mxu0 %v1926
        %2429 = vmatpush2.bf16.msra.mxu0 %v1925
        %2430 = vmatprep.subr.bf16.mxu0 %v1918
        %2431 = vmatpush2.bf16.msra.mxu0 %v1917
        %2432 = vmatprep.subr.bf16.mxu0 %v1910
        %2433 = vmatpush2.bf16.msra.mxu0 %v1909
        %2434 = vmatprep.subr.bf16.mxu0 %v1902
        %2435 = vmatpush2.bf16.msra.mxu0 %v1901
        %2436 = vmatprep.subr.bf16.mxu0 %v1894
        %2437 = vmatpush2.bf16.msra.mxu0 %v1893
        %2438 = vmatprep.subr.bf16.mxu0 %v1886
        %2439 = vmatpush2.bf16.msra.mxu0 %v1885
        %2440 = vmatprep.mubr.bf16.mxu0 %v1430
        %2441 = vmatmul.mubr.bf16.gmra.mxu0 %v1429
        %v2442 = vpop.f32.mrf.mxu0
        %v2443 = vadd.f32 %v2402, %v2442
        %v2444 = vpop.f32.mrf.mxu0
        %v2445 = vadd.f32 %v2404, %v2444
        %v2446 = vpop.f32.mrf.mxu0
        %v2447 = vpop.f32.mrf.mxu0
        %2448 = vdwg.mxu0
        %2449 = vmatprep.subr.bf16.mxu0 %v2006
        %2450 = vmatpush1.bf16.msra.mxu0 %v2005
        %2451 = vmatprep.subr.bf16.mxu0 %v1998
        %2452 = vmatpush1.bf16.msra.mxu0 %v1997
        %2453 = vmatprep.subr.bf16.mxu0 %v1990
        %2454 = vmatpush1.bf16.msra.mxu0 %v1989
        %2455 = vmatprep.subr.bf16.mxu0 %v1982
        %2456 = vmatpush1.bf16.msra.mxu0 %v1981
        %2457 = vmatprep.subr.bf16.mxu0 %v1974
        %2458 = vmatpush1.bf16.msra.mxu0 %v1973
        %2459 = vmatprep.subr.bf16.mxu0 %v1966
        %2460 = vmatpush1.bf16.msra.mxu0 %v1965
        %2461 = vmatprep.subr.bf16.mxu0 %v1958
        %2462 = vmatpush1.bf16.msra.mxu0 %v1957
        %2463 = vmatprep.subr.bf16.mxu0 %v1950
        %2464 = vmatpush1.bf16.msra.mxu0 %v1949
        %2465 = vmatprep.subr.bf16.mxu0 %v2070
        %2466 = vmatpush2.bf16.msra.mxu0 %v2069
        %2467 = vmatprep.subr.bf16.mxu0 %v2062
        %2468 = vmatpush2.bf16.msra.mxu0 %v2061
        %2469 = vmatprep.subr.bf16.mxu0 %v2054
        %2470 = vmatpush2.bf16.msra.mxu0 %v2053
        %2471 = vmatprep.subr.bf16.mxu0 %v2046
        %2472 = vmatpush2.bf16.msra.mxu0 %v2045
        %2473 = vmatprep.subr.bf16.mxu0 %v2038
        %2474 = vmatpush2.bf16.msra.mxu0 %v2037
        %2475 = vmatprep.subr.bf16.mxu0 %v2030
        %2476 = vmatpush2.bf16.msra.mxu0 %v2029
        %2477 = vmatprep.subr.bf16.mxu0 %v2022
        %2478 = vmatpush2.bf16.msra.mxu0 %v2021
        %2479 = vmatprep.subr.bf16.mxu0 %v2014
        %2480 = vmatpush2.bf16.msra.mxu0 %v2013
        %2481 = vmatprep.mubr.bf16.mxu0 %v1432
        %2482 = vmatmul.mubr.bf16.gmra.mxu0 %v1431
        %v2483 = vpop.f32.mrf.mxu0
        %v2484 = vadd.f32 %v2443, %v2483
        %v2485 = vpop.f32.mrf.mxu0
        %v2486 = vadd.f32 %v2445, %v2485
        %v2487 = vpop.f32.mrf.mxu0
        %v2488 = vpop.f32.mrf.mxu0
        %2489 = vdwg.mxu0
        %2490 = vmatprep.subr.bf16.mxu0 %v2134
        %2491 = vmatpush1.bf16.msra.mxu0 %v2133
        %2492 = vmatprep.subr.bf16.mxu0 %v2126
        %2493 = vmatpush1.bf16.msra.mxu0 %v2125
        %2494 = vmatprep.subr.bf16.mxu0 %v2118
        %2495 = vmatpush1.bf16.msra.mxu0 %v2117
        %2496 = vmatprep.subr.bf16.mxu0 %v2110
        %2497 = vmatpush1.bf16.msra.mxu0 %v2109
        %2498 = vmatprep.subr.bf16.mxu0 %v2102
        %2499 = vmatpush1.bf16.msra.mxu0 %v2101
        %2500 = vmatprep.subr.bf16.mxu0 %v2094
        %2501 = vmatpush1.bf16.msra.mxu0 %v2093
        %2502 = vmatprep.subr.bf16.mxu0 %v2086
        %2503 = vmatpush1.bf16.msra.mxu0 %v2085
        %2504 = vmatprep.subr.bf16.mxu0 %v2078
        %2505 = vmatpush1.bf16.msra.mxu0 %v2077
        %2506 = vmatprep.subr.bf16.mxu0 %v2198
        %2507 = vmatpush2.bf16.msra.mxu0 %v2197
        %2508 = vmatprep.subr.bf16.mxu0 %v2190
        %2509 = vmatpush2.bf16.msra.mxu0 %v2189
        %2510 = vmatprep.subr.bf16.mxu0 %v2182
        %2511 = vmatpush2.bf16.msra.mxu0 %v2181
        %2512 = vmatprep.subr.bf16.mxu0 %v2174
        %2513 = vmatpush2.bf16.msra.mxu0 %v2173
        %2514 = vmatprep.subr.bf16.mxu0 %v2166
        %2515 = vmatpush2.bf16.msra.mxu0 %v2165
        %2516 = vmatprep.subr.bf16.mxu0 %v2158
        %2517 = vmatpush2.bf16.msra.mxu0 %v2157
        %2518 = vmatprep.subr.bf16.mxu0 %v2150
        %2519 = vmatpush2.bf16.msra.mxu0 %v2149
        %2520 = vmatprep.subr.bf16.mxu0 %v2142
        %2521 = vmatpush2.bf16.msra.mxu0 %v2141
        %2522 = vmatprep.mubr.bf16.mxu0 %v1434
        %2523 = vmatmul.mubr.bf16.gmra.mxu0 %v1433
        %v2524 = vpop.f32.mrf.mxu0
        %v2525 = vadd.f32 %v2484, %v2524
        %v2526 = vpop.f32.mrf.mxu0
        %v2527 = vadd.f32 %v2486, %v2526
        %v2528 = vpop.f32.mrf.mxu0
        %v2529 = vpop.f32.mrf.mxu0
        %2530 = vdwg.mxu0
        %2531 = vmatprep.subr.bf16.mxu0 %v1752
        %2532 = vmatpush1.bf16.msra.mxu0 %v1751
        %2533 = vmatprep.subr.bf16.mxu0 %v1744
        %2534 = vmatpush1.bf16.msra.mxu0 %v1743
        %2535 = vmatprep.subr.bf16.mxu0 %v1736
        %2536 = vmatpush1.bf16.msra.mxu0 %v1735
        %2537 = vmatprep.subr.bf16.mxu0 %v1728
        %2538 = vmatpush1.bf16.msra.mxu0 %v1727
        %2539 = vmatprep.subr.bf16.mxu0 %v1720
        %2540 = vmatpush1.bf16.msra.mxu0 %v1719
        %2541 = vmatprep.subr.bf16.mxu0 %v1712
        %2542 = vmatpush1.bf16.msra.mxu0 %v1711
        %2543 = vmatprep.subr.bf16.mxu0 %v1704
        %2544 = vmatpush1.bf16.msra.mxu0 %v1703
        %2545 = vmatprep.subr.bf16.mxu0 %v1696
        %2546 = vmatpush1.bf16.msra.mxu0 %v1695
        %2547 = vmatprep.subr.bf16.mxu0 %v1816
        %2548 = vmatpush2.bf16.msra.mxu0 %v1815
        %2549 = vmatprep.subr.bf16.mxu0 %v1808
        %2550 = vmatpush2.bf16.msra.mxu0 %v1807
        %2551 = vmatprep.subr.bf16.mxu0 %v1800
        %2552 = vmatpush2.bf16.msra.mxu0 %v1799
        %2553 = vmatprep.subr.bf16.mxu0 %v1792
        %2554 = vmatpush2.bf16.msra.mxu0 %v1791
        %2555 = vmatprep.subr.bf16.mxu0 %v1784
        %2556 = vmatpush2.bf16.msra.mxu0 %v1783
        %2557 = vmatprep.subr.bf16.mxu0 %v1776
        %2558 = vmatpush2.bf16.msra.mxu0 %v1775
        %2559 = vmatprep.subr.bf16.mxu0 %v1768
        %2560 = vmatpush2.bf16.msra.mxu0 %v1767
        %2561 = vmatprep.subr.bf16.mxu0 %v1760
        %2562 = vmatpush2.bf16.msra.mxu0 %v1759
        %2563 = vmatprep.mubr.bf16.mxu0 %v1428
        %2564 = vmatmul.mubr.bf16.gmra.mxu0 %v1427
        %v2565 = vpop.f32.mrf.mxu0
        %v2566 = vadd.f32 0.0, %v2565
        %v2567 = vpop.f32.mrf.mxu0
        %v2568 = vadd.f32 0.0, %v2567
        %v2569 = vpop.f32.mrf.mxu0
        %v2570 = vpop.f32.mrf.mxu0
        %2571 = vdwg.mxu0
        %2572 = vmatprep.subr.bf16.mxu0 %v1880
        %2573 = vmatpush1.bf16.msra.mxu0 %v1879
        %2574 = vmatprep.subr.bf16.mxu0 %v1872
        %2575 = vmatpush1.bf16.msra.mxu0 %v1871
        %2576 = vmatprep.subr.bf16.mxu0 %v1864
        %2577 = vmatpush1.bf16.msra.mxu0 %v1863
        %2578 = vmatprep.subr.bf16.mxu0 %v1856
        %2579 = vmatpush1.bf16.msra.mxu0 %v1855
        %2580 = vmatprep.subr.bf16.mxu0 %v1848
        %2581 = vmatpush1.bf16.msra.mxu0 %v1847
        %2582 = vmatprep.subr.bf16.mxu0 %v1840
        %2583 = vmatpush1.bf16.msra.mxu0 %v1839
        %2584 = vmatprep.subr.bf16.mxu0 %v1832
        %2585 = vmatpush1.bf16.msra.mxu0 %v1831
        %2586 = vmatprep.subr.bf16.mxu0 %v1824
        %2587 = vmatpush1.bf16.msra.mxu0 %v1823
        %2588 = vmatprep.subr.bf16.mxu0 %v1944
        %2589 = vmatpush2.bf16.msra.mxu0 %v1943
        %2590 = vmatprep.subr.bf16.mxu0 %v1936
        %2591 = vmatpush2.bf16.msra.mxu0 %v1935
        %2592 = vmatprep.subr.bf16.mxu0 %v1928
        %2593 = vmatpush2.bf16.msra.mxu0 %v1927
        %2594 = vmatprep.subr.bf16.mxu0 %v1920
        %2595 = vmatpush2.bf16.msra.mxu0 %v1919
        %2596 = vmatprep.subr.bf16.mxu0 %v1912
        %2597 = vmatpush2.bf16.msra.mxu0 %v1911
        %2598 = vmatprep.subr.bf16.mxu0 %v1904
        %2599 = vmatpush2.bf16.msra.mxu0 %v1903
        %2600 = vmatprep.subr.bf16.mxu0 %v1896
        %2601 = vmatpush2.bf16.msra.mxu0 %v1895
        %2602 = vmatprep.subr.bf16.mxu0 %v1888
        %2603 = vmatpush2.bf16.msra.mxu0 %v1887
        %2604 = vmatprep.mubr.bf16.mxu0 %v1430
        %2605 = vmatmul.mubr.bf16.gmra.mxu0 %v1429
        %v2606 = vpop.f32.mrf.mxu0
        %v2607 = vadd.f32 %v2566, %v2606
        %v2608 = vpop.f32.mrf.mxu0
        %v2609 = vadd.f32 %v2568, %v2608
        %v2610 = vpop.f32.mrf.mxu0
        %v2611 = vpop.f32.mrf.mxu0
        %2612 = vdwg.mxu0
        %2613 = vmatprep.subr.bf16.mxu0 %v2008
        %2614 = vmatpush1.bf16.msra.mxu0 %v2007
        %2615 = vmatprep.subr.bf16.mxu0 %v2000
        %2616 = vmatpush1.bf16.msra.mxu0 %v1999
        %2617 = vmatprep.subr.bf16.mxu0 %v1992
        %2618 = vmatpush1.bf16.msra.mxu0 %v1991
        %2619 = vmatprep.subr.bf16.mxu0 %v1984
        %2620 = vmatpush1.bf16.msra.mxu0 %v1983
        %2621 = vmatprep.subr.bf16.mxu0 %v1976
        %2622 = vmatpush1.bf16.msra.mxu0 %v1975
        %2623 = vmatprep.subr.bf16.mxu0 %v1968
        %2624 = vmatpush1.bf16.msra.mxu0 %v1967
        %2625 = vmatprep.subr.bf16.mxu0 %v1960
        %2626 = vmatpush1.bf16.msra.mxu0 %v1959
        %2627 = vmatprep.subr.bf16.mxu0 %v1952
        %2628 = vmatpush1.bf16.msra.mxu0 %v1951
        %2629 = vmatprep.subr.bf16.mxu0 %v2072
        %2630 = vmatpush2.bf16.msra.mxu0 %v2071
        %2631 = vmatprep.subr.bf16.mxu0 %v2064
        %2632 = vmatpush2.bf16.msra.mxu0 %v2063
        %2633 = vmatprep.subr.bf16.mxu0 %v2056
        %2634 = vmatpush2.bf16.msra.mxu0 %v2055
        %2635 = vmatprep.subr.bf16.mxu0 %v2048
        %2636 = vmatpush2.bf16.msra.mxu0 %v2047
        %2637 = vmatprep.subr.bf16.mxu0 %v2040
        %2638 = vmatpush2.bf16.msra.mxu0 %v2039
        %2639 = vmatprep.subr.bf16.mxu0 %v2032
        %2640 = vmatpush2.bf16.msra.mxu0 %v2031
        %2641 = vmatprep.subr.bf16.mxu0 %v2024
        %2642 = vmatpush2.bf16.msra.mxu0 %v2023
        %2643 = vmatprep.subr.bf16.mxu0 %v2016
        %2644 = vmatpush2.bf16.msra.mxu0 %v2015
        %2645 = vmatprep.mubr.bf16.mxu0 %v1432
        %2646 = vmatmul.mubr.bf16.gmra.mxu0 %v1431
        %v2647 = vpop.f32.mrf.mxu0
        %v2648 = vadd.f32 %v2607, %v2647
        %v2649 = vpop.f32.mrf.mxu0
        %v2650 = vadd.f32 %v2609, %v2649
        %v2651 = vpop.f32.mrf.mxu0
        %v2652 = vpop.f32.mrf.mxu0
        %2653 = vdwg.mxu0
        %2654 = vmatprep.subr.bf16.mxu0 %v2136
        %2655 = vmatpush1.bf16.msra.mxu0 %v2135
        %2656 = vmatprep.subr.bf16.mxu0 %v2128
        %2657 = vmatpush1.bf16.msra.mxu0 %v2127
        %2658 = vmatprep.subr.bf16.mxu0 %v2120
        %2659 = vmatpush1.bf16.msra.mxu0 %v2119
        %2660 = vmatprep.subr.bf16.mxu0 %v2112
        %2661 = vmatpush1.bf16.msra.mxu0 %v2111
        %2662 = vmatprep.subr.bf16.mxu0 %v2104
        %2663 = vmatpush1.bf16.msra.mxu0 %v2103
        %2664 = vmatprep.subr.bf16.mxu0 %v2096
        %2665 = vmatpush1.bf16.msra.mxu0 %v2095
        %2666 = vmatprep.subr.bf16.mxu0 %v2088
        %2667 = vmatpush1.bf16.msra.mxu0 %v2087
        %2668 = vmatprep.subr.bf16.mxu0 %v2080
        %2669 = vmatpush1.bf16.msra.mxu0 %v2079
        %2670 = vmatprep.subr.bf16.mxu0 %v2200
        %2671 = vmatpush2.bf16.msra.mxu0 %v2199
        %2672 = vmatprep.subr.bf16.mxu0 %v2192
        %2673 = vmatpush2.bf16.msra.mxu0 %v2191
        %2674 = vmatprep.subr.bf16.mxu0 %v2184
        %2675 = vmatpush2.bf16.msra.mxu0 %v2183
        %2676 = vmatprep.subr.bf16.mxu0 %v2176
        %2677 = vmatpush2.bf16.msra.mxu0 %v2175
        %2678 = vmatprep.subr.bf16.mxu0 %v2168
        %2679 = vmatpush2.bf16.msra.mxu0 %v2167
        %2680 = vmatprep.subr.bf16.mxu0 %v2160
        %2681 = vmatpush2.bf16.msra.mxu0 %v2159
        %2682 = vmatprep.subr.bf16.mxu0 %v2152
        %2683 = vmatpush2.bf16.msra.mxu0 %v2151
        %2684 = vmatprep.subr.bf16.mxu0 %v2144
        %2685 = vmatpush2.bf16.msra.mxu0 %v2143
        %2686 = vmatprep.mubr.bf16.mxu0 %v1434
        %2687 = vmatmul.mubr.bf16.gmra.mxu0 %v1433
        %v2688 = vpop.f32.mrf.mxu0
        %v2689 = vadd.f32 %v2648, %v2688
        %v2690 = vpop.f32.mrf.mxu0
        %v2691 = vadd.f32 %v2650, %v2690
        %v2692 = vpop.f32.mrf.mxu0
        %v2693 = vpop.f32.mrf.mxu0
        %2694 = vdwg.mxu0
        %2695 = vmatprep.subr.bf16.mxu0 %v1754
        %2696 = vmatpush1.bf16.msra.mxu0 %v1753
        %2697 = vmatprep.subr.bf16.mxu0 %v1746
        %2698 = vmatpush1.bf16.msra.mxu0 %v1745
        %2699 = vmatprep.subr.bf16.mxu0 %v1738
        %2700 = vmatpush1.bf16.msra.mxu0 %v1737
        %2701 = vmatprep.subr.bf16.mxu0 %v1730
        %2702 = vmatpush1.bf16.msra.mxu0 %v1729
        %2703 = vmatprep.subr.bf16.mxu0 %v1722
        %2704 = vmatpush1.bf16.msra.mxu0 %v1721
        %2705 = vmatprep.subr.bf16.mxu0 %v1714
        %2706 = vmatpush1.bf16.msra.mxu0 %v1713
        %2707 = vmatprep.subr.bf16.mxu0 %v1706
        %2708 = vmatpush1.bf16.msra.mxu0 %v1705
        %2709 = vmatprep.subr.bf16.mxu0 %v1698
        %2710 = vmatpush1.bf16.msra.mxu0 %v1697
        %2711 = vmatprep.subr.bf16.mxu0 %v1818
        %2712 = vmatpush2.bf16.msra.mxu0 %v1817
        %2713 = vmatprep.subr.bf16.mxu0 %v1810
        %2714 = vmatpush2.bf16.msra.mxu0 %v1809
        %2715 = vmatprep.subr.bf16.mxu0 %v1802
        %2716 = vmatpush2.bf16.msra.mxu0 %v1801
        %2717 = vmatprep.subr.bf16.mxu0 %v1794
        %2718 = vmatpush2.bf16.msra.mxu0 %v1793
        %2719 = vmatprep.subr.bf16.mxu0 %v1786
        %2720 = vmatpush2.bf16.msra.mxu0 %v1785
        %2721 = vmatprep.subr.bf16.mxu0 %v1778
        %2722 = vmatpush2.bf16.msra.mxu0 %v1777
        %2723 = vmatprep.subr.bf16.mxu0 %v1770
        %2724 = vmatpush2.bf16.msra.mxu0 %v1769
        %2725 = vmatprep.subr.bf16.mxu0 %v1762
        %2726 = vmatpush2.bf16.msra.mxu0 %v1761
        %2727 = vmatprep.mubr.bf16.mxu0 %v1428
        %2728 = vmatmul.mubr.bf16.gmra.mxu0 %v1427
        %v2729 = vpop.f32.mrf.mxu0
        %v2730 = vadd.f32 0.0, %v2729
        %v2731 = vpop.f32.mrf.mxu0
        %v2732 = vadd.f32 0.0, %v2731
        %v2733 = vpop.f32.mrf.mxu0
        %v2734 = vpop.f32.mrf.mxu0
        %2735 = vdwg.mxu0
        %2736 = vmatprep.subr.bf16.mxu0 %v1882
        %2737 = vmatpush1.bf16.msra.mxu0 %v1881
        %2738 = vmatprep.subr.bf16.mxu0 %v1874
        %2739 = vmatpush1.bf16.msra.mxu0 %v1873
        %2740 = vmatprep.subr.bf16.mxu0 %v1866
        %2741 = vmatpush1.bf16.msra.mxu0 %v1865
        %2742 = vmatprep.subr.bf16.mxu0 %v1858
        %2743 = vmatpush1.bf16.msra.mxu0 %v1857
        %2744 = vmatprep.subr.bf16.mxu0 %v1850
        %2745 = vmatpush1.bf16.msra.mxu0 %v1849
        %2746 = vmatprep.subr.bf16.mxu0 %v1842
        %2747 = vmatpush1.bf16.msra.mxu0 %v1841
        %2748 = vmatprep.subr.bf16.mxu0 %v1834
        %2749 = vmatpush1.bf16.msra.mxu0 %v1833
        %2750 = vmatprep.subr.bf16.mxu0 %v1826
        %2751 = vmatpush1.bf16.msra.mxu0 %v1825
        %2752 = vmatprep.subr.bf16.mxu0 %v1946
        %2753 = vmatpush2.bf16.msra.mxu0 %v1945
        %2754 = vmatprep.subr.bf16.mxu0 %v1938
        %2755 = vmatpush2.bf16.msra.mxu0 %v1937
        %2756 = vmatprep.subr.bf16.mxu0 %v1930
        %2757 = vmatpush2.bf16.msra.mxu0 %v1929
        %2758 = vmatprep.subr.bf16.mxu0 %v1922
        %2759 = vmatpush2.bf16.msra.mxu0 %v1921
        %2760 = vmatprep.subr.bf16.mxu0 %v1914
        %2761 = vmatpush2.bf16.msra.mxu0 %v1913
        %2762 = vmatprep.subr.bf16.mxu0 %v1906
        %2763 = vmatpush2.bf16.msra.mxu0 %v1905
        %2764 = vmatprep.subr.bf16.mxu0 %v1898
        %2765 = vmatpush2.bf16.msra.mxu0 %v1897
        %2766 = vmatprep.subr.bf16.mxu0 %v1890
        %2767 = vmatpush2.bf16.msra.mxu0 %v1889
        %2768 = vmatprep.mubr.bf16.mxu0 %v1430
        %2769 = vmatmul.mubr.bf16.gmra.mxu0 %v1429
        %v2770 = vpop.f32.mrf.mxu0
        %v2771 = vadd.f32 %v2730, %v2770
        %v2772 = vpop.f32.mrf.mxu0
        %v2773 = vadd.f32 %v2732, %v2772
        %v2774 = vpop.f32.mrf.mxu0
        %v2775 = vpop.f32.mrf.mxu0
        %2776 = vdwg.mxu0
        %2777 = vmatprep.subr.bf16.mxu0 %v2010
        %2778 = vmatpush1.bf16.msra.mxu0 %v2009
        %2779 = vmatprep.subr.bf16.mxu0 %v2002
        %2780 = vmatpush1.bf16.msra.mxu0 %v2001
        %2781 = vmatprep.subr.bf16.mxu0 %v1994
        %2782 = vmatpush1.bf16.msra.mxu0 %v1993
        %2783 = vmatprep.subr.bf16.mxu0 %v1986
        %2784 = vmatpush1.bf16.msra.mxu0 %v1985
        %2785 = vmatprep.subr.bf16.mxu0 %v1978
        %2786 = vmatpush1.bf16.msra.mxu0 %v1977
        %2787 = vmatprep.subr.bf16.mxu0 %v1970
        %2788 = vmatpush1.bf16.msra.mxu0 %v1969
        %2789 = vmatprep.subr.bf16.mxu0 %v1962
        %2790 = vmatpush1.bf16.msra.mxu0 %v1961
        %2791 = vmatprep.subr.bf16.mxu0 %v1954
        %2792 = vmatpush1.bf16.msra.mxu0 %v1953
        %2793 = vmatprep.subr.bf16.mxu0 %v2074
        %2794 = vmatpush2.bf16.msra.mxu0 %v2073
        %2795 = vmatprep.subr.bf16.mxu0 %v2066
        %2796 = vmatpush2.bf16.msra.mxu0 %v2065
        %2797 = vmatprep.subr.bf16.mxu0 %v2058
        %2798 = vmatpush2.bf16.msra.mxu0 %v2057
        %2799 = vmatprep.subr.bf16.mxu0 %v2050
        %2800 = vmatpush2.bf16.msra.mxu0 %v2049
        %2801 = vmatprep.subr.bf16.mxu0 %v2042
        %2802 = vmatpush2.bf16.msra.mxu0 %v2041
        %2803 = vmatprep.subr.bf16.mxu0 %v2034
        %2804 = vmatpush2.bf16.msra.mxu0 %v2033
        %2805 = vmatprep.subr.bf16.mxu0 %v2026
        %2806 = vmatpush2.bf16.msra.mxu0 %v2025
        %2807 = vmatprep.subr.bf16.mxu0 %v2018
        %2808 = vmatpush2.bf16.msra.mxu0 %v2017
        %2809 = vmatprep.mubr.bf16.mxu0 %v1432
        %2810 = vmatmul.mubr.bf16.gmra.mxu0 %v1431
        %v2811 = vpop.f32.mrf.mxu0
        %v2812 = vadd.f32 %v2771, %v2811
        %v2813 = vpop.f32.mrf.mxu0
        %v2814 = vadd.f32 %v2773, %v2813
        %v2815 = vpop.f32.mrf.mxu0
        %v2816 = vpop.f32.mrf.mxu0
        %2817 = vdwg.mxu0
        %2818 = vmatprep.subr.bf16.mxu0 %v2138
        %2819 = vmatpush1.bf16.msra.mxu0 %v2137
        %2820 = vmatprep.subr.bf16.mxu0 %v2130
        %2821 = vmatpush1.bf16.msra.mxu0 %v2129
        %2822 = vmatprep.subr.bf16.mxu0 %v2122
        %2823 = vmatpush1.bf16.msra.mxu0 %v2121
        %2824 = vmatprep.subr.bf16.mxu0 %v2114
        %2825 = vmatpush1.bf16.msra.mxu0 %v2113
        %2826 = vmatprep.subr.bf16.mxu0 %v2106
        %2827 = vmatpush1.bf16.msra.mxu0 %v2105
        %2828 = vmatprep.subr.bf16.mxu0 %v2098
        %2829 = vmatpush1.bf16.msra.mxu0 %v2097
        %2830 = vmatprep.subr.bf16.mxu0 %v2090
        %2831 = vmatpush1.bf16.msra.mxu0 %v2089
        %2832 = vmatprep.subr.bf16.mxu0 %v2082
        %2833 = vmatpush1.bf16.msra.mxu0 %v2081
        %2834 = vmatprep.subr.bf16.mxu0 %v2202
        %2835 = vmatpush2.bf16.msra.mxu0 %v2201
        %2836 = vmatprep.subr.bf16.mxu0 %v2194
        %2837 = vmatpush2.bf16.msra.mxu0 %v2193
        %2838 = vmatprep.subr.bf16.mxu0 %v2186
        %2839 = vmatpush2.bf16.msra.mxu0 %v2185
        %2840 = vmatprep.subr.bf16.mxu0 %v2178
        %2841 = vmatpush2.bf16.msra.mxu0 %v2177
        %2842 = vmatprep.subr.bf16.mxu0 %v2170
        %2843 = vmatpush2.bf16.msra.mxu0 %v2169
        %2844 = vmatprep.subr.bf16.mxu0 %v2162
        %2845 = vmatpush2.bf16.msra.mxu0 %v2161
        %2846 = vmatprep.subr.bf16.mxu0 %v2154
        %2847 = vmatpush2.bf16.msra.mxu0 %v2153
        %2848 = vmatprep.subr.bf16.mxu0 %v2146
        %2849 = vmatpush2.bf16.msra.mxu0 %v2145
        %2850 = vmatprep.mubr.bf16.mxu0 %v1434
        %2851 = vmatmul.mubr.bf16.gmra.mxu0 %v1433
        %v2852 = vpop.f32.mrf.mxu0
        %v2853 = vadd.f32 %v2812, %v2852
        %v2854 = vpop.f32.mrf.mxu0
        %v2855 = vadd.f32 %v2814, %v2854
        %v2856 = vpop.f32.mrf.mxu0
        %v2857 = vpop.f32.mrf.mxu0
        %2858 = vdwg.mxu0
        %v2861 = vlaneseq
        %v2862 = vshrl.u32 %v2861, 7
        %v2863 = vsub.s32 0, %v2862
        %v2864 = vrot.slane %v1417, %v2863
        %v2865 = vlaneseq
        %v2866 = vshrl.u32 %v2865, 7
        %v2867 = vsub.s32 2, %v2866
        %v2868 = vrot.slane %v1417, %v2867
        %v2869 = vlaneseq
        %v2870 = vshrl.u32 %v2869, 7
        %v2871 = vsub.s32 4, %v2870
        %v2872 = vrot.slane %v1417, %v2871
        %v2873 = vlaneseq
        %v2874 = vshrl.u32 %v2873, 7
        %v2875 = vsub.s32 6, %v2874
        %v2876 = vrot.slane %v1417, %v2875
        %v2877 = vlaneseq
        %v2878 = vshrl.u32 %v2877, 7
        %v2879 = vsub.s32 0, %v2878
        %v2880 = vrot.slane %v1418, %v2879
        %v2881 = vlaneseq
        %v2882 = vshrl.u32 %v2881, 7
        %v2883 = vsub.s32 2, %v2882
        %v2884 = vrot.slane %v1418, %v2883
        %v2885 = vlaneseq
        %v2886 = vshrl.u32 %v2885, 7
        %v2887 = vsub.s32 4, %v2886
        %v2888 = vrot.slane %v1418, %v2887
        %v2889 = vlaneseq
        %v2890 = vshrl.u32 %v2889, 7
        %v2891 = vsub.s32 6, %v2890
        %v2892 = vrot.slane %v1418, %v2891
        %v2901 = vlaneseq
        %v2902 = vshrl.u32 %v2901, 7
        %v2903 = vsub.s32 0, %v2902
        %v2904 = vrot.slane %v2864, %v2903
        %v2905 = vlaneseq
        %v2906 = vshrl.u32 %v2905, 7
        %v2907 = vsub.s32 0, %v2906
        %v2908 = vrot.slane %v2868, %v2907
        %v2909 = vlaneseq
        %v2910 = vshrl.u32 %v2909, 7
        %v2911 = vsub.s32 0, %v2910
        %v2912 = vrot.slane %v2872, %v2911
        %v2913 = vlaneseq
        %v2914 = vshrl.u32 %v2913, 7
        %v2915 = vsub.s32 0, %v2914
        %v2916 = vrot.slane %v2876, %v2915
        %v2917 = vlaneseq
        %v2918 = vshrl.u32 %v2917, 7
        %v2919 = vsub.s32 0, %v2918
        %v2920 = vrot.slane %v2880, %v2919
        %v2921 = vlaneseq
        %v2922 = vshrl.u32 %v2921, 7
        %v2923 = vsub.s32 0, %v2922
        %v2924 = vrot.slane %v2884, %v2923
        %v2925 = vlaneseq
        %v2926 = vshrl.u32 %v2925, 7
        %v2927 = vsub.s32 0, %v2926
        %v2928 = vrot.slane %v2888, %v2927
        %v2929 = vlaneseq
        %v2930 = vshrl.u32 %v2929, 7
        %v2931 = vsub.s32 0, %v2930
        %v2932 = vrot.slane %v2892, %v2931
        %v2933 = vmul.f32 %v2361, %v2904
        %v2934 = vmul.f32 %v2363, %v2908
        %v2935 = vmul.f32 %v2525, %v2912
        %v2936 = vmul.f32 %v2527, %v2916
        %v2937 = vmul.f32 %v2689, %v2920
        %v2938 = vmul.f32 %v2691, %v2924
        %v2939 = vmul.f32 %v2853, %v2928
        %v2940 = vmul.f32 %v2855, %v2932
        %v2941 = vlaneseq
        %v2942 = vshrl.u32 %v2941, 7
        %v2943 = vsub.s32 1, %v2942
        %v2944 = vrot.slane %v1417, %v2943
        %v2945 = vlaneseq
        %v2946 = vshrl.u32 %v2945, 7
        %v2947 = vsub.s32 3, %v2946
        %v2948 = vrot.slane %v1417, %v2947
        %v2949 = vlaneseq
        %v2950 = vshrl.u32 %v2949, 7
        %v2951 = vsub.s32 5, %v2950
        %v2952 = vrot.slane %v1417, %v2951
        %v2953 = vlaneseq
        %v2954 = vshrl.u32 %v2953, 7
        %v2955 = vsub.s32 7, %v2954
        %v2956 = vrot.slane %v1417, %v2955
        %v2957 = vlaneseq
        %v2958 = vshrl.u32 %v2957, 7
        %v2959 = vsub.s32 1, %v2958
        %v2960 = vrot.slane %v1418, %v2959
        %v2961 = vlaneseq
        %v2962 = vshrl.u32 %v2961, 7
        %v2963 = vsub.s32 3, %v2962
        %v2964 = vrot.slane %v1418, %v2963
        %v2965 = vlaneseq
        %v2966 = vshrl.u32 %v2965, 7
        %v2967 = vsub.s32 5, %v2966
        %v2968 = vrot.slane %v1418, %v2967
        %v2969 = vlaneseq
        %v2970 = vshrl.u32 %v2969, 7
        %v2971 = vsub.s32 7, %v2970
        %v2972 = vrot.slane %v1418, %v2971
        %v2981 = vlaneseq
        %v2982 = vshrl.u32 %v2981, 7
        %v2983 = vsub.s32 1, %v2982
        %v2984 = vrot.slane %v2944, %v2983
        %v2985 = vlaneseq
        %v2986 = vshrl.u32 %v2985, 7
        %v2987 = vsub.s32 1, %v2986
        %v2988 = vrot.slane %v2948, %v2987
        %v2989 = vlaneseq
        %v2990 = vshrl.u32 %v2989, 7
        %v2991 = vsub.s32 1, %v2990
        %v2992 = vrot.slane %v2952, %v2991
        %v2993 = vlaneseq
        %v2994 = vshrl.u32 %v2993, 7
        %v2995 = vsub.s32 1, %v2994
        %v2996 = vrot.slane %v2956, %v2995
        %v2997 = vlaneseq
        %v2998 = vshrl.u32 %v2997, 7
        %v2999 = vsub.s32 1, %v2998
        %v3000 = vrot.slane %v2960, %v2999
        %v3001 = vlaneseq
        %v3002 = vshrl.u32 %v3001, 7
        %v3003 = vsub.s32 1, %v3002
        %v3004 = vrot.slane %v2964, %v3003
        %v3005 = vlaneseq
        %v3006 = vshrl.u32 %v3005, 7
        %v3007 = vsub.s32 1, %v3006
        %v3008 = vrot.slane %v2968, %v3007
        %v3009 = vlaneseq
        %v3010 = vshrl.u32 %v3009, 7
        %v3011 = vsub.s32 1, %v3010
        %v3012 = vrot.slane %v2972, %v3011
        %v3013 = vadd.f32 %v2933, %v2984
        %v3014 = vadd.f32 %v2934, %v2988
        %v3015 = vadd.f32 %v2935, %v2992
        %v3016 = vadd.f32 %v2936, %v2996
        %v3017 = vadd.f32 %v2937, %v3000
        %v3018 = vadd.f32 %v2938, %v3004
        %v3019 = vadd.f32 %v2939, %v3008
        %v3020 = vadd.f32 %v2940, %v3012
        %v3021 = vmax.f32 %v3013, 0.0
        %v3022 = vmax.f32 %v3014, 0.0
        %v3023 = vmax.f32 %v3015, 0.0
        %v3024 = vmax.f32 %v3016, 0.0
        %v3025 = vmax.f32 %v3017, 0.0
        %v3026 = vmax.f32 %v3018, 0.0
        %v3027 = vmax.f32 %v3019, 0.0
        %v3028 = vmax.f32 %v3020, 0.0
        %3029 = vst [vmem:[#allocation2] sm:$0xff] %v3021
        %3030 = vst [vmem:[#allocation2 + $0x8] sm:$0xff] %v3022
        %3031 = vst [vmem:[#allocation2 + $0x10] sm:$0xff] %v3023
        %3032 = vst [vmem:[#allocation2 + $0x18] sm:$0xff] %v3024
        %3033 = vst [vmem:[#allocation2 + $0x20] sm:$0xff] %v3025
        %3034 = vst [vmem:[#allocation2 + $0x28] sm:$0xff] %v3026
        %3035 = vst [vmem:[#allocation2 + $0x30] sm:$0xff] %v3027
        %3036 = vst [vmem:[#allocation2 + $0x38] sm:$0xff] %v3028
        %s3037 = scalar_lea.vmem %s809, 16 [#allocation11]
        %v3038 = vld [vmem:[%s3037] sm:$0xff]
        %v3039 = vld [vmem:[%s3037 + $0x8] sm:$0xff]
        %v3040 = vld [vmem:[#allocation2] sm:$0xff]
        %v3041 = vld [vmem:[#allocation2 + $0x8] sm:$0xff]
        %v3042 = vld [vmem:[#allocation2 + $0x10] sm:$0xff]
        %v3043 = vld [vmem:[#allocation2 + $0x18] sm:$0xff]
        %v3044 = vld [vmem:[#allocation2 + $0x20] sm:$0xff]
        %v3045 = vld [vmem:[#allocation2 + $0x28] sm:$0xff]
        %v3046 = vld [vmem:[#allocation2 + $0x30] sm:$0xff]
        %v3047 = vld [vmem:[#allocation2 + $0x38] sm:$0xff]
        %v3048 = vpack.c.bf16 %v3040, %v3040
        %v3049 = vpack.c.bf16 %v3041, %v3041
        %v3050 = vpack.c.bf16 %v3042, %v3042
        %v3051 = vpack.c.bf16 %v3043, %v3043
        %v3052 = vpack.c.bf16 %v3044, %v3044
        %v3053 = vpack.c.bf16 %v3045, %v3045
        %v3054 = vpack.c.bf16 %v3046, %v3046
        %v3055 = vpack.c.bf16 %v3047, %v3047
        %s3056 = scalar_lea.vmem %s800, 2048 [#allocation10]
        %v3057 = vld [vmem:[%s3056] sm:$0xff]
        %v3058 = vld [vmem:[%s3056 + $0x8] sm:$0xff]
        %v3059 = vld [vmem:[%s3056 + $0x10] sm:$0xff]
        %v3060 = vld [vmem:[%s3056 + $0x18] sm:$0xff]
        %v3061 = vld [vmem:[%s3056 + $0x20] sm:$0xff]
        %v3062 = vld [vmem:[%s3056 + $0x28] sm:$0xff]
        %v3063 = vld [vmem:[%s3056 + $0x30] sm:$0xff]
        %v3064 = vld [vmem:[%s3056 + $0x38] sm:$0xff]
        %v3065 = vld [vmem:[%s3056 + $0x40] sm:$0xff]
        %v3066 = vld [vmem:[%s3056 + $0x48] sm:$0xff]
        %v3067 = vld [vmem:[%s3056 + $0x50] sm:$0xff]
        %v3068 = vld [vmem:[%s3056 + $0x58] sm:$0xff]
        %v3069 = vld [vmem:[%s3056 + $0x60] sm:$0xff]
        %v3070 = vld [vmem:[%s3056 + $0x68] sm:$0xff]
        %v3071 = vld [vmem:[%s3056 + $0x70] sm:$0xff]
        %v3072 = vld [vmem:[%s3056 + $0x78] sm:$0xff]
        %v3073 = vld [vmem:[%s3056 + $0x80] sm:$0xff]
        %v3074 = vld [vmem:[%s3056 + $0x88] sm:$0xff]
        %v3075 = vld [vmem:[%s3056 + $0x90] sm:$0xff]
        %v3076 = vld [vmem:[%s3056 + $0x98] sm:$0xff]
        %v3077 = vld [vmem:[%s3056 + $0xa0] sm:$0xff]
        %v3078 = vld [vmem:[%s3056 + $0xa8] sm:$0xff]
        %v3079 = vld [vmem:[%s3056 + $0xb0] sm:$0xff]
        %v3080 = vld [vmem:[%s3056 + $0xb8] sm:$0xff]
        %v3081 = vld [vmem:[%s3056 + $0xc0] sm:$0xff]
        %v3082 = vld [vmem:[%s3056 + $0xc8] sm:$0xff]
        %v3083 = vld [vmem:[%s3056 + $0xd0] sm:$0xff]
        %v3084 = vld [vmem:[%s3056 + $0xd8] sm:$0xff]
        %v3085 = vld [vmem:[%s3056 + $0xe0] sm:$0xff]
        %v3086 = vld [vmem:[%s3056 + $0xe8] sm:$0xff]
        %v3087 = vld [vmem:[%s3056 + $0xf0] sm:$0xff]
        %v3088 = vld [vmem:[%s3056 + $0xf8] sm:$0xff]
        %v3089 = vld [vmem:[%s3056 + $0x100] sm:$0xff]
        %v3090 = vld [vmem:[%s3056 + $0x108] sm:$0xff]
        %v3091 = vld [vmem:[%s3056 + $0x110] sm:$0xff]
        %v3092 = vld [vmem:[%s3056 + $0x118] sm:$0xff]
        %v3093 = vld [vmem:[%s3056 + $0x120] sm:$0xff]
        %v3094 = vld [vmem:[%s3056 + $0x128] sm:$0xff]
        %v3095 = vld [vmem:[%s3056 + $0x130] sm:$0xff]
        %v3096 = vld [vmem:[%s3056 + $0x138] sm:$0xff]
        %v3097 = vld [vmem:[%s3056 + $0x140] sm:$0xff]
        %v3098 = vld [vmem:[%s3056 + $0x148] sm:$0xff]
        %v3099 = vld [vmem:[%s3056 + $0x150] sm:$0xff]
        %v3100 = vld [vmem:[%s3056 + $0x158] sm:$0xff]
        %v3101 = vld [vmem:[%s3056 + $0x160] sm:$0xff]
        %v3102 = vld [vmem:[%s3056 + $0x168] sm:$0xff]
        %v3103 = vld [vmem:[%s3056 + $0x170] sm:$0xff]
        %v3104 = vld [vmem:[%s3056 + $0x178] sm:$0xff]
        %v3105 = vld [vmem:[%s3056 + $0x180] sm:$0xff]
        %v3106 = vld [vmem:[%s3056 + $0x188] sm:$0xff]
        %v3107 = vld [vmem:[%s3056 + $0x190] sm:$0xff]
        %v3108 = vld [vmem:[%s3056 + $0x198] sm:$0xff]
        %v3109 = vld [vmem:[%s3056 + $0x1a0] sm:$0xff]
        %v3110 = vld [vmem:[%s3056 + $0x1a8] sm:$0xff]
        %v3111 = vld [vmem:[%s3056 + $0x1b0] sm:$0xff]
        %v3112 = vld [vmem:[%s3056 + $0x1b8] sm:$0xff]
        %v3113 = vld [vmem:[%s3056 + $0x1c0] sm:$0xff]
        %v3114 = vld [vmem:[%s3056 + $0x1c8] sm:$0xff]
        %v3115 = vld [vmem:[%s3056 + $0x1d0] sm:$0xff]
        %v3116 = vld [vmem:[%s3056 + $0x1d8] sm:$0xff]
        %v3117 = vld [vmem:[%s3056 + $0x1e0] sm:$0xff]
        %v3118 = vld [vmem:[%s3056 + $0x1e8] sm:$0xff]
        %v3119 = vld [vmem:[%s3056 + $0x1f0] sm:$0xff]
        %v3120 = vld [vmem:[%s3056 + $0x1f8] sm:$0xff]
        %v3121 = vld [vmem:[%s3056 + $0x200] sm:$0xff]
        %v3122 = vld [vmem:[%s3056 + $0x208] sm:$0xff]
        %v3123 = vld [vmem:[%s3056 + $0x210] sm:$0xff]
        %v3124 = vld [vmem:[%s3056 + $0x218] sm:$0xff]
        %v3125 = vld [vmem:[%s3056 + $0x220] sm:$0xff]
        %v3126 = vld [vmem:[%s3056 + $0x228] sm:$0xff]
        %v3127 = vld [vmem:[%s3056 + $0x230] sm:$0xff]
        %v3128 = vld [vmem:[%s3056 + $0x238] sm:$0xff]
        %v3129 = vld [vmem:[%s3056 + $0x240] sm:$0xff]
        %v3130 = vld [vmem:[%s3056 + $0x248] sm:$0xff]
        %v3131 = vld [vmem:[%s3056 + $0x250] sm:$0xff]
        %v3132 = vld [vmem:[%s3056 + $0x258] sm:$0xff]
        %v3133 = vld [vmem:[%s3056 + $0x260] sm:$0xff]
        %v3134 = vld [vmem:[%s3056 + $0x268] sm:$0xff]
        %v3135 = vld [vmem:[%s3056 + $0x270] sm:$0xff]
        %v3136 = vld [vmem:[%s3056 + $0x278] sm:$0xff]
        %v3137 = vld [vmem:[%s3056 + $0x280] sm:$0xff]
        %v3138 = vld [vmem:[%s3056 + $0x288] sm:$0xff]
        %v3139 = vld [vmem:[%s3056 + $0x290] sm:$0xff]
        %v3140 = vld [vmem:[%s3056 + $0x298] sm:$0xff]
        %v3141 = vld [vmem:[%s3056 + $0x2a0] sm:$0xff]
        %v3142 = vld [vmem:[%s3056 + $0x2a8] sm:$0xff]
        %v3143 = vld [vmem:[%s3056 + $0x2b0] sm:$0xff]
        %v3144 = vld [vmem:[%s3056 + $0x2b8] sm:$0xff]
        %v3145 = vld [vmem:[%s3056 + $0x2c0] sm:$0xff]
        %v3146 = vld [vmem:[%s3056 + $0x2c8] sm:$0xff]
        %v3147 = vld [vmem:[%s3056 + $0x2d0] sm:$0xff]
        %v3148 = vld [vmem:[%s3056 + $0x2d8] sm:$0xff]
        %v3149 = vld [vmem:[%s3056 + $0x2e0] sm:$0xff]
        %v3150 = vld [vmem:[%s3056 + $0x2e8] sm:$0xff]
        %v3151 = vld [vmem:[%s3056 + $0x2f0] sm:$0xff]
        %v3152 = vld [vmem:[%s3056 + $0x2f8] sm:$0xff]
        %v3153 = vld [vmem:[%s3056 + $0x300] sm:$0xff]
        %v3154 = vld [vmem:[%s3056 + $0x308] sm:$0xff]
        %v3155 = vld [vmem:[%s3056 + $0x310] sm:$0xff]
        %v3156 = vld [vmem:[%s3056 + $0x318] sm:$0xff]
        %v3157 = vld [vmem:[%s3056 + $0x320] sm:$0xff]
        %v3158 = vld [vmem:[%s3056 + $0x328] sm:$0xff]
        %v3159 = vld [vmem:[%s3056 + $0x330] sm:$0xff]
        %v3160 = vld [vmem:[%s3056 + $0x338] sm:$0xff]
        %v3161 = vld [vmem:[%s3056 + $0x340] sm:$0xff]
        %v3162 = vld [vmem:[%s3056 + $0x348] sm:$0xff]
        %v3163 = vld [vmem:[%s3056 + $0x350] sm:$0xff]
        %v3164 = vld [vmem:[%s3056 + $0x358] sm:$0xff]
        %v3165 = vld [vmem:[%s3056 + $0x360] sm:$0xff]
        %v3166 = vld [vmem:[%s3056 + $0x368] sm:$0xff]
        %v3167 = vld [vmem:[%s3056 + $0x370] sm:$0xff]
        %v3168 = vld [vmem:[%s3056 + $0x378] sm:$0xff]
        %v3169 = vld [vmem:[%s3056 + $0x380] sm:$0xff]
        %v3170 = vld [vmem:[%s3056 + $0x388] sm:$0xff]
        %v3171 = vld [vmem:[%s3056 + $0x390] sm:$0xff]
        %v3172 = vld [vmem:[%s3056 + $0x398] sm:$0xff]
        %v3173 = vld [vmem:[%s3056 + $0x3a0] sm:$0xff]
        %v3174 = vld [vmem:[%s3056 + $0x3a8] sm:$0xff]
        %v3175 = vld [vmem:[%s3056 + $0x3b0] sm:$0xff]
        %v3176 = vld [vmem:[%s3056 + $0x3b8] sm:$0xff]
        %v3177 = vld [vmem:[%s3056 + $0x3c0] sm:$0xff]
        %v3178 = vld [vmem:[%s3056 + $0x3c8] sm:$0xff]
        %v3179 = vld [vmem:[%s3056 + $0x3d0] sm:$0xff]
        %v3180 = vld [vmem:[%s3056 + $0x3d8] sm:$0xff]
        %v3181 = vld [vmem:[%s3056 + $0x3e0] sm:$0xff]
        %v3182 = vld [vmem:[%s3056 + $0x3e8] sm:$0xff]
        %v3183 = vld [vmem:[%s3056 + $0x3f0] sm:$0xff]
        %v3184 = vld [vmem:[%s3056 + $0x3f8] sm:$0xff]
        %v3185 = vld [vmem:[%s3056 + $0x400] sm:$0xff]
        %v3186 = vld [vmem:[%s3056 + $0x408] sm:$0xff]
        %v3187 = vld [vmem:[%s3056 + $0x410] sm:$0xff]
        %v3188 = vld [vmem:[%s3056 + $0x418] sm:$0xff]
        %v3189 = vld [vmem:[%s3056 + $0x420] sm:$0xff]
        %v3190 = vld [vmem:[%s3056 + $0x428] sm:$0xff]
        %v3191 = vld [vmem:[%s3056 + $0x430] sm:$0xff]
        %v3192 = vld [vmem:[%s3056 + $0x438] sm:$0xff]
        %v3193 = vld [vmem:[%s3056 + $0x440] sm:$0xff]
        %v3194 = vld [vmem:[%s3056 + $0x448] sm:$0xff]
        %v3195 = vld [vmem:[%s3056 + $0x450] sm:$0xff]
        %v3196 = vld [vmem:[%s3056 + $0x458] sm:$0xff]
        %v3197 = vld [vmem:[%s3056 + $0x460] sm:$0xff]
        %v3198 = vld [vmem:[%s3056 + $0x468] sm:$0xff]
        %v3199 = vld [vmem:[%s3056 + $0x470] sm:$0xff]
        %v3200 = vld [vmem:[%s3056 + $0x478] sm:$0xff]
        %v3201 = vld [vmem:[%s3056 + $0x480] sm:$0xff]
        %v3202 = vld [vmem:[%s3056 + $0x488] sm:$0xff]
        %v3203 = vld [vmem:[%s3056 + $0x490] sm:$0xff]
        %v3204 = vld [vmem:[%s3056 + $0x498] sm:$0xff]
        %v3205 = vld [vmem:[%s3056 + $0x4a0] sm:$0xff]
        %v3206 = vld [vmem:[%s3056 + $0x4a8] sm:$0xff]
        %v3207 = vld [vmem:[%s3056 + $0x4b0] sm:$0xff]
        %v3208 = vld [vmem:[%s3056 + $0x4b8] sm:$0xff]
        %v3209 = vld [vmem:[%s3056 + $0x4c0] sm:$0xff]
        %v3210 = vld [vmem:[%s3056 + $0x4c8] sm:$0xff]
        %v3211 = vld [vmem:[%s3056 + $0x4d0] sm:$0xff]
        %v3212 = vld [vmem:[%s3056 + $0x4d8] sm:$0xff]
        %v3213 = vld [vmem:[%s3056 + $0x4e0] sm:$0xff]
        %v3214 = vld [vmem:[%s3056 + $0x4e8] sm:$0xff]
        %v3215 = vld [vmem:[%s3056 + $0x4f0] sm:$0xff]
        %v3216 = vld [vmem:[%s3056 + $0x4f8] sm:$0xff]
        %v3217 = vld [vmem:[%s3056 + $0x500] sm:$0xff]
        %v3218 = vld [vmem:[%s3056 + $0x508] sm:$0xff]
        %v3219 = vld [vmem:[%s3056 + $0x510] sm:$0xff]
        %v3220 = vld [vmem:[%s3056 + $0x518] sm:$0xff]
        %v3221 = vld [vmem:[%s3056 + $0x520] sm:$0xff]
        %v3222 = vld [vmem:[%s3056 + $0x528] sm:$0xff]
        %v3223 = vld [vmem:[%s3056 + $0x530] sm:$0xff]
        %v3224 = vld [vmem:[%s3056 + $0x538] sm:$0xff]
        %v3225 = vld [vmem:[%s3056 + $0x540] sm:$0xff]
        %v3226 = vld [vmem:[%s3056 + $0x548] sm:$0xff]
        %v3227 = vld [vmem:[%s3056 + $0x550] sm:$0xff]
        %v3228 = vld [vmem:[%s3056 + $0x558] sm:$0xff]
        %v3229 = vld [vmem:[%s3056 + $0x560] sm:$0xff]
        %v3230 = vld [vmem:[%s3056 + $0x568] sm:$0xff]
        %v3231 = vld [vmem:[%s3056 + $0x570] sm:$0xff]
        %v3232 = vld [vmem:[%s3056 + $0x578] sm:$0xff]
        %v3233 = vld [vmem:[%s3056 + $0x580] sm:$0xff]
        %v3234 = vld [vmem:[%s3056 + $0x588] sm:$0xff]
        %v3235 = vld [vmem:[%s3056 + $0x590] sm:$0xff]
        %v3236 = vld [vmem:[%s3056 + $0x598] sm:$0xff]
        %v3237 = vld [vmem:[%s3056 + $0x5a0] sm:$0xff]
        %v3238 = vld [vmem:[%s3056 + $0x5a8] sm:$0xff]
        %v3239 = vld [vmem:[%s3056 + $0x5b0] sm:$0xff]
        %v3240 = vld [vmem:[%s3056 + $0x5b8] sm:$0xff]
        %v3241 = vld [vmem:[%s3056 + $0x5c0] sm:$0xff]
        %v3242 = vld [vmem:[%s3056 + $0x5c8] sm:$0xff]
        %v3243 = vld [vmem:[%s3056 + $0x5d0] sm:$0xff]
        %v3244 = vld [vmem:[%s3056 + $0x5d8] sm:$0xff]
        %v3245 = vld [vmem:[%s3056 + $0x5e0] sm:$0xff]
        %v3246 = vld [vmem:[%s3056 + $0x5e8] sm:$0xff]
        %v3247 = vld [vmem:[%s3056 + $0x5f0] sm:$0xff]
        %v3248 = vld [vmem:[%s3056 + $0x5f8] sm:$0xff]
        %v3249 = vld [vmem:[%s3056 + $0x600] sm:$0xff]
        %v3250 = vld [vmem:[%s3056 + $0x608] sm:$0xff]
        %v3251 = vld [vmem:[%s3056 + $0x610] sm:$0xff]
        %v3252 = vld [vmem:[%s3056 + $0x618] sm:$0xff]
        %v3253 = vld [vmem:[%s3056 + $0x620] sm:$0xff]
        %v3254 = vld [vmem:[%s3056 + $0x628] sm:$0xff]
        %v3255 = vld [vmem:[%s3056 + $0x630] sm:$0xff]
        %v3256 = vld [vmem:[%s3056 + $0x638] sm:$0xff]
        %v3257 = vld [vmem:[%s3056 + $0x640] sm:$0xff]
        %v3258 = vld [vmem:[%s3056 + $0x648] sm:$0xff]
        %v3259 = vld [vmem:[%s3056 + $0x650] sm:$0xff]
        %v3260 = vld [vmem:[%s3056 + $0x658] sm:$0xff]
        %v3261 = vld [vmem:[%s3056 + $0x660] sm:$0xff]
        %v3262 = vld [vmem:[%s3056 + $0x668] sm:$0xff]
        %v3263 = vld [vmem:[%s3056 + $0x670] sm:$0xff]
        %v3264 = vld [vmem:[%s3056 + $0x678] sm:$0xff]
        %v3265 = vld [vmem:[%s3056 + $0x680] sm:$0xff]
        %v3266 = vld [vmem:[%s3056 + $0x688] sm:$0xff]
        %v3267 = vld [vmem:[%s3056 + $0x690] sm:$0xff]
        %v3268 = vld [vmem:[%s3056 + $0x698] sm:$0xff]
        %v3269 = vld [vmem:[%s3056 + $0x6a0] sm:$0xff]
        %v3270 = vld [vmem:[%s3056 + $0x6a8] sm:$0xff]
        %v3271 = vld [vmem:[%s3056 + $0x6b0] sm:$0xff]
        %v3272 = vld [vmem:[%s3056 + $0x6b8] sm:$0xff]
        %v3273 = vld [vmem:[%s3056 + $0x6c0] sm:$0xff]
        %v3274 = vld [vmem:[%s3056 + $0x6c8] sm:$0xff]
        %v3275 = vld [vmem:[%s3056 + $0x6d0] sm:$0xff]
        %v3276 = vld [vmem:[%s3056 + $0x6d8] sm:$0xff]
        %v3277 = vld [vmem:[%s3056 + $0x6e0] sm:$0xff]
        %v3278 = vld [vmem:[%s3056 + $0x6e8] sm:$0xff]
        %v3279 = vld [vmem:[%s3056 + $0x6f0] sm:$0xff]
        %v3280 = vld [vmem:[%s3056 + $0x6f8] sm:$0xff]
        %v3281 = vld [vmem:[%s3056 + $0x700] sm:$0xff]
        %v3282 = vld [vmem:[%s3056 + $0x708] sm:$0xff]
        %v3283 = vld [vmem:[%s3056 + $0x710] sm:$0xff]
        %v3284 = vld [vmem:[%s3056 + $0x718] sm:$0xff]
        %v3285 = vld [vmem:[%s3056 + $0x720] sm:$0xff]
        %v3286 = vld [vmem:[%s3056 + $0x728] sm:$0xff]
        %v3287 = vld [vmem:[%s3056 + $0x730] sm:$0xff]
        %v3288 = vld [vmem:[%s3056 + $0x738] sm:$0xff]
        %v3289 = vld [vmem:[%s3056 + $0x740] sm:$0xff]
        %v3290 = vld [vmem:[%s3056 + $0x748] sm:$0xff]
        %v3291 = vld [vmem:[%s3056 + $0x750] sm:$0xff]
        %v3292 = vld [vmem:[%s3056 + $0x758] sm:$0xff]
        %v3293 = vld [vmem:[%s3056 + $0x760] sm:$0xff]
        %v3294 = vld [vmem:[%s3056 + $0x768] sm:$0xff]
        %v3295 = vld [vmem:[%s3056 + $0x770] sm:$0xff]
        %v3296 = vld [vmem:[%s3056 + $0x778] sm:$0xff]
        %v3297 = vld [vmem:[%s3056 + $0x780] sm:$0xff]
        %v3298 = vld [vmem:[%s3056 + $0x788] sm:$0xff]
        %v3299 = vld [vmem:[%s3056 + $0x790] sm:$0xff]
        %v3300 = vld [vmem:[%s3056 + $0x798] sm:$0xff]
        %v3301 = vld [vmem:[%s3056 + $0x7a0] sm:$0xff]
        %v3302 = vld [vmem:[%s3056 + $0x7a8] sm:$0xff]
        %v3303 = vld [vmem:[%s3056 + $0x7b0] sm:$0xff]
        %v3304 = vld [vmem:[%s3056 + $0x7b8] sm:$0xff]
        %v3305 = vld [vmem:[%s3056 + $0x7c0] sm:$0xff]
        %v3306 = vld [vmem:[%s3056 + $0x7c8] sm:$0xff]
        %v3307 = vld [vmem:[%s3056 + $0x7d0] sm:$0xff]
        %v3308 = vld [vmem:[%s3056 + $0x7d8] sm:$0xff]
        %v3309 = vld [vmem:[%s3056 + $0x7e0] sm:$0xff]
        %v3310 = vld [vmem:[%s3056 + $0x7e8] sm:$0xff]
        %v3311 = vld [vmem:[%s3056 + $0x7f0] sm:$0xff]
        %v3312 = vld [vmem:[%s3056 + $0x7f8] sm:$0xff]
        %v3313 = vunpack.c.l.s8.bf16 %v3057
        %v3314 = vunpack.c.l.s8.bf16 %v3058
        %v3315 = vunpack.c.l.s8.bf16 %v3059
        %v3316 = vunpack.c.l.s8.bf16 %v3060
        %v3317 = vunpack.c.l.s8.bf16 %v3061
        %v3318 = vunpack.c.l.s8.bf16 %v3062
        %v3319 = vunpack.c.l.s8.bf16 %v3063
        %v3320 = vunpack.c.l.s8.bf16 %v3064
        %v3321 = vunpack.c.h.s8.bf16 %v3057
        %v3322 = vunpack.c.h.s8.bf16 %v3058
        %v3323 = vunpack.c.h.s8.bf16 %v3059
        %v3324 = vunpack.c.h.s8.bf16 %v3060
        %v3325 = vunpack.c.h.s8.bf16 %v3061
        %v3326 = vunpack.c.h.s8.bf16 %v3062
        %v3327 = vunpack.c.h.s8.bf16 %v3063
        %v3328 = vunpack.c.h.s8.bf16 %v3064
        %v3329 = vunpack.c.l.s8.bf16 %v3065
        %v3330 = vunpack.c.l.s8.bf16 %v3066
        %v3331 = vunpack.c.l.s8.bf16 %v3067
        %v3332 = vunpack.c.l.s8.bf16 %v3068
        %v3333 = vunpack.c.l.s8.bf16 %v3069
        %v3334 = vunpack.c.l.s8.bf16 %v3070
        %v3335 = vunpack.c.l.s8.bf16 %v3071
        %v3336 = vunpack.c.l.s8.bf16 %v3072
        %v3337 = vunpack.c.h.s8.bf16 %v3065
        %v3338 = vunpack.c.h.s8.bf16 %v3066
        %v3339 = vunpack.c.h.s8.bf16 %v3067
        %v3340 = vunpack.c.h.s8.bf16 %v3068
        %v3341 = vunpack.c.h.s8.bf16 %v3069
        %v3342 = vunpack.c.h.s8.bf16 %v3070
        %v3343 = vunpack.c.h.s8.bf16 %v3071
        %v3344 = vunpack.c.h.s8.bf16 %v3072
        %v3345 = vunpack.c.l.s8.bf16 %v3073
        %v3346 = vunpack.c.l.s8.bf16 %v3074
        %v3347 = vunpack.c.l.s8.bf16 %v3075
        %v3348 = vunpack.c.l.s8.bf16 %v3076
        %v3349 = vunpack.c.l.s8.bf16 %v3077
        %v3350 = vunpack.c.l.s8.bf16 %v3078
        %v3351 = vunpack.c.l.s8.bf16 %v3079
        %v3352 = vunpack.c.l.s8.bf16 %v3080
        %v3353 = vunpack.c.h.s8.bf16 %v3073
        %v3354 = vunpack.c.h.s8.bf16 %v3074
        %v3355 = vunpack.c.h.s8.bf16 %v3075
        %v3356 = vunpack.c.h.s8.bf16 %v3076
        %v3357 = vunpack.c.h.s8.bf16 %v3077
        %v3358 = vunpack.c.h.s8.bf16 %v3078
        %v3359 = vunpack.c.h.s8.bf16 %v3079
        %v3360 = vunpack.c.h.s8.bf16 %v3080
        %v3361 = vunpack.c.l.s8.bf16 %v3081
        %v3362 = vunpack.c.l.s8.bf16 %v3082
        %v3363 = vunpack.c.l.s8.bf16 %v3083
        %v3364 = vunpack.c.l.s8.bf16 %v3084
        %v3365 = vunpack.c.l.s8.bf16 %v3085
        %v3366 = vunpack.c.l.s8.bf16 %v3086
        %v3367 = vunpack.c.l.s8.bf16 %v3087
        %v3368 = vunpack.c.l.s8.bf16 %v3088
        %v3369 = vunpack.c.h.s8.bf16 %v3081
        %v3370 = vunpack.c.h.s8.bf16 %v3082
        %v3371 = vunpack.c.h.s8.bf16 %v3083
        %v3372 = vunpack.c.h.s8.bf16 %v3084
        %v3373 = vunpack.c.h.s8.bf16 %v3085
        %v3374 = vunpack.c.h.s8.bf16 %v3086
        %v3375 = vunpack.c.h.s8.bf16 %v3087
        %v3376 = vunpack.c.h.s8.bf16 %v3088
        %v3377 = vunpack.c.l.s8.bf16 %v3089
        %v3378 = vunpack.c.l.s8.bf16 %v3090
        %v3379 = vunpack.c.l.s8.bf16 %v3091
        %v3380 = vunpack.c.l.s8.bf16 %v3092
        %v3381 = vunpack.c.l.s8.bf16 %v3093
        %v3382 = vunpack.c.l.s8.bf16 %v3094
        %v3383 = vunpack.c.l.s8.bf16 %v3095
        %v3384 = vunpack.c.l.s8.bf16 %v3096
        %v3385 = vunpack.c.h.s8.bf16 %v3089
        %v3386 = vunpack.c.h.s8.bf16 %v3090
        %v3387 = vunpack.c.h.s8.bf16 %v3091
        %v3388 = vunpack.c.h.s8.bf16 %v3092
        %v3389 = vunpack.c.h.s8.bf16 %v3093
        %v3390 = vunpack.c.h.s8.bf16 %v3094
        %v3391 = vunpack.c.h.s8.bf16 %v3095
        %v3392 = vunpack.c.h.s8.bf16 %v3096
        %v3393 = vunpack.c.l.s8.bf16 %v3097
        %v3394 = vunpack.c.l.s8.bf16 %v3098
        %v3395 = vunpack.c.l.s8.bf16 %v3099
        %v3396 = vunpack.c.l.s8.bf16 %v3100
        %v3397 = vunpack.c.l.s8.bf16 %v3101
        %v3398 = vunpack.c.l.s8.bf16 %v3102
        %v3399 = vunpack.c.l.s8.bf16 %v3103
        %v3400 = vunpack.c.l.s8.bf16 %v3104
        %v3401 = vunpack.c.h.s8.bf16 %v3097
        %v3402 = vunpack.c.h.s8.bf16 %v3098
        %v3403 = vunpack.c.h.s8.bf16 %v3099
        %v3404 = vunpack.c.h.s8.bf16 %v3100
        %v3405 = vunpack.c.h.s8.bf16 %v3101
        %v3406 = vunpack.c.h.s8.bf16 %v3102
        %v3407 = vunpack.c.h.s8.bf16 %v3103
        %v3408 = vunpack.c.h.s8.bf16 %v3104
        %v3409 = vunpack.c.l.s8.bf16 %v3105
        %v3410 = vunpack.c.l.s8.bf16 %v3106
        %v3411 = vunpack.c.l.s8.bf16 %v3107
        %v3412 = vunpack.c.l.s8.bf16 %v3108
        %v3413 = vunpack.c.l.s8.bf16 %v3109
        %v3414 = vunpack.c.l.s8.bf16 %v3110
        %v3415 = vunpack.c.l.s8.bf16 %v3111
        %v3416 = vunpack.c.l.s8.bf16 %v3112
        %v3417 = vunpack.c.h.s8.bf16 %v3105
        %v3418 = vunpack.c.h.s8.bf16 %v3106
        %v3419 = vunpack.c.h.s8.bf16 %v3107
        %v3420 = vunpack.c.h.s8.bf16 %v3108
        %v3421 = vunpack.c.h.s8.bf16 %v3109
        %v3422 = vunpack.c.h.s8.bf16 %v3110
        %v3423 = vunpack.c.h.s8.bf16 %v3111
        %v3424 = vunpack.c.h.s8.bf16 %v3112
        %v3425 = vunpack.c.l.s8.bf16 %v3113
        %v3426 = vunpack.c.l.s8.bf16 %v3114
        %v3427 = vunpack.c.l.s8.bf16 %v3115
        %v3428 = vunpack.c.l.s8.bf16 %v3116
        %v3429 = vunpack.c.l.s8.bf16 %v3117
        %v3430 = vunpack.c.l.s8.bf16 %v3118
        %v3431 = vunpack.c.l.s8.bf16 %v3119
        %v3432 = vunpack.c.l.s8.bf16 %v3120
        %v3433 = vunpack.c.h.s8.bf16 %v3113
        %v3434 = vunpack.c.h.s8.bf16 %v3114
        %v3435 = vunpack.c.h.s8.bf16 %v3115
        %v3436 = vunpack.c.h.s8.bf16 %v3116
        %v3437 = vunpack.c.h.s8.bf16 %v3117
        %v3438 = vunpack.c.h.s8.bf16 %v3118
        %v3439 = vunpack.c.h.s8.bf16 %v3119
        %v3440 = vunpack.c.h.s8.bf16 %v3120
        %v3441 = vunpack.c.l.s8.bf16 %v3121
        %v3442 = vunpack.c.l.s8.bf16 %v3122
        %v3443 = vunpack.c.l.s8.bf16 %v3123
        %v3444 = vunpack.c.l.s8.bf16 %v3124
        %v3445 = vunpack.c.l.s8.bf16 %v3125
        %v3446 = vunpack.c.l.s8.bf16 %v3126
        %v3447 = vunpack.c.l.s8.bf16 %v3127
        %v3448 = vunpack.c.l.s8.bf16 %v3128
        %v3449 = vunpack.c.h.s8.bf16 %v3121
        %v3450 = vunpack.c.h.s8.bf16 %v3122
        %v3451 = vunpack.c.h.s8.bf16 %v3123
        %v3452 = vunpack.c.h.s8.bf16 %v3124
        %v3453 = vunpack.c.h.s8.bf16 %v3125
        %v3454 = vunpack.c.h.s8.bf16 %v3126
        %v3455 = vunpack.c.h.s8.bf16 %v3127
        %v3456 = vunpack.c.h.s8.bf16 %v3128
        %v3457 = vunpack.c.l.s8.bf16 %v3129
        %v3458 = vunpack.c.l.s8.bf16 %v3130
        %v3459 = vunpack.c.l.s8.bf16 %v3131
        %v3460 = vunpack.c.l.s8.bf16 %v3132
        %v3461 = vunpack.c.l.s8.bf16 %v3133
        %v3462 = vunpack.c.l.s8.bf16 %v3134
        %v3463 = vunpack.c.l.s8.bf16 %v3135
        %v3464 = vunpack.c.l.s8.bf16 %v3136
        %v3465 = vunpack.c.h.s8.bf16 %v3129
        %v3466 = vunpack.c.h.s8.bf16 %v3130
        %v3467 = vunpack.c.h.s8.bf16 %v3131
        %v3468 = vunpack.c.h.s8.bf16 %v3132
        %v3469 = vunpack.c.h.s8.bf16 %v3133
        %v3470 = vunpack.c.h.s8.bf16 %v3134
        %v3471 = vunpack.c.h.s8.bf16 %v3135
        %v3472 = vunpack.c.h.s8.bf16 %v3136
        %v3473 = vunpack.c.l.s8.bf16 %v3137
        %v3474 = vunpack.c.l.s8.bf16 %v3138
        %v3475 = vunpack.c.l.s8.bf16 %v3139
        %v3476 = vunpack.c.l.s8.bf16 %v3140
        %v3477 = vunpack.c.l.s8.bf16 %v3141
        %v3478 = vunpack.c.l.s8.bf16 %v3142
        %v3479 = vunpack.c.l.s8.bf16 %v3143
        %v3480 = vunpack.c.l.s8.bf16 %v3144
        %v3481 = vunpack.c.h.s8.bf16 %v3137
        %v3482 = vunpack.c.h.s8.bf16 %v3138
        %v3483 = vunpack.c.h.s8.bf16 %v3139
        %v3484 = vunpack.c.h.s8.bf16 %v3140
        %v3485 = vunpack.c.h.s8.bf16 %v3141
        %v3486 = vunpack.c.h.s8.bf16 %v3142
        %v3487 = vunpack.c.h.s8.bf16 %v3143
        %v3488 = vunpack.c.h.s8.bf16 %v3144
        %v3489 = vunpack.c.l.s8.bf16 %v3145
        %v3490 = vunpack.c.l.s8.bf16 %v3146
        %v3491 = vunpack.c.l.s8.bf16 %v3147
        %v3492 = vunpack.c.l.s8.bf16 %v3148
        %v3493 = vunpack.c.l.s8.bf16 %v3149
        %v3494 = vunpack.c.l.s8.bf16 %v3150
        %v3495 = vunpack.c.l.s8.bf16 %v3151
        %v3496 = vunpack.c.l.s8.bf16 %v3152
        %v3497 = vunpack.c.h.s8.bf16 %v3145
        %v3498 = vunpack.c.h.s8.bf16 %v3146
        %v3499 = vunpack.c.h.s8.bf16 %v3147
        %v3500 = vunpack.c.h.s8.bf16 %v3148
        %v3501 = vunpack.c.h.s8.bf16 %v3149
        %v3502 = vunpack.c.h.s8.bf16 %v3150
        %v3503 = vunpack.c.h.s8.bf16 %v3151
        %v3504 = vunpack.c.h.s8.bf16 %v3152
        %v3505 = vunpack.c.l.s8.bf16 %v3153
        %v3506 = vunpack.c.l.s8.bf16 %v3154
        %v3507 = vunpack.c.l.s8.bf16 %v3155
        %v3508 = vunpack.c.l.s8.bf16 %v3156
        %v3509 = vunpack.c.l.s8.bf16 %v3157
        %v3510 = vunpack.c.l.s8.bf16 %v3158
        %v3511 = vunpack.c.l.s8.bf16 %v3159
        %v3512 = vunpack.c.l.s8.bf16 %v3160
        %v3513 = vunpack.c.h.s8.bf16 %v3153
        %v3514 = vunpack.c.h.s8.bf16 %v3154
        %v3515 = vunpack.c.h.s8.bf16 %v3155
        %v3516 = vunpack.c.h.s8.bf16 %v3156
        %v3517 = vunpack.c.h.s8.bf16 %v3157
        %v3518 = vunpack.c.h.s8.bf16 %v3158
        %v3519 = vunpack.c.h.s8.bf16 %v3159
        %v3520 = vunpack.c.h.s8.bf16 %v3160
        %v3521 = vunpack.c.l.s8.bf16 %v3161
        %v3522 = vunpack.c.l.s8.bf16 %v3162
        %v3523 = vunpack.c.l.s8.bf16 %v3163
        %v3524 = vunpack.c.l.s8.bf16 %v3164
        %v3525 = vunpack.c.l.s8.bf16 %v3165
        %v3526 = vunpack.c.l.s8.bf16 %v3166
        %v3527 = vunpack.c.l.s8.bf16 %v3167
        %v3528 = vunpack.c.l.s8.bf16 %v3168
        %v3529 = vunpack.c.h.s8.bf16 %v3161
        %v3530 = vunpack.c.h.s8.bf16 %v3162
        %v3531 = vunpack.c.h.s8.bf16 %v3163
        %v3532 = vunpack.c.h.s8.bf16 %v3164
        %v3533 = vunpack.c.h.s8.bf16 %v3165
        %v3534 = vunpack.c.h.s8.bf16 %v3166
        %v3535 = vunpack.c.h.s8.bf16 %v3167
        %v3536 = vunpack.c.h.s8.bf16 %v3168
        %v3537 = vunpack.c.l.s8.bf16 %v3169
        %v3538 = vunpack.c.l.s8.bf16 %v3170
        %v3539 = vunpack.c.l.s8.bf16 %v3171
        %v3540 = vunpack.c.l.s8.bf16 %v3172
        %v3541 = vunpack.c.l.s8.bf16 %v3173
        %v3542 = vunpack.c.l.s8.bf16 %v3174
        %v3543 = vunpack.c.l.s8.bf16 %v3175
        %v3544 = vunpack.c.l.s8.bf16 %v3176
        %v3545 = vunpack.c.h.s8.bf16 %v3169
        %v3546 = vunpack.c.h.s8.bf16 %v3170
        %v3547 = vunpack.c.h.s8.bf16 %v3171
        %v3548 = vunpack.c.h.s8.bf16 %v3172
        %v3549 = vunpack.c.h.s8.bf16 %v3173
        %v3550 = vunpack.c.h.s8.bf16 %v3174
        %v3551 = vunpack.c.h.s8.bf16 %v3175
        %v3552 = vunpack.c.h.s8.bf16 %v3176
        %v3553 = vunpack.c.l.s8.bf16 %v3177
        %v3554 = vunpack.c.l.s8.bf16 %v3178
        %v3555 = vunpack.c.l.s8.bf16 %v3179
        %v3556 = vunpack.c.l.s8.bf16 %v3180
        %v3557 = vunpack.c.l.s8.bf16 %v3181
        %v3558 = vunpack.c.l.s8.bf16 %v3182
        %v3559 = vunpack.c.l.s8.bf16 %v3183
        %v3560 = vunpack.c.l.s8.bf16 %v3184
        %v3561 = vunpack.c.h.s8.bf16 %v3177
        %v3562 = vunpack.c.h.s8.bf16 %v3178
        %v3563 = vunpack.c.h.s8.bf16 %v3179
        %v3564 = vunpack.c.h.s8.bf16 %v3180
        %v3565 = vunpack.c.h.s8.bf16 %v3181
        %v3566 = vunpack.c.h.s8.bf16 %v3182
        %v3567 = vunpack.c.h.s8.bf16 %v3183
        %v3568 = vunpack.c.h.s8.bf16 %v3184
        %v3569 = vunpack.c.l.s8.bf16 %v3185
        %v3570 = vunpack.c.l.s8.bf16 %v3186
        %v3571 = vunpack.c.l.s8.bf16 %v3187
        %v3572 = vunpack.c.l.s8.bf16 %v3188
        %v3573 = vunpack.c.l.s8.bf16 %v3189
        %v3574 = vunpack.c.l.s8.bf16 %v3190
        %v3575 = vunpack.c.l.s8.bf16 %v3191
        %v3576 = vunpack.c.l.s8.bf16 %v3192
        %v3577 = vunpack.c.h.s8.bf16 %v3185
        %v3578 = vunpack.c.h.s8.bf16 %v3186
        %v3579 = vunpack.c.h.s8.bf16 %v3187
        %v3580 = vunpack.c.h.s8.bf16 %v3188
        %v3581 = vunpack.c.h.s8.bf16 %v3189
        %v3582 = vunpack.c.h.s8.bf16 %v3190
        %v3583 = vunpack.c.h.s8.bf16 %v3191
        %v3584 = vunpack.c.h.s8.bf16 %v3192
        %v3585 = vunpack.c.l.s8.bf16 %v3193
        %v3586 = vunpack.c.l.s8.bf16 %v3194
        %v3587 = vunpack.c.l.s8.bf16 %v3195
        %v3588 = vunpack.c.l.s8.bf16 %v3196
        %v3589 = vunpack.c.l.s8.bf16 %v3197
        %v3590 = vunpack.c.l.s8.bf16 %v3198
        %v3591 = vunpack.c.l.s8.bf16 %v3199
        %v3592 = vunpack.c.l.s8.bf16 %v3200
        %v3593 = vunpack.c.h.s8.bf16 %v3193
        %v3594 = vunpack.c.h.s8.bf16 %v3194
        %v3595 = vunpack.c.h.s8.bf16 %v3195
        %v3596 = vunpack.c.h.s8.bf16 %v3196
        %v3597 = vunpack.c.h.s8.bf16 %v3197
        %v3598 = vunpack.c.h.s8.bf16 %v3198
        %v3599 = vunpack.c.h.s8.bf16 %v3199
        %v3600 = vunpack.c.h.s8.bf16 %v3200
        %v3601 = vunpack.c.l.s8.bf16 %v3201
        %v3602 = vunpack.c.l.s8.bf16 %v3202
        %v3603 = vunpack.c.l.s8.bf16 %v3203
        %v3604 = vunpack.c.l.s8.bf16 %v3204
        %v3605 = vunpack.c.l.s8.bf16 %v3205
        %v3606 = vunpack.c.l.s8.bf16 %v3206
        %v3607 = vunpack.c.l.s8.bf16 %v3207
        %v3608 = vunpack.c.l.s8.bf16 %v3208
        %v3609 = vunpack.c.h.s8.bf16 %v3201
        %v3610 = vunpack.c.h.s8.bf16 %v3202
        %v3611 = vunpack.c.h.s8.bf16 %v3203
        %v3612 = vunpack.c.h.s8.bf16 %v3204
        %v3613 = vunpack.c.h.s8.bf16 %v3205
        %v3614 = vunpack.c.h.s8.bf16 %v3206
        %v3615 = vunpack.c.h.s8.bf16 %v3207
        %v3616 = vunpack.c.h.s8.bf16 %v3208
        %v3617 = vunpack.c.l.s8.bf16 %v3209
        %v3618 = vunpack.c.l.s8.bf16 %v3210
        %v3619 = vunpack.c.l.s8.bf16 %v3211
        %v3620 = vunpack.c.l.s8.bf16 %v3212
        %v3621 = vunpack.c.l.s8.bf16 %v3213
        %v3622 = vunpack.c.l.s8.bf16 %v3214
        %v3623 = vunpack.c.l.s8.bf16 %v3215
        %v3624 = vunpack.c.l.s8.bf16 %v3216
        %v3625 = vunpack.c.h.s8.bf16 %v3209
        %v3626 = vunpack.c.h.s8.bf16 %v3210
        %v3627 = vunpack.c.h.s8.bf16 %v3211
        %v3628 = vunpack.c.h.s8.bf16 %v3212
        %v3629 = vunpack.c.h.s8.bf16 %v3213
        %v3630 = vunpack.c.h.s8.bf16 %v3214
        %v3631 = vunpack.c.h.s8.bf16 %v3215
        %v3632 = vunpack.c.h.s8.bf16 %v3216
        %v3633 = vunpack.c.l.s8.bf16 %v3217
        %v3634 = vunpack.c.l.s8.bf16 %v3218
        %v3635 = vunpack.c.l.s8.bf16 %v3219
        %v3636 = vunpack.c.l.s8.bf16 %v3220
        %v3637 = vunpack.c.l.s8.bf16 %v3221
        %v3638 = vunpack.c.l.s8.bf16 %v3222
        %v3639 = vunpack.c.l.s8.bf16 %v3223
        %v3640 = vunpack.c.l.s8.bf16 %v3224
        %v3641 = vunpack.c.h.s8.bf16 %v3217
        %v3642 = vunpack.c.h.s8.bf16 %v3218
        %v3643 = vunpack.c.h.s8.bf16 %v3219
        %v3644 = vunpack.c.h.s8.bf16 %v3220
        %v3645 = vunpack.c.h.s8.bf16 %v3221
        %v3646 = vunpack.c.h.s8.bf16 %v3222
        %v3647 = vunpack.c.h.s8.bf16 %v3223
        %v3648 = vunpack.c.h.s8.bf16 %v3224
        %v3649 = vunpack.c.l.s8.bf16 %v3225
        %v3650 = vunpack.c.l.s8.bf16 %v3226
        %v3651 = vunpack.c.l.s8.bf16 %v3227
        %v3652 = vunpack.c.l.s8.bf16 %v3228
        %v3653 = vunpack.c.l.s8.bf16 %v3229
        %v3654 = vunpack.c.l.s8.bf16 %v3230
        %v3655 = vunpack.c.l.s8.bf16 %v3231
        %v3656 = vunpack.c.l.s8.bf16 %v3232
        %v3657 = vunpack.c.h.s8.bf16 %v3225
        %v3658 = vunpack.c.h.s8.bf16 %v3226
        %v3659 = vunpack.c.h.s8.bf16 %v3227
        %v3660 = vunpack.c.h.s8.bf16 %v3228
        %v3661 = vunpack.c.h.s8.bf16 %v3229
        %v3662 = vunpack.c.h.s8.bf16 %v3230
        %v3663 = vunpack.c.h.s8.bf16 %v3231
        %v3664 = vunpack.c.h.s8.bf16 %v3232
        %v3665 = vunpack.c.l.s8.bf16 %v3233
        %v3666 = vunpack.c.l.s8.bf16 %v3234
        %v3667 = vunpack.c.l.s8.bf16 %v3235
        %v3668 = vunpack.c.l.s8.bf16 %v3236
        %v3669 = vunpack.c.l.s8.bf16 %v3237
        %v3670 = vunpack.c.l.s8.bf16 %v3238
        %v3671 = vunpack.c.l.s8.bf16 %v3239
        %v3672 = vunpack.c.l.s8.bf16 %v3240
        %v3673 = vunpack.c.h.s8.bf16 %v3233
        %v3674 = vunpack.c.h.s8.bf16 %v3234
        %v3675 = vunpack.c.h.s8.bf16 %v3235
        %v3676 = vunpack.c.h.s8.bf16 %v3236
        %v3677 = vunpack.c.h.s8.bf16 %v3237
        %v3678 = vunpack.c.h.s8.bf16 %v3238
        %v3679 = vunpack.c.h.s8.bf16 %v3239
        %v3680 = vunpack.c.h.s8.bf16 %v3240
        %v3681 = vunpack.c.l.s8.bf16 %v3241
        %v3682 = vunpack.c.l.s8.bf16 %v3242
        %v3683 = vunpack.c.l.s8.bf16 %v3243
        %v3684 = vunpack.c.l.s8.bf16 %v3244
        %v3685 = vunpack.c.l.s8.bf16 %v3245
        %v3686 = vunpack.c.l.s8.bf16 %v3246
        %v3687 = vunpack.c.l.s8.bf16 %v3247
        %v3688 = vunpack.c.l.s8.bf16 %v3248
        %v3689 = vunpack.c.h.s8.bf16 %v3241
        %v3690 = vunpack.c.h.s8.bf16 %v3242
        %v3691 = vunpack.c.h.s8.bf16 %v3243
        %v3692 = vunpack.c.h.s8.bf16 %v3244
        %v3693 = vunpack.c.h.s8.bf16 %v3245
        %v3694 = vunpack.c.h.s8.bf16 %v3246
        %v3695 = vunpack.c.h.s8.bf16 %v3247
        %v3696 = vunpack.c.h.s8.bf16 %v3248
        %v3697 = vunpack.c.l.s8.bf16 %v3249
        %v3698 = vunpack.c.l.s8.bf16 %v3250
        %v3699 = vunpack.c.l.s8.bf16 %v3251
        %v3700 = vunpack.c.l.s8.bf16 %v3252
        %v3701 = vunpack.c.l.s8.bf16 %v3253
        %v3702 = vunpack.c.l.s8.bf16 %v3254
        %v3703 = vunpack.c.l.s8.bf16 %v3255
        %v3704 = vunpack.c.l.s8.bf16 %v3256
        %v3705 = vunpack.c.h.s8.bf16 %v3249
        %v3706 = vunpack.c.h.s8.bf16 %v3250
        %v3707 = vunpack.c.h.s8.bf16 %v3251
        %v3708 = vunpack.c.h.s8.bf16 %v3252
        %v3709 = vunpack.c.h.s8.bf16 %v3253
        %v3710 = vunpack.c.h.s8.bf16 %v3254
        %v3711 = vunpack.c.h.s8.bf16 %v3255
        %v3712 = vunpack.c.h.s8.bf16 %v3256
        %v3713 = vunpack.c.l.s8.bf16 %v3257
        %v3714 = vunpack.c.l.s8.bf16 %v3258
        %v3715 = vunpack.c.l.s8.bf16 %v3259
        %v3716 = vunpack.c.l.s8.bf16 %v3260
        %v3717 = vunpack.c.l.s8.bf16 %v3261
        %v3718 = vunpack.c.l.s8.bf16 %v3262
        %v3719 = vunpack.c.l.s8.bf16 %v3263
        %v3720 = vunpack.c.l.s8.bf16 %v3264
        %v3721 = vunpack.c.h.s8.bf16 %v3257
        %v3722 = vunpack.c.h.s8.bf16 %v3258
        %v3723 = vunpack.c.h.s8.bf16 %v3259
        %v3724 = vunpack.c.h.s8.bf16 %v3260
        %v3725 = vunpack.c.h.s8.bf16 %v3261
        %v3726 = vunpack.c.h.s8.bf16 %v3262
        %v3727 = vunpack.c.h.s8.bf16 %v3263
        %v3728 = vunpack.c.h.s8.bf16 %v3264
        %v3729 = vunpack.c.l.s8.bf16 %v3265
        %v3730 = vunpack.c.l.s8.bf16 %v3266
        %v3731 = vunpack.c.l.s8.bf16 %v3267
        %v3732 = vunpack.c.l.s8.bf16 %v3268
        %v3733 = vunpack.c.l.s8.bf16 %v3269
        %v3734 = vunpack.c.l.s8.bf16 %v3270
        %v3735 = vunpack.c.l.s8.bf16 %v3271
        %v3736 = vunpack.c.l.s8.bf16 %v3272
        %v3737 = vunpack.c.h.s8.bf16 %v3265
        %v3738 = vunpack.c.h.s8.bf16 %v3266
        %v3739 = vunpack.c.h.s8.bf16 %v3267
        %v3740 = vunpack.c.h.s8.bf16 %v3268
        %v3741 = vunpack.c.h.s8.bf16 %v3269
        %v3742 = vunpack.c.h.s8.bf16 %v3270
        %v3743 = vunpack.c.h.s8.bf16 %v3271
        %v3744 = vunpack.c.h.s8.bf16 %v3272
        %v3745 = vunpack.c.l.s8.bf16 %v3273
        %v3746 = vunpack.c.l.s8.bf16 %v3274
        %v3747 = vunpack.c.l.s8.bf16 %v3275
        %v3748 = vunpack.c.l.s8.bf16 %v3276
        %v3749 = vunpack.c.l.s8.bf16 %v3277
        %v3750 = vunpack.c.l.s8.bf16 %v3278
        %v3751 = vunpack.c.l.s8.bf16 %v3279
        %v3752 = vunpack.c.l.s8.bf16 %v3280
        %v3753 = vunpack.c.h.s8.bf16 %v3273
        %v3754 = vunpack.c.h.s8.bf16 %v3274
        %v3755 = vunpack.c.h.s8.bf16 %v3275
        %v3756 = vunpack.c.h.s8.bf16 %v3276
        %v3757 = vunpack.c.h.s8.bf16 %v3277
        %v3758 = vunpack.c.h.s8.bf16 %v3278
        %v3759 = vunpack.c.h.s8.bf16 %v3279
        %v3760 = vunpack.c.h.s8.bf16 %v3280
        %v3761 = vunpack.c.l.s8.bf16 %v3281
        %v3762 = vunpack.c.l.s8.bf16 %v3282
        %v3763 = vunpack.c.l.s8.bf16 %v3283
        %v3764 = vunpack.c.l.s8.bf16 %v3284
        %v3765 = vunpack.c.l.s8.bf16 %v3285
        %v3766 = vunpack.c.l.s8.bf16 %v3286
        %v3767 = vunpack.c.l.s8.bf16 %v3287
        %v3768 = vunpack.c.l.s8.bf16 %v3288
        %v3769 = vunpack.c.h.s8.bf16 %v3281
        %v3770 = vunpack.c.h.s8.bf16 %v3282
        %v3771 = vunpack.c.h.s8.bf16 %v3283
        %v3772 = vunpack.c.h.s8.bf16 %v3284
        %v3773 = vunpack.c.h.s8.bf16 %v3285
        %v3774 = vunpack.c.h.s8.bf16 %v3286
        %v3775 = vunpack.c.h.s8.bf16 %v3287
        %v3776 = vunpack.c.h.s8.bf16 %v3288
        %v3777 = vunpack.c.l.s8.bf16 %v3289
        %v3778 = vunpack.c.l.s8.bf16 %v3290
        %v3779 = vunpack.c.l.s8.bf16 %v3291
        %v3780 = vunpack.c.l.s8.bf16 %v3292
        %v3781 = vunpack.c.l.s8.bf16 %v3293
        %v3782 = vunpack.c.l.s8.bf16 %v3294
        %v3783 = vunpack.c.l.s8.bf16 %v3295
        %v3784 = vunpack.c.l.s8.bf16 %v3296
        %v3785 = vunpack.c.h.s8.bf16 %v3289
        %v3786 = vunpack.c.h.s8.bf16 %v3290
        %v3787 = vunpack.c.h.s8.bf16 %v3291
        %v3788 = vunpack.c.h.s8.bf16 %v3292
        %v3789 = vunpack.c.h.s8.bf16 %v3293
        %v3790 = vunpack.c.h.s8.bf16 %v3294
        %v3791 = vunpack.c.h.s8.bf16 %v3295
        %v3792 = vunpack.c.h.s8.bf16 %v3296
        %v3793 = vunpack.c.l.s8.bf16 %v3297
        %v3794 = vunpack.c.l.s8.bf16 %v3298
        %v3795 = vunpack.c.l.s8.bf16 %v3299
        %v3796 = vunpack.c.l.s8.bf16 %v3300
        %v3797 = vunpack.c.l.s8.bf16 %v3301
        %v3798 = vunpack.c.l.s8.bf16 %v3302
        %v3799 = vunpack.c.l.s8.bf16 %v3303
        %v3800 = vunpack.c.l.s8.bf16 %v3304
        %v3801 = vunpack.c.h.s8.bf16 %v3297
        %v3802 = vunpack.c.h.s8.bf16 %v3298
        %v3803 = vunpack.c.h.s8.bf16 %v3299
        %v3804 = vunpack.c.h.s8.bf16 %v3300
        %v3805 = vunpack.c.h.s8.bf16 %v3301
        %v3806 = vunpack.c.h.s8.bf16 %v3302
        %v3807 = vunpack.c.h.s8.bf16 %v3303
        %v3808 = vunpack.c.h.s8.bf16 %v3304
        %v3809 = vunpack.c.l.s8.bf16 %v3305
        %v3810 = vunpack.c.l.s8.bf16 %v3306
        %v3811 = vunpack.c.l.s8.bf16 %v3307
        %v3812 = vunpack.c.l.s8.bf16 %v3308
        %v3813 = vunpack.c.l.s8.bf16 %v3309
        %v3814 = vunpack.c.l.s8.bf16 %v3310
        %v3815 = vunpack.c.l.s8.bf16 %v3311
        %v3816 = vunpack.c.l.s8.bf16 %v3312
        %v3817 = vunpack.c.h.s8.bf16 %v3305
        %v3818 = vunpack.c.h.s8.bf16 %v3306
        %v3819 = vunpack.c.h.s8.bf16 %v3307
        %v3820 = vunpack.c.h.s8.bf16 %v3308
        %v3821 = vunpack.c.h.s8.bf16 %v3309
        %v3822 = vunpack.c.h.s8.bf16 %v3310
        %v3823 = vunpack.c.h.s8.bf16 %v3311
        %v3824 = vunpack.c.h.s8.bf16 %v3312
        %3825 = vmatprep.subr.bf16.mxu0 %v3370
        %3826 = vmatpush1.bf16.msra.mxu0 %v3369
        %3827 = vmatprep.subr.bf16.mxu0 %v3362
        %3828 = vmatpush1.bf16.msra.mxu0 %v3361
        %3829 = vmatprep.subr.bf16.mxu0 %v3354
        %3830 = vmatpush1.bf16.msra.mxu0 %v3353
        %3831 = vmatprep.subr.bf16.mxu0 %v3346
        %3832 = vmatpush1.bf16.msra.mxu0 %v3345
        %3833 = vmatprep.subr.bf16.mxu0 %v3338
        %3834 = vmatpush1.bf16.msra.mxu0 %v3337
        %3835 = vmatprep.subr.bf16.mxu0 %v3330
        %3836 = vmatpush1.bf16.msra.mxu0 %v3329
        %3837 = vmatprep.subr.bf16.mxu0 %v3322
        %3838 = vmatpush1.bf16.msra.mxu0 %v3321
        %3839 = vmatprep.subr.bf16.mxu0 %v3314
        %3840 = vmatpush1.bf16.msra.mxu0 %v3313
        %3841 = vmatprep.subr.bf16.mxu0 %v3434
        %3842 = vmatpush2.bf16.msra.mxu0 %v3433
        %3843 = vmatprep.subr.bf16.mxu0 %v3426
        %3844 = vmatpush2.bf16.msra.mxu0 %v3425
        %3845 = vmatprep.subr.bf16.mxu0 %v3418
        %3846 = vmatpush2.bf16.msra.mxu0 %v3417
        %3847 = vmatprep.subr.bf16.mxu0 %v3410
        %3848 = vmatpush2.bf16.msra.mxu0 %v3409
        %3849 = vmatprep.subr.bf16.mxu0 %v3402
        %3850 = vmatpush2.bf16.msra.mxu0 %v3401
        %3851 = vmatprep.subr.bf16.mxu0 %v3394
        %3852 = vmatpush2.bf16.msra.mxu0 %v3393
        %3853 = vmatprep.subr.bf16.mxu0 %v3386
        %3854 = vmatpush2.bf16.msra.mxu0 %v3385
        %3855 = vmatprep.subr.bf16.mxu0 %v3378
        %3856 = vmatpush2.bf16.msra.mxu0 %v3377
        %3857 = vmatprep.mubr.bf16.mxu0 %v3049
        %3858 = vmatmul.mubr.bf16.gmra.mxu0 %v3048
        %v3859 = vpop.f32.mrf.mxu0
        %v3860 = vadd.f32 0.0, %v3859
        %v3861 = vpop.f32.mrf.mxu0
        %v3862 = vadd.f32 0.0, %v3861
        %v3863 = vpop.f32.mrf.mxu0
        %v3864 = vpop.f32.mrf.mxu0
        %3865 = vdwg.mxu0
        %3866 = vmatprep.subr.bf16.mxu0 %v3498
        %3867 = vmatpush1.bf16.msra.mxu0 %v3497
        %3868 = vmatprep.subr.bf16.mxu0 %v3490
        %3869 = vmatpush1.bf16.msra.mxu0 %v3489
        %3870 = vmatprep.subr.bf16.mxu0 %v3482
        %3871 = vmatpush1.bf16.msra.mxu0 %v3481
        %3872 = vmatprep.subr.bf16.mxu0 %v3474
        %3873 = vmatpush1.bf16.msra.mxu0 %v3473
        %3874 = vmatprep.subr.bf16.mxu0 %v3466
        %3875 = vmatpush1.bf16.msra.mxu0 %v3465
        %3876 = vmatprep.subr.bf16.mxu0 %v3458
        %3877 = vmatpush1.bf16.msra.mxu0 %v3457
        %3878 = vmatprep.subr.bf16.mxu0 %v3450
        %3879 = vmatpush1.bf16.msra.mxu0 %v3449
        %3880 = vmatprep.subr.bf16.mxu0 %v3442
        %3881 = vmatpush1.bf16.msra.mxu0 %v3441
        %3882 = vmatprep.subr.bf16.mxu0 %v3562
        %3883 = vmatpush2.bf16.msra.mxu0 %v3561
        %3884 = vmatprep.subr.bf16.mxu0 %v3554
        %3885 = vmatpush2.bf16.msra.mxu0 %v3553
        %3886 = vmatprep.subr.bf16.mxu0 %v3546
        %3887 = vmatpush2.bf16.msra.mxu0 %v3545
        %3888 = vmatprep.subr.bf16.mxu0 %v3538
        %3889 = vmatpush2.bf16.msra.mxu0 %v3537
        %3890 = vmatprep.subr.bf16.mxu0 %v3530
        %3891 = vmatpush2.bf16.msra.mxu0 %v3529
        %3892 = vmatprep.subr.bf16.mxu0 %v3522
        %3893 = vmatpush2.bf16.msra.mxu0 %v3521
        %3894 = vmatprep.subr.bf16.mxu0 %v3514
        %3895 = vmatpush2.bf16.msra.mxu0 %v3513
        %3896 = vmatprep.subr.bf16.mxu0 %v3506
        %3897 = vmatpush2.bf16.msra.mxu0 %v3505
        %3898 = vmatprep.mubr.bf16.mxu0 %v3051
        %3899 = vmatmul.mubr.bf16.gmra.mxu0 %v3050
        %v3900 = vpop.f32.mrf.mxu0
        %v3901 = vadd.f32 %v3860, %v3900
        %v3902 = vpop.f32.mrf.mxu0
        %v3903 = vadd.f32 %v3862, %v3902
        %v3904 = vpop.f32.mrf.mxu0
        %v3905 = vpop.f32.mrf.mxu0
        %3906 = vdwg.mxu0
        %3907 = vmatprep.subr.bf16.mxu0 %v3626
        %3908 = vmatpush1.bf16.msra.mxu0 %v3625
        %3909 = vmatprep.subr.bf16.mxu0 %v3618
        %3910 = vmatpush1.bf16.msra.mxu0 %v3617
        %3911 = vmatprep.subr.bf16.mxu0 %v3610
        %3912 = vmatpush1.bf16.msra.mxu0 %v3609
        %3913 = vmatprep.subr.bf16.mxu0 %v3602
        %3914 = vmatpush1.bf16.msra.mxu0 %v3601
        %3915 = vmatprep.subr.bf16.mxu0 %v3594
        %3916 = vmatpush1.bf16.msra.mxu0 %v3593
        %3917 = vmatprep.subr.bf16.mxu0 %v3586
        %3918 = vmatpush1.bf16.msra.mxu0 %v3585
        %3919 = vmatprep.subr.bf16.mxu0 %v3578
        %3920 = vmatpush1.bf16.msra.mxu0 %v3577
        %3921 = vmatprep.subr.bf16.mxu0 %v3570
        %3922 = vmatpush1.bf16.msra.mxu0 %v3569
        %3923 = vmatprep.subr.bf16.mxu0 %v3690
        %3924 = vmatpush2.bf16.msra.mxu0 %v3689
        %3925 = vmatprep.subr.bf16.mxu0 %v3682
        %3926 = vmatpush2.bf16.msra.mxu0 %v3681
        %3927 = vmatprep.subr.bf16.mxu0 %v3674
        %3928 = vmatpush2.bf16.msra.mxu0 %v3673
        %3929 = vmatprep.subr.bf16.mxu0 %v3666
        %3930 = vmatpush2.bf16.msra.mxu0 %v3665
        %3931 = vmatprep.subr.bf16.mxu0 %v3658
        %3932 = vmatpush2.bf16.msra.mxu0 %v3657
        %3933 = vmatprep.subr.bf16.mxu0 %v3650
        %3934 = vmatpush2.bf16.msra.mxu0 %v3649
        %3935 = vmatprep.subr.bf16.mxu0 %v3642
        %3936 = vmatpush2.bf16.msra.mxu0 %v3641
        %3937 = vmatprep.subr.bf16.mxu0 %v3634
        %3938 = vmatpush2.bf16.msra.mxu0 %v3633
        %3939 = vmatprep.mubr.bf16.mxu0 %v3053
        %3940 = vmatmul.mubr.bf16.gmra.mxu0 %v3052
        %v3941 = vpop.f32.mrf.mxu0
        %v3942 = vadd.f32 %v3901, %v3941
        %v3943 = vpop.f32.mrf.mxu0
        %v3944 = vadd.f32 %v3903, %v3943
        %v3945 = vpop.f32.mrf.mxu0
        %v3946 = vpop.f32.mrf.mxu0
        %3947 = vdwg.mxu0
        %3948 = vmatprep.subr.bf16.mxu0 %v3754
        %3949 = vmatpush1.bf16.msra.mxu0 %v3753
        %3950 = vmatprep.subr.bf16.mxu0 %v3746
        %3951 = vmatpush1.bf16.msra.mxu0 %v3745
        %3952 = vmatprep.subr.bf16.mxu0 %v3738
        %3953 = vmatpush1.bf16.msra.mxu0 %v3737
        %3954 = vmatprep.subr.bf16.mxu0 %v3730
        %3955 = vmatpush1.bf16.msra.mxu0 %v3729
        %3956 = vmatprep.subr.bf16.mxu0 %v3722
        %3957 = vmatpush1.bf16.msra.mxu0 %v3721
        %3958 = vmatprep.subr.bf16.mxu0 %v3714
        %3959 = vmatpush1.bf16.msra.mxu0 %v3713
        %3960 = vmatprep.subr.bf16.mxu0 %v3706
        %3961 = vmatpush1.bf16.msra.mxu0 %v3705
        %3962 = vmatprep.subr.bf16.mxu0 %v3698
        %3963 = vmatpush1.bf16.msra.mxu0 %v3697
        %3964 = vmatprep.subr.bf16.mxu0 %v3818
        %3965 = vmatpush2.bf16.msra.mxu0 %v3817
        %3966 = vmatprep.subr.bf16.mxu0 %v3810
        %3967 = vmatpush2.bf16.msra.mxu0 %v3809
        %3968 = vmatprep.subr.bf16.mxu0 %v3802
        %3969 = vmatpush2.bf16.msra.mxu0 %v3801
        %3970 = vmatprep.subr.bf16.mxu0 %v3794
        %3971 = vmatpush2.bf16.msra.mxu0 %v3793
        %3972 = vmatprep.subr.bf16.mxu0 %v3786
        %3973 = vmatpush2.bf16.msra.mxu0 %v3785
        %3974 = vmatprep.subr.bf16.mxu0 %v3778
        %3975 = vmatpush2.bf16.msra.mxu0 %v3777
        %3976 = vmatprep.subr.bf16.mxu0 %v3770
        %3977 = vmatpush2.bf16.msra.mxu0 %v3769
        %3978 = vmatprep.subr.bf16.mxu0 %v3762
        %3979 = vmatpush2.bf16.msra.mxu0 %v3761
        %3980 = vmatprep.mubr.bf16.mxu0 %v3055
        %3981 = vmatmul.mubr.bf16.gmra.mxu0 %v3054
        %v3982 = vpop.f32.mrf.mxu0
        %v3983 = vadd.f32 %v3942, %v3982
        %v3984 = vpop.f32.mrf.mxu0
        %v3985 = vadd.f32 %v3944, %v3984
        %v3986 = vpop.f32.mrf.mxu0
        %v3987 = vpop.f32.mrf.mxu0
        %3988 = vdwg.mxu0
        %3989 = vmatprep.subr.bf16.mxu0 %v3372
        %3990 = vmatpush1.bf16.msra.mxu0 %v3371
        %3991 = vmatprep.subr.bf16.mxu0 %v3364
        %3992 = vmatpush1.bf16.msra.mxu0 %v3363
        %3993 = vmatprep.subr.bf16.mxu0 %v3356
        %3994 = vmatpush1.bf16.msra.mxu0 %v3355
        %3995 = vmatprep.subr.bf16.mxu0 %v3348
        %3996 = vmatpush1.bf16.msra.mxu0 %v3347
        %3997 = vmatprep.subr.bf16.mxu0 %v3340
        %3998 = vmatpush1.bf16.msra.mxu0 %v3339
        %3999 = vmatprep.subr.bf16.mxu0 %v3332
        %4000 = vmatpush1.bf16.msra.mxu0 %v3331
        %4001 = vmatprep.subr.bf16.mxu0 %v3324
        %4002 = vmatpush1.bf16.msra.mxu0 %v3323
        %4003 = vmatprep.subr.bf16.mxu0 %v3316
        %4004 = vmatpush1.bf16.msra.mxu0 %v3315
        %4005 = vmatprep.subr.bf16.mxu0 %v3436
        %4006 = vmatpush2.bf16.msra.mxu0 %v3435
        %4007 = vmatprep.subr.bf16.mxu0 %v3428
        %4008 = vmatpush2.bf16.msra.mxu0 %v3427
        %4009 = vmatprep.subr.bf16.mxu0 %v3420
        %4010 = vmatpush2.bf16.msra.mxu0 %v3419
        %4011 = vmatprep.subr.bf16.mxu0 %v3412
        %4012 = vmatpush2.bf16.msra.mxu0 %v3411
        %4013 = vmatprep.subr.bf16.mxu0 %v3404
        %4014 = vmatpush2.bf16.msra.mxu0 %v3403
        %4015 = vmatprep.subr.bf16.mxu0 %v3396
        %4016 = vmatpush2.bf16.msra.mxu0 %v3395
        %4017 = vmatprep.subr.bf16.mxu0 %v3388
        %4018 = vmatpush2.bf16.msra.mxu0 %v3387
        %4019 = vmatprep.subr.bf16.mxu0 %v3380
        %4020 = vmatpush2.bf16.msra.mxu0 %v3379
        %4021 = vmatprep.mubr.bf16.mxu0 %v3049
        %4022 = vmatmul.mubr.bf16.gmra.mxu0 %v3048
        %v4023 = vpop.f32.mrf.mxu0
        %v4024 = vadd.f32 0.0, %v4023
        %v4025 = vpop.f32.mrf.mxu0
        %v4026 = vadd.f32 0.0, %v4025
        %v4027 = vpop.f32.mrf.mxu0
        %v4028 = vpop.f32.mrf.mxu0
        %4029 = vdwg.mxu0
        %4030 = vmatprep.subr.bf16.mxu0 %v3500
        %4031 = vmatpush1.bf16.msra.mxu0 %v3499
        %4032 = vmatprep.subr.bf16.mxu0 %v3492
        %4033 = vmatpush1.bf16.msra.mxu0 %v3491
        %4034 = vmatprep.subr.bf16.mxu0 %v3484
        %4035 = vmatpush1.bf16.msra.mxu0 %v3483
        %4036 = vmatprep.subr.bf16.mxu0 %v3476
        %4037 = vmatpush1.bf16.msra.mxu0 %v3475
        %4038 = vmatprep.subr.bf16.mxu0 %v3468
        %4039 = vmatpush1.bf16.msra.mxu0 %v3467
        %4040 = vmatprep.subr.bf16.mxu0 %v3460
        %4041 = vmatpush1.bf16.msra.mxu0 %v3459
        %4042 = vmatprep.subr.bf16.mxu0 %v3452
        %4043 = vmatpush1.bf16.msra.mxu0 %v3451
        %4044 = vmatprep.subr.bf16.mxu0 %v3444
        %4045 = vmatpush1.bf16.msra.mxu0 %v3443
        %4046 = vmatprep.subr.bf16.mxu0 %v3564
        %4047 = vmatpush2.bf16.msra.mxu0 %v3563
        %4048 = vmatprep.subr.bf16.mxu0 %v3556
        %4049 = vmatpush2.bf16.msra.mxu0 %v3555
        %4050 = vmatprep.subr.bf16.mxu0 %v3548
        %4051 = vmatpush2.bf16.msra.mxu0 %v3547
        %4052 = vmatprep.subr.bf16.mxu0 %v3540
        %4053 = vmatpush2.bf16.msra.mxu0 %v3539
        %4054 = vmatprep.subr.bf16.mxu0 %v3532
        %4055 = vmatpush2.bf16.msra.mxu0 %v3531
        %4056 = vmatprep.subr.bf16.mxu0 %v3524
        %4057 = vmatpush2.bf16.msra.mxu0 %v3523
        %4058 = vmatprep.subr.bf16.mxu0 %v3516
        %4059 = vmatpush2.bf16.msra.mxu0 %v3515
        %4060 = vmatprep.subr.bf16.mxu0 %v3508
        %4061 = vmatpush2.bf16.msra.mxu0 %v3507
        %4062 = vmatprep.mubr.bf16.mxu0 %v3051
        %4063 = vmatmul.mubr.bf16.gmra.mxu0 %v3050
        %v4064 = vpop.f32.mrf.mxu0
        %v4065 = vadd.f32 %v4024, %v4064
        %v4066 = vpop.f32.mrf.mxu0
        %v4067 = vadd.f32 %v4026, %v4066
        %v4068 = vpop.f32.mrf.mxu0
        %v4069 = vpop.f32.mrf.mxu0
        %4070 = vdwg.mxu0
        %4071 = vmatprep.subr.bf16.mxu0 %v3628
        %4072 = vmatpush1.bf16.msra.mxu0 %v3627
        %4073 = vmatprep.subr.bf16.mxu0 %v3620
        %4074 = vmatpush1.bf16.msra.mxu0 %v3619
        %4075 = vmatprep.subr.bf16.mxu0 %v3612
        %4076 = vmatpush1.bf16.msra.mxu0 %v3611
        %4077 = vmatprep.subr.bf16.mxu0 %v3604
        %4078 = vmatpush1.bf16.msra.mxu0 %v3603
        %4079 = vmatprep.subr.bf16.mxu0 %v3596
        %4080 = vmatpush1.bf16.msra.mxu0 %v3595
        %4081 = vmatprep.subr.bf16.mxu0 %v3588
        %4082 = vmatpush1.bf16.msra.mxu0 %v3587
        %4083 = vmatprep.subr.bf16.mxu0 %v3580
        %4084 = vmatpush1.bf16.msra.mxu0 %v3579
        %4085 = vmatprep.subr.bf16.mxu0 %v3572
        %4086 = vmatpush1.bf16.msra.mxu0 %v3571
        %4087 = vmatprep.subr.bf16.mxu0 %v3692
        %4088 = vmatpush2.bf16.msra.mxu0 %v3691
        %4089 = vmatprep.subr.bf16.mxu0 %v3684
        %4090 = vmatpush2.bf16.msra.mxu0 %v3683
        %4091 = vmatprep.subr.bf16.mxu0 %v3676
        %4092 = vmatpush2.bf16.msra.mxu0 %v3675
        %4093 = vmatprep.subr.bf16.mxu0 %v3668
        %4094 = vmatpush2.bf16.msra.mxu0 %v3667
        %4095 = vmatprep.subr.bf16.mxu0 %v3660
        %4096 = vmatpush2.bf16.msra.mxu0 %v3659
        %4097 = vmatprep.subr.bf16.mxu0 %v3652
        %4098 = vmatpush2.bf16.msra.mxu0 %v3651
        %4099 = vmatprep.subr.bf16.mxu0 %v3644
        %4100 = vmatpush2.bf16.msra.mxu0 %v3643
        %4101 = vmatprep.subr.bf16.mxu0 %v3636
        %4102 = vmatpush2.bf16.msra.mxu0 %v3635
        %4103 = vmatprep.mubr.bf16.mxu0 %v3053
        %4104 = vmatmul.mubr.bf16.gmra.mxu0 %v3052
        %v4105 = vpop.f32.mrf.mxu0
        %v4106 = vadd.f32 %v4065, %v4105
        %v4107 = vpop.f32.mrf.mxu0
        %v4108 = vadd.f32 %v4067, %v4107
        %v4109 = vpop.f32.mrf.mxu0
        %v4110 = vpop.f32.mrf.mxu0
        %4111 = vdwg.mxu0
        %4112 = vmatprep.subr.bf16.mxu0 %v3756
        %4113 = vmatpush1.bf16.msra.mxu0 %v3755
        %4114 = vmatprep.subr.bf16.mxu0 %v3748
        %4115 = vmatpush1.bf16.msra.mxu0 %v3747
        %4116 = vmatprep.subr.bf16.mxu0 %v3740
        %4117 = vmatpush1.bf16.msra.mxu0 %v3739
        %4118 = vmatprep.subr.bf16.mxu0 %v3732
        %4119 = vmatpush1.bf16.msra.mxu0 %v3731
        %4120 = vmatprep.subr.bf16.mxu0 %v3724
        %4121 = vmatpush1.bf16.msra.mxu0 %v3723
        %4122 = vmatprep.subr.bf16.mxu0 %v3716
        %4123 = vmatpush1.bf16.msra.mxu0 %v3715
        %4124 = vmatprep.subr.bf16.mxu0 %v3708
        %4125 = vmatpush1.bf16.msra.mxu0 %v3707
        %4126 = vmatprep.subr.bf16.mxu0 %v3700
        %4127 = vmatpush1.bf16.msra.mxu0 %v3699
        %4128 = vmatprep.subr.bf16.mxu0 %v3820
        %4129 = vmatpush2.bf16.msra.mxu0 %v3819
        %4130 = vmatprep.subr.bf16.mxu0 %v3812
        %4131 = vmatpush2.bf16.msra.mxu0 %v3811
        %4132 = vmatprep.subr.bf16.mxu0 %v3804
        %4133 = vmatpush2.bf16.msra.mxu0 %v3803
        %4134 = vmatprep.subr.bf16.mxu0 %v3796
        %4135 = vmatpush2.bf16.msra.mxu0 %v3795
        %4136 = vmatprep.subr.bf16.mxu0 %v3788
        %4137 = vmatpush2.bf16.msra.mxu0 %v3787
        %4138 = vmatprep.subr.bf16.mxu0 %v3780
        %4139 = vmatpush2.bf16.msra.mxu0 %v3779
        %4140 = vmatprep.subr.bf16.mxu0 %v3772
        %4141 = vmatpush2.bf16.msra.mxu0 %v3771
        %4142 = vmatprep.subr.bf16.mxu0 %v3764
        %4143 = vmatpush2.bf16.msra.mxu0 %v3763
        %4144 = vmatprep.mubr.bf16.mxu0 %v3055
        %4145 = vmatmul.mubr.bf16.gmra.mxu0 %v3054
        %v4146 = vpop.f32.mrf.mxu0
        %v4147 = vadd.f32 %v4106, %v4146
        %v4148 = vpop.f32.mrf.mxu0
        %v4149 = vadd.f32 %v4108, %v4148
        %v4150 = vpop.f32.mrf.mxu0
        %v4151 = vpop.f32.mrf.mxu0
        %4152 = vdwg.mxu0
        %4153 = vmatprep.subr.bf16.mxu0 %v3374
        %4154 = vmatpush1.bf16.msra.mxu0 %v3373
        %4155 = vmatprep.subr.bf16.mxu0 %v3366
        %4156 = vmatpush1.bf16.msra.mxu0 %v3365
        %4157 = vmatprep.subr.bf16.mxu0 %v3358
        %4158 = vmatpush1.bf16.msra.mxu0 %v3357
        %4159 = vmatprep.subr.bf16.mxu0 %v3350
        %4160 = vmatpush1.bf16.msra.mxu0 %v3349
        %4161 = vmatprep.subr.bf16.mxu0 %v3342
        %4162 = vmatpush1.bf16.msra.mxu0 %v3341
        %4163 = vmatprep.subr.bf16.mxu0 %v3334
        %4164 = vmatpush1.bf16.msra.mxu0 %v3333
        %4165 = vmatprep.subr.bf16.mxu0 %v3326
        %4166 = vmatpush1.bf16.msra.mxu0 %v3325
        %4167 = vmatprep.subr.bf16.mxu0 %v3318
        %4168 = vmatpush1.bf16.msra.mxu0 %v3317
        %4169 = vmatprep.subr.bf16.mxu0 %v3438
        %4170 = vmatpush2.bf16.msra.mxu0 %v3437
        %4171 = vmatprep.subr.bf16.mxu0 %v3430
        %4172 = vmatpush2.bf16.msra.mxu0 %v3429
        %4173 = vmatprep.subr.bf16.mxu0 %v3422
        %4174 = vmatpush2.bf16.msra.mxu0 %v3421
        %4175 = vmatprep.subr.bf16.mxu0 %v3414
        %4176 = vmatpush2.bf16.msra.mxu0 %v3413
        %4177 = vmatprep.subr.bf16.mxu0 %v3406
        %4178 = vmatpush2.bf16.msra.mxu0 %v3405
        %4179 = vmatprep.subr.bf16.mxu0 %v3398
        %4180 = vmatpush2.bf16.msra.mxu0 %v3397
        %4181 = vmatprep.subr.bf16.mxu0 %v3390
        %4182 = vmatpush2.bf16.msra.mxu0 %v3389
        %4183 = vmatprep.subr.bf16.mxu0 %v3382
        %4184 = vmatpush2.bf16.msra.mxu0 %v3381
        %4185 = vmatprep.mubr.bf16.mxu0 %v3049
        %4186 = vmatmul.mubr.bf16.gmra.mxu0 %v3048
        %v4187 = vpop.f32.mrf.mxu0
        %v4188 = vadd.f32 0.0, %v4187
        %v4189 = vpop.f32.mrf.mxu0
        %v4190 = vadd.f32 0.0, %v4189
        %v4191 = vpop.f32.mrf.mxu0
        %v4192 = vpop.f32.mrf.mxu0
        %4193 = vdwg.mxu0
        %4194 = vmatprep.subr.bf16.mxu0 %v3502
        %4195 = vmatpush1.bf16.msra.mxu0 %v3501
        %4196 = vmatprep.subr.bf16.mxu0 %v3494
        %4197 = vmatpush1.bf16.msra.mxu0 %v3493
        %4198 = vmatprep.subr.bf16.mxu0 %v3486
        %4199 = vmatpush1.bf16.msra.mxu0 %v3485
        %4200 = vmatprep.subr.bf16.mxu0 %v3478
        %4201 = vmatpush1.bf16.msra.mxu0 %v3477
        %4202 = vmatprep.subr.bf16.mxu0 %v3470
        %4203 = vmatpush1.bf16.msra.mxu0 %v3469
        %4204 = vmatprep.subr.bf16.mxu0 %v3462
        %4205 = vmatpush1.bf16.msra.mxu0 %v3461
        %4206 = vmatprep.subr.bf16.mxu0 %v3454
        %4207 = vmatpush1.bf16.msra.mxu0 %v3453
        %4208 = vmatprep.subr.bf16.mxu0 %v3446
        %4209 = vmatpush1.bf16.msra.mxu0 %v3445
        %4210 = vmatprep.subr.bf16.mxu0 %v3566
        %4211 = vmatpush2.bf16.msra.mxu0 %v3565
        %4212 = vmatprep.subr.bf16.mxu0 %v3558
        %4213 = vmatpush2.bf16.msra.mxu0 %v3557
        %4214 = vmatprep.subr.bf16.mxu0 %v3550
        %4215 = vmatpush2.bf16.msra.mxu0 %v3549
        %4216 = vmatprep.subr.bf16.mxu0 %v3542
        %4217 = vmatpush2.bf16.msra.mxu0 %v3541
        %4218 = vmatprep.subr.bf16.mxu0 %v3534
        %4219 = vmatpush2.bf16.msra.mxu0 %v3533
        %4220 = vmatprep.subr.bf16.mxu0 %v3526
        %4221 = vmatpush2.bf16.msra.mxu0 %v3525
        %4222 = vmatprep.subr.bf16.mxu0 %v3518
        %4223 = vmatpush2.bf16.msra.mxu0 %v3517
        %4224 = vmatprep.subr.bf16.mxu0 %v3510
        %4225 = vmatpush2.bf16.msra.mxu0 %v3509
        %4226 = vmatprep.mubr.bf16.mxu0 %v3051
        %4227 = vmatmul.mubr.bf16.gmra.mxu0 %v3050
        %v4228 = vpop.f32.mrf.mxu0
        %v4229 = vadd.f32 %v4188, %v4228
        %v4230 = vpop.f32.mrf.mxu0
        %v4231 = vadd.f32 %v4190, %v4230
        %v4232 = vpop.f32.mrf.mxu0
        %v4233 = vpop.f32.mrf.mxu0
        %4234 = vdwg.mxu0
        %4235 = vmatprep.subr.bf16.mxu0 %v3630
        %4236 = vmatpush1.bf16.msra.mxu0 %v3629
        %4237 = vmatprep.subr.bf16.mxu0 %v3622
        %4238 = vmatpush1.bf16.msra.mxu0 %v3621
        %4239 = vmatprep.subr.bf16.mxu0 %v3614
        %4240 = vmatpush1.bf16.msra.mxu0 %v3613
        %4241 = vmatprep.subr.bf16.mxu0 %v3606
        %4242 = vmatpush1.bf16.msra.mxu0 %v3605
        %4243 = vmatprep.subr.bf16.mxu0 %v3598
        %4244 = vmatpush1.bf16.msra.mxu0 %v3597
        %4245 = vmatprep.subr.bf16.mxu0 %v3590
        %4246 = vmatpush1.bf16.msra.mxu0 %v3589
        %4247 = vmatprep.subr.bf16.mxu0 %v3582
        %4248 = vmatpush1.bf16.msra.mxu0 %v3581
        %4249 = vmatprep.subr.bf16.mxu0 %v3574
        %4250 = vmatpush1.bf16.msra.mxu0 %v3573
        %4251 = vmatprep.subr.bf16.mxu0 %v3694
        %4252 = vmatpush2.bf16.msra.mxu0 %v3693
        %4253 = vmatprep.subr.bf16.mxu0 %v3686
        %4254 = vmatpush2.bf16.msra.mxu0 %v3685
        %4255 = vmatprep.subr.bf16.mxu0 %v3678
        %4256 = vmatpush2.bf16.msra.mxu0 %v3677
        %4257 = vmatprep.subr.bf16.mxu0 %v3670
        %4258 = vmatpush2.bf16.msra.mxu0 %v3669
        %4259 = vmatprep.subr.bf16.mxu0 %v3662
        %4260 = vmatpush2.bf16.msra.mxu0 %v3661
        %4261 = vmatprep.subr.bf16.mxu0 %v3654
        %4262 = vmatpush2.bf16.msra.mxu0 %v3653
        %4263 = vmatprep.subr.bf16.mxu0 %v3646
        %4264 = vmatpush2.bf16.msra.mxu0 %v3645
        %4265 = vmatprep.subr.bf16.mxu0 %v3638
        %4266 = vmatpush2.bf16.msra.mxu0 %v3637
        %4267 = vmatprep.mubr.bf16.mxu0 %v3053
        %4268 = vmatmul.mubr.bf16.gmra.mxu0 %v3052
        %v4269 = vpop.f32.mrf.mxu0
        %v4270 = vadd.f32 %v4229, %v4269
        %v4271 = vpop.f32.mrf.mxu0
        %v4272 = vadd.f32 %v4231, %v4271
        %v4273 = vpop.f32.mrf.mxu0
        %v4274 = vpop.f32.mrf.mxu0
        %4275 = vdwg.mxu0
        %4276 = vmatprep.subr.bf16.mxu0 %v3758
        %4277 = vmatpush1.bf16.msra.mxu0 %v3757
        %4278 = vmatprep.subr.bf16.mxu0 %v3750
        %4279 = vmatpush1.bf16.msra.mxu0 %v3749
        %4280 = vmatprep.subr.bf16.mxu0 %v3742
        %4281 = vmatpush1.bf16.msra.mxu0 %v3741
        %4282 = vmatprep.subr.bf16.mxu0 %v3734
        %4283 = vmatpush1.bf16.msra.mxu0 %v3733
        %4284 = vmatprep.subr.bf16.mxu0 %v3726
        %4285 = vmatpush1.bf16.msra.mxu0 %v3725
        %4286 = vmatprep.subr.bf16.mxu0 %v3718
        %4287 = vmatpush1.bf16.msra.mxu0 %v3717
        %4288 = vmatprep.subr.bf16.mxu0 %v3710
        %4289 = vmatpush1.bf16.msra.mxu0 %v3709
        %4290 = vmatprep.subr.bf16.mxu0 %v3702
        %4291 = vmatpush1.bf16.msra.mxu0 %v3701
        %4292 = vmatprep.subr.bf16.mxu0 %v3822
        %4293 = vmatpush2.bf16.msra.mxu0 %v3821
        %4294 = vmatprep.subr.bf16.mxu0 %v3814
        %4295 = vmatpush2.bf16.msra.mxu0 %v3813
        %4296 = vmatprep.subr.bf16.mxu0 %v3806
        %4297 = vmatpush2.bf16.msra.mxu0 %v3805
        %4298 = vmatprep.subr.bf16.mxu0 %v3798
        %4299 = vmatpush2.bf16.msra.mxu0 %v3797
        %4300 = vmatprep.subr.bf16.mxu0 %v3790
        %4301 = vmatpush2.bf16.msra.mxu0 %v3789
        %4302 = vmatprep.subr.bf16.mxu0 %v3782
        %4303 = vmatpush2.bf16.msra.mxu0 %v3781
        %4304 = vmatprep.subr.bf16.mxu0 %v3774
        %4305 = vmatpush2.bf16.msra.mxu0 %v3773
        %4306 = vmatprep.subr.bf16.mxu0 %v3766
        %4307 = vmatpush2.bf16.msra.mxu0 %v3765
        %4308 = vmatprep.mubr.bf16.mxu0 %v3055
        %4309 = vmatmul.mubr.bf16.gmra.mxu0 %v3054
        %v4310 = vpop.f32.mrf.mxu0
        %v4311 = vadd.f32 %v4270, %v4310
        %v4312 = vpop.f32.mrf.mxu0
        %v4313 = vadd.f32 %v4272, %v4312
        %v4314 = vpop.f32.mrf.mxu0
        %v4315 = vpop.f32.mrf.mxu0
        %4316 = vdwg.mxu0
        %4317 = vmatprep.subr.bf16.mxu0 %v3376
        %4318 = vmatpush1.bf16.msra.mxu0 %v3375
        %4319 = vmatprep.subr.bf16.mxu0 %v3368
        %4320 = vmatpush1.bf16.msra.mxu0 %v3367
        %4321 = vmatprep.subr.bf16.mxu0 %v3360
        %4322 = vmatpush1.bf16.msra.mxu0 %v3359
        %4323 = vmatprep.subr.bf16.mxu0 %v3352
        %4324 = vmatpush1.bf16.msra.mxu0 %v3351
        %4325 = vmatprep.subr.bf16.mxu0 %v3344
        %4326 = vmatpush1.bf16.msra.mxu0 %v3343
        %4327 = vmatprep.subr.bf16.mxu0 %v3336
        %4328 = vmatpush1.bf16.msra.mxu0 %v3335
        %4329 = vmatprep.subr.bf16.mxu0 %v3328
        %4330 = vmatpush1.bf16.msra.mxu0 %v3327
        %4331 = vmatprep.subr.bf16.mxu0 %v3320
        %4332 = vmatpush1.bf16.msra.mxu0 %v3319
        %4333 = vmatprep.subr.bf16.mxu0 %v3440
        %4334 = vmatpush2.bf16.msra.mxu0 %v3439
        %4335 = vmatprep.subr.bf16.mxu0 %v3432
        %4336 = vmatpush2.bf16.msra.mxu0 %v3431
        %4337 = vmatprep.subr.bf16.mxu0 %v3424
        %4338 = vmatpush2.bf16.msra.mxu0 %v3423
        %4339 = vmatprep.subr.bf16.mxu0 %v3416
        %4340 = vmatpush2.bf16.msra.mxu0 %v3415
        %4341 = vmatprep.subr.bf16.mxu0 %v3408
        %4342 = vmatpush2.bf16.msra.mxu0 %v3407
        %4343 = vmatprep.subr.bf16.mxu0 %v3400
        %4344 = vmatpush2.bf16.msra.mxu0 %v3399
        %4345 = vmatprep.subr.bf16.mxu0 %v3392
        %4346 = vmatpush2.bf16.msra.mxu0 %v3391
        %4347 = vmatprep.subr.bf16.mxu0 %v3384
        %4348 = vmatpush2.bf16.msra.mxu0 %v3383
        %4349 = vmatprep.mubr.bf16.mxu0 %v3049
        %4350 = vmatmul.mubr.bf16.gmra.mxu0 %v3048
        %v4351 = vpop.f32.mrf.mxu0
        %v4352 = vadd.f32 0.0, %v4351
        %v4353 = vpop.f32.mrf.mxu0
        %v4354 = vadd.f32 0.0, %v4353
        %v4355 = vpop.f32.mrf.mxu0
        %v4356 = vpop.f32.mrf.mxu0
        %4357 = vdwg.mxu0
        %4358 = vmatprep.subr.bf16.mxu0 %v3504
        %4359 = vmatpush1.bf16.msra.mxu0 %v3503
        %4360 = vmatprep.subr.bf16.mxu0 %v3496
        %4361 = vmatpush1.bf16.msra.mxu0 %v3495
        %4362 = vmatprep.subr.bf16.mxu0 %v3488
        %4363 = vmatpush1.bf16.msra.mxu0 %v3487
        %4364 = vmatprep.subr.bf16.mxu0 %v3480
        %4365 = vmatpush1.bf16.msra.mxu0 %v3479
        %4366 = vmatprep.subr.bf16.mxu0 %v3472
        %4367 = vmatpush1.bf16.msra.mxu0 %v3471
        %4368 = vmatprep.subr.bf16.mxu0 %v3464
        %4369 = vmatpush1.bf16.msra.mxu0 %v3463
        %4370 = vmatprep.subr.bf16.mxu0 %v3456
        %4371 = vmatpush1.bf16.msra.mxu0 %v3455
        %4372 = vmatprep.subr.bf16.mxu0 %v3448
        %4373 = vmatpush1.bf16.msra.mxu0 %v3447
        %4374 = vmatprep.subr.bf16.mxu0 %v3568
        %4375 = vmatpush2.bf16.msra.mxu0 %v3567
        %4376 = vmatprep.subr.bf16.mxu0 %v3560
        %4377 = vmatpush2.bf16.msra.mxu0 %v3559
        %4378 = vmatprep.subr.bf16.mxu0 %v3552
        %4379 = vmatpush2.bf16.msra.mxu0 %v3551
        %4380 = vmatprep.subr.bf16.mxu0 %v3544
        %4381 = vmatpush2.bf16.msra.mxu0 %v3543
        %4382 = vmatprep.subr.bf16.mxu0 %v3536
        %4383 = vmatpush2.bf16.msra.mxu0 %v3535
        %4384 = vmatprep.subr.bf16.mxu0 %v3528
        %4385 = vmatpush2.bf16.msra.mxu0 %v3527
        %4386 = vmatprep.subr.bf16.mxu0 %v3520
        %4387 = vmatpush2.bf16.msra.mxu0 %v3519
        %4388 = vmatprep.subr.bf16.mxu0 %v3512
        %4389 = vmatpush2.bf16.msra.mxu0 %v3511
        %4390 = vmatprep.mubr.bf16.mxu0 %v3051
        %4391 = vmatmul.mubr.bf16.gmra.mxu0 %v3050
        %v4392 = vpop.f32.mrf.mxu0
        %v4393 = vadd.f32 %v4352, %v4392
        %v4394 = vpop.f32.mrf.mxu0
        %v4395 = vadd.f32 %v4354, %v4394
        %v4396 = vpop.f32.mrf.mxu0
        %v4397 = vpop.f32.mrf.mxu0
        %4398 = vdwg.mxu0
        %4399 = vmatprep.subr.bf16.mxu0 %v3632
        %4400 = vmatpush1.bf16.msra.mxu0 %v3631
        %4401 = vmatprep.subr.bf16.mxu0 %v3624
        %4402 = vmatpush1.bf16.msra.mxu0 %v3623
        %4403 = vmatprep.subr.bf16.mxu0 %v3616
        %4404 = vmatpush1.bf16.msra.mxu0 %v3615
        %4405 = vmatprep.subr.bf16.mxu0 %v3608
        %4406 = vmatpush1.bf16.msra.mxu0 %v3607
        %4407 = vmatprep.subr.bf16.mxu0 %v3600
        %4408 = vmatpush1.bf16.msra.mxu0 %v3599
        %4409 = vmatprep.subr.bf16.mxu0 %v3592
        %4410 = vmatpush1.bf16.msra.mxu0 %v3591
        %4411 = vmatprep.subr.bf16.mxu0 %v3584
        %4412 = vmatpush1.bf16.msra.mxu0 %v3583
        %4413 = vmatprep.subr.bf16.mxu0 %v3576
        %4414 = vmatpush1.bf16.msra.mxu0 %v3575
        %4415 = vmatprep.subr.bf16.mxu0 %v3696
        %4416 = vmatpush2.bf16.msra.mxu0 %v3695
        %4417 = vmatprep.subr.bf16.mxu0 %v3688
        %4418 = vmatpush2.bf16.msra.mxu0 %v3687
        %4419 = vmatprep.subr.bf16.mxu0 %v3680
        %4420 = vmatpush2.bf16.msra.mxu0 %v3679
        %4421 = vmatprep.subr.bf16.mxu0 %v3672
        %4422 = vmatpush2.bf16.msra.mxu0 %v3671
        %4423 = vmatprep.subr.bf16.mxu0 %v3664
        %4424 = vmatpush2.bf16.msra.mxu0 %v3663
        %4425 = vmatprep.subr.bf16.mxu0 %v3656
        %4426 = vmatpush2.bf16.msra.mxu0 %v3655
        %4427 = vmatprep.subr.bf16.mxu0 %v3648
        %4428 = vmatpush2.bf16.msra.mxu0 %v3647
        %4429 = vmatprep.subr.bf16.mxu0 %v3640
        %4430 = vmatpush2.bf16.msra.mxu0 %v3639
        %4431 = vmatprep.mubr.bf16.mxu0 %v3053
        %4432 = vmatmul.mubr.bf16.gmra.mxu0 %v3052
        %v4433 = vpop.f32.mrf.mxu0
        %v4434 = vadd.f32 %v4393, %v4433
        %v4435 = vpop.f32.mrf.mxu0
        %v4436 = vadd.f32 %v4395, %v4435
        %v4437 = vpop.f32.mrf.mxu0
        %v4438 = vpop.f32.mrf.mxu0
        %4439 = vdwg.mxu0
        %4440 = vmatprep.subr.bf16.mxu0 %v3760
        %4441 = vmatpush1.bf16.msra.mxu0 %v3759
        %4442 = vmatprep.subr.bf16.mxu0 %v3752
        %4443 = vmatpush1.bf16.msra.mxu0 %v3751
        %4444 = vmatprep.subr.bf16.mxu0 %v3744
        %4445 = vmatpush1.bf16.msra.mxu0 %v3743
        %4446 = vmatprep.subr.bf16.mxu0 %v3736
        %4447 = vmatpush1.bf16.msra.mxu0 %v3735
        %4448 = vmatprep.subr.bf16.mxu0 %v3728
        %4449 = vmatpush1.bf16.msra.mxu0 %v3727
        %4450 = vmatprep.subr.bf16.mxu0 %v3720
        %4451 = vmatpush1.bf16.msra.mxu0 %v3719
        %4452 = vmatprep.subr.bf16.mxu0 %v3712
        %4453 = vmatpush1.bf16.msra.mxu0 %v3711
        %4454 = vmatprep.subr.bf16.mxu0 %v3704
        %4455 = vmatpush1.bf16.msra.mxu0 %v3703
        %4456 = vmatprep.subr.bf16.mxu0 %v3824
        %4457 = vmatpush2.bf16.msra.mxu0 %v3823
        %4458 = vmatprep.subr.bf16.mxu0 %v3816
        %4459 = vmatpush2.bf16.msra.mxu0 %v3815
        %4460 = vmatprep.subr.bf16.mxu0 %v3808
        %4461 = vmatpush2.bf16.msra.mxu0 %v3807
        %4462 = vmatprep.subr.bf16.mxu0 %v3800
        %4463 = vmatpush2.bf16.msra.mxu0 %v3799
        %4464 = vmatprep.subr.bf16.mxu0 %v3792
        %4465 = vmatpush2.bf16.msra.mxu0 %v3791
        %4466 = vmatprep.subr.bf16.mxu0 %v3784
        %4467 = vmatpush2.bf16.msra.mxu0 %v3783
        %4468 = vmatprep.subr.bf16.mxu0 %v3776
        %4469 = vmatpush2.bf16.msra.mxu0 %v3775
        %4470 = vmatprep.subr.bf16.mxu0 %v3768
        %4471 = vmatpush2.bf16.msra.mxu0 %v3767
        %4472 = vmatprep.mubr.bf16.mxu0 %v3055
        %4473 = vmatmul.mubr.bf16.gmra.mxu0 %v3054
        %v4474 = vpop.f32.mrf.mxu0
        %v4475 = vadd.f32 %v4434, %v4474
        %v4476 = vpop.f32.mrf.mxu0
        %v4477 = vadd.f32 %v4436, %v4476
        %v4478 = vpop.f32.mrf.mxu0
        %v4479 = vpop.f32.mrf.mxu0
        %4480 = vdwg.mxu0
        %v4483 = vlaneseq
        %v4484 = vshrl.u32 %v4483, 7
        %v4485 = vsub.s32 0, %v4484
        %v4486 = vrot.slane %v3038, %v4485
        %v4487 = vlaneseq
        %v4488 = vshrl.u32 %v4487, 7
        %v4489 = vsub.s32 2, %v4488
        %v4490 = vrot.slane %v3038, %v4489
        %v4491 = vlaneseq
        %v4492 = vshrl.u32 %v4491, 7
        %v4493 = vsub.s32 4, %v4492
        %v4494 = vrot.slane %v3038, %v4493
        %v4495 = vlaneseq
        %v4496 = vshrl.u32 %v4495, 7
        %v4497 = vsub.s32 6, %v4496
        %v4498 = vrot.slane %v3038, %v4497
        %v4499 = vlaneseq
        %v4500 = vshrl.u32 %v4499, 7
        %v4501 = vsub.s32 0, %v4500
        %v4502 = vrot.slane %v3039, %v4501
        %v4503 = vlaneseq
        %v4504 = vshrl.u32 %v4503, 7
        %v4505 = vsub.s32 2, %v4504
        %v4506 = vrot.slane %v3039, %v4505
        %v4507 = vlaneseq
        %v4508 = vshrl.u32 %v4507, 7
        %v4509 = vsub.s32 4, %v4508
        %v4510 = vrot.slane %v3039, %v4509
        %v4511 = vlaneseq
        %v4512 = vshrl.u32 %v4511, 7
        %v4513 = vsub.s32 6, %v4512
        %v4514 = vrot.slane %v3039, %v4513
        %v4523 = vlaneseq
        %v4524 = vshrl.u32 %v4523, 7
        %v4525 = vsub.s32 0, %v4524
        %v4526 = vrot.slane %v4486, %v4525
        %v4527 = vlaneseq
        %v4528 = vshrl.u32 %v4527, 7
        %v4529 = vsub.s32 0, %v4528
        %v4530 = vrot.slane %v4490, %v4529
        %v4531 = vlaneseq
        %v4532 = vshrl.u32 %v4531, 7
        %v4533 = vsub.s32 0, %v4532
        %v4534 = vrot.slane %v4494, %v4533
        %v4535 = vlaneseq
        %v4536 = vshrl.u32 %v4535, 7
        %v4537 = vsub.s32 0, %v4536
        %v4538 = vrot.slane %v4498, %v4537
        %v4539 = vlaneseq
        %v4540 = vshrl.u32 %v4539, 7
        %v4541 = vsub.s32 0, %v4540
        %v4542 = vrot.slane %v4502, %v4541
        %v4543 = vlaneseq
        %v4544 = vshrl.u32 %v4543, 7
        %v4545 = vsub.s32 0, %v4544
        %v4546 = vrot.slane %v4506, %v4545
        %v4547 = vlaneseq
        %v4548 = vshrl.u32 %v4547, 7
        %v4549 = vsub.s32 0, %v4548
        %v4550 = vrot.slane %v4510, %v4549
        %v4551 = vlaneseq
        %v4552 = vshrl.u32 %v4551, 7
        %v4553 = vsub.s32 0, %v4552
        %v4554 = vrot.slane %v4514, %v4553
        %v4555 = vmul.f32 %v3983, %v4526
        %v4556 = vmul.f32 %v3985, %v4530
        %v4557 = vmul.f32 %v4147, %v4534
        %v4558 = vmul.f32 %v4149, %v4538
        %v4559 = vmul.f32 %v4311, %v4542
        %v4560 = vmul.f32 %v4313, %v4546
        %v4561 = vmul.f32 %v4475, %v4550
        %v4562 = vmul.f32 %v4477, %v4554
        %v4563 = vlaneseq
        %v4564 = vshrl.u32 %v4563, 7
        %v4565 = vsub.s32 1, %v4564
        %v4566 = vrot.slane %v3038, %v4565
        %v4567 = vlaneseq
        %v4568 = vshrl.u32 %v4567, 7
        %v4569 = vsub.s32 3, %v4568
        %v4570 = vrot.slane %v3038, %v4569
        %v4571 = vlaneseq
        %v4572 = vshrl.u32 %v4571, 7
        %v4573 = vsub.s32 5, %v4572
        %v4574 = vrot.slane %v3038, %v4573
        %v4575 = vlaneseq
        %v4576 = vshrl.u32 %v4575, 7
        %v4577 = vsub.s32 7, %v4576
        %v4578 = vrot.slane %v3038, %v4577
        %v4579 = vlaneseq
        %v4580 = vshrl.u32 %v4579, 7
        %v4581 = vsub.s32 1, %v4580
        %v4582 = vrot.slane %v3039, %v4581
        %v4583 = vlaneseq
        %v4584 = vshrl.u32 %v4583, 7
        %v4585 = vsub.s32 3, %v4584
        %v4586 = vrot.slane %v3039, %v4585
        %v4587 = vlaneseq
        %v4588 = vshrl.u32 %v4587, 7
        %v4589 = vsub.s32 5, %v4588
        %v4590 = vrot.slane %v3039, %v4589
        %v4591 = vlaneseq
        %v4592 = vshrl.u32 %v4591, 7
        %v4593 = vsub.s32 7, %v4592
        %v4594 = vrot.slane %v3039, %v4593
        %v4603 = vlaneseq
        %v4604 = vshrl.u32 %v4603, 7
        %v4605 = vsub.s32 1, %v4604
        %v4606 = vrot.slane %v4566, %v4605
        %v4607 = vlaneseq
        %v4608 = vshrl.u32 %v4607, 7
        %v4609 = vsub.s32 1, %v4608
        %v4610 = vrot.slane %v4570, %v4609
        %v4611 = vlaneseq
        %v4612 = vshrl.u32 %v4611, 7
        %v4613 = vsub.s32 1, %v4612
        %v4614 = vrot.slane %v4574, %v4613
        %v4615 = vlaneseq
        %v4616 = vshrl.u32 %v4615, 7
        %v4617 = vsub.s32 1, %v4616
        %v4618 = vrot.slane %v4578, %v4617
        %v4619 = vlaneseq
        %v4620 = vshrl.u32 %v4619, 7
        %v4621 = vsub.s32 1, %v4620
        %v4622 = vrot.slane %v4582, %v4621
        %v4623 = vlaneseq
        %v4624 = vshrl.u32 %v4623, 7
        %v4625 = vsub.s32 1, %v4624
        %v4626 = vrot.slane %v4586, %v4625
        %v4627 = vlaneseq
        %v4628 = vshrl.u32 %v4627, 7
        %v4629 = vsub.s32 1, %v4628
        %v4630 = vrot.slane %v4590, %v4629
        %v4631 = vlaneseq
        %v4632 = vshrl.u32 %v4631, 7
        %v4633 = vsub.s32 1, %v4632
        %v4634 = vrot.slane %v4594, %v4633
        %v4635 = vadd.f32 %v4555, %v4606
        %v4636 = vadd.f32 %v4556, %v4610
        %v4637 = vadd.f32 %v4557, %v4614
        %v4638 = vadd.f32 %v4558, %v4618
        %v4639 = vadd.f32 %v4559, %v4622
        %v4640 = vadd.f32 %v4560, %v4626
        %v4641 = vadd.f32 %v4561, %v4630
        %v4642 = vadd.f32 %v4562, %v4634
        %v4643 = vmax.f32 %v4635, 0.0
        %v4644 = vmax.f32 %v4636, 0.0
        %v4645 = vmax.f32 %v4637, 0.0
        %v4646 = vmax.f32 %v4638, 0.0
        %v4647 = vmax.f32 %v4639, 0.0
        %v4648 = vmax.f32 %v4640, 0.0
        %v4649 = vmax.f32 %v4641, 0.0
        %v4650 = vmax.f32 %v4642, 0.0
        %4651 = vst [vmem:[#allocation2] sm:$0xff] %v4643
        %4652 = vst [vmem:[#allocation2 + $0x8] sm:$0xff] %v4644
        %4653 = vst [vmem:[#allocation2 + $0x10] sm:$0xff] %v4645
        %4654 = vst [vmem:[#allocation2 + $0x18] sm:$0xff] %v4646
        %4655 = vst [vmem:[#allocation2 + $0x20] sm:$0xff] %v4647
        %4656 = vst [vmem:[#allocation2 + $0x28] sm:$0xff] %v4648
        %4657 = vst [vmem:[#allocation2 + $0x30] sm:$0xff] %v4649
        %4658 = vst [vmem:[#allocation2 + $0x38] sm:$0xff] %v4650
        %s4659 = scalar_lea.vmem %s809, 32 [#allocation11]
        %v4660 = vld [vmem:[%s4659] sm:$0xff]
        %v4661 = vld [vmem:[%s4659 + $0x8] sm:$0xff]
        %v4662 = vld [vmem:[#allocation2] sm:$0xff]
        %v4663 = vld [vmem:[#allocation2 + $0x8] sm:$0xff]
        %v4664 = vld [vmem:[#allocation2 + $0x10] sm:$0xff]
        %v4665 = vld [vmem:[#allocation2 + $0x18] sm:$0xff]
        %v4666 = vld [vmem:[#allocation2 + $0x20] sm:$0xff]
        %v4667 = vld [vmem:[#allocation2 + $0x28] sm:$0xff]
        %v4668 = vld [vmem:[#allocation2 + $0x30] sm:$0xff]
        %v4669 = vld [vmem:[#allocation2 + $0x38] sm:$0xff]
        %v4670 = vpack.c.bf16 %v4662, %v4662
        %v4671 = vpack.c.bf16 %v4663, %v4663
        %v4672 = vpack.c.bf16 %v4664, %v4664
        %v4673 = vpack.c.bf16 %v4665, %v4665
        %v4674 = vpack.c.bf16 %v4666, %v4666
        %v4675 = vpack.c.bf16 %v4667, %v4667
        %v4676 = vpack.c.bf16 %v4668, %v4668
        %v4677 = vpack.c.bf16 %v4669, %v4669
        %s4678 = scalar_lea.vmem %s800, 4096 [#allocation10]
        %v4679 = vld [vmem:[%s4678] sm:$0xff]
        %v4680 = vld [vmem:[%s4678 + $0x8] sm:$0xff]
        %v4681 = vld [vmem:[%s4678 + $0x10] sm:$0xff]
        %v4682 = vld [vmem:[%s4678 + $0x18] sm:$0xff]
        %v4683 = vld [vmem:[%s4678 + $0x20] sm:$0xff]
        %v4684 = vld [vmem:[%s4678 + $0x28] sm:$0xff]
        %v4685 = vld [vmem:[%s4678 + $0x30] sm:$0xff]
        %v4686 = vld [vmem:[%s4678 + $0x38] sm:$0xff]
        %v4687 = vld [vmem:[%s4678 + $0x40] sm:$0xff]
        %v4688 = vld [vmem:[%s4678 + $0x48] sm:$0xff]
        %v4689 = vld [vmem:[%s4678 + $0x50] sm:$0xff]
        %v4690 = vld [vmem:[%s4678 + $0x58] sm:$0xff]
        %v4691 = vld [vmem:[%s4678 + $0x60] sm:$0xff]
        %v4692 = vld [vmem:[%s4678 + $0x68] sm:$0xff]
        %v4693 = vld [vmem:[%s4678 + $0x70] sm:$0xff]
        %v4694 = vld [vmem:[%s4678 + $0x78] sm:$0xff]
        %v4695 = vld [vmem:[%s4678 + $0x80] sm:$0xff]
        %v4696 = vld [vmem:[%s4678 + $0x88] sm:$0xff]
        %v4697 = vld [vmem:[%s4678 + $0x90] sm:$0xff]
        %v4698 = vld [vmem:[%s4678 + $0x98] sm:$0xff]
        %v4699 = vld [vmem:[%s4678 + $0xa0] sm:$0xff]
        %v4700 = vld [vmem:[%s4678 + $0xa8] sm:$0xff]
        %v4701 = vld [vmem:[%s4678 + $0xb0] sm:$0xff]
        %v4702 = vld [vmem:[%s4678 + $0xb8] sm:$0xff]
        %v4703 = vld [vmem:[%s4678 + $0xc0] sm:$0xff]
        %v4704 = vld [vmem:[%s4678 + $0xc8] sm:$0xff]
        %v4705 = vld [vmem:[%s4678 + $0xd0] sm:$0xff]
        %v4706 = vld [vmem:[%s4678 + $0xd8] sm:$0xff]
        %v4707 = vld [vmem:[%s4678 + $0xe0] sm:$0xff]
        %v4708 = vld [vmem:[%s4678 + $0xe8] sm:$0xff]
        %v4709 = vld [vmem:[%s4678 + $0xf0] sm:$0xff]
        %v4710 = vld [vmem:[%s4678 + $0xf8] sm:$0xff]
        %v4711 = vld [vmem:[%s4678 + $0x100] sm:$0xff]
        %v4712 = vld [vmem:[%s4678 + $0x108] sm:$0xff]
        %v4713 = vld [vmem:[%s4678 + $0x110] sm:$0xff]
        %v4714 = vld [vmem:[%s4678 + $0x118] sm:$0xff]
        %v4715 = vld [vmem:[%s4678 + $0x120] sm:$0xff]
        %v4716 = vld [vmem:[%s4678 + $0x128] sm:$0xff]
        %v4717 = vld [vmem:[%s4678 + $0x130] sm:$0xff]
        %v4718 = vld [vmem:[%s4678 + $0x138] sm:$0xff]
        %v4719 = vld [vmem:[%s4678 + $0x140] sm:$0xff]
        %v4720 = vld [vmem:[%s4678 + $0x148] sm:$0xff]
        %v4721 = vld [vmem:[%s4678 + $0x150] sm:$0xff]
        %v4722 = vld [vmem:[%s4678 + $0x158] sm:$0xff]
        %v4723 = vld [vmem:[%s4678 + $0x160] sm:$0xff]
        %v4724 = vld [vmem:[%s4678 + $0x168] sm:$0xff]
        %v4725 = vld [vmem:[%s4678 + $0x170] sm:$0xff]
        %v4726 = vld [vmem:[%s4678 + $0x178] sm:$0xff]
        %v4727 = vld [vmem:[%s4678 + $0x180] sm:$0xff]
        %v4728 = vld [vmem:[%s4678 + $0x188] sm:$0xff]
        %v4729 = vld [vmem:[%s4678 + $0x190] sm:$0xff]
        %v4730 = vld [vmem:[%s4678 + $0x198] sm:$0xff]
        %v4731 = vld [vmem:[%s4678 + $0x1a0] sm:$0xff]
        %v4732 = vld [vmem:[%s4678 + $0x1a8] sm:$0xff]
        %v4733 = vld [vmem:[%s4678 + $0x1b0] sm:$0xff]
        %v4734 = vld [vmem:[%s4678 + $0x1b8] sm:$0xff]
        %v4735 = vld [vmem:[%s4678 + $0x1c0] sm:$0xff]
        %v4736 = vld [vmem:[%s4678 + $0x1c8] sm:$0xff]
        %v4737 = vld [vmem:[%s4678 + $0x1d0] sm:$0xff]
        %v4738 = vld [vmem:[%s4678 + $0x1d8] sm:$0xff]
        %v4739 = vld [vmem:[%s4678 + $0x1e0] sm:$0xff]
        %v4740 = vld [vmem:[%s4678 + $0x1e8] sm:$0xff]
        %v4741 = vld [vmem:[%s4678 + $0x1f0] sm:$0xff]
        %v4742 = vld [vmem:[%s4678 + $0x1f8] sm:$0xff]
        %v4743 = vld [vmem:[%s4678 + $0x200] sm:$0xff]
        %v4744 = vld [vmem:[%s4678 + $0x208] sm:$0xff]
        %v4745 = vld [vmem:[%s4678 + $0x210] sm:$0xff]
        %v4746 = vld [vmem:[%s4678 + $0x218] sm:$0xff]
        %v4747 = vld [vmem:[%s4678 + $0x220] sm:$0xff]
        %v4748 = vld [vmem:[%s4678 + $0x228] sm:$0xff]
        %v4749 = vld [vmem:[%s4678 + $0x230] sm:$0xff]
        %v4750 = vld [vmem:[%s4678 + $0x238] sm:$0xff]
        %v4751 = vld [vmem:[%s4678 + $0x240] sm:$0xff]
        %v4752 = vld [vmem:[%s4678 + $0x248] sm:$0xff]
        %v4753 = vld [vmem:[%s4678 + $0x250] sm:$0xff]
        %v4754 = vld [vmem:[%s4678 + $0x258] sm:$0xff]
        %v4755 = vld [vmem:[%s4678 + $0x260] sm:$0xff]
        %v4756 = vld [vmem:[%s4678 + $0x268] sm:$0xff]
        %v4757 = vld [vmem:[%s4678 + $0x270] sm:$0xff]
        %v4758 = vld [vmem:[%s4678 + $0x278] sm:$0xff]
        %v4759 = vld [vmem:[%s4678 + $0x280] sm:$0xff]
        %v4760 = vld [vmem:[%s4678 + $0x288] sm:$0xff]
        %v4761 = vld [vmem:[%s4678 + $0x290] sm:$0xff]
        %v4762 = vld [vmem:[%s4678 + $0x298] sm:$0xff]
        %v4763 = vld [vmem:[%s4678 + $0x2a0] sm:$0xff]
        %v4764 = vld [vmem:[%s4678 + $0x2a8] sm:$0xff]
        %v4765 = vld [vmem:[%s4678 + $0x2b0] sm:$0xff]
        %v4766 = vld [vmem:[%s4678 + $0x2b8] sm:$0xff]
        %v4767 = vld [vmem:[%s4678 + $0x2c0] sm:$0xff]
        %v4768 = vld [vmem:[%s4678 + $0x2c8] sm:$0xff]
        %v4769 = vld [vmem:[%s4678 + $0x2d0] sm:$0xff]
        %v4770 = vld [vmem:[%s4678 + $0x2d8] sm:$0xff]
        %v4771 = vld [vmem:[%s4678 + $0x2e0] sm:$0xff]
        %v4772 = vld [vmem:[%s4678 + $0x2e8] sm:$0xff]
        %v4773 = vld [vmem:[%s4678 + $0x2f0] sm:$0xff]
        %v4774 = vld [vmem:[%s4678 + $0x2f8] sm:$0xff]
        %v4775 = vld [vmem:[%s4678 + $0x300] sm:$0xff]
        %v4776 = vld [vmem:[%s4678 + $0x308] sm:$0xff]
        %v4777 = vld [vmem:[%s4678 + $0x310] sm:$0xff]
        %v4778 = vld [vmem:[%s4678 + $0x318] sm:$0xff]
        %v4779 = vld [vmem:[%s4678 + $0x320] sm:$0xff]
        %v4780 = vld [vmem:[%s4678 + $0x328] sm:$0xff]
        %v4781 = vld [vmem:[%s4678 + $0x330] sm:$0xff]
        %v4782 = vld [vmem:[%s4678 + $0x338] sm:$0xff]
        %v4783 = vld [vmem:[%s4678 + $0x340] sm:$0xff]
        %v4784 = vld [vmem:[%s4678 + $0x348] sm:$0xff]
        %v4785 = vld [vmem:[%s4678 + $0x350] sm:$0xff]
        %v4786 = vld [vmem:[%s4678 + $0x358] sm:$0xff]
        %v4787 = vld [vmem:[%s4678 + $0x360] sm:$0xff]
        %v4788 = vld [vmem:[%s4678 + $0x368] sm:$0xff]
        %v4789 = vld [vmem:[%s4678 + $0x370] sm:$0xff]
        %v4790 = vld [vmem:[%s4678 + $0x378] sm:$0xff]
        %v4791 = vld [vmem:[%s4678 + $0x380] sm:$0xff]
        %v4792 = vld [vmem:[%s4678 + $0x388] sm:$0xff]
        %v4793 = vld [vmem:[%s4678 + $0x390] sm:$0xff]
        %v4794 = vld [vmem:[%s4678 + $0x398] sm:$0xff]
        %v4795 = vld [vmem:[%s4678 + $0x3a0] sm:$0xff]
        %v4796 = vld [vmem:[%s4678 + $0x3a8] sm:$0xff]
        %v4797 = vld [vmem:[%s4678 + $0x3b0] sm:$0xff]
        %v4798 = vld [vmem:[%s4678 + $0x3b8] sm:$0xff]
        %v4799 = vld [vmem:[%s4678 + $0x3c0] sm:$0xff]
        %v4800 = vld [vmem:[%s4678 + $0x3c8] sm:$0xff]
        %v4801 = vld [vmem:[%s4678 + $0x3d0] sm:$0xff]
        %v4802 = vld [vmem:[%s4678 + $0x3d8] sm:$0xff]
        %v4803 = vld [vmem:[%s4678 + $0x3e0] sm:$0xff]
        %v4804 = vld [vmem:[%s4678 + $0x3e8] sm:$0xff]
        %v4805 = vld [vmem:[%s4678 + $0x3f0] sm:$0xff]
        %v4806 = vld [vmem:[%s4678 + $0x3f8] sm:$0xff]
        %v4807 = vld [vmem:[%s4678 + $0x400] sm:$0xff]
        %v4808 = vld [vmem:[%s4678 + $0x408] sm:$0xff]
        %v4809 = vld [vmem:[%s4678 + $0x410] sm:$0xff]
        %v4810 = vld [vmem:[%s4678 + $0x418] sm:$0xff]
        %v4811 = vld [vmem:[%s4678 + $0x420] sm:$0xff]
        %v4812 = vld [vmem:[%s4678 + $0x428] sm:$0xff]
        %v4813 = vld [vmem:[%s4678 + $0x430] sm:$0xff]
        %v4814 = vld [vmem:[%s4678 + $0x438] sm:$0xff]
        %v4815 = vld [vmem:[%s4678 + $0x440] sm:$0xff]
        %v4816 = vld [vmem:[%s4678 + $0x448] sm:$0xff]
        %v4817 = vld [vmem:[%s4678 + $0x450] sm:$0xff]
        %v4818 = vld [vmem:[%s4678 + $0x458] sm:$0xff]
        %v4819 = vld [vmem:[%s4678 + $0x460] sm:$0xff]
        %v4820 = vld [vmem:[%s4678 + $0x468] sm:$0xff]
        %v4821 = vld [vmem:[%s4678 + $0x470] sm:$0xff]
        %v4822 = vld [vmem:[%s4678 + $0x478] sm:$0xff]
        %v4823 = vld [vmem:[%s4678 + $0x480] sm:$0xff]
        %v4824 = vld [vmem:[%s4678 + $0x488] sm:$0xff]
        %v4825 = vld [vmem:[%s4678 + $0x490] sm:$0xff]
        %v4826 = vld [vmem:[%s4678 + $0x498] sm:$0xff]
        %v4827 = vld [vmem:[%s4678 + $0x4a0] sm:$0xff]
        %v4828 = vld [vmem:[%s4678 + $0x4a8] sm:$0xff]
        %v4829 = vld [vmem:[%s4678 + $0x4b0] sm:$0xff]
        %v4830 = vld [vmem:[%s4678 + $0x4b8] sm:$0xff]
        %v4831 = vld [vmem:[%s4678 + $0x4c0] sm:$0xff]
        %v4832 = vld [vmem:[%s4678 + $0x4c8] sm:$0xff]
        %v4833 = vld [vmem:[%s4678 + $0x4d0] sm:$0xff]
        %v4834 = vld [vmem:[%s4678 + $0x4d8] sm:$0xff]
        %v4835 = vld [vmem:[%s4678 + $0x4e0] sm:$0xff]
        %v4836 = vld [vmem:[%s4678 + $0x4e8] sm:$0xff]
        %v4837 = vld [vmem:[%s4678 + $0x4f0] sm:$0xff]
        %v4838 = vld [vmem:[%s4678 + $0x4f8] sm:$0xff]
        %v4839 = vld [vmem:[%s4678 + $0x500] sm:$0xff]
        %v4840 = vld [vmem:[%s4678 + $0x508] sm:$0xff]
        %v4841 = vld [vmem:[%s4678 + $0x510] sm:$0xff]
        %v4842 = vld [vmem:[%s4678 + $0x518] sm:$0xff]
        %v4843 = vld [vmem:[%s4678 + $0x520] sm:$0xff]
        %v4844 = vld [vmem:[%s4678 + $0x528] sm:$0xff]
        %v4845 = vld [vmem:[%s4678 + $0x530] sm:$0xff]
        %v4846 = vld [vmem:[%s4678 + $0x538] sm:$0xff]
        %v4847 = vld [vmem:[%s4678 + $0x540] sm:$0xff]
        %v4848 = vld [vmem:[%s4678 + $0x548] sm:$0xff]
        %v4849 = vld [vmem:[%s4678 + $0x550] sm:$0xff]
        %v4850 = vld [vmem:[%s4678 + $0x558] sm:$0xff]
        %v4851 = vld [vmem:[%s4678 + $0x560] sm:$0xff]
        %v4852 = vld [vmem:[%s4678 + $0x568] sm:$0xff]
        %v4853 = vld [vmem:[%s4678 + $0x570] sm:$0xff]
        %v4854 = vld [vmem:[%s4678 + $0x578] sm:$0xff]
        %v4855 = vld [vmem:[%s4678 + $0x580] sm:$0xff]
        %v4856 = vld [vmem:[%s4678 + $0x588] sm:$0xff]
        %v4857 = vld [vmem:[%s4678 + $0x590] sm:$0xff]
        %v4858 = vld [vmem:[%s4678 + $0x598] sm:$0xff]
        %v4859 = vld [vmem:[%s4678 + $0x5a0] sm:$0xff]
        %v4860 = vld [vmem:[%s4678 + $0x5a8] sm:$0xff]
        %v4861 = vld [vmem:[%s4678 + $0x5b0] sm:$0xff]
        %v4862 = vld [vmem:[%s4678 + $0x5b8] sm:$0xff]
        %v4863 = vld [vmem:[%s4678 + $0x5c0] sm:$0xff]
        %v4864 = vld [vmem:[%s4678 + $0x5c8] sm:$0xff]
        %v4865 = vld [vmem:[%s4678 + $0x5d0] sm:$0xff]
        %v4866 = vld [vmem:[%s4678 + $0x5d8] sm:$0xff]
        %v4867 = vld [vmem:[%s4678 + $0x5e0] sm:$0xff]
        %v4868 = vld [vmem:[%s4678 + $0x5e8] sm:$0xff]
        %v4869 = vld [vmem:[%s4678 + $0x5f0] sm:$0xff]
        %v4870 = vld [vmem:[%s4678 + $0x5f8] sm:$0xff]
        %v4871 = vld [vmem:[%s4678 + $0x600] sm:$0xff]
        %v4872 = vld [vmem:[%s4678 + $0x608] sm:$0xff]
        %v4873 = vld [vmem:[%s4678 + $0x610] sm:$0xff]
        %v4874 = vld [vmem:[%s4678 + $0x618] sm:$0xff]
        %v4875 = vld [vmem:[%s4678 + $0x620] sm:$0xff]
        %v4876 = vld [vmem:[%s4678 + $0x628] sm:$0xff]
        %v4877 = vld [vmem:[%s4678 + $0x630] sm:$0xff]
        %v4878 = vld [vmem:[%s4678 + $0x638] sm:$0xff]
        %v4879 = vld [vmem:[%s4678 + $0x640] sm:$0xff]
        %v4880 = vld [vmem:[%s4678 + $0x648] sm:$0xff]
        %v4881 = vld [vmem:[%s4678 + $0x650] sm:$0xff]
        %v4882 = vld [vmem:[%s4678 + $0x658] sm:$0xff]
        %v4883 = vld [vmem:[%s4678 + $0x660] sm:$0xff]
        %v4884 = vld [vmem:[%s4678 + $0x668] sm:$0xff]
        %v4885 = vld [vmem:[%s4678 + $0x670] sm:$0xff]
        %v4886 = vld [vmem:[%s4678 + $0x678] sm:$0xff]
        %v4887 = vld [vmem:[%s4678 + $0x680] sm:$0xff]
        %v4888 = vld [vmem:[%s4678 + $0x688] sm:$0xff]
        %v4889 = vld [vmem:[%s4678 + $0x690] sm:$0xff]
        %v4890 = vld [vmem:[%s4678 + $0x698] sm:$0xff]
        %v4891 = vld [vmem:[%s4678 + $0x6a0] sm:$0xff]
        %v4892 = vld [vmem:[%s4678 + $0x6a8] sm:$0xff]
        %v4893 = vld [vmem:[%s4678 + $0x6b0] sm:$0xff]
        %v4894 = vld [vmem:[%s4678 + $0x6b8] sm:$0xff]
        %v4895 = vld [vmem:[%s4678 + $0x6c0] sm:$0xff]
        %v4896 = vld [vmem:[%s4678 + $0x6c8] sm:$0xff]
        %v4897 = vld [vmem:[%s4678 + $0x6d0] sm:$0xff]
        %v4898 = vld [vmem:[%s4678 + $0x6d8] sm:$0xff]
        %v4899 = vld [vmem:[%s4678 + $0x6e0] sm:$0xff]
        %v4900 = vld [vmem:[%s4678 + $0x6e8] sm:$0xff]
        %v4901 = vld [vmem:[%s4678 + $0x6f0] sm:$0xff]
        %v4902 = vld [vmem:[%s4678 + $0x6f8] sm:$0xff]
        %v4903 = vld [vmem:[%s4678 + $0x700] sm:$0xff]
        %v4904 = vld [vmem:[%s4678 + $0x708] sm:$0xff]
        %v4905 = vld [vmem:[%s4678 + $0x710] sm:$0xff]
        %v4906 = vld [vmem:[%s4678 + $0x718] sm:$0xff]
        %v4907 = vld [vmem:[%s4678 + $0x720] sm:$0xff]
        %v4908 = vld [vmem:[%s4678 + $0x728] sm:$0xff]
        %v4909 = vld [vmem:[%s4678 + $0x730] sm:$0xff]
        %v4910 = vld [vmem:[%s4678 + $0x738] sm:$0xff]
        %v4911 = vld [vmem:[%s4678 + $0x740] sm:$0xff]
        %v4912 = vld [vmem:[%s4678 + $0x748] sm:$0xff]
        %v4913 = vld [vmem:[%s4678 + $0x750] sm:$0xff]
        %v4914 = vld [vmem:[%s4678 + $0x758] sm:$0xff]
        %v4915 = vld [vmem:[%s4678 + $0x760] sm:$0xff]
        %v4916 = vld [vmem:[%s4678 + $0x768] sm:$0xff]
        %v4917 = vld [vmem:[%s4678 + $0x770] sm:$0xff]
        %v4918 = vld [vmem:[%s4678 + $0x778] sm:$0xff]
        %v4919 = vld [vmem:[%s4678 + $0x780] sm:$0xff]
        %v4920 = vld [vmem:[%s4678 + $0x788] sm:$0xff]
        %v4921 = vld [vmem:[%s4678 + $0x790] sm:$0xff]
        %v4922 = vld [vmem:[%s4678 + $0x798] sm:$0xff]
        %v4923 = vld [vmem:[%s4678 + $0x7a0] sm:$0xff]
        %v4924 = vld [vmem:[%s4678 + $0x7a8] sm:$0xff]
        %v4925 = vld [vmem:[%s4678 + $0x7b0] sm:$0xff]
        %v4926 = vld [vmem:[%s4678 + $0x7b8] sm:$0xff]
        %v4927 = vld [vmem:[%s4678 + $0x7c0] sm:$0xff]
        %v4928 = vld [vmem:[%s4678 + $0x7c8] sm:$0xff]
        %v4929 = vld [vmem:[%s4678 + $0x7d0] sm:$0xff]
        %v4930 = vld [vmem:[%s4678 + $0x7d8] sm:$0xff]
        %v4931 = vld [vmem:[%s4678 + $0x7e0] sm:$0xff]
        %v4932 = vld [vmem:[%s4678 + $0x7e8] sm:$0xff]
        %v4933 = vld [vmem:[%s4678 + $0x7f0] sm:$0xff]
        %v4934 = vld [vmem:[%s4678 + $0x7f8] sm:$0xff]
        %v4935 = vunpack.c.l.s8.bf16 %v4679
        %v4936 = vunpack.c.l.s8.bf16 %v4680
        %v4937 = vunpack.c.l.s8.bf16 %v4681
        %v4938 = vunpack.c.l.s8.bf16 %v4682
        %v4939 = vunpack.c.l.s8.bf16 %v4683
        %v4940 = vunpack.c.l.s8.bf16 %v4684
        %v4941 = vunpack.c.l.s8.bf16 %v4685
        %v4942 = vunpack.c.l.s8.bf16 %v4686
        %v4943 = vunpack.c.h.s8.bf16 %v4679
        %v4944 = vunpack.c.h.s8.bf16 %v4680
        %v4945 = vunpack.c.h.s8.bf16 %v4681
        %v4946 = vunpack.c.h.s8.bf16 %v4682
        %v4947 = vunpack.c.h.s8.bf16 %v4683
        %v4948 = vunpack.c.h.s8.bf16 %v4684
        %v4949 = vunpack.c.h.s8.bf16 %v4685
        %v4950 = vunpack.c.h.s8.bf16 %v4686
        %v4951 = vunpack.c.l.s8.bf16 %v4687
        %v4952 = vunpack.c.l.s8.bf16 %v4688
        %v4953 = vunpack.c.l.s8.bf16 %v4689
        %v4954 = vunpack.c.l.s8.bf16 %v4690
        %v4955 = vunpack.c.l.s8.bf16 %v4691
        %v4956 = vunpack.c.l.s8.bf16 %v4692
        %v4957 = vunpack.c.l.s8.bf16 %v4693
        %v4958 = vunpack.c.l.s8.bf16 %v4694
        %v4959 = vunpack.c.h.s8.bf16 %v4687
        %v4960 = vunpack.c.h.s8.bf16 %v4688
        %v4961 = vunpack.c.h.s8.bf16 %v4689
        %v4962 = vunpack.c.h.s8.bf16 %v4690
        %v4963 = vunpack.c.h.s8.bf16 %v4691
        %v4964 = vunpack.c.h.s8.bf16 %v4692
        %v4965 = vunpack.c.h.s8.bf16 %v4693
        %v4966 = vunpack.c.h.s8.bf16 %v4694
        %v4967 = vunpack.c.l.s8.bf16 %v4695
        %v4968 = vunpack.c.l.s8.bf16 %v4696
        %v4969 = vunpack.c.l.s8.bf16 %v4697
        %v4970 = vunpack.c.l.s8.bf16 %v4698
        %v4971 = vunpack.c.l.s8.bf16 %v4699
        %v4972 = vunpack.c.l.s8.bf16 %v4700
        %v4973 = vunpack.c.l.s8.bf16 %v4701
        %v4974 = vunpack.c.l.s8.bf16 %v4702
        %v4975 = vunpack.c.h.s8.bf16 %v4695
        %v4976 = vunpack.c.h.s8.bf16 %v4696
        %v4977 = vunpack.c.h.s8.bf16 %v4697
        %v4978 = vunpack.c.h.s8.bf16 %v4698
        %v4979 = vunpack.c.h.s8.bf16 %v4699
        %v4980 = vunpack.c.h.s8.bf16 %v4700
        %v4981 = vunpack.c.h.s8.bf16 %v4701
        %v4982 = vunpack.c.h.s8.bf16 %v4702
        %v4983 = vunpack.c.l.s8.bf16 %v4703
        %v4984 = vunpack.c.l.s8.bf16 %v4704
        %v4985 = vunpack.c.l.s8.bf16 %v4705
        %v4986 = vunpack.c.l.s8.bf16 %v4706
        %v4987 = vunpack.c.l.s8.bf16 %v4707
        %v4988 = vunpack.c.l.s8.bf16 %v4708
        %v4989 = vunpack.c.l.s8.bf16 %v4709
        %v4990 = vunpack.c.l.s8.bf16 %v4710
        %v4991 = vunpack.c.h.s8.bf16 %v4703
        %v4992 = vunpack.c.h.s8.bf16 %v4704
        %v4993 = vunpack.c.h.s8.bf16 %v4705
        %v4994 = vunpack.c.h.s8.bf16 %v4706
        %v4995 = vunpack.c.h.s8.bf16 %v4707
        %v4996 = vunpack.c.h.s8.bf16 %v4708
        %v4997 = vunpack.c.h.s8.bf16 %v4709
        %v4998 = vunpack.c.h.s8.bf16 %v4710
        %v4999 = vunpack.c.l.s8.bf16 %v4711
        %v5000 = vunpack.c.l.s8.bf16 %v4712
        %v5001 = vunpack.c.l.s8.bf16 %v4713
        %v5002 = vunpack.c.l.s8.bf16 %v4714
        %v5003 = vunpack.c.l.s8.bf16 %v4715
        %v5004 = vunpack.c.l.s8.bf16 %v4716
        %v5005 = vunpack.c.l.s8.bf16 %v4717
        %v5006 = vunpack.c.l.s8.bf16 %v4718
        %v5007 = vunpack.c.h.s8.bf16 %v4711
        %v5008 = vunpack.c.h.s8.bf16 %v4712
        %v5009 = vunpack.c.h.s8.bf16 %v4713
        %v5010 = vunpack.c.h.s8.bf16 %v4714
        %v5011 = vunpack.c.h.s8.bf16 %v4715
        %v5012 = vunpack.c.h.s8.bf16 %v4716
        %v5013 = vunpack.c.h.s8.bf16 %v4717
        %v5014 = vunpack.c.h.s8.bf16 %v4718
        %v5015 = vunpack.c.l.s8.bf16 %v4719
        %v5016 = vunpack.c.l.s8.bf16 %v4720
        %v5017 = vunpack.c.l.s8.bf16 %v4721
        %v5018 = vunpack.c.l.s8.bf16 %v4722
        %v5019 = vunpack.c.l.s8.bf16 %v4723
        %v5020 = vunpack.c.l.s8.bf16 %v4724
        %v5021 = vunpack.c.l.s8.bf16 %v4725
        %v5022 = vunpack.c.l.s8.bf16 %v4726
        %v5023 = vunpack.c.h.s8.bf16 %v4719
        %v5024 = vunpack.c.h.s8.bf16 %v4720
        %v5025 = vunpack.c.h.s8.bf16 %v4721
        %v5026 = vunpack.c.h.s8.bf16 %v4722
        %v5027 = vunpack.c.h.s8.bf16 %v4723
        %v5028 = vunpack.c.h.s8.bf16 %v4724
        %v5029 = vunpack.c.h.s8.bf16 %v4725
        %v5030 = vunpack.c.h.s8.bf16 %v4726
        %v5031 = vunpack.c.l.s8.bf16 %v4727
        %v5032 = vunpack.c.l.s8.bf16 %v4728
        %v5033 = vunpack.c.l.s8.bf16 %v4729
        %v5034 = vunpack.c.l.s8.bf16 %v4730
        %v5035 = vunpack.c.l.s8.bf16 %v4731
        %v5036 = vunpack.c.l.s8.bf16 %v4732
        %v5037 = vunpack.c.l.s8.bf16 %v4733
        %v5038 = vunpack.c.l.s8.bf16 %v4734
        %v5039 = vunpack.c.h.s8.bf16 %v4727
        %v5040 = vunpack.c.h.s8.bf16 %v4728
        %v5041 = vunpack.c.h.s8.bf16 %v4729
        %v5042 = vunpack.c.h.s8.bf16 %v4730
        %v5043 = vunpack.c.h.s8.bf16 %v4731
        %v5044 = vunpack.c.h.s8.bf16 %v4732
        %v5045 = vunpack.c.h.s8.bf16 %v4733
        %v5046 = vunpack.c.h.s8.bf16 %v4734
        %v5047 = vunpack.c.l.s8.bf16 %v4735
        %v5048 = vunpack.c.l.s8.bf16 %v4736
        %v5049 = vunpack.c.l.s8.bf16 %v4737
        %v5050 = vunpack.c.l.s8.bf16 %v4738
        %v5051 = vunpack.c.l.s8.bf16 %v4739
        %v5052 = vunpack.c.l.s8.bf16 %v4740
        %v5053 = vunpack.c.l.s8.bf16 %v4741
        %v5054 = vunpack.c.l.s8.bf16 %v4742
        %v5055 = vunpack.c.h.s8.bf16 %v4735
        %v5056 = vunpack.c.h.s8.bf16 %v4736
        %v5057 = vunpack.c.h.s8.bf16 %v4737
        %v5058 = vunpack.c.h.s8.bf16 %v4738
        %v5059 = vunpack.c.h.s8.bf16 %v4739
        %v5060 = vunpack.c.h.s8.bf16 %v4740
        %v5061 = vunpack.c.h.s8.bf16 %v4741
        %v5062 = vunpack.c.h.s8.bf16 %v4742
        %v5063 = vunpack.c.l.s8.bf16 %v4743
        %v5064 = vunpack.c.l.s8.bf16 %v4744
        %v5065 = vunpack.c.l.s8.bf16 %v4745
        %v5066 = vunpack.c.l.s8.bf16 %v4746
        %v5067 = vunpack.c.l.s8.bf16 %v4747
        %v5068 = vunpack.c.l.s8.bf16 %v4748
        %v5069 = vunpack.c.l.s8.bf16 %v4749
        %v5070 = vunpack.c.l.s8.bf16 %v4750
        %v5071 = vunpack.c.h.s8.bf16 %v4743
        %v5072 = vunpack.c.h.s8.bf16 %v4744
        %v5073 = vunpack.c.h.s8.bf16 %v4745
        %v5074 = vunpack.c.h.s8.bf16 %v4746
        %v5075 = vunpack.c.h.s8.bf16 %v4747
        %v5076 = vunpack.c.h.s8.bf16 %v4748
        %v5077 = vunpack.c.h.s8.bf16 %v4749
        %v5078 = vunpack.c.h.s8.bf16 %v4750
        %v5079 = vunpack.c.l.s8.bf16 %v4751
        %v5080 = vunpack.c.l.s8.bf16 %v4752
        %v5081 = vunpack.c.l.s8.bf16 %v4753
        %v5082 = vunpack.c.l.s8.bf16 %v4754
        %v5083 = vunpack.c.l.s8.bf16 %v4755
        %v5084 = vunpack.c.l.s8.bf16 %v4756
        %v5085 = vunpack.c.l.s8.bf16 %v4757
        %v5086 = vunpack.c.l.s8.bf16 %v4758
        %v5087 = vunpack.c.h.s8.bf16 %v4751
        %v5088 = vunpack.c.h.s8.bf16 %v4752
        %v5089 = vunpack.c.h.s8.bf16 %v4753
        %v5090 = vunpack.c.h.s8.bf16 %v4754
        %v5091 = vunpack.c.h.s8.bf16 %v4755
        %v5092 = vunpack.c.h.s8.bf16 %v4756
        %v5093 = vunpack.c.h.s8.bf16 %v4757
        %v5094 = vunpack.c.h.s8.bf16 %v4758
        %v5095 = vunpack.c.l.s8.bf16 %v4759
        %v5096 = vunpack.c.l.s8.bf16 %v4760
        %v5097 = vunpack.c.l.s8.bf16 %v4761
        %v5098 = vunpack.c.l.s8.bf16 %v4762
        %v5099 = vunpack.c.l.s8.bf16 %v4763
        %v5100 = vunpack.c.l.s8.bf16 %v4764
        %v5101 = vunpack.c.l.s8.bf16 %v4765
        %v5102 = vunpack.c.l.s8.bf16 %v4766
        %v5103 = vunpack.c.h.s8.bf16 %v4759
        %v5104 = vunpack.c.h.s8.bf16 %v4760
        %v5105 = vunpack.c.h.s8.bf16 %v4761
        %v5106 = vunpack.c.h.s8.bf16 %v4762
        %v5107 = vunpack.c.h.s8.bf16 %v4763
        %v5108 = vunpack.c.h.s8.bf16 %v4764
        %v5109 = vunpack.c.h.s8.bf16 %v4765
        %v5110 = vunpack.c.h.s8.bf16 %v4766
        %v5111 = vunpack.c.l.s8.bf16 %v4767
        %v5112 = vunpack.c.l.s8.bf16 %v4768
        %v5113 = vunpack.c.l.s8.bf16 %v4769
        %v5114 = vunpack.c.l.s8.bf16 %v4770
        %v5115 = vunpack.c.l.s8.bf16 %v4771
        %v5116 = vunpack.c.l.s8.bf16 %v4772
        %v5117 = vunpack.c.l.s8.bf16 %v4773
        %v5118 = vunpack.c.l.s8.bf16 %v4774
        %v5119 = vunpack.c.h.s8.bf16 %v4767
        %v5120 = vunpack.c.h.s8.bf16 %v4768
        %v5121 = vunpack.c.h.s8.bf16 %v4769
        %v5122 = vunpack.c.h.s8.bf16 %v4770
        %v5123 = vunpack.c.h.s8.bf16 %v4771
        %v5124 = vunpack.c.h.s8.bf16 %v4772
        %v5125 = vunpack.c.h.s8.bf16 %v4773
        %v5126 = vunpack.c.h.s8.bf16 %v4774
        %v5127 = vunpack.c.l.s8.bf16 %v4775
        %v5128 = vunpack.c.l.s8.bf16 %v4776
        %v5129 = vunpack.c.l.s8.bf16 %v4777
        %v5130 = vunpack.c.l.s8.bf16 %v4778
        %v5131 = vunpack.c.l.s8.bf16 %v4779
        %v5132 = vunpack.c.l.s8.bf16 %v4780
        %v5133 = vunpack.c.l.s8.bf16 %v4781
        %v5134 = vunpack.c.l.s8.bf16 %v4782
        %v5135 = vunpack.c.h.s8.bf16 %v4775
        %v5136 = vunpack.c.h.s8.bf16 %v4776
        %v5137 = vunpack.c.h.s8.bf16 %v4777
        %v5138 = vunpack.c.h.s8.bf16 %v4778
        %v5139 = vunpack.c.h.s8.bf16 %v4779
        %v5140 = vunpack.c.h.s8.bf16 %v4780
        %v5141 = vunpack.c.h.s8.bf16 %v4781
        %v5142 = vunpack.c.h.s8.bf16 %v4782
        %v5143 = vunpack.c.l.s8.bf16 %v4783
        %v5144 = vunpack.c.l.s8.bf16 %v4784
        %v5145 = vunpack.c.l.s8.bf16 %v4785
        %v5146 = vunpack.c.l.s8.bf16 %v4786
        %v5147 = vunpack.c.l.s8.bf16 %v4787
        %v5148 = vunpack.c.l.s8.bf16 %v4788
        %v5149 = vunpack.c.l.s8.bf16 %v4789
        %v5150 = vunpack.c.l.s8.bf16 %v4790
        %v5151 = vunpack.c.h.s8.bf16 %v4783
        %v5152 = vunpack.c.h.s8.bf16 %v4784
        %v5153 = vunpack.c.h.s8.bf16 %v4785
        %v5154 = vunpack.c.h.s8.bf16 %v4786
        %v5155 = vunpack.c.h.s8.bf16 %v4787
        %v5156 = vunpack.c.h.s8.bf16 %v4788
        %v5157 = vunpack.c.h.s8.bf16 %v4789
        %v5158 = vunpack.c.h.s8.bf16 %v4790
        %v5159 = vunpack.c.l.s8.bf16 %v4791
        %v5160 = vunpack.c.l.s8.bf16 %v4792
        %v5161 = vunpack.c.l.s8.bf16 %v4793
        %v5162 = vunpack.c.l.s8.bf16 %v4794
        %v5163 = vunpack.c.l.s8.bf16 %v4795
        %v5164 = vunpack.c.l.s8.bf16 %v4796
        %v5165 = vunpack.c.l.s8.bf16 %v4797
        %v5166 = vunpack.c.l.s8.bf16 %v4798
        %v5167 = vunpack.c.h.s8.bf16 %v4791
        %v5168 = vunpack.c.h.s8.bf16 %v4792
        %v5169 = vunpack.c.h.s8.bf16 %v4793
        %v5170 = vunpack.c.h.s8.bf16 %v4794
        %v5171 = vunpack.c.h.s8.bf16 %v4795
        %v5172 = vunpack.c.h.s8.bf16 %v4796
        %v5173 = vunpack.c.h.s8.bf16 %v4797
        %v5174 = vunpack.c.h.s8.bf16 %v4798
        %v5175 = vunpack.c.l.s8.bf16 %v4799
        %v5176 = vunpack.c.l.s8.bf16 %v4800
        %v5177 = vunpack.c.l.s8.bf16 %v4801
        %v5178 = vunpack.c.l.s8.bf16 %v4802
        %v5179 = vunpack.c.l.s8.bf16 %v4803
        %v5180 = vunpack.c.l.s8.bf16 %v4804
        %v5181 = vunpack.c.l.s8.bf16 %v4805
        %v5182 = vunpack.c.l.s8.bf16 %v4806
        %v5183 = vunpack.c.h.s8.bf16 %v4799
        %v5184 = vunpack.c.h.s8.bf16 %v4800
        %v5185 = vunpack.c.h.s8.bf16 %v4801
        %v5186 = vunpack.c.h.s8.bf16 %v4802
        %v5187 = vunpack.c.h.s8.bf16 %v4803
        %v5188 = vunpack.c.h.s8.bf16 %v4804
        %v5189 = vunpack.c.h.s8.bf16 %v4805
        %v5190 = vunpack.c.h.s8.bf16 %v4806
        %v5191 = vunpack.c.l.s8.bf16 %v4807
        %v5192 = vunpack.c.l.s8.bf16 %v4808
        %v5193 = vunpack.c.l.s8.bf16 %v4809
        %v5194 = vunpack.c.l.s8.bf16 %v4810
        %v5195 = vunpack.c.l.s8.bf16 %v4811
        %v5196 = vunpack.c.l.s8.bf16 %v4812
        %v5197 = vunpack.c.l.s8.bf16 %v4813
        %v5198 = vunpack.c.l.s8.bf16 %v4814
        %v5199 = vunpack.c.h.s8.bf16 %v4807
        %v5200 = vunpack.c.h.s8.bf16 %v4808
        %v5201 = vunpack.c.h.s8.bf16 %v4809
        %v5202 = vunpack.c.h.s8.bf16 %v4810
        %v5203 = vunpack.c.h.s8.bf16 %v4811
        %v5204 = vunpack.c.h.s8.bf16 %v4812
        %v5205 = vunpack.c.h.s8.bf16 %v4813
        %v5206 = vunpack.c.h.s8.bf16 %v4814
        %v5207 = vunpack.c.l.s8.bf16 %v4815
        %v5208 = vunpack.c.l.s8.bf16 %v4816
        %v5209 = vunpack.c.l.s8.bf16 %v4817
        %v5210 = vunpack.c.l.s8.bf16 %v4818
        %v5211 = vunpack.c.l.s8.bf16 %v4819
        %v5212 = vunpack.c.l.s8.bf16 %v4820
        %v5213 = vunpack.c.l.s8.bf16 %v4821
        %v5214 = vunpack.c.l.s8.bf16 %v4822
        %v5215 = vunpack.c.h.s8.bf16 %v4815
        %v5216 = vunpack.c.h.s8.bf16 %v4816
        %v5217 = vunpack.c.h.s8.bf16 %v4817
        %v5218 = vunpack.c.h.s8.bf16 %v4818
        %v5219 = vunpack.c.h.s8.bf16 %v4819
        %v5220 = vunpack.c.h.s8.bf16 %v4820
        %v5221 = vunpack.c.h.s8.bf16 %v4821
        %v5222 = vunpack.c.h.s8.bf16 %v4822
        %v5223 = vunpack.c.l.s8.bf16 %v4823
        %v5224 = vunpack.c.l.s8.bf16 %v4824
        %v5225 = vunpack.c.l.s8.bf16 %v4825
        %v5226 = vunpack.c.l.s8.bf16 %v4826
        %v5227 = vunpack.c.l.s8.bf16 %v4827
        %v5228 = vunpack.c.l.s8.bf16 %v4828
        %v5229 = vunpack.c.l.s8.bf16 %v4829
        %v5230 = vunpack.c.l.s8.bf16 %v4830
        %v5231 = vunpack.c.h.s8.bf16 %v4823
        %v5232 = vunpack.c.h.s8.bf16 %v4824
        %v5233 = vunpack.c.h.s8.bf16 %v4825
        %v5234 = vunpack.c.h.s8.bf16 %v4826
        %v5235 = vunpack.c.h.s8.bf16 %v4827
        %v5236 = vunpack.c.h.s8.bf16 %v4828
        %v5237 = vunpack.c.h.s8.bf16 %v4829
        %v5238 = vunpack.c.h.s8.bf16 %v4830
        %v5239 = vunpack.c.l.s8.bf16 %v4831
        %v5240 = vunpack.c.l.s8.bf16 %v4832
        %v5241 = vunpack.c.l.s8.bf16 %v4833
        %v5242 = vunpack.c.l.s8.bf16 %v4834
        %v5243 = vunpack.c.l.s8.bf16 %v4835
        %v5244 = vunpack.c.l.s8.bf16 %v4836
        %v5245 = vunpack.c.l.s8.bf16 %v4837
        %v5246 = vunpack.c.l.s8.bf16 %v4838
        %v5247 = vunpack.c.h.s8.bf16 %v4831
        %v5248 = vunpack.c.h.s8.bf16 %v4832
        %v5249 = vunpack.c.h.s8.bf16 %v4833
        %v5250 = vunpack.c.h.s8.bf16 %v4834
        %v5251 = vunpack.c.h.s8.bf16 %v4835
        %v5252 = vunpack.c.h.s8.bf16 %v4836
        %v5253 = vunpack.c.h.s8.bf16 %v4837
        %v5254 = vunpack.c.h.s8.bf16 %v4838
        %v5255 = vunpack.c.l.s8.bf16 %v4839
        %v5256 = vunpack.c.l.s8.bf16 %v4840
        %v5257 = vunpack.c.l.s8.bf16 %v4841
        %v5258 = vunpack.c.l.s8.bf16 %v4842
        %v5259 = vunpack.c.l.s8.bf16 %v4843
        %v5260 = vunpack.c.l.s8.bf16 %v4844
        %v5261 = vunpack.c.l.s8.bf16 %v4845
        %v5262 = vunpack.c.l.s8.bf16 %v4846
        %v5263 = vunpack.c.h.s8.bf16 %v4839
        %v5264 = vunpack.c.h.s8.bf16 %v4840
        %v5265 = vunpack.c.h.s8.bf16 %v4841
        %v5266 = vunpack.c.h.s8.bf16 %v4842
        %v5267 = vunpack.c.h.s8.bf16 %v4843
        %v5268 = vunpack.c.h.s8.bf16 %v4844
        %v5269 = vunpack.c.h.s8.bf16 %v4845
        %v5270 = vunpack.c.h.s8.bf16 %v4846
        %v5271 = vunpack.c.l.s8.bf16 %v4847
        %v5272 = vunpack.c.l.s8.bf16 %v4848
        %v5273 = vunpack.c.l.s8.bf16 %v4849
        %v5274 = vunpack.c.l.s8.bf16 %v4850
        %v5275 = vunpack.c.l.s8.bf16 %v4851
        %v5276 = vunpack.c.l.s8.bf16 %v4852
        %v5277 = vunpack.c.l.s8.bf16 %v4853
        %v5278 = vunpack.c.l.s8.bf16 %v4854
        %v5279 = vunpack.c.h.s8.bf16 %v4847
        %v5280 = vunpack.c.h.s8.bf16 %v4848
        %v5281 = vunpack.c.h.s8.bf16 %v4849
        %v5282 = vunpack.c.h.s8.bf16 %v4850
        %v5283 = vunpack.c.h.s8.bf16 %v4851
        %v5284 = vunpack.c.h.s8.bf16 %v4852
        %v5285 = vunpack.c.h.s8.bf16 %v4853
        %v5286 = vunpack.c.h.s8.bf16 %v4854
        %v5287 = vunpack.c.l.s8.bf16 %v4855
        %v5288 = vunpack.c.l.s8.bf16 %v4856
        %v5289 = vunpack.c.l.s8.bf16 %v4857
        %v5290 = vunpack.c.l.s8.bf16 %v4858
        %v5291 = vunpack.c.l.s8.bf16 %v4859
        %v5292 = vunpack.c.l.s8.bf16 %v4860
        %v5293 = vunpack.c.l.s8.bf16 %v4861
        %v5294 = vunpack.c.l.s8.bf16 %v4862
        %v5295 = vunpack.c.h.s8.bf16 %v4855
        %v5296 = vunpack.c.h.s8.bf16 %v4856
        %v5297 = vunpack.c.h.s8.bf16 %v4857
        %v5298 = vunpack.c.h.s8.bf16 %v4858
        %v5299 = vunpack.c.h.s8.bf16 %v4859
        %v5300 = vunpack.c.h.s8.bf16 %v4860
        %v5301 = vunpack.c.h.s8.bf16 %v4861
        %v5302 = vunpack.c.h.s8.bf16 %v4862
        %v5303 = vunpack.c.l.s8.bf16 %v4863
        %v5304 = vunpack.c.l.s8.bf16 %v4864
        %v5305 = vunpack.c.l.s8.bf16 %v4865
        %v5306 = vunpack.c.l.s8.bf16 %v4866
        %v5307 = vunpack.c.l.s8.bf16 %v4867
        %v5308 = vunpack.c.l.s8.bf16 %v4868
        %v5309 = vunpack.c.l.s8.bf16 %v4869
        %v5310 = vunpack.c.l.s8.bf16 %v4870
        %v5311 = vunpack.c.h.s8.bf16 %v4863
        %v5312 = vunpack.c.h.s8.bf16 %v4864
        %v5313 = vunpack.c.h.s8.bf16 %v4865
        %v5314 = vunpack.c.h.s8.bf16 %v4866
        %v5315 = vunpack.c.h.s8.bf16 %v4867
        %v5316 = vunpack.c.h.s8.bf16 %v4868
        %v5317 = vunpack.c.h.s8.bf16 %v4869
        %v5318 = vunpack.c.h.s8.bf16 %v4870
        %v5319 = vunpack.c.l.s8.bf16 %v4871
        %v5320 = vunpack.c.l.s8.bf16 %v4872
        %v5321 = vunpack.c.l.s8.bf16 %v4873
        %v5322 = vunpack.c.l.s8.bf16 %v4874
        %v5323 = vunpack.c.l.s8.bf16 %v4875
        %v5324 = vunpack.c.l.s8.bf16 %v4876
        %v5325 = vunpack.c.l.s8.bf16 %v4877
        %v5326 = vunpack.c.l.s8.bf16 %v4878
        %v5327 = vunpack.c.h.s8.bf16 %v4871
        %v5328 = vunpack.c.h.s8.bf16 %v4872
        %v5329 = vunpack.c.h.s8.bf16 %v4873
        %v5330 = vunpack.c.h.s8.bf16 %v4874
        %v5331 = vunpack.c.h.s8.bf16 %v4875
        %v5332 = vunpack.c.h.s8.bf16 %v4876
        %v5333 = vunpack.c.h.s8.bf16 %v4877
        %v5334 = vunpack.c.h.s8.bf16 %v4878
        %v5335 = vunpack.c.l.s8.bf16 %v4879
        %v5336 = vunpack.c.l.s8.bf16 %v4880
        %v5337 = vunpack.c.l.s8.bf16 %v4881
        %v5338 = vunpack.c.l.s8.bf16 %v4882
        %v5339 = vunpack.c.l.s8.bf16 %v4883
        %v5340 = vunpack.c.l.s8.bf16 %v4884
        %v5341 = vunpack.c.l.s8.bf16 %v4885
        %v5342 = vunpack.c.l.s8.bf16 %v4886
        %v5343 = vunpack.c.h.s8.bf16 %v4879
        %v5344 = vunpack.c.h.s8.bf16 %v4880
        %v5345 = vunpack.c.h.s8.bf16 %v4881
        %v5346 = vunpack.c.h.s8.bf16 %v4882
        %v5347 = vunpack.c.h.s8.bf16 %v4883
        %v5348 = vunpack.c.h.s8.bf16 %v4884
        %v5349 = vunpack.c.h.s8.bf16 %v4885
        %v5350 = vunpack.c.h.s8.bf16 %v4886
        %v5351 = vunpack.c.l.s8.bf16 %v4887
        %v5352 = vunpack.c.l.s8.bf16 %v4888
        %v5353 = vunpack.c.l.s8.bf16 %v4889
        %v5354 = vunpack.c.l.s8.bf16 %v4890
        %v5355 = vunpack.c.l.s8.bf16 %v4891
        %v5356 = vunpack.c.l.s8.bf16 %v4892
        %v5357 = vunpack.c.l.s8.bf16 %v4893
        %v5358 = vunpack.c.l.s8.bf16 %v4894
        %v5359 = vunpack.c.h.s8.bf16 %v4887
        %v5360 = vunpack.c.h.s8.bf16 %v4888
        %v5361 = vunpack.c.h.s8.bf16 %v4889
        %v5362 = vunpack.c.h.s8.bf16 %v4890
        %v5363 = vunpack.c.h.s8.bf16 %v4891
        %v5364 = vunpack.c.h.s8.bf16 %v4892
        %v5365 = vunpack.c.h.s8.bf16 %v4893
        %v5366 = vunpack.c.h.s8.bf16 %v4894
        %v5367 = vunpack.c.l.s8.bf16 %v4895
        %v5368 = vunpack.c.l.s8.bf16 %v4896
        %v5369 = vunpack.c.l.s8.bf16 %v4897
        %v5370 = vunpack.c.l.s8.bf16 %v4898
        %v5371 = vunpack.c.l.s8.bf16 %v4899
        %v5372 = vunpack.c.l.s8.bf16 %v4900
        %v5373 = vunpack.c.l.s8.bf16 %v4901
        %v5374 = vunpack.c.l.s8.bf16 %v4902
        %v5375 = vunpack.c.h.s8.bf16 %v4895
        %v5376 = vunpack.c.h.s8.bf16 %v4896
        %v5377 = vunpack.c.h.s8.bf16 %v4897
        %v5378 = vunpack.c.h.s8.bf16 %v4898
        %v5379 = vunpack.c.h.s8.bf16 %v4899
        %v5380 = vunpack.c.h.s8.bf16 %v4900
        %v5381 = vunpack.c.h.s8.bf16 %v4901
        %v5382 = vunpack.c.h.s8.bf16 %v4902
        %v5383 = vunpack.c.l.s8.bf16 %v4903
        %v5384 = vunpack.c.l.s8.bf16 %v4904
        %v5385 = vunpack.c.l.s8.bf16 %v4905
        %v5386 = vunpack.c.l.s8.bf16 %v4906
        %v5387 = vunpack.c.l.s8.bf16 %v4907
        %v5388 = vunpack.c.l.s8.bf16 %v4908
        %v5389 = vunpack.c.l.s8.bf16 %v4909
        %v5390 = vunpack.c.l.s8.bf16 %v4910
        %v5391 = vunpack.c.h.s8.bf16 %v4903
        %v5392 = vunpack.c.h.s8.bf16 %v4904
        %v5393 = vunpack.c.h.s8.bf16 %v4905
        %v5394 = vunpack.c.h.s8.bf16 %v4906
        %v5395 = vunpack.c.h.s8.bf16 %v4907
        %v5396 = vunpack.c.h.s8.bf16 %v4908
        %v5397 = vunpack.c.h.s8.bf16 %v4909
        %v5398 = vunpack.c.h.s8.bf16 %v4910
        %v5399 = vunpack.c.l.s8.bf16 %v4911
        %v5400 = vunpack.c.l.s8.bf16 %v4912
        %v5401 = vunpack.c.l.s8.bf16 %v4913
        %v5402 = vunpack.c.l.s8.bf16 %v4914
        %v5403 = vunpack.c.l.s8.bf16 %v4915
        %v5404 = vunpack.c.l.s8.bf16 %v4916
        %v5405 = vunpack.c.l.s8.bf16 %v4917
        %v5406 = vunpack.c.l.s8.bf16 %v4918
        %v5407 = vunpack.c.h.s8.bf16 %v4911
        %v5408 = vunpack.c.h.s8.bf16 %v4912
        %v5409 = vunpack.c.h.s8.bf16 %v4913
        %v5410 = vunpack.c.h.s8.bf16 %v4914
        %v5411 = vunpack.c.h.s8.bf16 %v4915
        %v5412 = vunpack.c.h.s8.bf16 %v4916
        %v5413 = vunpack.c.h.s8.bf16 %v4917
        %v5414 = vunpack.c.h.s8.bf16 %v4918
        %v5415 = vunpack.c.l.s8.bf16 %v4919
        %v5416 = vunpack.c.l.s8.bf16 %v4920
        %v5417 = vunpack.c.l.s8.bf16 %v4921
        %v5418 = vunpack.c.l.s8.bf16 %v4922
        %v5419 = vunpack.c.l.s8.bf16 %v4923
        %v5420 = vunpack.c.l.s8.bf16 %v4924
        %v5421 = vunpack.c.l.s8.bf16 %v4925
        %v5422 = vunpack.c.l.s8.bf16 %v4926
        %v5423 = vunpack.c.h.s8.bf16 %v4919
        %v5424 = vunpack.c.h.s8.bf16 %v4920
        %v5425 = vunpack.c.h.s8.bf16 %v4921
        %v5426 = vunpack.c.h.s8.bf16 %v4922
        %v5427 = vunpack.c.h.s8.bf16 %v4923
        %v5428 = vunpack.c.h.s8.bf16 %v4924
        %v5429 = vunpack.c.h.s8.bf16 %v4925
        %v5430 = vunpack.c.h.s8.bf16 %v4926
        %v5431 = vunpack.c.l.s8.bf16 %v4927
        %v5432 = vunpack.c.l.s8.bf16 %v4928
        %v5433 = vunpack.c.l.s8.bf16 %v4929
        %v5434 = vunpack.c.l.s8.bf16 %v4930
        %v5435 = vunpack.c.l.s8.bf16 %v4931
        %v5436 = vunpack.c.l.s8.bf16 %v4932
        %v5437 = vunpack.c.l.s8.bf16 %v4933
        %v5438 = vunpack.c.l.s8.bf16 %v4934
        %v5439 = vunpack.c.h.s8.bf16 %v4927
        %v5440 = vunpack.c.h.s8.bf16 %v4928
        %v5441 = vunpack.c.h.s8.bf16 %v4929
        %v5442 = vunpack.c.h.s8.bf16 %v4930
        %v5443 = vunpack.c.h.s8.bf16 %v4931
        %v5444 = vunpack.c.h.s8.bf16 %v4932
        %v5445 = vunpack.c.h.s8.bf16 %v4933
        %v5446 = vunpack.c.h.s8.bf16 %v4934
        %5447 = vmatprep.subr.bf16.mxu0 %v4992
        %5448 = vmatpush1.bf16.msra.mxu0 %v4991
        %5449 = vmatprep.subr.bf16.mxu0 %v4984
        %5450 = vmatpush1.bf16.msra.mxu0 %v4983
        %5451 = vmatprep.subr.bf16.mxu0 %v4976
        %5452 = vmatpush1.bf16.msra.mxu0 %v4975
        %5453 = vmatprep.subr.bf16.mxu0 %v4968
        %5454 = vmatpush1.bf16.msra.mxu0 %v4967
        %5455 = vmatprep.subr.bf16.mxu0 %v4960
        %5456 = vmatpush1.bf16.msra.mxu0 %v4959
        %5457 = vmatprep.subr.bf16.mxu0 %v4952
        %5458 = vmatpush1.bf16.msra.mxu0 %v4951
        %5459 = vmatprep.subr.bf16.mxu0 %v4944
        %5460 = vmatpush1.bf16.msra.mxu0 %v4943
        %5461 = vmatprep.subr.bf16.mxu0 %v4936
        %5462 = vmatpush1.bf16.msra.mxu0 %v4935
        %5463 = vmatprep.subr.bf16.mxu0 %v5056
        %5464 = vmatpush2.bf16.msra.mxu0 %v5055
        %5465 = vmatprep.subr.bf16.mxu0 %v5048
        %5466 = vmatpush2.bf16.msra.mxu0 %v5047
        %5467 = vmatprep.subr.bf16.mxu0 %v5040
        %5468 = vmatpush2.bf16.msra.mxu0 %v5039
        %5469 = vmatprep.subr.bf16.mxu0 %v5032
        %5470 = vmatpush2.bf16.msra.mxu0 %v5031
        %5471 = vmatprep.subr.bf16.mxu0 %v5024
        %5472 = vmatpush2.bf16.msra.mxu0 %v5023
        %5473 = vmatprep.subr.bf16.mxu0 %v5016
        %5474 = vmatpush2.bf16.msra.mxu0 %v5015
        %5475 = vmatprep.subr.bf16.mxu0 %v5008
        %5476 = vmatpush2.bf16.msra.mxu0 %v5007
        %5477 = vmatprep.subr.bf16.mxu0 %v5000
        %5478 = vmatpush2.bf16.msra.mxu0 %v4999
        %5479 = vmatprep.mubr.bf16.mxu0 %v4671
        %5480 = vmatmul.mubr.bf16.gmra.mxu0 %v4670
        %v5481 = vpop.f32.mrf.mxu0
        %v5482 = vadd.f32 0.0, %v5481
        %v5483 = vpop.f32.mrf.mxu0
        %v5484 = vadd.f32 0.0, %v5483
        %v5485 = vpop.f32.mrf.mxu0
        %v5486 = vpop.f32.mrf.mxu0
        %5487 = vdwg.mxu0
        %5488 = vmatprep.subr.bf16.mxu0 %v5120
        %5489 = vmatpush1.bf16.msra.mxu0 %v5119
        %5490 = vmatprep.subr.bf16.mxu0 %v5112
        %5491 = vmatpush1.bf16.msra.mxu0 %v5111
        %5492 = vmatprep.subr.bf16.mxu0 %v5104
        %5493 = vmatpush1.bf16.msra.mxu0 %v5103
        %5494 = vmatprep.subr.bf16.mxu0 %v5096
        %5495 = vmatpush1.bf16.msra.mxu0 %v5095
        %5496 = vmatprep.subr.bf16.mxu0 %v5088
        %5497 = vmatpush1.bf16.msra.mxu0 %v5087
        %5498 = vmatprep.subr.bf16.mxu0 %v5080
        %5499 = vmatpush1.bf16.msra.mxu0 %v5079
        %5500 = vmatprep.subr.bf16.mxu0 %v5072
        %5501 = vmatpush1.bf16.msra.mxu0 %v5071
        %5502 = vmatprep.subr.bf16.mxu0 %v5064
        %5503 = vmatpush1.bf16.msra.mxu0 %v5063
        %5504 = vmatprep.subr.bf16.mxu0 %v5184
        %5505 = vmatpush2.bf16.msra.mxu0 %v5183
        %5506 = vmatprep.subr.bf16.mxu0 %v5176
        %5507 = vmatpush2.bf16.msra.mxu0 %v5175
        %5508 = vmatprep.subr.bf16.mxu0 %v5168
        %5509 = vmatpush2.bf16.msra.mxu0 %v5167
        %5510 = vmatprep.subr.bf16.mxu0 %v5160
        %5511 = vmatpush2.bf16.msra.mxu0 %v5159
        %5512 = vmatprep.subr.bf16.mxu0 %v5152
        %5513 = vmatpush2.bf16.msra.mxu0 %v5151
        %5514 = vmatprep.subr.bf16.mxu0 %v5144
        %5515 = vmatpush2.bf16.msra.mxu0 %v5143
        %5516 = vmatprep.subr.bf16.mxu0 %v5136
        %5517 = vmatpush2.bf16.msra.mxu0 %v5135
        %5518 = vmatprep.subr.bf16.mxu0 %v5128
        %5519 = vmatpush2.bf16.msra.mxu0 %v5127
        %5520 = vmatprep.mubr.bf16.mxu0 %v4673
        %5521 = vmatmul.mubr.bf16.gmra.mxu0 %v4672
        %v5522 = vpop.f32.mrf.mxu0
        %v5523 = vadd.f32 %v5482, %v5522
        %v5524 = vpop.f32.mrf.mxu0
        %v5525 = vadd.f32 %v5484, %v5524
        %v5526 = vpop.f32.mrf.mxu0
        %v5527 = vpop.f32.mrf.mxu0
        %5528 = vdwg.mxu0
        %5529 = vmatprep.subr.bf16.mxu0 %v5248
        %5530 = vmatpush1.bf16.msra.mxu0 %v5247
        %5531 = vmatprep.subr.bf16.mxu0 %v5240
        %5532 = vmatpush1.bf16.msra.mxu0 %v5239
        %5533 = vmatprep.subr.bf16.mxu0 %v5232
        %5534 = vmatpush1.bf16.msra.mxu0 %v5231
        %5535 = vmatprep.subr.bf16.mxu0 %v5224
        %5536 = vmatpush1.bf16.msra.mxu0 %v5223
        %5537 = vmatprep.subr.bf16.mxu0 %v5216
        %5538 = vmatpush1.bf16.msra.mxu0 %v5215
        %5539 = vmatprep.subr.bf16.mxu0 %v5208
        %5540 = vmatpush1.bf16.msra.mxu0 %v5207
        %5541 = vmatprep.subr.bf16.mxu0 %v5200
        %5542 = vmatpush1.bf16.msra.mxu0 %v5199
        %5543 = vmatprep.subr.bf16.mxu0 %v5192
        %5544 = vmatpush1.bf16.msra.mxu0 %v5191
        %5545 = vmatprep.subr.bf16.mxu0 %v5312
        %5546 = vmatpush2.bf16.msra.mxu0 %v5311
        %5547 = vmatprep.subr.bf16.mxu0 %v5304
        %5548 = vmatpush2.bf16.msra.mxu0 %v5303
        %5549 = vmatprep.subr.bf16.mxu0 %v5296
        %5550 = vmatpush2.bf16.msra.mxu0 %v5295
        %5551 = vmatprep.subr.bf16.mxu0 %v5288
        %5552 = vmatpush2.bf16.msra.mxu0 %v5287
        %5553 = vmatprep.subr.bf16.mxu0 %v5280
        %5554 = vmatpush2.bf16.msra.mxu0 %v5279
        %5555 = vmatprep.subr.bf16.mxu0 %v5272
        %5556 = vmatpush2.bf16.msra.mxu0 %v5271
        %5557 = vmatprep.subr.bf16.mxu0 %v5264
        %5558 = vmatpush2.bf16.msra.mxu0 %v5263
        %5559 = vmatprep.subr.bf16.mxu0 %v5256
        %5560 = vmatpush2.bf16.msra.mxu0 %v5255
        %5561 = vmatprep.mubr.bf16.mxu0 %v4675
        %5562 = vmatmul.mubr.bf16.gmra.mxu0 %v4674
        %v5563 = vpop.f32.mrf.mxu0
        %v5564 = vadd.f32 %v5523, %v5563
        %v5565 = vpop.f32.mrf.mxu0
        %v5566 = vadd.f32 %v5525, %v5565
        %v5567 = vpop.f32.mrf.mxu0
        %v5568 = vpop.f32.mrf.mxu0
        %5569 = vdwg.mxu0
        %5570 = vmatprep.subr.bf16.mxu0 %v5376
        %5571 = vmatpush1.bf16.msra.mxu0 %v5375
        %5572 = vmatprep.subr.bf16.mxu0 %v5368
        %5573 = vmatpush1.bf16.msra.mxu0 %v5367
        %5574 = vmatprep.subr.bf16.mxu0 %v5360
        %5575 = vmatpush1.bf16.msra.mxu0 %v5359
        %5576 = vmatprep.subr.bf16.mxu0 %v5352
        %5577 = vmatpush1.bf16.msra.mxu0 %v5351
        %5578 = vmatprep.subr.bf16.mxu0 %v5344
        %5579 = vmatpush1.bf16.msra.mxu0 %v5343
        %5580 = vmatprep.subr.bf16.mxu0 %v5336
        %5581 = vmatpush1.bf16.msra.mxu0 %v5335
        %5582 = vmatprep.subr.bf16.mxu0 %v5328
        %5583 = vmatpush1.bf16.msra.mxu0 %v5327
        %5584 = vmatprep.subr.bf16.mxu0 %v5320
        %5585 = vmatpush1.bf16.msra.mxu0 %v5319
        %5586 = vmatprep.subr.bf16.mxu0 %v5440
        %5587 = vmatpush2.bf16.msra.mxu0 %v5439
        %5588 = vmatprep.subr.bf16.mxu0 %v5432
        %5589 = vmatpush2.bf16.msra.mxu0 %v5431
        %5590 = vmatprep.subr.bf16.mxu0 %v5424
        %5591 = vmatpush2.bf16.msra.mxu0 %v5423
        %5592 = vmatprep.subr.bf16.mxu0 %v5416
        %5593 = vmatpush2.bf16.msra.mxu0 %v5415
        %5594 = vmatprep.subr.bf16.mxu0 %v5408
        %5595 = vmatpush2.bf16.msra.mxu0 %v5407
        %5596 = vmatprep.subr.bf16.mxu0 %v5400
        %5597 = vmatpush2.bf16.msra.mxu0 %v5399
        %5598 = vmatprep.subr.bf16.mxu0 %v5392
        %5599 = vmatpush2.bf16.msra.mxu0 %v5391
        %5600 = vmatprep.subr.bf16.mxu0 %v5384
        %5601 = vmatpush2.bf16.msra.mxu0 %v5383
        %5602 = vmatprep.mubr.bf16.mxu0 %v4677
        %5603 = vmatmul.mubr.bf16.gmra.mxu0 %v4676
        %v5604 = vpop.f32.mrf.mxu0
        %v5605 = vadd.f32 %v5564, %v5604
        %v5606 = vpop.f32.mrf.mxu0
        %v5607 = vadd.f32 %v5566, %v5606
        %v5608 = vpop.f32.mrf.mxu0
        %v5609 = vpop.f32.mrf.mxu0
        %5610 = vdwg.mxu0
        %5611 = vmatprep.subr.bf16.mxu0 %v4994
        %5612 = vmatpush1.bf16.msra.mxu0 %v4993
        %5613 = vmatprep.subr.bf16.mxu0 %v4986
        %5614 = vmatpush1.bf16.msra.mxu0 %v4985
        %5615 = vmatprep.subr.bf16.mxu0 %v4978
        %5616 = vmatpush1.bf16.msra.mxu0 %v4977
        %5617 = vmatprep.subr.bf16.mxu0 %v4970
        %5618 = vmatpush1.bf16.msra.mxu0 %v4969
        %5619 = vmatprep.subr.bf16.mxu0 %v4962
        %5620 = vmatpush1.bf16.msra.mxu0 %v4961
        %5621 = vmatprep.subr.bf16.mxu0 %v4954
        %5622 = vmatpush1.bf16.msra.mxu0 %v4953
        %5623 = vmatprep.subr.bf16.mxu0 %v4946
        %5624 = vmatpush1.bf16.msra.mxu0 %v4945
        %5625 = vmatprep.subr.bf16.mxu0 %v4938
        %5626 = vmatpush1.bf16.msra.mxu0 %v4937
        %5627 = vmatprep.subr.bf16.mxu0 %v5058
        %5628 = vmatpush2.bf16.msra.mxu0 %v5057
        %5629 = vmatprep.subr.bf16.mxu0 %v5050
        %5630 = vmatpush2.bf16.msra.mxu0 %v5049
        %5631 = vmatprep.subr.bf16.mxu0 %v5042
        %5632 = vmatpush2.bf16.msra.mxu0 %v5041
        %5633 = vmatprep.subr.bf16.mxu0 %v5034
        %5634 = vmatpush2.bf16.msra.mxu0 %v5033
        %5635 = vmatprep.subr.bf16.mxu0 %v5026
        %5636 = vmatpush2.bf16.msra.mxu0 %v5025
        %5637 = vmatprep.subr.bf16.mxu0 %v5018
        %5638 = vmatpush2.bf16.msra.mxu0 %v5017
        %5639 = vmatprep.subr.bf16.mxu0 %v5010
        %5640 = vmatpush2.bf16.msra.mxu0 %v5009
        %5641 = vmatprep.subr.bf16.mxu0 %v5002
        %5642 = vmatpush2.bf16.msra.mxu0 %v5001
        %5643 = vmatprep.mubr.bf16.mxu0 %v4671
        %5644 = vmatmul.mubr.bf16.gmra.mxu0 %v4670
        %v5645 = vpop.f32.mrf.mxu0
        %v5646 = vadd.f32 0.0, %v5645
        %v5647 = vpop.f32.mrf.mxu0
        %v5648 = vadd.f32 0.0, %v5647
        %v5649 = vpop.f32.mrf.mxu0
        %v5650 = vpop.f32.mrf.mxu0
        %5651 = vdwg.mxu0
        %5652 = vmatprep.subr.bf16.mxu0 %v5122
        %5653 = vmatpush1.bf16.msra.mxu0 %v5121
        %5654 = vmatprep.subr.bf16.mxu0 %v5114
        %5655 = vmatpush1.bf16.msra.mxu0 %v5113
        %5656 = vmatprep.subr.bf16.mxu0 %v5106
        %5657 = vmatpush1.bf16.msra.mxu0 %v5105
        %5658 = vmatprep.subr.bf16.mxu0 %v5098
        %5659 = vmatpush1.bf16.msra.mxu0 %v5097
        %5660 = vmatprep.subr.bf16.mxu0 %v5090
        %5661 = vmatpush1.bf16.msra.mxu0 %v5089
        %5662 = vmatprep.subr.bf16.mxu0 %v5082
        %5663 = vmatpush1.bf16.msra.mxu0 %v5081
        %5664 = vmatprep.subr.bf16.mxu0 %v5074
        %5665 = vmatpush1.bf16.msra.mxu0 %v5073
        %5666 = vmatprep.subr.bf16.mxu0 %v5066
        %5667 = vmatpush1.bf16.msra.mxu0 %v5065
        %5668 = vmatprep.subr.bf16.mxu0 %v5186
        %5669 = vmatpush2.bf16.msra.mxu0 %v5185
        %5670 = vmatprep.subr.bf16.mxu0 %v5178
        %5671 = vmatpush2.bf16.msra.mxu0 %v5177
        %5672 = vmatprep.subr.bf16.mxu0 %v5170
        %5673 = vmatpush2.bf16.msra.mxu0 %v5169
        %5674 = vmatprep.subr.bf16.mxu0 %v5162
        %5675 = vmatpush2.bf16.msra.mxu0 %v5161
        %5676 = vmatprep.subr.bf16.mxu0 %v5154
        %5677 = vmatpush2.bf16.msra.mxu0 %v5153
        %5678 = vmatprep.subr.bf16.mxu0 %v5146
        %5679 = vmatpush2.bf16.msra.mxu0 %v5145
        %5680 = vmatprep.subr.bf16.mxu0 %v5138
        %5681 = vmatpush2.bf16.msra.mxu0 %v5137
        %5682 = vmatprep.subr.bf16.mxu0 %v5130
        %5683 = vmatpush2.bf16.msra.mxu0 %v5129
        %5684 = vmatprep.mubr.bf16.mxu0 %v4673
        %5685 = vmatmul.mubr.bf16.gmra.mxu0 %v4672
        %v5686 = vpop.f32.mrf.mxu0
        %v5687 = vadd.f32 %v5646, %v5686
        %v5688 = vpop.f32.mrf.mxu0
        %v5689 = vadd.f32 %v5648, %v5688
        %v5690 = vpop.f32.mrf.mxu0
        %v5691 = vpop.f32.mrf.mxu0
        %5692 = vdwg.mxu0
        %5693 = vmatprep.subr.bf16.mxu0 %v5250
        %5694 = vmatpush1.bf16.msra.mxu0 %v5249
        %5695 = vmatprep.subr.bf16.mxu0 %v5242
        %5696 = vmatpush1.bf16.msra.mxu0 %v5241
        %5697 = vmatprep.subr.bf16.mxu0 %v5234
        %5698 = vmatpush1.bf16.msra.mxu0 %v5233
        %5699 = vmatprep.subr.bf16.mxu0 %v5226
        %5700 = vmatpush1.bf16.msra.mxu0 %v5225
        %5701 = vmatprep.subr.bf16.mxu0 %v5218
        %5702 = vmatpush1.bf16.msra.mxu0 %v5217
        %5703 = vmatprep.subr.bf16.mxu0 %v5210
        %5704 = vmatpush1.bf16.msra.mxu0 %v5209
        %5705 = vmatprep.subr.bf16.mxu0 %v5202
        %5706 = vmatpush1.bf16.msra.mxu0 %v5201
        %5707 = vmatprep.subr.bf16.mxu0 %v5194
        %5708 = vmatpush1.bf16.msra.mxu0 %v5193
        %5709 = vmatprep.subr.bf16.mxu0 %v5314
        %5710 = vmatpush2.bf16.msra.mxu0 %v5313
        %5711 = vmatprep.subr.bf16.mxu0 %v5306
        %5712 = vmatpush2.bf16.msra.mxu0 %v5305
        %5713 = vmatprep.subr.bf16.mxu0 %v5298
        %5714 = vmatpush2.bf16.msra.mxu0 %v5297
        %5715 = vmatprep.subr.bf16.mxu0 %v5290
        %5716 = vmatpush2.bf16.msra.mxu0 %v5289
        %5717 = vmatprep.subr.bf16.mxu0 %v5282
        %5718 = vmatpush2.bf16.msra.mxu0 %v5281
        %5719 = vmatprep.subr.bf16.mxu0 %v5274
        %5720 = vmatpush2.bf16.msra.mxu0 %v5273
        %5721 = vmatprep.subr.bf16.mxu0 %v5266
        %5722 = vmatpush2.bf16.msra.mxu0 %v5265
        %5723 = vmatprep.subr.bf16.mxu0 %v5258
        %5724 = vmatpush2.bf16.msra.mxu0 %v5257
        %5725 = vmatprep.mubr.bf16.mxu0 %v4675
        %5726 = vmatmul.mubr.bf16.gmra.mxu0 %v4674
        %v5727 = vpop.f32.mrf.mxu0
        %v5728 = vadd.f32 %v5687, %v5727
        %v5729 = vpop.f32.mrf.mxu0
        %v5730 = vadd.f32 %v5689, %v5729
        %v5731 = vpop.f32.mrf.mxu0
        %v5732 = vpop.f32.mrf.mxu0
        %5733 = vdwg.mxu0
        %5734 = vmatprep.subr.bf16.mxu0 %v5378
        %5735 = vmatpush1.bf16.msra.mxu0 %v5377
        %5736 = vmatprep.subr.bf16.mxu0 %v5370
        %5737 = vmatpush1.bf16.msra.mxu0 %v5369
        %5738 = vmatprep.subr.bf16.mxu0 %v5362
        %5739 = vmatpush1.bf16.msra.mxu0 %v5361
        %5740 = vmatprep.subr.bf16.mxu0 %v5354
        %5741 = vmatpush1.bf16.msra.mxu0 %v5353
        %5742 = vmatprep.subr.bf16.mxu0 %v5346
        %5743 = vmatpush1.bf16.msra.mxu0 %v5345
        %5744 = vmatprep.subr.bf16.mxu0 %v5338
        %5745 = vmatpush1.bf16.msra.mxu0 %v5337
        %5746 = vmatprep.subr.bf16.mxu0 %v5330
        %5747 = vmatpush1.bf16.msra.mxu0 %v5329
        %5748 = vmatprep.subr.bf16.mxu0 %v5322
        %5749 = vmatpush1.bf16.msra.mxu0 %v5321
        %5750 = vmatprep.subr.bf16.mxu0 %v5442
        %5751 = vmatpush2.bf16.msra.mxu0 %v5441
        %5752 = vmatprep.subr.bf16.mxu0 %v5434
        %5753 = vmatpush2.bf16.msra.mxu0 %v5433
        %5754 = vmatprep.subr.bf16.mxu0 %v5426
        %5755 = vmatpush2.bf16.msra.mxu0 %v5425
        %5756 = vmatprep.subr.bf16.mxu0 %v5418
        %5757 = vmatpush2.bf16.msra.mxu0 %v5417
        %5758 = vmatprep.subr.bf16.mxu0 %v5410
        %5759 = vmatpush2.bf16.msra.mxu0 %v5409
        %5760 = vmatprep.subr.bf16.mxu0 %v5402
        %5761 = vmatpush2.bf16.msra.mxu0 %v5401
        %5762 = vmatprep.subr.bf16.mxu0 %v5394
        %5763 = vmatpush2.bf16.msra.mxu0 %v5393
        %5764 = vmatprep.subr.bf16.mxu0 %v5386
        %5765 = vmatpush2.bf16.msra.mxu0 %v5385
        %5766 = vmatprep.mubr.bf16.mxu0 %v4677
        %5767 = vmatmul.mubr.bf16.gmra.mxu0 %v4676
        %v5768 = vpop.f32.mrf.mxu0
        %v5769 = vadd.f32 %v5728, %v5768
        %v5770 = vpop.f32.mrf.mxu0
        %v5771 = vadd.f32 %v5730, %v5770
        %v5772 = vpop.f32.mrf.mxu0
        %v5773 = vpop.f32.mrf.mxu0
        %5774 = vdwg.mxu0
        %5775 = vmatprep.subr.bf16.mxu0 %v4996
        %5776 = vmatpush1.bf16.msra.mxu0 %v4995
        %5777 = vmatprep.subr.bf16.mxu0 %v4988
        %5778 = vmatpush1.bf16.msra.mxu0 %v4987
        %5779 = vmatprep.subr.bf16.mxu0 %v4980
        %5780 = vmatpush1.bf16.msra.mxu0 %v4979
        %5781 = vmatprep.subr.bf16.mxu0 %v4972
        %5782 = vmatpush1.bf16.msra.mxu0 %v4971
        %5783 = vmatprep.subr.bf16.mxu0 %v4964
        %5784 = vmatpush1.bf16.msra.mxu0 %v4963
        %5785 = vmatprep.subr.bf16.mxu0 %v4956
        %5786 = vmatpush1.bf16.msra.mxu0 %v4955
        %5787 = vmatprep.subr.bf16.mxu0 %v4948
        %5788 = vmatpush1.bf16.msra.mxu0 %v4947
        %5789 = vmatprep.subr.bf16.mxu0 %v4940
        %5790 = vmatpush1.bf16.msra.mxu0 %v4939
        %5791 = vmatprep.subr.bf16.mxu0 %v5060
        %5792 = vmatpush2.bf16.msra.mxu0 %v5059
        %5793 = vmatprep.subr.bf16.mxu0 %v5052
        %5794 = vmatpush2.bf16.msra.mxu0 %v5051
        %5795 = vmatprep.subr.bf16.mxu0 %v5044
        %5796 = vmatpush2.bf16.msra.mxu0 %v5043
        %5797 = vmatprep.subr.bf16.mxu0 %v5036
        %5798 = vmatpush2.bf16.msra.mxu0 %v5035
        %5799 = vmatprep.subr.bf16.mxu0 %v5028
        %5800 = vmatpush2.bf16.msra.mxu0 %v5027
        %5801 = vmatprep.subr.bf16.mxu0 %v5020
        %5802 = vmatpush2.bf16.msra.mxu0 %v5019
        %5803 = vmatprep.subr.bf16.mxu0 %v5012
        %5804 = vmatpush2.bf16.msra.mxu0 %v5011
        %5805 = vmatprep.subr.bf16.mxu0 %v5004
        %5806 = vmatpush2.bf16.msra.mxu0 %v5003
        %5807 = vmatprep.mubr.bf16.mxu0 %v4671
        %5808 = vmatmul.mubr.bf16.gmra.mxu0 %v4670
        %v5809 = vpop.f32.mrf.mxu0
        %v5810 = vadd.f32 0.0, %v5809
        %v5811 = vpop.f32.mrf.mxu0
        %v5812 = vadd.f32 0.0, %v5811
        %v5813 = vpop.f32.mrf.mxu0
        %v5814 = vpop.f32.mrf.mxu0
        %5815 = vdwg.mxu0
        %5816 = vmatprep.subr.bf16.mxu0 %v5124
        %5817 = vmatpush1.bf16.msra.mxu0 %v5123
        %5818 = vmatprep.subr.bf16.mxu0 %v5116
        %5819 = vmatpush1.bf16.msra.mxu0 %v5115
        %5820 = vmatprep.subr.bf16.mxu0 %v5108
        %5821 = vmatpush1.bf16.msra.mxu0 %v5107
        %5822 = vmatprep.subr.bf16.mxu0 %v5100
        %5823 = vmatpush1.bf16.msra.mxu0 %v5099
        %5824 = vmatprep.subr.bf16.mxu0 %v5092
        %5825 = vmatpush1.bf16.msra.mxu0 %v5091
        %5826 = vmatprep.subr.bf16.mxu0 %v5084
        %5827 = vmatpush1.bf16.msra.mxu0 %v5083
        %5828 = vmatprep.subr.bf16.mxu0 %v5076
        %5829 = vmatpush1.bf16.msra.mxu0 %v5075
        %5830 = vmatprep.subr.bf16.mxu0 %v5068
        %5831 = vmatpush1.bf16.msra.mxu0 %v5067
        %5832 = vmatprep.subr.bf16.mxu0 %v5188
        %5833 = vmatpush2.bf16.msra.mxu0 %v5187
        %5834 = vmatprep.subr.bf16.mxu0 %v5180
        %5835 = vmatpush2.bf16.msra.mxu0 %v5179
        %5836 = vmatprep.subr.bf16.mxu0 %v5172
        %5837 = vmatpush2.bf16.msra.mxu0 %v5171
        %5838 = vmatprep.subr.bf16.mxu0 %v5164
        %5839 = vmatpush2.bf16.msra.mxu0 %v5163
        %5840 = vmatprep.subr.bf16.mxu0 %v5156
        %5841 = vmatpush2.bf16.msra.mxu0 %v5155
        %5842 = vmatprep.subr.bf16.mxu0 %v5148
        %5843 = vmatpush2.bf16.msra.mxu0 %v5147
        %5844 = vmatprep.subr.bf16.mxu0 %v5140
        %5845 = vmatpush2.bf16.msra.mxu0 %v5139
        %5846 = vmatprep.subr.bf16.mxu0 %v5132
        %5847 = vmatpush2.bf16.msra.mxu0 %v5131
        %5848 = vmatprep.mubr.bf16.mxu0 %v4673
        %5849 = vmatmul.mubr.bf16.gmra.mxu0 %v4672
        %v5850 = vpop.f32.mrf.mxu0
        %v5851 = vadd.f32 %v5810, %v5850
        %v5852 = vpop.f32.mrf.mxu0
        %v5853 = vadd.f32 %v5812, %v5852
        %v5854 = vpop.f32.mrf.mxu0
        %v5855 = vpop.f32.mrf.mxu0
        %5856 = vdwg.mxu0
        %5857 = vmatprep.subr.bf16.mxu0 %v5252
        %5858 = vmatpush1.bf16.msra.mxu0 %v5251
        %5859 = vmatprep.subr.bf16.mxu0 %v5244
        %5860 = vmatpush1.bf16.msra.mxu0 %v5243
        %5861 = vmatprep.subr.bf16.mxu0 %v5236
        %5862 = vmatpush1.bf16.msra.mxu0 %v5235
        %5863 = vmatprep.subr.bf16.mxu0 %v5228
        %5864 = vmatpush1.bf16.msra.mxu0 %v5227
        %5865 = vmatprep.subr.bf16.mxu0 %v5220
        %5866 = vmatpush1.bf16.msra.mxu0 %v5219
        %5867 = vmatprep.subr.bf16.mxu0 %v5212
        %5868 = vmatpush1.bf16.msra.mxu0 %v5211
        %5869 = vmatprep.subr.bf16.mxu0 %v5204
        %5870 = vmatpush1.bf16.msra.mxu0 %v5203
        %5871 = vmatprep.subr.bf16.mxu0 %v5196
        %5872 = vmatpush1.bf16.msra.mxu0 %v5195
        %5873 = vmatprep.subr.bf16.mxu0 %v5316
        %5874 = vmatpush2.bf16.msra.mxu0 %v5315
        %5875 = vmatprep.subr.bf16.mxu0 %v5308
        %5876 = vmatpush2.bf16.msra.mxu0 %v5307
        %5877 = vmatprep.subr.bf16.mxu0 %v5300
        %5878 = vmatpush2.bf16.msra.mxu0 %v5299
        %5879 = vmatprep.subr.bf16.mxu0 %v5292
        %5880 = vmatpush2.bf16.msra.mxu0 %v5291
        %5881 = vmatprep.subr.bf16.mxu0 %v5284
        %5882 = vmatpush2.bf16.msra.mxu0 %v5283
        %5883 = vmatprep.subr.bf16.mxu0 %v5276
        %5884 = vmatpush2.bf16.msra.mxu0 %v5275
        %5885 = vmatprep.subr.bf16.mxu0 %v5268
        %5886 = vmatpush2.bf16.msra.mxu0 %v5267
        %5887 = vmatprep.subr.bf16.mxu0 %v5260
        %5888 = vmatpush2.bf16.msra.mxu0 %v5259
        %5889 = vmatprep.mubr.bf16.mxu0 %v4675
        %5890 = vmatmul.mubr.bf16.gmra.mxu0 %v4674
        %v5891 = vpop.f32.mrf.mxu0
        %v5892 = vadd.f32 %v5851, %v5891
        %v5893 = vpop.f32.mrf.mxu0
        %v5894 = vadd.f32 %v5853, %v5893
        %v5895 = vpop.f32.mrf.mxu0
        %v5896 = vpop.f32.mrf.mxu0
        %5897 = vdwg.mxu0
        %5898 = vmatprep.subr.bf16.mxu0 %v5380
        %5899 = vmatpush1.bf16.msra.mxu0 %v5379
        %5900 = vmatprep.subr.bf16.mxu0 %v5372
        %5901 = vmatpush1.bf16.msra.mxu0 %v5371
        %5902 = vmatprep.subr.bf16.mxu0 %v5364
        %5903 = vmatpush1.bf16.msra.mxu0 %v5363
        %5904 = vmatprep.subr.bf16.mxu0 %v5356
        %5905 = vmatpush1.bf16.msra.mxu0 %v5355
        %5906 = vmatprep.subr.bf16.mxu0 %v5348
        %5907 = vmatpush1.bf16.msra.mxu0 %v5347
        %5908 = vmatprep.subr.bf16.mxu0 %v5340
        %5909 = vmatpush1.bf16.msra.mxu0 %v5339
        %5910 = vmatprep.subr.bf16.mxu0 %v5332
        %5911 = vmatpush1.bf16.msra.mxu0 %v5331
        %5912 = vmatprep.subr.bf16.mxu0 %v5324
        %5913 = vmatpush1.bf16.msra.mxu0 %v5323
        %5914 = vmatprep.subr.bf16.mxu0 %v5444
        %5915 = vmatpush2.bf16.msra.mxu0 %v5443
        %5916 = vmatprep.subr.bf16.mxu0 %v5436
        %5917 = vmatpush2.bf16.msra.mxu0 %v5435
        %5918 = vmatprep.subr.bf16.mxu0 %v5428
        %5919 = vmatpush2.bf16.msra.mxu0 %v5427
        %5920 = vmatprep.subr.bf16.mxu0 %v5420
        %5921 = vmatpush2.bf16.msra.mxu0 %v5419
        %5922 = vmatprep.subr.bf16.mxu0 %v5412
        %5923 = vmatpush2.bf16.msra.mxu0 %v5411
        %5924 = vmatprep.subr.bf16.mxu0 %v5404
        %5925 = vmatpush2.bf16.msra.mxu0 %v5403
        %5926 = vmatprep.subr.bf16.mxu0 %v5396
        %5927 = vmatpush2.bf16.msra.mxu0 %v5395
        %5928 = vmatprep.subr.bf16.mxu0 %v5388
        %5929 = vmatpush2.bf16.msra.mxu0 %v5387
        %5930 = vmatprep.mubr.bf16.mxu0 %v4677
        %5931 = vmatmul.mubr.bf16.gmra.mxu0 %v4676
        %v5932 = vpop.f32.mrf.mxu0
        %v5933 = vadd.f32 %v5892, %v5932
        %v5934 = vpop.f32.mrf.mxu0
        %v5935 = vadd.f32 %v5894, %v5934
        %v5936 = vpop.f32.mrf.mxu0
        %v5937 = vpop.f32.mrf.mxu0
        %5938 = vdwg.mxu0
        %5939 = vmatprep.subr.bf16.mxu0 %v4998
        %5940 = vmatpush1.bf16.msra.mxu0 %v4997
        %5941 = vmatprep.subr.bf16.mxu0 %v4990
        %5942 = vmatpush1.bf16.msra.mxu0 %v4989
        %5943 = vmatprep.subr.bf16.mxu0 %v4982
        %5944 = vmatpush1.bf16.msra.mxu0 %v4981
        %5945 = vmatprep.subr.bf16.mxu0 %v4974
        %5946 = vmatpush1.bf16.msra.mxu0 %v4973
        %5947 = vmatprep.subr.bf16.mxu0 %v4966
        %5948 = vmatpush1.bf16.msra.mxu0 %v4965
        %5949 = vmatprep.subr.bf16.mxu0 %v4958
        %5950 = vmatpush1.bf16.msra.mxu0 %v4957
        %5951 = vmatprep.subr.bf16.mxu0 %v4950
        %5952 = vmatpush1.bf16.msra.mxu0 %v4949
        %5953 = vmatprep.subr.bf16.mxu0 %v4942
        %5954 = vmatpush1.bf16.msra.mxu0 %v4941
        %5955 = vmatprep.subr.bf16.mxu0 %v5062
        %5956 = vmatpush2.bf16.msra.mxu0 %v5061
        %5957 = vmatprep.subr.bf16.mxu0 %v5054
        %5958 = vmatpush2.bf16.msra.mxu0 %v5053
        %5959 = vmatprep.subr.bf16.mxu0 %v5046
        %5960 = vmatpush2.bf16.msra.mxu0 %v5045
        %5961 = vmatprep.subr.bf16.mxu0 %v5038
        %5962 = vmatpush2.bf16.msra.mxu0 %v5037
        %5963 = vmatprep.subr.bf16.mxu0 %v5030
        %5964 = vmatpush2.bf16.msra.mxu0 %v5029
        %5965 = vmatprep.subr.bf16.mxu0 %v5022
        %5966 = vmatpush2.bf16.msra.mxu0 %v5021
        %5967 = vmatprep.subr.bf16.mxu0 %v5014
        %5968 = vmatpush2.bf16.msra.mxu0 %v5013
        %5969 = vmatprep.subr.bf16.mxu0 %v5006
        %5970 = vmatpush2.bf16.msra.mxu0 %v5005
        %5971 = vmatprep.mubr.bf16.mxu0 %v4671
        %5972 = vmatmul.mubr.bf16.gmra.mxu0 %v4670
        %v5973 = vpop.f32.mrf.mxu0
        %v5974 = vadd.f32 0.0, %v5973
        %v5975 = vpop.f32.mrf.mxu0
        %v5976 = vadd.f32 0.0, %v5975
        %v5977 = vpop.f32.mrf.mxu0
        %v5978 = vpop.f32.mrf.mxu0
        %5979 = vdwg.mxu0
        %5980 = vmatprep.subr.bf16.mxu0 %v5126
        %5981 = vmatpush1.bf16.msra.mxu0 %v5125
        %5982 = vmatprep.subr.bf16.mxu0 %v5118
        %5983 = vmatpush1.bf16.msra.mxu0 %v5117
        %5984 = vmatprep.subr.bf16.mxu0 %v5110
        %5985 = vmatpush1.bf16.msra.mxu0 %v5109
        %5986 = vmatprep.subr.bf16.mxu0 %v5102
        %5987 = vmatpush1.bf16.msra.mxu0 %v5101
        %5988 = vmatprep.subr.bf16.mxu0 %v5094
        %5989 = vmatpush1.bf16.msra.mxu0 %v5093
        %5990 = vmatprep.subr.bf16.mxu0 %v5086
        %5991 = vmatpush1.bf16.msra.mxu0 %v5085
        %5992 = vmatprep.subr.bf16.mxu0 %v5078
        %5993 = vmatpush1.bf16.msra.mxu0 %v5077
        %5994 = vmatprep.subr.bf16.mxu0 %v5070
        %5995 = vmatpush1.bf16.msra.mxu0 %v5069
        %5996 = vmatprep.subr.bf16.mxu0 %v5190
        %5997 = vmatpush2.bf16.msra.mxu0 %v5189
        %5998 = vmatprep.subr.bf16.mxu0 %v5182
        %5999 = vmatpush2.bf16.msra.mxu0 %v5181
        %6000 = vmatprep.subr.bf16.mxu0 %v5174
        %6001 = vmatpush2.bf16.msra.mxu0 %v5173
        %6002 = vmatprep.subr.bf16.mxu0 %v5166
        %6003 = vmatpush2.bf16.msra.mxu0 %v5165
        %6004 = vmatprep.subr.bf16.mxu0 %v5158
        %6005 = vmatpush2.bf16.msra.mxu0 %v5157
        %6006 = vmatprep.subr.bf16.mxu0 %v5150
        %6007 = vmatpush2.bf16.msra.mxu0 %v5149
        %6008 = vmatprep.subr.bf16.mxu0 %v5142
        %6009 = vmatpush2.bf16.msra.mxu0 %v5141
        %6010 = vmatprep.subr.bf16.mxu0 %v5134
        %6011 = vmatpush2.bf16.msra.mxu0 %v5133
        %6012 = vmatprep.mubr.bf16.mxu0 %v4673
        %6013 = vmatmul.mubr.bf16.gmra.mxu0 %v4672
        %v6014 = vpop.f32.mrf.mxu0
        %v6015 = vadd.f32 %v5974, %v6014
        %v6016 = vpop.f32.mrf.mxu0
        %v6017 = vadd.f32 %v5976, %v6016
        %v6018 = vpop.f32.mrf.mxu0
        %v6019 = vpop.f32.mrf.mxu0
        %6020 = vdwg.mxu0
        %6021 = vmatprep.subr.bf16.mxu0 %v5254
        %6022 = vmatpush1.bf16.msra.mxu0 %v5253
        %6023 = vmatprep.subr.bf16.mxu0 %v5246
        %6024 = vmatpush1.bf16.msra.mxu0 %v5245
        %6025 = vmatprep.subr.bf16.mxu0 %v5238
        %6026 = vmatpush1.bf16.msra.mxu0 %v5237
        %6027 = vmatprep.subr.bf16.mxu0 %v5230
        %6028 = vmatpush1.bf16.msra.mxu0 %v5229
        %6029 = vmatprep.subr.bf16.mxu0 %v5222
        %6030 = vmatpush1.bf16.msra.mxu0 %v5221
        %6031 = vmatprep.subr.bf16.mxu0 %v5214
        %6032 = vmatpush1.bf16.msra.mxu0 %v5213
        %6033 = vmatprep.subr.bf16.mxu0 %v5206
        %6034 = vmatpush1.bf16.msra.mxu0 %v5205
        %6035 = vmatprep.subr.bf16.mxu0 %v5198
        %6036 = vmatpush1.bf16.msra.mxu0 %v5197
        %6037 = vmatprep.subr.bf16.mxu0 %v5318
        %6038 = vmatpush2.bf16.msra.mxu0 %v5317
        %6039 = vmatprep.subr.bf16.mxu0 %v5310
        %6040 = vmatpush2.bf16.msra.mxu0 %v5309
        %6041 = vmatprep.subr.bf16.mxu0 %v5302
        %6042 = vmatpush2.bf16.msra.mxu0 %v5301
        %6043 = vmatprep.subr.bf16.mxu0 %v5294
        %6044 = vmatpush2.bf16.msra.mxu0 %v5293
        %6045 = vmatprep.subr.bf16.mxu0 %v5286
        %6046 = vmatpush2.bf16.msra.mxu0 %v5285
        %6047 = vmatprep.subr.bf16.mxu0 %v5278
        %6048 = vmatpush2.bf16.msra.mxu0 %v5277
        %6049 = vmatprep.subr.bf16.mxu0 %v5270
        %6050 = vmatpush2.bf16.msra.mxu0 %v5269
        %6051 = vmatprep.subr.bf16.mxu0 %v5262
        %6052 = vmatpush2.bf16.msra.mxu0 %v5261
        %6053 = vmatprep.mubr.bf16.mxu0 %v4675
        %6054 = vmatmul.mubr.bf16.gmra.mxu0 %v4674
        %v6055 = vpop.f32.mrf.mxu0
        %v6056 = vadd.f32 %v6015, %v6055
        %v6057 = vpop.f32.mrf.mxu0
        %v6058 = vadd.f32 %v6017, %v6057
        %v6059 = vpop.f32.mrf.mxu0
        %v6060 = vpop.f32.mrf.mxu0
        %6061 = vdwg.mxu0
        %6062 = vmatprep.subr.bf16.mxu0 %v5382
        %6063 = vmatpush1.bf16.msra.mxu0 %v5381
        %6064 = vmatprep.subr.bf16.mxu0 %v5374
        %6065 = vmatpush1.bf16.msra.mxu0 %v5373
        %6066 = vmatprep.subr.bf16.mxu0 %v5366
        %6067 = vmatpush1.bf16.msra.mxu0 %v5365
        %6068 = vmatprep.subr.bf16.mxu0 %v5358
        %6069 = vmatpush1.bf16.msra.mxu0 %v5357
        %6070 = vmatprep.subr.bf16.mxu0 %v5350
        %6071 = vmatpush1.bf16.msra.mxu0 %v5349
        %6072 = vmatprep.subr.bf16.mxu0 %v5342
        %6073 = vmatpush1.bf16.msra.mxu0 %v5341
        %6074 = vmatprep.subr.bf16.mxu0 %v5334
        %6075 = vmatpush1.bf16.msra.mxu0 %v5333
        %6076 = vmatprep.subr.bf16.mxu0 %v5326
        %6077 = vmatpush1.bf16.msra.mxu0 %v5325
        %6078 = vmatprep.subr.bf16.mxu0 %v5446
        %6079 = vmatpush2.bf16.msra.mxu0 %v5445
        %6080 = vmatprep.subr.bf16.mxu0 %v5438
        %6081 = vmatpush2.bf16.msra.mxu0 %v5437
        %6082 = vmatprep.subr.bf16.mxu0 %v5430
        %6083 = vmatpush2.bf16.msra.mxu0 %v5429
        %6084 = vmatprep.subr.bf16.mxu0 %v5422
        %6085 = vmatpush2.bf16.msra.mxu0 %v5421
        %6086 = vmatprep.subr.bf16.mxu0 %v5414
        %6087 = vmatpush2.bf16.msra.mxu0 %v5413
        %6088 = vmatprep.subr.bf16.mxu0 %v5406
        %6089 = vmatpush2.bf16.msra.mxu0 %v5405
        %6090 = vmatprep.subr.bf16.mxu0 %v5398
        %6091 = vmatpush2.bf16.msra.mxu0 %v5397
        %6092 = vmatprep.subr.bf16.mxu0 %v5390
        %6093 = vmatpush2.bf16.msra.mxu0 %v5389
        %6094 = vmatprep.mubr.bf16.mxu0 %v4677
        %6095 = vmatmul.mubr.bf16.gmra.mxu0 %v4676
        %v6096 = vpop.f32.mrf.mxu0
        %v6097 = vadd.f32 %v6056, %v6096
        %v6098 = vpop.f32.mrf.mxu0
        %v6099 = vadd.f32 %v6058, %v6098
        %v6100 = vpop.f32.mrf.mxu0
        %v6101 = vpop.f32.mrf.mxu0
        %6102 = vdwg.mxu0
        %v6105 = vlaneseq
        %v6106 = vshrl.u32 %v6105, 7
        %v6107 = vsub.s32 0, %v6106
        %v6108 = vrot.slane %v4660, %v6107
        %v6109 = vlaneseq
        %v6110 = vshrl.u32 %v6109, 7
        %v6111 = vsub.s32 2, %v6110
        %v6112 = vrot.slane %v4660, %v6111
        %v6113 = vlaneseq
        %v6114 = vshrl.u32 %v6113, 7
        %v6115 = vsub.s32 4, %v6114
        %v6116 = vrot.slane %v4660, %v6115
        %v6117 = vlaneseq
        %v6118 = vshrl.u32 %v6117, 7
        %v6119 = vsub.s32 6, %v6118
        %v6120 = vrot.slane %v4660, %v6119
        %v6121 = vlaneseq
        %v6122 = vshrl.u32 %v6121, 7
        %v6123 = vsub.s32 0, %v6122
        %v6124 = vrot.slane %v4661, %v6123
        %v6125 = vlaneseq
        %v6126 = vshrl.u32 %v6125, 7
        %v6127 = vsub.s32 2, %v6126
        %v6128 = vrot.slane %v4661, %v6127
        %v6129 = vlaneseq
        %v6130 = vshrl.u32 %v6129, 7
        %v6131 = vsub.s32 4, %v6130
        %v6132 = vrot.slane %v4661, %v6131
        %v6133 = vlaneseq
        %v6134 = vshrl.u32 %v6133, 7
        %v6135 = vsub.s32 6, %v6134
        %v6136 = vrot.slane %v4661, %v6135
        %v6145 = vlaneseq
        %v6146 = vshrl.u32 %v6145, 7
        %v6147 = vsub.s32 0, %v6146
        %v6148 = vrot.slane %v6108, %v6147
        %v6149 = vlaneseq
        %v6150 = vshrl.u32 %v6149, 7
        %v6151 = vsub.s32 0, %v6150
        %v6152 = vrot.slane %v6112, %v6151
        %v6153 = vlaneseq
        %v6154 = vshrl.u32 %v6153, 7
        %v6155 = vsub.s32 0, %v6154
        %v6156 = vrot.slane %v6116, %v6155
        %v6157 = vlaneseq
        %v6158 = vshrl.u32 %v6157, 7
        %v6159 = vsub.s32 0, %v6158
        %v6160 = vrot.slane %v6120, %v6159
        %v6161 = vlaneseq
        %v6162 = vshrl.u32 %v6161, 7
        %v6163 = vsub.s32 0, %v6162
        %v6164 = vrot.slane %v6124, %v6163
        %v6165 = vlaneseq
        %v6166 = vshrl.u32 %v6165, 7
        %v6167 = vsub.s32 0, %v6166
        %v6168 = vrot.slane %v6128, %v6167
        %v6169 = vlaneseq
        %v6170 = vshrl.u32 %v6169, 7
        %v6171 = vsub.s32 0, %v6170
        %v6172 = vrot.slane %v6132, %v6171
        %v6173 = vlaneseq
        %v6174 = vshrl.u32 %v6173, 7
        %v6175 = vsub.s32 0, %v6174
        %v6176 = vrot.slane %v6136, %v6175
        %v6177 = vmul.f32 %v5605, %v6148
        %v6178 = vmul.f32 %v5607, %v6152
        %v6179 = vmul.f32 %v5769, %v6156
        %v6180 = vmul.f32 %v5771, %v6160
        %v6181 = vmul.f32 %v5933, %v6164
        %v6182 = vmul.f32 %v5935, %v6168
        %v6183 = vmul.f32 %v6097, %v6172
        %v6184 = vmul.f32 %v6099, %v6176
        %v6185 = vlaneseq
        %v6186 = vshrl.u32 %v6185, 7
        %v6187 = vsub.s32 1, %v6186
        %v6188 = vrot.slane %v4660, %v6187
        %v6189 = vlaneseq
        %v6190 = vshrl.u32 %v6189, 7
        %v6191 = vsub.s32 3, %v6190
        %v6192 = vrot.slane %v4660, %v6191
        %v6193 = vlaneseq
        %v6194 = vshrl.u32 %v6193, 7
        %v6195 = vsub.s32 5, %v6194
        %v6196 = vrot.slane %v4660, %v6195
        %v6197 = vlaneseq
        %v6198 = vshrl.u32 %v6197, 7
        %v6199 = vsub.s32 7, %v6198
        %v6200 = vrot.slane %v4660, %v6199
        %v6201 = vlaneseq
        %v6202 = vshrl.u32 %v6201, 7
        %v6203 = vsub.s32 1, %v6202
        %v6204 = vrot.slane %v4661, %v6203
        %v6205 = vlaneseq
        %v6206 = vshrl.u32 %v6205, 7
        %v6207 = vsub.s32 3, %v6206
        %v6208 = vrot.slane %v4661, %v6207
        %v6209 = vlaneseq
        %v6210 = vshrl.u32 %v6209, 7
        %v6211 = vsub.s32 5, %v6210
        %v6212 = vrot.slane %v4661, %v6211
        %v6213 = vlaneseq
        %v6214 = vshrl.u32 %v6213, 7
        %v6215 = vsub.s32 7, %v6214
        %v6216 = vrot.slane %v4661, %v6215
        %v6225 = vlaneseq
        %v6226 = vshrl.u32 %v6225, 7
        %v6227 = vsub.s32 1, %v6226
        %v6228 = vrot.slane %v6188, %v6227
        %v6229 = vlaneseq
        %v6230 = vshrl.u32 %v6229, 7
        %v6231 = vsub.s32 1, %v6230
        %v6232 = vrot.slane %v6192, %v6231
        %v6233 = vlaneseq
        %v6234 = vshrl.u32 %v6233, 7
        %v6235 = vsub.s32 1, %v6234
        %v6236 = vrot.slane %v6196, %v6235
        %v6237 = vlaneseq
        %v6238 = vshrl.u32 %v6237, 7
        %v6239 = vsub.s32 1, %v6238
        %v6240 = vrot.slane %v6200, %v6239
        %v6241 = vlaneseq
        %v6242 = vshrl.u32 %v6241, 7
        %v6243 = vsub.s32 1, %v6242
        %v6244 = vrot.slane %v6204, %v6243
        %v6245 = vlaneseq
        %v6246 = vshrl.u32 %v6245, 7
        %v6247 = vsub.s32 1, %v6246
        %v6248 = vrot.slane %v6208, %v6247
        %v6249 = vlaneseq
        %v6250 = vshrl.u32 %v6249, 7
        %v6251 = vsub.s32 1, %v6250
        %v6252 = vrot.slane %v6212, %v6251
        %v6253 = vlaneseq
        %v6254 = vshrl.u32 %v6253, 7
        %v6255 = vsub.s32 1, %v6254
        %v6256 = vrot.slane %v6216, %v6255
        %v6257 = vadd.f32 %v6177, %v6228
        %v6258 = vadd.f32 %v6178, %v6232
        %v6259 = vadd.f32 %v6179, %v6236
        %v6260 = vadd.f32 %v6180, %v6240
        %v6261 = vadd.f32 %v6181, %v6244
        %v6262 = vadd.f32 %v6182, %v6248
        %v6263 = vadd.f32 %v6183, %v6252
        %v6264 = vadd.f32 %v6184, %v6256
        %v6265 = vmax.f32 %v6257, 0.0
        %v6266 = vmax.f32 %v6258, 0.0
        %v6267 = vmax.f32 %v6259, 0.0
        %v6268 = vmax.f32 %v6260, 0.0
        %v6269 = vmax.f32 %v6261, 0.0
        %v6270 = vmax.f32 %v6262, 0.0
        %v6271 = vmax.f32 %v6263, 0.0
        %v6272 = vmax.f32 %v6264, 0.0
        %6273 = vst [vmem:[#allocation2] sm:$0xff] %v6265
        %6274 = vst [vmem:[#allocation2 + $0x8] sm:$0xff] %v6266
        %6275 = vst [vmem:[#allocation2 + $0x10] sm:$0xff] %v6267
        %6276 = vst [vmem:[#allocation2 + $0x18] sm:$0xff] %v6268
        %6277 = vst [vmem:[#allocation2 + $0x20] sm:$0xff] %v6269
        %6278 = vst [vmem:[#allocation2 + $0x28] sm:$0xff] %v6270
        %6279 = vst [vmem:[#allocation2 + $0x30] sm:$0xff] %v6271
        %6280 = vst [vmem:[#allocation2 + $0x38] sm:$0xff] %v6272
        %v6281 = vld [vmem:[%s827] sm:$0x3]
        %v6282 = vld [vmem:[#allocation2] sm:$0xff]
        %v6283 = vld [vmem:[#allocation2 + $0x8] sm:$0xff]
        %v6284 = vld [vmem:[#allocation2 + $0x10] sm:$0xff]
        %v6285 = vld [vmem:[#allocation2 + $0x18] sm:$0xff]
        %v6286 = vld [vmem:[#allocation2 + $0x20] sm:$0xff]
        %v6287 = vld [vmem:[#allocation2 + $0x28] sm:$0xff]
        %v6288 = vld [vmem:[#allocation2 + $0x30] sm:$0xff]
        %v6289 = vld [vmem:[#allocation2 + $0x38] sm:$0xff]
        %v6290 = vpack.c.bf16 %v6282, %v6282
        %v6291 = vpack.c.bf16 %v6283, %v6283
        %v6292 = vpack.c.bf16 %v6284, %v6284
        %v6293 = vpack.c.bf16 %v6285, %v6285
        %v6294 = vpack.c.bf16 %v6286, %v6286
        %v6295 = vpack.c.bf16 %v6287, %v6287
        %v6296 = vpack.c.bf16 %v6288, %v6288
        %v6297 = vpack.c.bf16 %v6289, %v6289
        %v6298 = vld [vmem:[%s818] sm:$0xff]
        %v6299 = vld [vmem:[%s818 + $0x8] sm:$0xff]
        %v6300 = vld [vmem:[%s818 + $0x10] sm:$0xff]
        %v6301 = vld [vmem:[%s818 + $0x18] sm:$0xff]
        %v6302 = vld [vmem:[%s818 + $0x20] sm:$0xff]
        %v6303 = vld [vmem:[%s818 + $0x28] sm:$0xff]
        %v6304 = vld [vmem:[%s818 + $0x30] sm:$0xff]
        %v6305 = vld [vmem:[%s818 + $0x38] sm:$0xff]
        %v6306 = vld [vmem:[%s818 + $0x40] sm:$0xff]
        %v6307 = vld [vmem:[%s818 + $0x48] sm:$0xff]
        %v6308 = vld [vmem:[%s818 + $0x50] sm:$0xff]
        %v6309 = vld [vmem:[%s818 + $0x58] sm:$0xff]
        %v6310 = vld [vmem:[%s818 + $0x60] sm:$0xff]
        %v6311 = vld [vmem:[%s818 + $0x68] sm:$0xff]
        %v6312 = vld [vmem:[%s818 + $0x70] sm:$0xff]
        %v6313 = vld [vmem:[%s818 + $0x78] sm:$0xff]
        %v6314 = vld [vmem:[%s818 + $0x80] sm:$0xff]
        %v6315 = vld [vmem:[%s818 + $0x88] sm:$0xff]
        %v6316 = vld [vmem:[%s818 + $0x90] sm:$0xff]
        %v6317 = vld [vmem:[%s818 + $0x98] sm:$0xff]
        %v6318 = vld [vmem:[%s818 + $0xa0] sm:$0xff]
        %v6319 = vld [vmem:[%s818 + $0xa8] sm:$0xff]
        %v6320 = vld [vmem:[%s818 + $0xb0] sm:$0xff]
        %v6321 = vld [vmem:[%s818 + $0xb8] sm:$0xff]
        %v6322 = vld [vmem:[%s818 + $0xc0] sm:$0xff]
        %v6323 = vld [vmem:[%s818 + $0xc8] sm:$0xff]
        %v6324 = vld [vmem:[%s818 + $0xd0] sm:$0xff]
        %v6325 = vld [vmem:[%s818 + $0xd8] sm:$0xff]
        %v6326 = vld [vmem:[%s818 + $0xe0] sm:$0xff]
        %v6327 = vld [vmem:[%s818 + $0xe8] sm:$0xff]
        %v6328 = vld [vmem:[%s818 + $0xf0] sm:$0xff]
        %v6329 = vld [vmem:[%s818 + $0xf8] sm:$0xff]
        %v6330 = vunpack.c.l.s8.bf16 %v6298
        %v6331 = vunpack.c.h.s8.bf16 %v6298
        %v6332 = vunpack.c.l.s8.bf16 %v6299
        %v6333 = vunpack.c.h.s8.bf16 %v6299
        %v6334 = vunpack.c.l.s8.bf16 %v6300
        %v6335 = vunpack.c.h.s8.bf16 %v6300
        %v6336 = vunpack.c.l.s8.bf16 %v6301
        %v6337 = vunpack.c.h.s8.bf16 %v6301
        %v6338 = vunpack.c.l.s8.bf16 %v6302
        %v6339 = vunpack.c.h.s8.bf16 %v6302
        %v6340 = vunpack.c.l.s8.bf16 %v6303
        %v6341 = vunpack.c.h.s8.bf16 %v6303
        %v6342 = vunpack.c.l.s8.bf16 %v6304
        %v6343 = vunpack.c.h.s8.bf16 %v6304
        %v6344 = vunpack.c.l.s8.bf16 %v6305
        %v6345 = vunpack.c.h.s8.bf16 %v6305
        %v6346 = vunpack.c.l.s8.bf16 %v6306
        %v6347 = vunpack.c.h.s8.bf16 %v6306
        %v6348 = vunpack.c.l.s8.bf16 %v6307
        %v6349 = vunpack.c.h.s8.bf16 %v6307
        %v6350 = vunpack.c.l.s8.bf16 %v6308
        %v6351 = vunpack.c.h.s8.bf16 %v6308
        %v6352 = vunpack.c.l.s8.bf16 %v6309
        %v6353 = vunpack.c.h.s8.bf16 %v6309
        %v6354 = vunpack.c.l.s8.bf16 %v6310
        %v6355 = vunpack.c.h.s8.bf16 %v6310
        %v6356 = vunpack.c.l.s8.bf16 %v6311
        %v6357 = vunpack.c.h.s8.bf16 %v6311
        %v6358 = vunpack.c.l.s8.bf16 %v6312
        %v6359 = vunpack.c.h.s8.bf16 %v6312
        %v6360 = vunpack.c.l.s8.bf16 %v6313
        %v6361 = vunpack.c.h.s8.bf16 %v6313
        %v6362 = vunpack.c.l.s8.bf16 %v6314
        %v6363 = vunpack.c.h.s8.bf16 %v6314
        %v6364 = vunpack.c.l.s8.bf16 %v6315
        %v6365 = vunpack.c.h.s8.bf16 %v6315
        %v6366 = vunpack.c.l.s8.bf16 %v6316
        %v6367 = vunpack.c.h.s8.bf16 %v6316
        %v6368 = vunpack.c.l.s8.bf16 %v6317
        %v6369 = vunpack.c.h.s8.bf16 %v6317
        %v6370 = vunpack.c.l.s8.bf16 %v6318
        %v6371 = vunpack.c.h.s8.bf16 %v6318
        %v6372 = vunpack.c.l.s8.bf16 %v6319
        %v6373 = vunpack.c.h.s8.bf16 %v6319
        %v6374 = vunpack.c.l.s8.bf16 %v6320
        %v6375 = vunpack.c.h.s8.bf16 %v6320
        %v6376 = vunpack.c.l.s8.bf16 %v6321
        %v6377 = vunpack.c.h.s8.bf16 %v6321
        %v6378 = vunpack.c.l.s8.bf16 %v6322
        %v6379 = vunpack.c.h.s8.bf16 %v6322
        %v6380 = vunpack.c.l.s8.bf16 %v6323
        %v6381 = vunpack.c.h.s8.bf16 %v6323
        %v6382 = vunpack.c.l.s8.bf16 %v6324
        %v6383 = vunpack.c.h.s8.bf16 %v6324
        %v6384 = vunpack.c.l.s8.bf16 %v6325
        %v6385 = vunpack.c.h.s8.bf16 %v6325
        %v6386 = vunpack.c.l.s8.bf16 %v6326
        %v6387 = vunpack.c.h.s8.bf16 %v6326
        %v6388 = vunpack.c.l.s8.bf16 %v6327
        %v6389 = vunpack.c.h.s8.bf16 %v6327
        %v6390 = vunpack.c.l.s8.bf16 %v6328
        %v6391 = vunpack.c.h.s8.bf16 %v6328
        %v6392 = vunpack.c.l.s8.bf16 %v6329
        %v6393 = vunpack.c.h.s8.bf16 %v6329
        %6394 = vmatprep.subr.bf16.mxu0 0
        %6395 = vmatpush1.bf16.msra.mxu0 %v6337
        %6396 = vmatprep.subr.bf16.mxu0 0
        %6397 = vmatpush1.bf16.msra.mxu0 %v6336
        %6398 = vmatprep.subr.bf16.mxu0 0
        %6399 = vmatpush1.bf16.msra.mxu0 %v6335
        %6400 = vmatprep.subr.bf16.mxu0 0
        %6401 = vmatpush1.bf16.msra.mxu0 %v6334
        %6402 = vmatprep.subr.bf16.mxu0 0
        %6403 = vmatpush1.bf16.msra.mxu0 %v6333
        %6404 = vmatprep.subr.bf16.mxu0 0
        %6405 = vmatpush1.bf16.msra.mxu0 %v6332
        %6406 = vmatprep.subr.bf16.mxu0 0
        %6407 = vmatpush1.bf16.msra.mxu0 %v6331
        %6408 = vmatprep.subr.bf16.mxu0 0
        %6409 = vmatpush1.bf16.msra.mxu0 %v6330
        %6410 = vmatprep.subr.bf16.mxu0 0
        %6411 = vmatpush2.bf16.msra.mxu0 %v6345
        %6412 = vmatprep.subr.bf16.mxu0 0
        %6413 = vmatpush2.bf16.msra.mxu0 %v6344
        %6414 = vmatprep.subr.bf16.mxu0 0
        %6415 = vmatpush2.bf16.msra.mxu0 %v6343
        %6416 = vmatprep.subr.bf16.mxu0 0
        %6417 = vmatpush2.bf16.msra.mxu0 %v6342
        %6418 = vmatprep.subr.bf16.mxu0 0
        %6419 = vmatpush2.bf16.msra.mxu0 %v6341
        %6420 = vmatprep.subr.bf16.mxu0 0
        %6421 = vmatpush2.bf16.msra.mxu0 %v6340
        %6422 = vmatprep.subr.bf16.mxu0 0
        %6423 = vmatpush2.bf16.msra.mxu0 %v6339
        %6424 = vmatprep.subr.bf16.mxu0 0
        %6425 = vmatpush2.bf16.msra.mxu0 %v6338
        %6426 = vmatprep.mubr.bf16.mxu0 %v6291
        %6427 = vmatmul.mubr.bf16.gmra.mxu0 %v6290
        %v6428 = vpop.f32.mrf.mxu0
        %v6429 = vadd.f32 0.0, %v6428
        %v6430 = vpop.f32.mrf.mxu0
        %v6431 = vpop.f32.mrf.mxu0
        %v6432 = vpop.f32.mrf.mxu0
        %6433 = vdwg.mxu0
        %6434 = vmatprep.subr.bf16.mxu0 0
        %6435 = vmatpush1.bf16.msra.mxu0 %v6353
        %6436 = vmatprep.subr.bf16.mxu0 0
        %6437 = vmatpush1.bf16.msra.mxu0 %v6352
        %6438 = vmatprep.subr.bf16.mxu0 0
        %6439 = vmatpush1.bf16.msra.mxu0 %v6351
        %6440 = vmatprep.subr.bf16.mxu0 0
        %6441 = vmatpush1.bf16.msra.mxu0 %v6350
        %6442 = vmatprep.subr.bf16.mxu0 0
        %6443 = vmatpush1.bf16.msra.mxu0 %v6349
        %6444 = vmatprep.subr.bf16.mxu0 0
        %6445 = vmatpush1.bf16.msra.mxu0 %v6348
        %6446 = vmatprep.subr.bf16.mxu0 0
        %6447 = vmatpush1.bf16.msra.mxu0 %v6347
        %6448 = vmatprep.subr.bf16.mxu0 0
        %6449 = vmatpush1.bf16.msra.mxu0 %v6346
        %6450 = vmatprep.subr.bf16.mxu0 0
        %6451 = vmatpush2.bf16.msra.mxu0 %v6361
        %6452 = vmatprep.subr.bf16.mxu0 0
        %6453 = vmatpush2.bf16.msra.mxu0 %v6360
        %6454 = vmatprep.subr.bf16.mxu0 0
        %6455 = vmatpush2.bf16.msra.mxu0 %v6359
        %6456 = vmatprep.subr.bf16.mxu0 0
        %6457 = vmatpush2.bf16.msra.mxu0 %v6358
        %6458 = vmatprep.subr.bf16.mxu0 0
        %6459 = vmatpush2.bf16.msra.mxu0 %v6357
        %6460 = vmatprep.subr.bf16.mxu0 0
        %6461 = vmatpush2.bf16.msra.mxu0 %v6356
        %6462 = vmatprep.subr.bf16.mxu0 0
        %6463 = vmatpush2.bf16.msra.mxu0 %v6355
        %6464 = vmatprep.subr.bf16.mxu0 0
        %6465 = vmatpush2.bf16.msra.mxu0 %v6354
        %6466 = vmatprep.mubr.bf16.mxu0 %v6293
        %6467 = vmatmul.mubr.bf16.gmra.mxu0 %v6292
        %v6468 = vpop.f32.mrf.mxu0
        %v6469 = vadd.f32 %v6429, %v6468
        %v6470 = vpop.f32.mrf.mxu0
        %v6471 = vpop.f32.mrf.mxu0
        %v6472 = vpop.f32.mrf.mxu0
        %6473 = vdwg.mxu0
        %6474 = vmatprep.subr.bf16.mxu0 0
        %6475 = vmatpush1.bf16.msra.mxu0 %v6369
        %6476 = vmatprep.subr.bf16.mxu0 0
        %6477 = vmatpush1.bf16.msra.mxu0 %v6368
        %6478 = vmatprep.subr.bf16.mxu0 0
        %6479 = vmatpush1.bf16.msra.mxu0 %v6367
        %6480 = vmatprep.subr.bf16.mxu0 0
        %6481 = vmatpush1.bf16.msra.mxu0 %v6366
        %6482 = vmatprep.subr.bf16.mxu0 0
        %6483 = vmatpush1.bf16.msra.mxu0 %v6365
        %6484 = vmatprep.subr.bf16.mxu0 0
        %6485 = vmatpush1.bf16.msra.mxu0 %v6364
        %6486 = vmatprep.subr.bf16.mxu0 0
        %6487 = vmatpush1.bf16.msra.mxu0 %v6363
        %6488 = vmatprep.subr.bf16.mxu0 0
        %6489 = vmatpush1.bf16.msra.mxu0 %v6362
        %6490 = vmatprep.subr.bf16.mxu0 0
        %6491 = vmatpush2.bf16.msra.mxu0 %v6377
        %6492 = vmatprep.subr.bf16.mxu0 0
        %6493 = vmatpush2.bf16.msra.mxu0 %v6376
        %6494 = vmatprep.subr.bf16.mxu0 0
        %6495 = vmatpush2.bf16.msra.mxu0 %v6375
        %6496 = vmatprep.subr.bf16.mxu0 0
        %6497 = vmatpush2.bf16.msra.mxu0 %v6374
        %6498 = vmatprep.subr.bf16.mxu0 0
        %6499 = vmatpush2.bf16.msra.mxu0 %v6373
        %6500 = vmatprep.subr.bf16.mxu0 0
        %6501 = vmatpush2.bf16.msra.mxu0 %v6372
        %6502 = vmatprep.subr.bf16.mxu0 0
        %6503 = vmatpush2.bf16.msra.mxu0 %v6371
        %6504 = vmatprep.subr.bf16.mxu0 0
        %6505 = vmatpush2.bf16.msra.mxu0 %v6370
        %6506 = vmatprep.mubr.bf16.mxu0 %v6295
        %6507 = vmatmul.mubr.bf16.gmra.mxu0 %v6294
        %v6508 = vpop.f32.mrf.mxu0
        %v6509 = vadd.f32 %v6469, %v6508
        %v6510 = vpop.f32.mrf.mxu0
        %v6511 = vpop.f32.mrf.mxu0
        %v6512 = vpop.f32.mrf.mxu0
        %6513 = vdwg.mxu0
        %6514 = vmatprep.subr.bf16.mxu0 0
        %6515 = vmatpush1.bf16.msra.mxu0 %v6385
        %6516 = vmatprep.subr.bf16.mxu0 0
        %6517 = vmatpush1.bf16.msra.mxu0 %v6384
        %6518 = vmatprep.subr.bf16.mxu0 0
        %6519 = vmatpush1.bf16.msra.mxu0 %v6383
        %6520 = vmatprep.subr.bf16.mxu0 0
        %6521 = vmatpush1.bf16.msra.mxu0 %v6382
        %6522 = vmatprep.subr.bf16.mxu0 0
        %6523 = vmatpush1.bf16.msra.mxu0 %v6381
        %6524 = vmatprep.subr.bf16.mxu0 0
        %6525 = vmatpush1.bf16.msra.mxu0 %v6380
        %6526 = vmatprep.subr.bf16.mxu0 0
        %6527 = vmatpush1.bf16.msra.mxu0 %v6379
        %6528 = vmatprep.subr.bf16.mxu0 0
        %6529 = vmatpush1.bf16.msra.mxu0 %v6378
        %6530 = vmatprep.subr.bf16.mxu0 0
        %6531 = vmatpush2.bf16.msra.mxu0 %v6393
        %6532 = vmatprep.subr.bf16.mxu0 0
        %6533 = vmatpush2.bf16.msra.mxu0 %v6392
        %6534 = vmatprep.subr.bf16.mxu0 0
        %6535 = vmatpush2.bf16.msra.mxu0 %v6391
        %6536 = vmatprep.subr.bf16.mxu0 0
        %6537 = vmatpush2.bf16.msra.mxu0 %v6390
        %6538 = vmatprep.subr.bf16.mxu0 0
        %6539 = vmatpush2.bf16.msra.mxu0 %v6389
        %6540 = vmatprep.subr.bf16.mxu0 0
        %6541 = vmatpush2.bf16.msra.mxu0 %v6388
        %6542 = vmatprep.subr.bf16.mxu0 0
        %6543 = vmatpush2.bf16.msra.mxu0 %v6387
        %6544 = vmatprep.subr.bf16.mxu0 0
        %6545 = vmatpush2.bf16.msra.mxu0 %v6386
        %6546 = vmatprep.mubr.bf16.mxu0 %v6297
        %6547 = vmatmul.mubr.bf16.gmra.mxu0 %v6296
        %v6548 = vpop.f32.mrf.mxu0
        %v6549 = vadd.f32 %v6509, %v6548
        %v6550 = vpop.f32.mrf.mxu0
        %v6551 = vpop.f32.mrf.mxu0
        %v6552 = vpop.f32.mrf.mxu0
        %6553 = vdwg.mxu0
        %v6554 = vlaneseq
        %v6555 = vshrl.u32 %v6554, 7
        %v6556 = vsub.s32 0, %v6555
        %v6557 = vrot.slane %v6281, %v6556
        %v6558 = vmul.f32 %v6549, %v6557
        %v6559 = vlaneseq
        %v6560 = vshrl.u32 %v6559, 7
        %v6561 = vsub.s32 1, %v6560
        %v6562 = vrot.slane %v6281, %v6561
        %v6563 = vadd.f32 %v6558, %v6562
        %s6564 = smul.u32 %s50, 8
        %s6565 = scalar_lea.vmem [#allocation3], %s6564
        %6566 = vst [vmem:[%s6565] sm:$0xff] %v6563
        %vm6567 = vcmp.ge.f32.partialorder %v6563, 0.0
        %v6568 = vmul.f32 %v6563, 0.01
        %v6569 = vsel %vm6567, %v6563, %v6568
        %v6570 = vld [vmem:[%s845] sm:$0x3]
        %v6571 = vpack.c.bf16 %v6569, %v6569
        %v6572 = vld [vmem:[%s836] sm:$0xff]
        %v6573 = vld [vmem:[%s836 + $0x8] sm:$0xff]
        %v6574 = vld [vmem:[%s836 + $0x10] sm:$0xff]
        %v6575 = vld [vmem:[%s836 + $0x18] sm:$0xff]
        %v6576 = vunpack.c.l.s8.bf16 %v6572
        %v6577 = vunpack.c.h.s8.bf16 %v6572
        %v6578 = vunpack.c.l.s8.bf16 %v6573
        %v6579 = vunpack.c.h.s8.bf16 %v6573
        %v6580 = vunpack.c.l.s8.bf16 %v6574
        %v6581 = vunpack.c.h.s8.bf16 %v6574
        %v6582 = vunpack.c.l.s8.bf16 %v6575
        %v6583 = vunpack.c.h.s8.bf16 %v6575
        %6584 = vmatprep.subr.bf16.mxu0 0
        %6585 = vmatpush1.bf16.msra.mxu0 %v6583
        %6586 = vmatprep.subr.bf16.mxu0 0
        %6587 = vmatpush1.bf16.msra.mxu0 %v6582
        %6588 = vmatprep.subr.bf16.mxu0 0
        %6589 = vmatpush1.bf16.msra.mxu0 %v6581
        %6590 = vmatprep.subr.bf16.mxu0 0
        %6591 = vmatpush1.bf16.msra.mxu0 %v6580
        %6592 = vmatprep.subr.bf16.mxu0 0
        %6593 = vmatpush1.bf16.msra.mxu0 %v6579
        %6594 = vmatprep.subr.bf16.mxu0 0
        %6595 = vmatpush1.bf16.msra.mxu0 %v6578
        %6596 = vmatprep.subr.bf16.mxu0 0
        %6597 = vmatpush1.bf16.msra.mxu0 %v6577
        %6598 = vmatprep.subr.bf16.mxu0 0
        %6599 = vmatpush1.bf16.msra.mxu0 %v6576
        %6600 = vmatprep.subr.bf16.mxu0 0
        %6601 = vmatpush2.bf16.msra.mxu0 0
        %6602 = vmatprep.subr.bf16.mxu0 0
        %6603 = vmatpush2.bf16.msra.mxu0 0
        %6604 = vmatprep.subr.bf16.mxu0 0
        %6605 = vmatpush2.bf16.msra.mxu0 0
        %6606 = vmatprep.subr.bf16.mxu0 0
        %6607 = vmatpush2.bf16.msra.mxu0 0
        %6608 = vmatprep.subr.bf16.mxu0 0
        %6609 = vmatpush2.bf16.msra.mxu0 0
        %6610 = vmatprep.subr.bf16.mxu0 0
        %6611 = vmatpush2.bf16.msra.mxu0 0
        %6612 = vmatprep.subr.bf16.mxu0 0
        %6613 = vmatpush2.bf16.msra.mxu0 0
        %6614 = vmatprep.subr.bf16.mxu0 0
        %6615 = vmatpush2.bf16.msra.mxu0 0
        %6616 = vmatprep.mubr.bf16.mxu0 0
        %6617 = vmatmul.mubr.bf16.gmra.mxu0 %v6571
        %v6618 = vpop.f32.mrf.mxu0
        %v6619 = vadd.f32 0.0, %v6618
        %v6620 = vpop.f32.mrf.mxu0
        %v6621 = vpop.f32.mrf.mxu0
        %v6622 = vpop.f32.mrf.mxu0
        %6623 = vdwg.mxu0
        %v6624 = vlaneseq
        %v6625 = vshrl.u32 %v6624, 7
        %v6626 = vsub.s32 0, %v6625
        %v6627 = vrot.slane %v6570, %v6626
        %v6628 = vmul.f32 %v6619, %v6627
        %v6629 = vlaneseq
        %v6630 = vshrl.u32 %v6629, 7
        %v6631 = vsub.s32 1, %v6630
        %v6632 = vrot.slane %v6570, %v6631
        %v6633 = vadd.f32 %v6628, %v6632
        %v6634 = vxor.u32 %v6633, 2147483648
        %v6635 = vmul.f32 %v6634, 1.442695
        %v6636 = vpow.pop %v6635
        %v6637 = vadd.f32 %v6636, 1.0
        %v6638 = vrcp.pop %v6637
        %v6639 = vmul.f32 1.0, %v6638
        %v6640 = vlaneseq
        %v6641 = vand.u32 %v6640, 127
        %vm6642 = vcmp.lt.s32.totalorder %v6641, 24
        %v6643 = vsel %vm6642, %v6639, 0.0
        %v6644 = vpack.c.bf16 %v6643, %v6643
        %v6645 = vld [vmem:[#allocation19] sm:$0xf]
        %v6646 = vld [vmem:[#allocation19 + $0x4] sm:$0xf]
        %v6647 = vld [vmem:[#allocation19 + $0x8] sm:$0xf]
        %v6648 = vld [vmem:[#allocation19 + $0xc] sm:$0xf]
        %v6649 = vld [vmem:[#allocation19 + $0x10] sm:$0xf]
        %v6650 = vld [vmem:[#allocation19 + $0x14] sm:$0xf]
        %v6651 = vld [vmem:[#allocation19 + $0x18] sm:$0xf]
        %v6652 = vld [vmem:[#allocation19 + $0x1c] sm:$0xf]
        %v6653 = vld [vmem:[#allocation19 + $0x20] sm:$0xf]
        %v6654 = vld [vmem:[#allocation19 + $0x24] sm:$0xf]
        %v6655 = vld [vmem:[#allocation19 + $0x28] sm:$0xf]
        %v6656 = vld [vmem:[#allocation19 + $0x2c] sm:$0xf]
        %v6657 = vld [vmem:[#allocation19 + $0x30] sm:$0xf]
        %v6658 = vld [vmem:[#allocation19 + $0x34] sm:$0xf]
        %v6659 = vld [vmem:[#allocation19 + $0x38] sm:$0xf]
        %v6660 = vld [vmem:[#allocation19 + $0x3c] sm:$0xf]
        %v6661 = vld [vmem:[#allocation20] sm:$0x1]
        %v6663 = vlaneseq
        %v6664 = vshrl.u32 %v6663, 7
        %v6665 = vsub.s32 0, %v6664
        %v6666 = vrot.slane %v6661, %v6665
        %v6684 = vunpack.c.l.b16 %v6645
        %v6685 = vunpack.c.l.b16 %v6646
        %v6686 = vunpack.c.l.b16 %v6647
        %v6687 = vunpack.c.l.b16 %v6648
        %v6688 = vunpack.c.l.b16 %v6649
        %v6689 = vunpack.c.l.b16 %v6650
        %v6690 = vunpack.c.l.b16 %v6651
        %v6691 = vunpack.c.l.b16 %v6652
        %v6692 = vunpack.c.l.b16 %v6653
        %v6693 = vunpack.c.l.b16 %v6654
        %v6694 = vunpack.c.l.b16 %v6655
        %v6695 = vunpack.c.l.b16 %v6656
        %v6696 = vunpack.c.l.b16 %v6657
        %v6697 = vunpack.c.l.b16 %v6658
        %v6698 = vunpack.c.l.b16 %v6659
        %v6699 = vunpack.c.l.b16 %v6660
        %v6700 = vpack.c.b16 %v6685, %v6684
        %v6701 = vpack.c.b16 %v6687, %v6686
        %v6702 = vpack.c.b16 %v6689, %v6688
        %v6703 = vpack.c.b16 %v6691, %v6690
        %v6704 = vpack.c.b16 %v6693, %v6692
        %v6705 = vpack.c.b16 %v6695, %v6694
        %v6706 = vpack.c.b16 %v6697, %v6696
        %v6707 = vpack.c.b16 %v6699, %v6698
        %6716 = vmatprep.subr.bf16.mxu0 0
        %6717 = vmatpush1.bf16.msra.mxu0 %v6707
        %6718 = vmatprep.subr.bf16.mxu0 0
        %6719 = vmatpush1.bf16.msra.mxu0 %v6706
        %6720 = vmatprep.subr.bf16.mxu0 0
        %6721 = vmatpush1.bf16.msra.mxu0 %v6705
        %6722 = vmatprep.subr.bf16.mxu0 0
        %6723 = vmatpush1.bf16.msra.mxu0 %v6704
        %6724 = vmatprep.subr.bf16.mxu0 0
        %6725 = vmatpush1.bf16.msra.mxu0 %v6703
        %6726 = vmatprep.subr.bf16.mxu0 0
        %6727 = vmatpush1.bf16.msra.mxu0 %v6702
        %6728 = vmatprep.subr.bf16.mxu0 0
        %6729 = vmatpush1.bf16.msra.mxu0 %v6701
        %6730 = vmatprep.subr.bf16.mxu0 0
        %6731 = vmatpush1.bf16.msra.mxu0 %v6700
        %6732 = vmatprep.subr.bf16.mxu0 0
        %6733 = vmatpush2.bf16.msra.mxu0 0
        %6734 = vmatprep.subr.bf16.mxu0 0
        %6735 = vmatpush2.bf16.msra.mxu0 0
        %6736 = vmatprep.subr.bf16.mxu0 0
        %6737 = vmatpush2.bf16.msra.mxu0 0
        %6738 = vmatprep.subr.bf16.mxu0 0
        %6739 = vmatpush2.bf16.msra.mxu0 0
        %6740 = vmatprep.subr.bf16.mxu0 0
        %6741 = vmatpush2.bf16.msra.mxu0 0
        %6742 = vmatprep.subr.bf16.mxu0 0
        %6743 = vmatpush2.bf16.msra.mxu0 0
        %6744 = vmatprep.subr.bf16.mxu0 0
        %6745 = vmatpush2.bf16.msra.mxu0 0
        %6746 = vmatprep.subr.bf16.mxu0 0
        %6747 = vmatpush2.bf16.msra.mxu0 0
        %6748 = vmatprep.mubr.bf16.mxu0 0
        %6749 = vmatmul.mubr.bf16.gmra.mxu0 %v6644
        %v6750 = vpop.f32.mrf.mxu0
        %v6751 = vadd.f32 %v6666, %v6750
        %v6752 = vpop.f32.mrf.mxu0
        %v6753 = vpop.f32.mrf.mxu0
        %v6754 = vpop.f32.mrf.mxu0
        %6755 = vdwg.mxu0
        %v6756 = vxor.u32 %v6751, 2147483648
        %v6757 = vmul.f32 %v6756, 1.442695
        %v6758 = vpow.pop %v6757
        %v6759 = vadd.f32 %v6758, 1.0
        %v6760 = vrcp.pop %v6759
        %v6761 = vmul.f32 1.0, %v6760
        %v6762 = vld [vmem:[#allocation4] sm:$0xff]
        %6764 = vset.pattern.permute.xlu0 5
        %6765 = vperm.xlu0 %6764, %v6761
        %v6766 = vpop.permute.xlu0 %6765
        %v6768 = vmul.f32 %v6761, %v6766
        %v6769 = vadd.f32 %v6762, %v6768
        %vm6770 = vcmask 39936
        %6771 = vst.msk [vmem:[#allocation4] sm:$0xff] %vm6770, %v6769
        %p6772 = scmp.eq.s32.totalorder %s50, 4
        // Predicated region
        $region157: #{attention_model_forward.1} parent=87 // pred_check
          %p6773 = pneg %p6772
        $region158: #{attention_model_forward.1} parent=87 // pred_check_branch
          %6775 = sbr.rel (%p6773) target = $region160
        $region159: #{attention_model_forward.1} parent=87 // pred_region
          %v6776 = vld [vmem:[#allocation4] sm:$0xff]
          %v6777 = vmul.f32 %v6776, 0.4472136
          %v6778 = vsel %vm6770, %v6777, -inf
          %6779 = vmax.xlane.f32.xlu0 %v6778
          %v6780 = vpop.xlane.xlu0 %6779
          %v6781 = vsub.f32 %v6777, %v6780
          %v6782 = vmul.f32 %v6781, 1.442695
          %v6783 = vpow.pop %v6782
          %v6784 = vsel %vm6770, %v6783, 0.0
          %6785 = vadd.xlane.f32.xlu0 %v6784
          %v6786 = vpop.xlane.xlu0 %6785
          %v6787 = vrcp.pop %v6786
          %v6788 = vmul.f32 %v6783, %v6787
          %v6789 = vld [vmem:[#allocation3] sm:$0xff]
          %6791 = vset.pattern.permute.xlu0 0
          %6792 = vperm.xlu0 %6791, %v6788
          %v6793 = vpop.permute.xlu0 %6792
          %v6795 = vmul.f32 %v6789, %v6793
          %6796 = vst [vmem:[%s18] sm:$0xff] %v6795
          %v6797 = vpack.c.bf16 %v6795, %v6795
          %v6798 = vld [vmem:[#allocation22] sm:$0xff]
          %v6799 = vld [vmem:[#allocation22 + $0x8] sm:$0xff]
          %v6800 = vld [vmem:[#allocation22 + $0x10] sm:$0xff]
          %v6801 = vld [vmem:[#allocation22 + $0x18] sm:$0xff]
          %v6802 = vld [vmem:[#allocation22 + $0x20] sm:$0xff]
          %v6803 = vld [vmem:[#allocation22 + $0x28] sm:$0xff]
          %v6804 = vld [vmem:[#allocation22 + $0x30] sm:$0xff]
          %v6805 = vld [vmem:[#allocation22 + $0x38] sm:$0xff]
          %v6806 = vld [vmem:[#allocation22 + $0x40] sm:$0xff]
          %v6807 = vld [vmem:[#allocation22 + $0x48] sm:$0xff]
          %v6808 = vld [vmem:[#allocation22 + $0x50] sm:$0xff]
          %v6809 = vld [vmem:[#allocation22 + $0x58] sm:$0xff]
          %v6810 = vld [vmem:[#allocation22 + $0x60] sm:$0xff]
          %v6811 = vld [vmem:[#allocation22 + $0x68] sm:$0xff]
          %v6812 = vld [vmem:[#allocation22 + $0x70] sm:$0xff]
          %v6813 = vld [vmem:[#allocation22 + $0x78] sm:$0xff]
          %v6814 = vld [vmem:[#allocation22 + $0x80] sm:$0xff]
          %v6815 = vld [vmem:[#allocation22 + $0x88] sm:$0xff]
          %v6816 = vld [vmem:[#allocation22 + $0x90] sm:$0xff]
          %v6817 = vld [vmem:[#allocation22 + $0x98] sm:$0xff]
          %v6818 = vld [vmem:[#allocation22 + $0xa0] sm:$0xff]
          %v6819 = vld [vmem:[#allocation22 + $0xa8] sm:$0xff]
          %v6820 = vld [vmem:[#allocation22 + $0xb0] sm:$0xff]
          %v6821 = vld [vmem:[#allocation22 + $0xb8] sm:$0xff]
          %v6822 = vld [vmem:[#allocation22 + $0xc0] sm:$0xff]
          %v6823 = vld [vmem:[#allocation22 + $0xc8] sm:$0xff]
          %v6824 = vld [vmem:[#allocation22 + $0xd0] sm:$0xff]
          %v6825 = vld [vmem:[#allocation22 + $0xd8] sm:$0xff]
          %v6826 = vld [vmem:[#allocation22 + $0xe0] sm:$0xff]
          %v6827 = vld [vmem:[#allocation22 + $0xe8] sm:$0xff]
          %v6828 = vld [vmem:[#allocation22 + $0xf0] sm:$0xff]
          %v6829 = vld [vmem:[#allocation22 + $0xf8] sm:$0xff]
          %s6830 = scalar_lea.vmem [#allocation3], 8
          %v6831 = vld [vmem:[%s6830] sm:$0xff]
          %6832 = vset.pattern.permute.xlu0 1
          %6833 = vperm.xlu0 %6832, %v6788
          %v6834 = vpop.permute.xlu0 %6833
          %v6836 = vmul.f32 %v6831, %v6834
          %s6837 = scalar_lea.vmem %s18, 8
          %6838 = vst [vmem:[%s6837] sm:$0xff] %v6836
          %v6839 = vpack.c.bf16 %v6836, %v6836
          %s6840 = scalar_lea.vmem [#allocation22], 256
          %v6841 = vld [vmem:[%s6840] sm:$0xff]
          %v6842 = vld [vmem:[%s6840 + $0x8] sm:$0xff]
          %v6843 = vld [vmem:[%s6840 + $0x10] sm:$0xff]
          %v6844 = vld [vmem:[%s6840 + $0x18] sm:$0xff]
          %v6845 = vld [vmem:[%s6840 + $0x20] sm:$0xff]
          %v6846 = vld [vmem:[%s6840 + $0x28] sm:$0xff]
          %v6847 = vld [vmem:[%s6840 + $0x30] sm:$0xff]
          %v6848 = vld [vmem:[%s6840 + $0x38] sm:$0xff]
          %v6849 = vld [vmem:[%s6840 + $0x40] sm:$0xff]
          %v6850 = vld [vmem:[%s6840 + $0x48] sm:$0xff]
          %v6851 = vld [vmem:[%s6840 + $0x50] sm:$0xff]
          %v6852 = vld [vmem:[%s6840 + $0x58] sm:$0xff]
          %v6853 = vld [vmem:[%s6840 + $0x60] sm:$0xff]
          %v6854 = vld [vmem:[%s6840 + $0x68] sm:$0xff]
          %v6855 = vld [vmem:[%s6840 + $0x70] sm:$0xff]
          %v6856 = vld [vmem:[%s6840 + $0x78] sm:$0xff]
          %v6857 = vld [vmem:[%s6840 + $0x80] sm:$0xff]
          %v6858 = vld [vmem:[%s6840 + $0x88] sm:$0xff]
          %v6859 = vld [vmem:[%s6840 + $0x90] sm:$0xff]
          %v6860 = vld [vmem:[%s6840 + $0x98] sm:$0xff]
          %v6861 = vld [vmem:[%s6840 + $0xa0] sm:$0xff]
          %v6862 = vld [vmem:[%s6840 + $0xa8] sm:$0xff]
          %v6863 = vld [vmem:[%s6840 + $0xb0] sm:$0xff]
          %v6864 = vld [vmem:[%s6840 + $0xb8] sm:$0xff]
          %v6865 = vld [vmem:[%s6840 + $0xc0] sm:$0xff]
          %v6866 = vld [vmem:[%s6840 + $0xc8] sm:$0xff]
          %v6867 = vld [vmem:[%s6840 + $0xd0] sm:$0xff]
          %v6868 = vld [vmem:[%s6840 + $0xd8] sm:$0xff]
          %v6869 = vld [vmem:[%s6840 + $0xe0] sm:$0xff]
          %v6870 = vld [vmem:[%s6840 + $0xe8] sm:$0xff]
          %v6871 = vld [vmem:[%s6840 + $0xf0] sm:$0xff]
          %v6872 = vld [vmem:[%s6840 + $0xf8] sm:$0xff]
          %v6905 = vunpack.c.l.b16 %v6841
          %v6906 = vunpack.c.h.b16 %v6841
          %v6907 = vunpack.c.l.b16 %v6842
          %v6908 = vunpack.c.h.b16 %v6842
          %v6909 = vunpack.c.l.b16 %v6843
          %v6910 = vunpack.c.h.b16 %v6843
          %v6911 = vunpack.c.l.b16 %v6844
          %v6912 = vunpack.c.h.b16 %v6844
          %v6913 = vunpack.c.l.b16 %v6845
          %v6914 = vunpack.c.h.b16 %v6845
          %v6915 = vunpack.c.l.b16 %v6846
          %v6916 = vunpack.c.h.b16 %v6846
          %v6917 = vunpack.c.l.b16 %v6847
          %v6918 = vunpack.c.h.b16 %v6847
          %v6919 = vunpack.c.l.b16 %v6848
          %v6920 = vunpack.c.h.b16 %v6848
          %v6921 = vunpack.c.l.b16 %v6849
          %v6922 = vunpack.c.h.b16 %v6849
          %v6923 = vunpack.c.l.b16 %v6850
          %v6924 = vunpack.c.h.b16 %v6850
          %v6925 = vunpack.c.l.b16 %v6851
          %v6926 = vunpack.c.h.b16 %v6851
          %v6927 = vunpack.c.l.b16 %v6852
          %v6928 = vunpack.c.h.b16 %v6852
          %v6929 = vunpack.c.l.b16 %v6853
          %v6930 = vunpack.c.h.b16 %v6853
          %v6931 = vunpack.c.l.b16 %v6854
          %v6932 = vunpack.c.h.b16 %v6854
          %v6933 = vunpack.c.l.b16 %v6855
          %v6934 = vunpack.c.h.b16 %v6855
          %v6935 = vunpack.c.l.b16 %v6856
          %v6936 = vunpack.c.h.b16 %v6856
          %v6937 = vunpack.c.l.b16 %v6857
          %v6938 = vunpack.c.h.b16 %v6857
          %v6939 = vunpack.c.l.b16 %v6858
          %v6940 = vunpack.c.h.b16 %v6858
          %v6941 = vunpack.c.l.b16 %v6859
          %v6942 = vunpack.c.h.b16 %v6859
          %v6943 = vunpack.c.l.b16 %v6860
          %v6944 = vunpack.c.h.b16 %v6860
          %v6945 = vunpack.c.l.b16 %v6861
          %v6946 = vunpack.c.h.b16 %v6861
          %v6947 = vunpack.c.l.b16 %v6862
          %v6948 = vunpack.c.h.b16 %v6862
          %v6949 = vunpack.c.l.b16 %v6863
          %v6950 = vunpack.c.h.b16 %v6863
          %v6951 = vunpack.c.l.b16 %v6864
          %v6952 = vunpack.c.h.b16 %v6864
          %v6953 = vunpack.c.l.b16 %v6865
          %v6954 = vunpack.c.h.b16 %v6865
          %v6955 = vunpack.c.l.b16 %v6866
          %v6956 = vunpack.c.h.b16 %v6866
          %v6957 = vunpack.c.l.b16 %v6867
          %v6958 = vunpack.c.h.b16 %v6867
          %v6959 = vunpack.c.l.b16 %v6868
          %v6960 = vunpack.c.h.b16 %v6868
          %v6961 = vunpack.c.l.b16 %v6869
          %v6962 = vunpack.c.h.b16 %v6869
          %v6963 = vunpack.c.l.b16 %v6870
          %v6964 = vunpack.c.h.b16 %v6870
          %v6965 = vunpack.c.l.b16 %v6871
          %v6966 = vunpack.c.h.b16 %v6871
          %v6967 = vunpack.c.l.b16 %v6872
          %v6968 = vunpack.c.h.b16 %v6872
          %v6969 = vpack.c.b16 %v6909, %v6905
          %v6970 = vpack.c.b16 %v6910, %v6906
          %v6971 = vpack.c.b16 %v6911, %v6907
          %v6972 = vpack.c.b16 %v6912, %v6908
          %v6973 = vpack.c.b16 %v6917, %v6913
          %v6974 = vpack.c.b16 %v6918, %v6914
          %v6975 = vpack.c.b16 %v6919, %v6915
          %v6976 = vpack.c.b16 %v6920, %v6916
          %v6977 = vpack.c.b16 %v6925, %v6921
          %v6978 = vpack.c.b16 %v6926, %v6922
          %v6979 = vpack.c.b16 %v6927, %v6923
          %v6980 = vpack.c.b16 %v6928, %v6924
          %v6981 = vpack.c.b16 %v6933, %v6929
          %v6982 = vpack.c.b16 %v6934, %v6930
          %v6983 = vpack.c.b16 %v6935, %v6931
          %v6984 = vpack.c.b16 %v6936, %v6932
          %v6985 = vpack.c.b16 %v6941, %v6937
          %v6986 = vpack.c.b16 %v6942, %v6938
          %v6987 = vpack.c.b16 %v6943, %v6939
          %v6988 = vpack.c.b16 %v6944, %v6940
          %v6989 = vpack.c.b16 %v6949, %v6945
          %v6990 = vpack.c.b16 %v6950, %v6946
          %v6991 = vpack.c.b16 %v6951, %v6947
          %v6992 = vpack.c.b16 %v6952, %v6948
          %v6993 = vpack.c.b16 %v6957, %v6953
          %v6994 = vpack.c.b16 %v6958, %v6954
          %v6995 = vpack.c.b16 %v6959, %v6955
          %v6996 = vpack.c.b16 %v6960, %v6956
          %v6997 = vpack.c.b16 %v6965, %v6961
          %v6998 = vpack.c.b16 %v6966, %v6962
          %v6999 = vpack.c.b16 %v6967, %v6963
          %v7000 = vpack.c.b16 %v6968, %v6964
          %7033 = vmatprep.subr.bf16.mxu0 %v6998
          %7034 = vmatpush1.bf16.msra.mxu0 %v6997
          %7035 = vmatprep.subr.bf16.mxu0 %v6994
          %7036 = vmatpush1.bf16.msra.mxu0 %v6993
          %7037 = vmatprep.subr.bf16.mxu0 %v6990
          %7038 = vmatpush1.bf16.msra.mxu0 %v6989
          %7039 = vmatprep.subr.bf16.mxu0 %v6986
          %7040 = vmatpush1.bf16.msra.mxu0 %v6985
          %7041 = vmatprep.subr.bf16.mxu0 %v6982
          %7042 = vmatpush1.bf16.msra.mxu0 %v6981
          %7043 = vmatprep.subr.bf16.mxu0 %v6978
          %7044 = vmatpush1.bf16.msra.mxu0 %v6977
          %7045 = vmatprep.subr.bf16.mxu0 %v6974
          %7046 = vmatpush1.bf16.msra.mxu0 %v6973
          %7047 = vmatprep.subr.bf16.mxu0 %v6970
          %7048 = vmatpush1.bf16.msra.mxu0 %v6969
          %7049 = vmatprep.subr.bf16.mxu0 0
          %7050 = vmatpush2.bf16.msra.mxu0 0
          %7051 = vmatprep.subr.bf16.mxu0 0
          %7052 = vmatpush2.bf16.msra.mxu0 0
          %7053 = vmatprep.subr.bf16.mxu0 0
          %7054 = vmatpush2.bf16.msra.mxu0 0
          %7055 = vmatprep.subr.bf16.mxu0 0
          %7056 = vmatpush2.bf16.msra.mxu0 0
          %7057 = vmatprep.subr.bf16.mxu0 0
          %7058 = vmatpush2.bf16.msra.mxu0 0
          %7059 = vmatprep.subr.bf16.mxu0 0
          %7060 = vmatpush2.bf16.msra.mxu0 0
          %7061 = vmatprep.subr.bf16.mxu0 0
          %7062 = vmatpush2.bf16.msra.mxu0 0
          %7063 = vmatprep.subr.bf16.mxu0 0
          %7064 = vmatpush2.bf16.msra.mxu0 0
          %7065 = vmatprep.mubr.bf16.mxu0 0
          %7066 = vmatmul.mubr.bf16.gmra.mxu0 %v6839
          %v7067 = vpop.f32.mrf.mxu0
          %v7068 = vadd.f32 0.0, %v7067
          %v7069 = vpop.f32.mrf.mxu0
          %v7070 = vadd.f32 0.0, %v7069
          %v7071 = vpop.f32.mrf.mxu0
          %v7072 = vpop.f32.mrf.mxu0
          %7073 = vdwg.mxu0
          %7074 = vmatprep.subr.bf16.mxu0 %v7000
          %7075 = vmatpush1.bf16.msra.mxu0 %v6999
          %7076 = vmatprep.subr.bf16.mxu0 %v6996
          %7077 = vmatpush1.bf16.msra.mxu0 %v6995
          %7078 = vmatprep.subr.bf16.mxu0 %v6992
          %7079 = vmatpush1.bf16.msra.mxu0 %v6991
          %7080 = vmatprep.subr.bf16.mxu0 %v6988
          %7081 = vmatpush1.bf16.msra.mxu0 %v6987
          %7082 = vmatprep.subr.bf16.mxu0 %v6984
          %7083 = vmatpush1.bf16.msra.mxu0 %v6983
          %7084 = vmatprep.subr.bf16.mxu0 %v6980
          %7085 = vmatpush1.bf16.msra.mxu0 %v6979
          %7086 = vmatprep.subr.bf16.mxu0 %v6976
          %7087 = vmatpush1.bf16.msra.mxu0 %v6975
          %7088 = vmatprep.subr.bf16.mxu0 %v6972
          %7089 = vmatpush1.bf16.msra.mxu0 %v6971
          %7090 = vmatprep.subr.bf16.mxu0 0
          %7091 = vmatpush2.bf16.msra.mxu0 0
          %7092 = vmatprep.subr.bf16.mxu0 0
          %7093 = vmatpush2.bf16.msra.mxu0 0
          %7094 = vmatprep.subr.bf16.mxu0 0
          %7095 = vmatpush2.bf16.msra.mxu0 0
          %7096 = vmatprep.subr.bf16.mxu0 0
          %7097 = vmatpush2.bf16.msra.mxu0 0
          %7098 = vmatprep.subr.bf16.mxu0 0
          %7099 = vmatpush2.bf16.msra.mxu0 0
          %7100 = vmatprep.subr.bf16.mxu0 0
          %7101 = vmatpush2.bf16.msra.mxu0 0
          %7102 = vmatprep.subr.bf16.mxu0 0
          %7103 = vmatpush2.bf16.msra.mxu0 0
          %7104 = vmatprep.subr.bf16.mxu0 0
          %7105 = vmatpush2.bf16.msra.mxu0 0
          %7106 = vmatprep.mubr.bf16.mxu0 0
          %7107 = vmatmul.mubr.bf16.gmra.mxu0 %v6839
          %v7108 = vpop.f32.mrf.mxu0
          %v7109 = vadd.f32 0.0, %v7108
          %v7110 = vpop.f32.mrf.mxu0
          %v7111 = vadd.f32 0.0, %v7110
          %v7112 = vpop.f32.mrf.mxu0
          %v7113 = vpop.f32.mrf.mxu0
          %7114 = vdwg.mxu0
          %v7147 = vunpack.c.l.b16 %v6798
          %v7148 = vunpack.c.h.b16 %v6798
          %v7149 = vunpack.c.l.b16 %v6799
          %v7150 = vunpack.c.h.b16 %v6799
          %v7151 = vunpack.c.l.b16 %v6800
          %v7152 = vunpack.c.h.b16 %v6800
          %v7153 = vunpack.c.l.b16 %v6801
          %v7154 = vunpack.c.h.b16 %v6801
          %v7155 = vunpack.c.l.b16 %v6802
          %v7156 = vunpack.c.h.b16 %v6802
          %v7157 = vunpack.c.l.b16 %v6803
          %v7158 = vunpack.c.h.b16 %v6803
          %v7159 = vunpack.c.l.b16 %v6804
          %v7160 = vunpack.c.h.b16 %v6804
          %v7161 = vunpack.c.l.b16 %v6805
          %v7162 = vunpack.c.h.b16 %v6805
          %v7163 = vunpack.c.l.b16 %v6806
          %v7164 = vunpack.c.h.b16 %v6806
          %v7165 = vunpack.c.l.b16 %v6807
          %v7166 = vunpack.c.h.b16 %v6807
          %v7167 = vunpack.c.l.b16 %v6808
          %v7168 = vunpack.c.h.b16 %v6808
          %v7169 = vunpack.c.l.b16 %v6809
          %v7170 = vunpack.c.h.b16 %v6809
          %v7171 = vunpack.c.l.b16 %v6810
          %v7172 = vunpack.c.h.b16 %v6810
          %v7173 = vunpack.c.l.b16 %v6811
          %v7174 = vunpack.c.h.b16 %v6811
          %v7175 = vunpack.c.l.b16 %v6812
          %v7176 = vunpack.c.h.b16 %v6812
          %v7177 = vunpack.c.l.b16 %v6813
          %v7178 = vunpack.c.h.b16 %v6813
          %v7179 = vunpack.c.l.b16 %v6814
          %v7180 = vunpack.c.h.b16 %v6814
          %v7181 = vunpack.c.l.b16 %v6815
          %v7182 = vunpack.c.h.b16 %v6815
          %v7183 = vunpack.c.l.b16 %v6816
          %v7184 = vunpack.c.h.b16 %v6816
          %v7185 = vunpack.c.l.b16 %v6817
          %v7186 = vunpack.c.h.b16 %v6817
          %v7187 = vunpack.c.l.b16 %v6818
          %v7188 = vunpack.c.h.b16 %v6818
          %v7189 = vunpack.c.l.b16 %v6819
          %v7190 = vunpack.c.h.b16 %v6819
          %v7191 = vunpack.c.l.b16 %v6820
          %v7192 = vunpack.c.h.b16 %v6820
          %v7193 = vunpack.c.l.b16 %v6821
          %v7194 = vunpack.c.h.b16 %v6821
          %v7195 = vunpack.c.l.b16 %v6822
          %v7196 = vunpack.c.h.b16 %v6822
          %v7197 = vunpack.c.l.b16 %v6823
          %v7198 = vunpack.c.h.b16 %v6823
          %v7199 = vunpack.c.l.b16 %v6824
          %v7200 = vunpack.c.h.b16 %v6824
          %v7201 = vunpack.c.l.b16 %v6825
          %v7202 = vunpack.c.h.b16 %v6825
          %v7203 = vunpack.c.l.b16 %v6826
          %v7204 = vunpack.c.h.b16 %v6826
          %v7205 = vunpack.c.l.b16 %v6827
          %v7206 = vunpack.c.h.b16 %v6827
          %v7207 = vunpack.c.l.b16 %v6828
          %v7208 = vunpack.c.h.b16 %v6828
          %v7209 = vunpack.c.l.b16 %v6829
          %v7210 = vunpack.c.h.b16 %v6829
          %v7211 = vpack.c.b16 %v7151, %v7147
          %v7212 = vpack.c.b16 %v7152, %v7148
          %v7213 = vpack.c.b16 %v7153, %v7149
          %v7214 = vpack.c.b16 %v7154, %v7150
          %v7215 = vpack.c.b16 %v7159, %v7155
          %v7216 = vpack.c.b16 %v7160, %v7156
          %v7217 = vpack.c.b16 %v7161, %v7157
          %v7218 = vpack.c.b16 %v7162, %v7158
          %v7219 = vpack.c.b16 %v7167, %v7163
          %v7220 = vpack.c.b16 %v7168, %v7164
          %v7221 = vpack.c.b16 %v7169, %v7165
          %v7222 = vpack.c.b16 %v7170, %v7166
          %v7223 = vpack.c.b16 %v7175, %v7171
          %v7224 = vpack.c.b16 %v7176, %v7172
          %v7225 = vpack.c.b16 %v7177, %v7173
          %v7226 = vpack.c.b16 %v7178, %v7174
          %v7227 = vpack.c.b16 %v7183, %v7179
          %v7228 = vpack.c.b16 %v7184, %v7180
          %v7229 = vpack.c.b16 %v7185, %v7181
          %v7230 = vpack.c.b16 %v7186, %v7182
          %v7231 = vpack.c.b16 %v7191, %v7187
          %v7232 = vpack.c.b16 %v7192, %v7188
          %v7233 = vpack.c.b16 %v7193, %v7189
          %v7234 = vpack.c.b16 %v7194, %v7190
          %v7235 = vpack.c.b16 %v7199, %v7195
          %v7236 = vpack.c.b16 %v7200, %v7196
          %v7237 = vpack.c.b16 %v7201, %v7197
          %v7238 = vpack.c.b16 %v7202, %v7198
          %v7239 = vpack.c.b16 %v7207, %v7203
          %v7240 = vpack.c.b16 %v7208, %v7204
          %v7241 = vpack.c.b16 %v7209, %v7205
          %v7242 = vpack.c.b16 %v7210, %v7206
          %7275 = vmatprep.subr.bf16.mxu0 %v7240
          %7276 = vmatpush1.bf16.msra.mxu0 %v7239
          %7277 = vmatprep.subr.bf16.mxu0 %v7236
          %7278 = vmatpush1.bf16.msra.mxu0 %v7235
          %7279 = vmatprep.subr.bf16.mxu0 %v7232
          %7280 = vmatpush1.bf16.msra.mxu0 %v7231
          %7281 = vmatprep.subr.bf16.mxu0 %v7228
          %7282 = vmatpush1.bf16.msra.mxu0 %v7227
          %7283 = vmatprep.subr.bf16.mxu0 %v7224
          %7284 = vmatpush1.bf16.msra.mxu0 %v7223
          %7285 = vmatprep.subr.bf16.mxu0 %v7220
          %7286 = vmatpush1.bf16.msra.mxu0 %v7219
          %7287 = vmatprep.subr.bf16.mxu0 %v7216
          %7288 = vmatpush1.bf16.msra.mxu0 %v7215
          %7289 = vmatprep.subr.bf16.mxu0 %v7212
          %7290 = vmatpush1.bf16.msra.mxu0 %v7211
          %7291 = vmatprep.subr.bf16.mxu0 0
          %7292 = vmatpush2.bf16.msra.mxu0 0
          %7293 = vmatprep.subr.bf16.mxu0 0
          %7294 = vmatpush2.bf16.msra.mxu0 0
          %7295 = vmatprep.subr.bf16.mxu0 0
          %7296 = vmatpush2.bf16.msra.mxu0 0
          %7297 = vmatprep.subr.bf16.mxu0 0
          %7298 = vmatpush2.bf16.msra.mxu0 0
          %7299 = vmatprep.subr.bf16.mxu0 0
          %7300 = vmatpush2.bf16.msra.mxu0 0
          %7301 = vmatprep.subr.bf16.mxu0 0
          %7302 = vmatpush2.bf16.msra.mxu0 0
          %7303 = vmatprep.subr.bf16.mxu0 0
          %7304 = vmatpush2.bf16.msra.mxu0 0
          %7305 = vmatprep.subr.bf16.mxu0 0
          %7306 = vmatpush2.bf16.msra.mxu0 0
          %7307 = vmatprep.mubr.bf16.mxu0 0
          %7308 = vmatmul.mubr.bf16.gmra.mxu0 %v6797
          %v7309 = vpop.f32.mrf.mxu0
          %v7310 = vadd.f32 %v7068, %v7309
          %v7311 = vpop.f32.mrf.mxu0
          %v7312 = vadd.f32 %v7070, %v7311
          %v7313 = vpop.f32.mrf.mxu0
          %v7314 = vpop.f32.mrf.mxu0
          %7315 = vdwg.mxu0
          %7316 = vmatprep.subr.bf16.mxu0 %v7242
          %7317 = vmatpush1.bf16.msra.mxu0 %v7241
          %7318 = vmatprep.subr.bf16.mxu0 %v7238
          %7319 = vmatpush1.bf16.msra.mxu0 %v7237
          %7320 = vmatprep.subr.bf16.mxu0 %v7234
          %7321 = vmatpush1.bf16.msra.mxu0 %v7233
          %7322 = vmatprep.subr.bf16.mxu0 %v7230
          %7323 = vmatpush1.bf16.msra.mxu0 %v7229
          %7324 = vmatprep.subr.bf16.mxu0 %v7226
          %7325 = vmatpush1.bf16.msra.mxu0 %v7225
          %7326 = vmatprep.subr.bf16.mxu0 %v7222
          %7327 = vmatpush1.bf16.msra.mxu0 %v7221
          %7328 = vmatprep.subr.bf16.mxu0 %v7218
          %7329 = vmatpush1.bf16.msra.mxu0 %v7217
          %7330 = vmatprep.subr.bf16.mxu0 %v7214
          %7331 = vmatpush1.bf16.msra.mxu0 %v7213
          %7332 = vmatprep.subr.bf16.mxu0 0
          %7333 = vmatpush2.bf16.msra.mxu0 0
          %7334 = vmatprep.subr.bf16.mxu0 0
          %7335 = vmatpush2.bf16.msra.mxu0 0
          %7336 = vmatprep.subr.bf16.mxu0 0
          %7337 = vmatpush2.bf16.msra.mxu0 0
          %7338 = vmatprep.subr.bf16.mxu0 0
          %7339 = vmatpush2.bf16.msra.mxu0 0
          %7340 = vmatprep.subr.bf16.mxu0 0
          %7341 = vmatpush2.bf16.msra.mxu0 0
          %7342 = vmatprep.subr.bf16.mxu0 0
          %7343 = vmatpush2.bf16.msra.mxu0 0
          %7344 = vmatprep.subr.bf16.mxu0 0
          %7345 = vmatpush2.bf16.msra.mxu0 0
          %7346 = vmatprep.subr.bf16.mxu0 0
          %7347 = vmatpush2.bf16.msra.mxu0 0
          %7348 = vmatprep.mubr.bf16.mxu0 0
          %7349 = vmatmul.mubr.bf16.gmra.mxu0 %v6797
          %v7350 = vpop.f32.mrf.mxu0
          %v7351 = vadd.f32 %v7109, %v7350
          %v7352 = vpop.f32.mrf.mxu0
          %v7353 = vadd.f32 %v7111, %v7352
          %v7354 = vpop.f32.mrf.mxu0
          %v7355 = vpop.f32.mrf.mxu0
          %7356 = vdwg.mxu0
          %s7357 = scalar_lea.vmem [#allocation3], 16
          %v7358 = vld [vmem:[%s7357] sm:$0xff]
          %7359 = vset.pattern.permute.xlu0 2
          %7360 = vperm.xlu0 %7359, %v6788
          %v7361 = vpop.permute.xlu0 %7360
          %v7363 = vmul.f32 %v7358, %v7361
          %s7364 = scalar_lea.vmem %s18, 16
          %7365 = vst [vmem:[%s7364] sm:$0xff] %v7363
          %v7366 = vpack.c.bf16 %v7363, %v7363
          %s7367 = scalar_lea.vmem [#allocation22], 512
          %v7368 = vld [vmem:[%s7367] sm:$0xff]
          %v7369 = vld [vmem:[%s7367 + $0x8] sm:$0xff]
          %v7370 = vld [vmem:[%s7367 + $0x10] sm:$0xff]
          %v7371 = vld [vmem:[%s7367 + $0x18] sm:$0xff]
          %v7372 = vld [vmem:[%s7367 + $0x20] sm:$0xff]
          %v7373 = vld [vmem:[%s7367 + $0x28] sm:$0xff]
          %v7374 = vld [vmem:[%s7367 + $0x30] sm:$0xff]
          %v7375 = vld [vmem:[%s7367 + $0x38] sm:$0xff]
          %v7376 = vld [vmem:[%s7367 + $0x40] sm:$0xff]
          %v7377 = vld [vmem:[%s7367 + $0x48] sm:$0xff]
          %v7378 = vld [vmem:[%s7367 + $0x50] sm:$0xff]
          %v7379 = vld [vmem:[%s7367 + $0x58] sm:$0xff]
          %v7380 = vld [vmem:[%s7367 + $0x60] sm:$0xff]
          %v7381 = vld [vmem:[%s7367 + $0x68] sm:$0xff]
          %v7382 = vld [vmem:[%s7367 + $0x70] sm:$0xff]
          %v7383 = vld [vmem:[%s7367 + $0x78] sm:$0xff]
          %v7384 = vld [vmem:[%s7367 + $0x80] sm:$0xff]
          %v7385 = vld [vmem:[%s7367 + $0x88] sm:$0xff]
          %v7386 = vld [vmem:[%s7367 + $0x90] sm:$0xff]
          %v7387 = vld [vmem:[%s7367 + $0x98] sm:$0xff]
          %v7388 = vld [vmem:[%s7367 + $0xa0] sm:$0xff]
          %v7389 = vld [vmem:[%s7367 + $0xa8] sm:$0xff]
          %v7390 = vld [vmem:[%s7367 + $0xb0] sm:$0xff]
          %v7391 = vld [vmem:[%s7367 + $0xb8] sm:$0xff]
          %v7392 = vld [vmem:[%s7367 + $0xc0] sm:$0xff]
          %v7393 = vld [vmem:[%s7367 + $0xc8] sm:$0xff]
          %v7394 = vld [vmem:[%s7367 + $0xd0] sm:$0xff]
          %v7395 = vld [vmem:[%s7367 + $0xd8] sm:$0xff]
          %v7396 = vld [vmem:[%s7367 + $0xe0] sm:$0xff]
          %v7397 = vld [vmem:[%s7367 + $0xe8] sm:$0xff]
          %v7398 = vld [vmem:[%s7367 + $0xf0] sm:$0xff]
          %v7399 = vld [vmem:[%s7367 + $0xf8] sm:$0xff]
          %v7432 = vunpack.c.l.b16 %v7368
          %v7433 = vunpack.c.h.b16 %v7368
          %v7434 = vunpack.c.l.b16 %v7369
          %v7435 = vunpack.c.h.b16 %v7369
          %v7436 = vunpack.c.l.b16 %v7370
          %v7437 = vunpack.c.h.b16 %v7370
          %v7438 = vunpack.c.l.b16 %v7371
          %v7439 = vunpack.c.h.b16 %v7371
          %v7440 = vunpack.c.l.b16 %v7372
          %v7441 = vunpack.c.h.b16 %v7372
          %v7442 = vunpack.c.l.b16 %v7373
          %v7443 = vunpack.c.h.b16 %v7373
          %v7444 = vunpack.c.l.b16 %v7374
          %v7445 = vunpack.c.h.b16 %v7374
          %v7446 = vunpack.c.l.b16 %v7375
          %v7447 = vunpack.c.h.b16 %v7375
          %v7448 = vunpack.c.l.b16 %v7376
          %v7449 = vunpack.c.h.b16 %v7376
          %v7450 = vunpack.c.l.b16 %v7377
          %v7451 = vunpack.c.h.b16 %v7377
          %v7452 = vunpack.c.l.b16 %v7378
          %v7453 = vunpack.c.h.b16 %v7378
          %v7454 = vunpack.c.l.b16 %v7379
          %v7455 = vunpack.c.h.b16 %v7379
          %v7456 = vunpack.c.l.b16 %v7380
          %v7457 = vunpack.c.h.b16 %v7380
          %v7458 = vunpack.c.l.b16 %v7381
          %v7459 = vunpack.c.h.b16 %v7381
          %v7460 = vunpack.c.l.b16 %v7382
          %v7461 = vunpack.c.h.b16 %v7382
          %v7462 = vunpack.c.l.b16 %v7383
          %v7463 = vunpack.c.h.b16 %v7383
          %v7464 = vunpack.c.l.b16 %v7384
          %v7465 = vunpack.c.h.b16 %v7384
          %v7466 = vunpack.c.l.b16 %v7385
          %v7467 = vunpack.c.h.b16 %v7385
          %v7468 = vunpack.c.l.b16 %v7386
          %v7469 = vunpack.c.h.b16 %v7386
          %v7470 = vunpack.c.l.b16 %v7387
          %v7471 = vunpack.c.h.b16 %v7387
          %v7472 = vunpack.c.l.b16 %v7388
          %v7473 = vunpack.c.h.b16 %v7388
          %v7474 = vunpack.c.l.b16 %v7389
          %v7475 = vunpack.c.h.b16 %v7389
          %v7476 = vunpack.c.l.b16 %v7390
          %v7477 = vunpack.c.h.b16 %v7390
          %v7478 = vunpack.c.l.b16 %v7391
          %v7479 = vunpack.c.h.b16 %v7391
          %v7480 = vunpack.c.l.b16 %v7392
          %v7481 = vunpack.c.h.b16 %v7392
          %v7482 = vunpack.c.l.b16 %v7393
          %v7483 = vunpack.c.h.b16 %v7393
          %v7484 = vunpack.c.l.b16 %v7394
          %v7485 = vunpack.c.h.b16 %v7394
          %v7486 = vunpack.c.l.b16 %v7395
          %v7487 = vunpack.c.h.b16 %v7395
          %v7488 = vunpack.c.l.b16 %v7396
          %v7489 = vunpack.c.h.b16 %v7396
          %v7490 = vunpack.c.l.b16 %v7397
          %v7491 = vunpack.c.h.b16 %v7397
          %v7492 = vunpack.c.l.b16 %v7398
          %v7493 = vunpack.c.h.b16 %v7398
          %v7494 = vunpack.c.l.b16 %v7399
          %v7495 = vunpack.c.h.b16 %v7399
          %v7496 = vpack.c.b16 %v7436, %v7432
          %v7497 = vpack.c.b16 %v7437, %v7433
          %v7498 = vpack.c.b16 %v7438, %v7434
          %v7499 = vpack.c.b16 %v7439, %v7435
          %v7500 = vpack.c.b16 %v7444, %v7440
          %v7501 = vpack.c.b16 %v7445, %v7441
          %v7502 = vpack.c.b16 %v7446, %v7442
          %v7503 = vpack.c.b16 %v7447, %v7443
          %v7504 = vpack.c.b16 %v7452, %v7448
          %v7505 = vpack.c.b16 %v7453, %v7449
          %v7506 = vpack.c.b16 %v7454, %v7450
          %v7507 = vpack.c.b16 %v7455, %v7451
          %v7508 = vpack.c.b16 %v7460, %v7456
          %v7509 = vpack.c.b16 %v7461, %v7457
          %v7510 = vpack.c.b16 %v7462, %v7458
          %v7511 = vpack.c.b16 %v7463, %v7459
          %v7512 = vpack.c.b16 %v7468, %v7464
          %v7513 = vpack.c.b16 %v7469, %v7465
          %v7514 = vpack.c.b16 %v7470, %v7466
          %v7515 = vpack.c.b16 %v7471, %v7467
          %v7516 = vpack.c.b16 %v7476, %v7472
          %v7517 = vpack.c.b16 %v7477, %v7473
          %v7518 = vpack.c.b16 %v7478, %v7474
          %v7519 = vpack.c.b16 %v7479, %v7475
          %v7520 = vpack.c.b16 %v7484, %v7480
          %v7521 = vpack.c.b16 %v7485, %v7481
          %v7522 = vpack.c.b16 %v7486, %v7482
          %v7523 = vpack.c.b16 %v7487, %v7483
          %v7524 = vpack.c.b16 %v7492, %v7488
          %v7525 = vpack.c.b16 %v7493, %v7489
          %v7526 = vpack.c.b16 %v7494, %v7490
          %v7527 = vpack.c.b16 %v7495, %v7491
          %7560 = vmatprep.subr.bf16.mxu0 %v7525
          %7561 = vmatpush1.bf16.msra.mxu0 %v7524
          %7562 = vmatprep.subr.bf16.mxu0 %v7521
          %7563 = vmatpush1.bf16.msra.mxu0 %v7520
          %7564 = vmatprep.subr.bf16.mxu0 %v7517
          %7565 = vmatpush1.bf16.msra.mxu0 %v7516
          %7566 = vmatprep.subr.bf16.mxu0 %v7513
          %7567 = vmatpush1.bf16.msra.mxu0 %v7512
          %7568 = vmatprep.subr.bf16.mxu0 %v7509
          %7569 = vmatpush1.bf16.msra.mxu0 %v7508
          %7570 = vmatprep.subr.bf16.mxu0 %v7505
          %7571 = vmatpush1.bf16.msra.mxu0 %v7504
          %7572 = vmatprep.subr.bf16.mxu0 %v7501
          %7573 = vmatpush1.bf16.msra.mxu0 %v7500
          %7574 = vmatprep.subr.bf16.mxu0 %v7497
          %7575 = vmatpush1.bf16.msra.mxu0 %v7496
          %7576 = vmatprep.subr.bf16.mxu0 0
          %7577 = vmatpush2.bf16.msra.mxu0 0
          %7578 = vmatprep.subr.bf16.mxu0 0
          %7579 = vmatpush2.bf16.msra.mxu0 0
          %7580 = vmatprep.subr.bf16.mxu0 0
          %7581 = vmatpush2.bf16.msra.mxu0 0
          %7582 = vmatprep.subr.bf16.mxu0 0
          %7583 = vmatpush2.bf16.msra.mxu0 0
          %7584 = vmatprep.subr.bf16.mxu0 0
          %7585 = vmatpush2.bf16.msra.mxu0 0
          %7586 = vmatprep.subr.bf16.mxu0 0
          %7587 = vmatpush2.bf16.msra.mxu0 0
          %7588 = vmatprep.subr.bf16.mxu0 0
          %7589 = vmatpush2.bf16.msra.mxu0 0
          %7590 = vmatprep.subr.bf16.mxu0 0
          %7591 = vmatpush2.bf16.msra.mxu0 0
          %7592 = vmatprep.mubr.bf16.mxu0 0
          %7593 = vmatmul.mubr.bf16.gmra.mxu0 %v7366
          %v7594 = vpop.f32.mrf.mxu0
          %v7595 = vadd.f32 0.0, %v7594
          %v7596 = vpop.f32.mrf.mxu0
          %v7597 = vadd.f32 0.0, %v7596
          %v7598 = vpop.f32.mrf.mxu0
          %v7599 = vpop.f32.mrf.mxu0
          %7600 = vdwg.mxu0
          %7601 = vmatprep.subr.bf16.mxu0 %v7527
          %7602 = vmatpush1.bf16.msra.mxu0 %v7526
          %7603 = vmatprep.subr.bf16.mxu0 %v7523
          %7604 = vmatpush1.bf16.msra.mxu0 %v7522
          %7605 = vmatprep.subr.bf16.mxu0 %v7519
          %7606 = vmatpush1.bf16.msra.mxu0 %v7518
          %7607 = vmatprep.subr.bf16.mxu0 %v7515
          %7608 = vmatpush1.bf16.msra.mxu0 %v7514
          %7609 = vmatprep.subr.bf16.mxu0 %v7511
          %7610 = vmatpush1.bf16.msra.mxu0 %v7510
          %7611 = vmatprep.subr.bf16.mxu0 %v7507
          %7612 = vmatpush1.bf16.msra.mxu0 %v7506
          %7613 = vmatprep.subr.bf16.mxu0 %v7503
          %7614 = vmatpush1.bf16.msra.mxu0 %v7502
          %7615 = vmatprep.subr.bf16.mxu0 %v7499
          %7616 = vmatpush1.bf16.msra.mxu0 %v7498
          %7617 = vmatprep.subr.bf16.mxu0 0
          %7618 = vmatpush2.bf16.msra.mxu0 0
          %7619 = vmatprep.subr.bf16.mxu0 0
          %7620 = vmatpush2.bf16.msra.mxu0 0
          %7621 = vmatprep.subr.bf16.mxu0 0
          %7622 = vmatpush2.bf16.msra.mxu0 0
          %7623 = vmatprep.subr.bf16.mxu0 0
          %7624 = vmatpush2.bf16.msra.mxu0 0
          %7625 = vmatprep.subr.bf16.mxu0 0
          %7626 = vmatpush2.bf16.msra.mxu0 0
          %7627 = vmatprep.subr.bf16.mxu0 0
          %7628 = vmatpush2.bf16.msra.mxu0 0
          %7629 = vmatprep.subr.bf16.mxu0 0
          %7630 = vmatpush2.bf16.msra.mxu0 0
          %7631 = vmatprep.subr.bf16.mxu0 0
          %7632 = vmatpush2.bf16.msra.mxu0 0
          %7633 = vmatprep.mubr.bf16.mxu0 0
          %7634 = vmatmul.mubr.bf16.gmra.mxu0 %v7366
          %v7635 = vpop.f32.mrf.mxu0
          %v7636 = vadd.f32 0.0, %v7635
          %v7637 = vpop.f32.mrf.mxu0
          %v7638 = vadd.f32 0.0, %v7637
          %v7639 = vpop.f32.mrf.mxu0
          %v7640 = vpop.f32.mrf.mxu0
          %7641 = vdwg.mxu0
          %v7642 = vadd.f32 %v7310, %v7595
          %v7643 = vadd.f32 %v7312, %v7597
          %v7644 = vadd.f32 %v7351, %v7636
          %v7645 = vadd.f32 %v7353, %v7638
          %s7646 = scalar_lea.vmem [#allocation3], 24
          %v7647 = vld [vmem:[%s7646] sm:$0xff]
          %7648 = vset.pattern.permute.xlu0 3
          %7649 = vperm.xlu0 %7648, %v6788
          %v7650 = vpop.permute.xlu0 %7649
          %v7652 = vmul.f32 %v7647, %v7650
          %s7653 = scalar_lea.vmem %s18, 24
          %7654 = vst [vmem:[%s7653] sm:$0xff] %v7652
          %v7655 = vpack.c.bf16 %v7652, %v7652
          %s7656 = scalar_lea.vmem [#allocation22], 768
          %v7657 = vld [vmem:[%s7656] sm:$0xff]
          %v7658 = vld [vmem:[%s7656 + $0x8] sm:$0xff]
          %v7659 = vld [vmem:[%s7656 + $0x10] sm:$0xff]
          %v7660 = vld [vmem:[%s7656 + $0x18] sm:$0xff]
          %v7661 = vld [vmem:[%s7656 + $0x20] sm:$0xff]
          %v7662 = vld [vmem:[%s7656 + $0x28] sm:$0xff]
          %v7663 = vld [vmem:[%s7656 + $0x30] sm:$0xff]
          %v7664 = vld [vmem:[%s7656 + $0x38] sm:$0xff]
          %v7665 = vld [vmem:[%s7656 + $0x40] sm:$0xff]
          %v7666 = vld [vmem:[%s7656 + $0x48] sm:$0xff]
          %v7667 = vld [vmem:[%s7656 + $0x50] sm:$0xff]
          %v7668 = vld [vmem:[%s7656 + $0x58] sm:$0xff]
          %v7669 = vld [vmem:[%s7656 + $0x60] sm:$0xff]
          %v7670 = vld [vmem:[%s7656 + $0x68] sm:$0xff]
          %v7671 = vld [vmem:[%s7656 + $0x70] sm:$0xff]
          %v7672 = vld [vmem:[%s7656 + $0x78] sm:$0xff]
          %v7673 = vld [vmem:[%s7656 + $0x80] sm:$0xff]
          %v7674 = vld [vmem:[%s7656 + $0x88] sm:$0xff]
          %v7675 = vld [vmem:[%s7656 + $0x90] sm:$0xff]
          %v7676 = vld [vmem:[%s7656 + $0x98] sm:$0xff]
          %v7677 = vld [vmem:[%s7656 + $0xa0] sm:$0xff]
          %v7678 = vld [vmem:[%s7656 + $0xa8] sm:$0xff]
          %v7679 = vld [vmem:[%s7656 + $0xb0] sm:$0xff]
          %v7680 = vld [vmem:[%s7656 + $0xb8] sm:$0xff]
          %v7681 = vld [vmem:[%s7656 + $0xc0] sm:$0xff]
          %v7682 = vld [vmem:[%s7656 + $0xc8] sm:$0xff]
          %v7683 = vld [vmem:[%s7656 + $0xd0] sm:$0xff]
          %v7684 = vld [vmem:[%s7656 + $0xd8] sm:$0xff]
          %v7685 = vld [vmem:[%s7656 + $0xe0] sm:$0xff]
          %v7686 = vld [vmem:[%s7656 + $0xe8] sm:$0xff]
          %v7687 = vld [vmem:[%s7656 + $0xf0] sm:$0xff]
          %v7688 = vld [vmem:[%s7656 + $0xf8] sm:$0xff]
          %v7721 = vunpack.c.l.b16 %v7657
          %v7722 = vunpack.c.h.b16 %v7657
          %v7723 = vunpack.c.l.b16 %v7658
          %v7724 = vunpack.c.h.b16 %v7658
          %v7725 = vunpack.c.l.b16 %v7659
          %v7726 = vunpack.c.h.b16 %v7659
          %v7727 = vunpack.c.l.b16 %v7660
          %v7728 = vunpack.c.h.b16 %v7660
          %v7729 = vunpack.c.l.b16 %v7661
          %v7730 = vunpack.c.h.b16 %v7661
          %v7731 = vunpack.c.l.b16 %v7662
          %v7732 = vunpack.c.h.b16 %v7662
          %v7733 = vunpack.c.l.b16 %v7663
          %v7734 = vunpack.c.h.b16 %v7663
          %v7735 = vunpack.c.l.b16 %v7664
          %v7736 = vunpack.c.h.b16 %v7664
          %v7737 = vunpack.c.l.b16 %v7665
          %v7738 = vunpack.c.h.b16 %v7665
          %v7739 = vunpack.c.l.b16 %v7666
          %v7740 = vunpack.c.h.b16 %v7666
          %v7741 = vunpack.c.l.b16 %v7667
          %v7742 = vunpack.c.h.b16 %v7667
          %v7743 = vunpack.c.l.b16 %v7668
          %v7744 = vunpack.c.h.b16 %v7668
          %v7745 = vunpack.c.l.b16 %v7669
          %v7746 = vunpack.c.h.b16 %v7669
          %v7747 = vunpack.c.l.b16 %v7670
          %v7748 = vunpack.c.h.b16 %v7670
          %v7749 = vunpack.c.l.b16 %v7671
          %v7750 = vunpack.c.h.b16 %v7671
          %v7751 = vunpack.c.l.b16 %v7672
          %v7752 = vunpack.c.h.b16 %v7672
          %v7753 = vunpack.c.l.b16 %v7673
          %v7754 = vunpack.c.h.b16 %v7673
          %v7755 = vunpack.c.l.b16 %v7674
          %v7756 = vunpack.c.h.b16 %v7674
          %v7757 = vunpack.c.l.b16 %v7675
          %v7758 = vunpack.c.h.b16 %v7675
          %v7759 = vunpack.c.l.b16 %v7676
          %v7760 = vunpack.c.h.b16 %v7676
          %v7761 = vunpack.c.l.b16 %v7677
          %v7762 = vunpack.c.h.b16 %v7677
          %v7763 = vunpack.c.l.b16 %v7678
          %v7764 = vunpack.c.h.b16 %v7678
          %v7765 = vunpack.c.l.b16 %v7679
          %v7766 = vunpack.c.h.b16 %v7679
          %v7767 = vunpack.c.l.b16 %v7680
          %v7768 = vunpack.c.h.b16 %v7680
          %v7769 = vunpack.c.l.b16 %v7681
          %v7770 = vunpack.c.h.b16 %v7681
          %v7771 = vunpack.c.l.b16 %v7682
          %v7772 = vunpack.c.h.b16 %v7682
          %v7773 = vunpack.c.l.b16 %v7683
          %v7774 = vunpack.c.h.b16 %v7683
          %v7775 = vunpack.c.l.b16 %v7684
          %v7776 = vunpack.c.h.b16 %v7684
          %v7777 = vunpack.c.l.b16 %v7685
          %v7778 = vunpack.c.h.b16 %v7685
          %v7779 = vunpack.c.l.b16 %v7686
          %v7780 = vunpack.c.h.b16 %v7686
          %v7781 = vunpack.c.l.b16 %v7687
          %v7782 = vunpack.c.h.b16 %v7687
          %v7783 = vunpack.c.l.b16 %v7688
          %v7784 = vunpack.c.h.b16 %v7688
          %v7785 = vpack.c.b16 %v7725, %v7721
          %v7786 = vpack.c.b16 %v7726, %v7722
          %v7787 = vpack.c.b16 %v7727, %v7723
          %v7788 = vpack.c.b16 %v7728, %v7724
          %v7789 = vpack.c.b16 %v7733, %v7729
          %v7790 = vpack.c.b16 %v7734, %v7730
          %v7791 = vpack.c.b16 %v7735, %v7731
          %v7792 = vpack.c.b16 %v7736, %v7732
          %v7793 = vpack.c.b16 %v7741, %v7737
          %v7794 = vpack.c.b16 %v7742, %v7738
          %v7795 = vpack.c.b16 %v7743, %v7739
          %v7796 = vpack.c.b16 %v7744, %v7740
          %v7797 = vpack.c.b16 %v7749, %v7745
          %v7798 = vpack.c.b16 %v7750, %v7746
          %v7799 = vpack.c.b16 %v7751, %v7747
          %v7800 = vpack.c.b16 %v7752, %v7748
          %v7801 = vpack.c.b16 %v7757, %v7753
          %v7802 = vpack.c.b16 %v7758, %v7754
          %v7803 = vpack.c.b16 %v7759, %v7755
          %v7804 = vpack.c.b16 %v7760, %v7756
          %v7805 = vpack.c.b16 %v7765, %v7761
          %v7806 = vpack.c.b16 %v7766, %v7762
          %v7807 = vpack.c.b16 %v7767, %v7763
          %v7808 = vpack.c.b16 %v7768, %v7764
          %v7809 = vpack.c.b16 %v7773, %v7769
          %v7810 = vpack.c.b16 %v7774, %v7770
          %v7811 = vpack.c.b16 %v7775, %v7771
          %v7812 = vpack.c.b16 %v7776, %v7772
          %v7813 = vpack.c.b16 %v7781, %v7777
          %v7814 = vpack.c.b16 %v7782, %v7778
          %v7815 = vpack.c.b16 %v7783, %v7779
          %v7816 = vpack.c.b16 %v7784, %v7780
          %7849 = vmatprep.subr.bf16.mxu0 %v7814
          %7850 = vmatpush1.bf16.msra.mxu0 %v7813
          %7851 = vmatprep.subr.bf16.mxu0 %v7810
          %7852 = vmatpush1.bf16.msra.mxu0 %v7809
          %7853 = vmatprep.subr.bf16.mxu0 %v7806
          %7854 = vmatpush1.bf16.msra.mxu0 %v7805
          %7855 = vmatprep.subr.bf16.mxu0 %v7802
          %7856 = vmatpush1.bf16.msra.mxu0 %v7801
          %7857 = vmatprep.subr.bf16.mxu0 %v7798
          %7858 = vmatpush1.bf16.msra.mxu0 %v7797
          %7859 = vmatprep.subr.bf16.mxu0 %v7794
          %7860 = vmatpush1.bf16.msra.mxu0 %v7793
          %7861 = vmatprep.subr.bf16.mxu0 %v7790
          %7862 = vmatpush1.bf16.msra.mxu0 %v7789
          %7863 = vmatprep.subr.bf16.mxu0 %v7786
          %7864 = vmatpush1.bf16.msra.mxu0 %v7785
          %7865 = vmatprep.subr.bf16.mxu0 0
          %7866 = vmatpush2.bf16.msra.mxu0 0
          %7867 = vmatprep.subr.bf16.mxu0 0
          %7868 = vmatpush2.bf16.msra.mxu0 0
          %7869 = vmatprep.subr.bf16.mxu0 0
          %7870 = vmatpush2.bf16.msra.mxu0 0
          %7871 = vmatprep.subr.bf16.mxu0 0
          %7872 = vmatpush2.bf16.msra.mxu0 0
          %7873 = vmatprep.subr.bf16.mxu0 0
          %7874 = vmatpush2.bf16.msra.mxu0 0
          %7875 = vmatprep.subr.bf16.mxu0 0
          %7876 = vmatpush2.bf16.msra.mxu0 0
          %7877 = vmatprep.subr.bf16.mxu0 0
          %7878 = vmatpush2.bf16.msra.mxu0 0
          %7879 = vmatprep.subr.bf16.mxu0 0
          %7880 = vmatpush2.bf16.msra.mxu0 0
          %7881 = vmatprep.mubr.bf16.mxu0 0
          %7882 = vmatmul.mubr.bf16.gmra.mxu0 %v7655
          %v7883 = vpop.f32.mrf.mxu0
          %v7884 = vadd.f32 0.0, %v7883
          %v7885 = vpop.f32.mrf.mxu0
          %v7886 = vadd.f32 0.0, %v7885
          %v7887 = vpop.f32.mrf.mxu0
          %v7888 = vpop.f32.mrf.mxu0
          %7889 = vdwg.mxu0
          %7890 = vmatprep.subr.bf16.mxu0 %v7816
          %7891 = vmatpush1.bf16.msra.mxu0 %v7815
          %7892 = vmatprep.subr.bf16.mxu0 %v7812
          %7893 = vmatpush1.bf16.msra.mxu0 %v7811
          %7894 = vmatprep.subr.bf16.mxu0 %v7808
          %7895 = vmatpush1.bf16.msra.mxu0 %v7807
          %7896 = vmatprep.subr.bf16.mxu0 %v7804
          %7897 = vmatpush1.bf16.msra.mxu0 %v7803
          %7898 = vmatprep.subr.bf16.mxu0 %v7800
          %7899 = vmatpush1.bf16.msra.mxu0 %v7799
          %7900 = vmatprep.subr.bf16.mxu0 %v7796
          %7901 = vmatpush1.bf16.msra.mxu0 %v7795
          %7902 = vmatprep.subr.bf16.mxu0 %v7792
          %7903 = vmatpush1.bf16.msra.mxu0 %v7791
          %7904 = vmatprep.subr.bf16.mxu0 %v7788
          %7905 = vmatpush1.bf16.msra.mxu0 %v7787
          %7906 = vmatprep.subr.bf16.mxu0 0
          %7907 = vmatpush2.bf16.msra.mxu0 0
          %7908 = vmatprep.subr.bf16.mxu0 0
          %7909 = vmatpush2.bf16.msra.mxu0 0
          %7910 = vmatprep.subr.bf16.mxu0 0
          %7911 = vmatpush2.bf16.msra.mxu0 0
          %7912 = vmatprep.subr.bf16.mxu0 0
          %7913 = vmatpush2.bf16.msra.mxu0 0
          %7914 = vmatprep.subr.bf16.mxu0 0
          %7915 = vmatpush2.bf16.msra.mxu0 0
          %7916 = vmatprep.subr.bf16.mxu0 0
          %7917 = vmatpush2.bf16.msra.mxu0 0
          %7918 = vmatprep.subr.bf16.mxu0 0
          %7919 = vmatpush2.bf16.msra.mxu0 0
          %7920 = vmatprep.subr.bf16.mxu0 0
          %7921 = vmatpush2.bf16.msra.mxu0 0
          %7922 = vmatprep.mubr.bf16.mxu0 0
          %7923 = vmatmul.mubr.bf16.gmra.mxu0 %v7655
          %v7924 = vpop.f32.mrf.mxu0
          %v7925 = vadd.f32 0.0, %v7924
          %v7926 = vpop.f32.mrf.mxu0
          %v7927 = vadd.f32 0.0, %v7926
          %v7928 = vpop.f32.mrf.mxu0
          %v7929 = vpop.f32.mrf.mxu0
          %7930 = vdwg.mxu0
          %v7931 = vadd.f32 %v7642, %v7884
          %v7932 = vadd.f32 %v7643, %v7886
          %v7933 = vadd.f32 %v7644, %v7925
          %v7934 = vadd.f32 %v7645, %v7927
          %s7935 = scalar_lea.vmem [#allocation3], 32
          %v7936 = vld [vmem:[%s7935] sm:$0xff]
          %7937 = vset.pattern.permute.xlu0 4
          %7938 = vperm.xlu0 %7937, %v6788
          %v7939 = vpop.permute.xlu0 %7938
          %v7941 = vmul.f32 %v7936, %v7939
          %s7942 = scalar_lea.vmem %s18, 32
          %7943 = vst [vmem:[%s7942] sm:$0xff] %v7941
          %v7944 = vpack.c.bf16 %v7941, %v7941
          %s7945 = scalar_lea.vmem [#allocation22], 1024
          %v7946 = vld [vmem:[%s7945] sm:$0xff]
          %v7947 = vld [vmem:[%s7945 + $0x8] sm:$0xff]
          %v7948 = vld [vmem:[%s7945 + $0x10] sm:$0xff]
          %v7949 = vld [vmem:[%s7945 + $0x18] sm:$0xff]
          %v7950 = vld [vmem:[%s7945 + $0x20] sm:$0xff]
          %v7951 = vld [vmem:[%s7945 + $0x28] sm:$0xff]
          %v7952 = vld [vmem:[%s7945 + $0x30] sm:$0xff]
          %v7953 = vld [vmem:[%s7945 + $0x38] sm:$0xff]
          %v7954 = vld [vmem:[%s7945 + $0x40] sm:$0xff]
          %v7955 = vld [vmem:[%s7945 + $0x48] sm:$0xff]
          %v7956 = vld [vmem:[%s7945 + $0x50] sm:$0xff]
          %v7957 = vld [vmem:[%s7945 + $0x58] sm:$0xff]
          %v7958 = vld [vmem:[%s7945 + $0x60] sm:$0xff]
          %v7959 = vld [vmem:[%s7945 + $0x68] sm:$0xff]
          %v7960 = vld [vmem:[%s7945 + $0x70] sm:$0xff]
          %v7961 = vld [vmem:[%s7945 + $0x78] sm:$0xff]
          %v7962 = vld [vmem:[%s7945 + $0x80] sm:$0xff]
          %v7963 = vld [vmem:[%s7945 + $0x88] sm:$0xff]
          %v7964 = vld [vmem:[%s7945 + $0x90] sm:$0xff]
          %v7965 = vld [vmem:[%s7945 + $0x98] sm:$0xff]
          %v7966 = vld [vmem:[%s7945 + $0xa0] sm:$0xff]
          %v7967 = vld [vmem:[%s7945 + $0xa8] sm:$0xff]
          %v7968 = vld [vmem:[%s7945 + $0xb0] sm:$0xff]
          %v7969 = vld [vmem:[%s7945 + $0xb8] sm:$0xff]
          %v7970 = vld [vmem:[%s7945 + $0xc0] sm:$0xff]
          %v7971 = vld [vmem:[%s7945 + $0xc8] sm:$0xff]
          %v7972 = vld [vmem:[%s7945 + $0xd0] sm:$0xff]
          %v7973 = vld [vmem:[%s7945 + $0xd8] sm:$0xff]
          %v7974 = vld [vmem:[%s7945 + $0xe0] sm:$0xff]
          %v7975 = vld [vmem:[%s7945 + $0xe8] sm:$0xff]
          %v7976 = vld [vmem:[%s7945 + $0xf0] sm:$0xff]
          %v7977 = vld [vmem:[%s7945 + $0xf8] sm:$0xff]
          %v8010 = vunpack.c.l.b16 %v7946
          %v8011 = vunpack.c.h.b16 %v7946
          %v8012 = vunpack.c.l.b16 %v7947
          %v8013 = vunpack.c.h.b16 %v7947
          %v8014 = vunpack.c.l.b16 %v7948
          %v8015 = vunpack.c.h.b16 %v7948
          %v8016 = vunpack.c.l.b16 %v7949
          %v8017 = vunpack.c.h.b16 %v7949
          %v8018 = vunpack.c.l.b16 %v7950
          %v8019 = vunpack.c.h.b16 %v7950
          %v8020 = vunpack.c.l.b16 %v7951
          %v8021 = vunpack.c.h.b16 %v7951
          %v8022 = vunpack.c.l.b16 %v7952
          %v8023 = vunpack.c.h.b16 %v7952
          %v8024 = vunpack.c.l.b16 %v7953
          %v8025 = vunpack.c.h.b16 %v7953
          %v8026 = vunpack.c.l.b16 %v7954
          %v8027 = vunpack.c.h.b16 %v7954
          %v8028 = vunpack.c.l.b16 %v7955
          %v8029 = vunpack.c.h.b16 %v7955
          %v8030 = vunpack.c.l.b16 %v7956
          %v8031 = vunpack.c.h.b16 %v7956
          %v8032 = vunpack.c.l.b16 %v7957
          %v8033 = vunpack.c.h.b16 %v7957
          %v8034 = vunpack.c.l.b16 %v7958
          %v8035 = vunpack.c.h.b16 %v7958
          %v8036 = vunpack.c.l.b16 %v7959
          %v8037 = vunpack.c.h.b16 %v7959
          %v8038 = vunpack.c.l.b16 %v7960
          %v8039 = vunpack.c.h.b16 %v7960
          %v8040 = vunpack.c.l.b16 %v7961
          %v8041 = vunpack.c.h.b16 %v7961
          %v8042 = vunpack.c.l.b16 %v7962
          %v8043 = vunpack.c.h.b16 %v7962
          %v8044 = vunpack.c.l.b16 %v7963
          %v8045 = vunpack.c.h.b16 %v7963
          %v8046 = vunpack.c.l.b16 %v7964
          %v8047 = vunpack.c.h.b16 %v7964
          %v8048 = vunpack.c.l.b16 %v7965
          %v8049 = vunpack.c.h.b16 %v7965
          %v8050 = vunpack.c.l.b16 %v7966
          %v8051 = vunpack.c.h.b16 %v7966
          %v8052 = vunpack.c.l.b16 %v7967
          %v8053 = vunpack.c.h.b16 %v7967
          %v8054 = vunpack.c.l.b16 %v7968
          %v8055 = vunpack.c.h.b16 %v7968
          %v8056 = vunpack.c.l.b16 %v7969
          %v8057 = vunpack.c.h.b16 %v7969
          %v8058 = vunpack.c.l.b16 %v7970
          %v8059 = vunpack.c.h.b16 %v7970
          %v8060 = vunpack.c.l.b16 %v7971
          %v8061 = vunpack.c.h.b16 %v7971
          %v8062 = vunpack.c.l.b16 %v7972
          %v8063 = vunpack.c.h.b16 %v7972
          %v8064 = vunpack.c.l.b16 %v7973
          %v8065 = vunpack.c.h.b16 %v7973
          %v8066 = vunpack.c.l.b16 %v7974
          %v8067 = vunpack.c.h.b16 %v7974
          %v8068 = vunpack.c.l.b16 %v7975
          %v8069 = vunpack.c.h.b16 %v7975
          %v8070 = vunpack.c.l.b16 %v7976
          %v8071 = vunpack.c.h.b16 %v7976
          %v8072 = vunpack.c.l.b16 %v7977
          %v8073 = vunpack.c.h.b16 %v7977
          %v8074 = vpack.c.b16 %v8014, %v8010
          %v8075 = vpack.c.b16 %v8015, %v8011
          %v8076 = vpack.c.b16 %v8016, %v8012
          %v8077 = vpack.c.b16 %v8017, %v8013
          %v8078 = vpack.c.b16 %v8022, %v8018
          %v8079 = vpack.c.b16 %v8023, %v8019
          %v8080 = vpack.c.b16 %v8024, %v8020
          %v8081 = vpack.c.b16 %v8025, %v8021
          %v8082 = vpack.c.b16 %v8030, %v8026
          %v8083 = vpack.c.b16 %v8031, %v8027
          %v8084 = vpack.c.b16 %v8032, %v8028
          %v8085 = vpack.c.b16 %v8033, %v8029
          %v8086 = vpack.c.b16 %v8038, %v8034
          %v8087 = vpack.c.b16 %v8039, %v8035
          %v8088 = vpack.c.b16 %v8040, %v8036
          %v8089 = vpack.c.b16 %v8041, %v8037
          %v8090 = vpack.c.b16 %v8046, %v8042
          %v8091 = vpack.c.b16 %v8047, %v8043
          %v8092 = vpack.c.b16 %v8048, %v8044
          %v8093 = vpack.c.b16 %v8049, %v8045
          %v8094 = vpack.c.b16 %v8054, %v8050
          %v8095 = vpack.c.b16 %v8055, %v8051
          %v8096 = vpack.c.b16 %v8056, %v8052
          %v8097 = vpack.c.b16 %v8057, %v8053
          %v8098 = vpack.c.b16 %v8062, %v8058
          %v8099 = vpack.c.b16 %v8063, %v8059
          %v8100 = vpack.c.b16 %v8064, %v8060
          %v8101 = vpack.c.b16 %v8065, %v8061
          %v8102 = vpack.c.b16 %v8070, %v8066
          %v8103 = vpack.c.b16 %v8071, %v8067
          %v8104 = vpack.c.b16 %v8072, %v8068
          %v8105 = vpack.c.b16 %v8073, %v8069
          %8138 = vmatprep.subr.bf16.mxu0 %v8103
          %8139 = vmatpush1.bf16.msra.mxu0 %v8102
          %8140 = vmatprep.subr.bf16.mxu0 %v8099
          %8141 = vmatpush1.bf16.msra.mxu0 %v8098
          %8142 = vmatprep.subr.bf16.mxu0 %v8095
          %8143 = vmatpush1.bf16.msra.mxu0 %v8094
          %8144 = vmatprep.subr.bf16.mxu0 %v8091
          %8145 = vmatpush1.bf16.msra.mxu0 %v8090
          %8146 = vmatprep.subr.bf16.mxu0 %v8087
          %8147 = vmatpush1.bf16.msra.mxu0 %v8086
          %8148 = vmatprep.subr.bf16.mxu0 %v8083
          %8149 = vmatpush1.bf16.msra.mxu0 %v8082
          %8150 = vmatprep.subr.bf16.mxu0 %v8079
          %8151 = vmatpush1.bf16.msra.mxu0 %v8078
          %8152 = vmatprep.subr.bf16.mxu0 %v8075
          %8153 = vmatpush1.bf16.msra.mxu0 %v8074
          %8154 = vmatprep.subr.bf16.mxu0 0
          %8155 = vmatpush2.bf16.msra.mxu0 0
          %8156 = vmatprep.subr.bf16.mxu0 0
          %8157 = vmatpush2.bf16.msra.mxu0 0
          %8158 = vmatprep.subr.bf16.mxu0 0
          %8159 = vmatpush2.bf16.msra.mxu0 0
          %8160 = vmatprep.subr.bf16.mxu0 0
          %8161 = vmatpush2.bf16.msra.mxu0 0
          %8162 = vmatprep.subr.bf16.mxu0 0
          %8163 = vmatpush2.bf16.msra.mxu0 0
          %8164 = vmatprep.subr.bf16.mxu0 0
          %8165 = vmatpush2.bf16.msra.mxu0 0
          %8166 = vmatprep.subr.bf16.mxu0 0
          %8167 = vmatpush2.bf16.msra.mxu0 0
          %8168 = vmatprep.subr.bf16.mxu0 0
          %8169 = vmatpush2.bf16.msra.mxu0 0
          %8170 = vmatprep.mubr.bf16.mxu0 0
          %8171 = vmatmul.mubr.bf16.gmra.mxu0 %v7944
          %v8172 = vpop.f32.mrf.mxu0
          %v8173 = vadd.f32 0.0, %v8172
          %v8174 = vpop.f32.mrf.mxu0
          %v8175 = vadd.f32 0.0, %v8174
          %v8176 = vpop.f32.mrf.mxu0
          %v8177 = vpop.f32.mrf.mxu0
          %8178 = vdwg.mxu0
          %8179 = vmatprep.subr.bf16.mxu0 %v8105
          %8180 = vmatpush1.bf16.msra.mxu0 %v8104
          %8181 = vmatprep.subr.bf16.mxu0 %v8101
          %8182 = vmatpush1.bf16.msra.mxu0 %v8100
          %8183 = vmatprep.subr.bf16.mxu0 %v8097
          %8184 = vmatpush1.bf16.msra.mxu0 %v8096
          %8185 = vmatprep.subr.bf16.mxu0 %v8093
          %8186 = vmatpush1.bf16.msra.mxu0 %v8092
          %8187 = vmatprep.subr.bf16.mxu0 %v8089
          %8188 = vmatpush1.bf16.msra.mxu0 %v8088
          %8189 = vmatprep.subr.bf16.mxu0 %v8085
          %8190 = vmatpush1.bf16.msra.mxu0 %v8084
          %8191 = vmatprep.subr.bf16.mxu0 %v8081
          %8192 = vmatpush1.bf16.msra.mxu0 %v8080
          %8193 = vmatprep.subr.bf16.mxu0 %v8077
          %8194 = vmatpush1.bf16.msra.mxu0 %v8076
          %8195 = vmatprep.subr.bf16.mxu0 0
          %8196 = vmatpush2.bf16.msra.mxu0 0
          %8197 = vmatprep.subr.bf16.mxu0 0
          %8198 = vmatpush2.bf16.msra.mxu0 0
          %8199 = vmatprep.subr.bf16.mxu0 0
          %8200 = vmatpush2.bf16.msra.mxu0 0
          %8201 = vmatprep.subr.bf16.mxu0 0
          %8202 = vmatpush2.bf16.msra.mxu0 0
          %8203 = vmatprep.subr.bf16.mxu0 0
          %8204 = vmatpush2.bf16.msra.mxu0 0
          %8205 = vmatprep.subr.bf16.mxu0 0
          %8206 = vmatpush2.bf16.msra.mxu0 0
          %8207 = vmatprep.subr.bf16.mxu0 0
          %8208 = vmatpush2.bf16.msra.mxu0 0
          %8209 = vmatprep.subr.bf16.mxu0 0
          %8210 = vmatpush2.bf16.msra.mxu0 0
          %8211 = vmatprep.mubr.bf16.mxu0 0
          %8212 = vmatmul.mubr.bf16.gmra.mxu0 %v7944
          %v8213 = vpop.f32.mrf.mxu0
          %v8214 = vadd.f32 0.0, %v8213
          %v8215 = vpop.f32.mrf.mxu0
          %v8216 = vadd.f32 0.0, %v8215
          %v8217 = vpop.f32.mrf.mxu0
          %v8218 = vpop.f32.mrf.mxu0
          %8219 = vdwg.mxu0
          %v8220 = vadd.f32 %v7931, %v8173
          %v8221 = vadd.f32 %v7932, %v8175
          %v8222 = vadd.f32 %v7933, %v8214
          %v8223 = vadd.f32 %v7934, %v8216
          %v8224 = vld [vmem:[#allocation23] sm:$0xf]
          %v8226 = vlaneseq
          %v8227 = vshrl.u32 %v8226, 7
          %v8228 = vsub.s32 0, %v8227
          %v8229 = vrot.slane %v8224, %v8228
          %v8230 = vlaneseq
          %v8231 = vshrl.u32 %v8230, 7
          %v8232 = vsub.s32 1, %v8231
          %v8233 = vrot.slane %v8224, %v8232
          %v8234 = vlaneseq
          %v8235 = vshrl.u32 %v8234, 7
          %v8236 = vsub.s32 2, %v8235
          %v8237 = vrot.slane %v8224, %v8236
          %v8238 = vlaneseq
          %v8239 = vshrl.u32 %v8238, 7
          %v8240 = vsub.s32 3, %v8239
          %v8241 = vrot.slane %v8224, %v8240
          %v8246 = vadd.f32 %v8220, %v8229
          %v8247 = vadd.f32 %v8221, %v8233
          %v8248 = vadd.f32 %v8222, %v8237
          %v8249 = vadd.f32 %v8223, %v8241
          %v8250 = vmax.f32 %v8246, 0.0
          %v8251 = vmax.f32 %v8247, 0.0
          %v8252 = vmax.f32 %v8248, 0.0
          %v8253 = vmax.f32 %v8249, 0.0
          %v8254 = vpack.c.bf16 %v8250, %v8250
          %v8255 = vpack.c.bf16 %v8251, %v8251
          %v8256 = vpack.c.bf16 %v8252, %v8252
          %v8257 = vpack.c.bf16 %v8253, %v8253
          %v8258 = vld [vmem:[#allocation25] sm:$0xff]
          %v8259 = vld [vmem:[#allocation25 + $0x8] sm:$0xff]
          %v8260 = vld [vmem:[#allocation25 + $0x10] sm:$0xff]
          %v8261 = vld [vmem:[#allocation25 + $0x18] sm:$0xff]
          %v8262 = vld [vmem:[#allocation25 + $0x20] sm:$0xff]
          %v8263 = vld [vmem:[#allocation25 + $0x28] sm:$0xff]
          %v8264 = vld [vmem:[#allocation25 + $0x30] sm:$0xff]
          %v8265 = vld [vmem:[#allocation25 + $0x38] sm:$0xff]
          %v8266 = vld [vmem:[#allocation25 + $0x40] sm:$0xff]
          %v8267 = vld [vmem:[#allocation25 + $0x48] sm:$0xff]
          %v8268 = vld [vmem:[#allocation25 + $0x50] sm:$0xff]
          %v8269 = vld [vmem:[#allocation25 + $0x58] sm:$0xff]
          %v8270 = vld [vmem:[#allocation25 + $0x60] sm:$0xff]
          %v8271 = vld [vmem:[#allocation25 + $0x68] sm:$0xff]
          %v8272 = vld [vmem:[#allocation25 + $0x70] sm:$0xff]
          %v8273 = vld [vmem:[#allocation25 + $0x78] sm:$0xff]
          %v8274 = vld [vmem:[#allocation25 + $0x80] sm:$0xff]
          %v8275 = vld [vmem:[#allocation25 + $0x88] sm:$0xff]
          %v8276 = vld [vmem:[#allocation25 + $0x90] sm:$0xff]
          %v8277 = vld [vmem:[#allocation25 + $0x98] sm:$0xff]
          %v8278 = vld [vmem:[#allocation25 + $0xa0] sm:$0xff]
          %v8279 = vld [vmem:[#allocation25 + $0xa8] sm:$0xff]
          %v8280 = vld [vmem:[#allocation25 + $0xb0] sm:$0xff]
          %v8281 = vld [vmem:[#allocation25 + $0xb8] sm:$0xff]
          %v8282 = vld [vmem:[#allocation25 + $0xc0] sm:$0xff]
          %v8283 = vld [vmem:[#allocation25 + $0xc8] sm:$0xff]
          %v8284 = vld [vmem:[#allocation25 + $0xd0] sm:$0xff]
          %v8285 = vld [vmem:[#allocation25 + $0xd8] sm:$0xff]
          %v8286 = vld [vmem:[#allocation25 + $0xe0] sm:$0xff]
          %v8287 = vld [vmem:[#allocation25 + $0xe8] sm:$0xff]
          %v8288 = vld [vmem:[#allocation25 + $0xf0] sm:$0xff]
          %v8289 = vld [vmem:[#allocation25 + $0xf8] sm:$0xff]
          %v8290 = vld [vmem:[#allocation25 + $0x100] sm:$0xff]
          %v8291 = vld [vmem:[#allocation25 + $0x108] sm:$0xff]
          %v8292 = vld [vmem:[#allocation25 + $0x110] sm:$0xff]
          %v8293 = vld [vmem:[#allocation25 + $0x118] sm:$0xff]
          %v8294 = vld [vmem:[#allocation25 + $0x120] sm:$0xff]
          %v8295 = vld [vmem:[#allocation25 + $0x128] sm:$0xff]
          %v8296 = vld [vmem:[#allocation25 + $0x130] sm:$0xff]
          %v8297 = vld [vmem:[#allocation25 + $0x138] sm:$0xff]
          %v8298 = vld [vmem:[#allocation25 + $0x140] sm:$0xff]
          %v8299 = vld [vmem:[#allocation25 + $0x148] sm:$0xff]
          %v8300 = vld [vmem:[#allocation25 + $0x150] sm:$0xff]
          %v8301 = vld [vmem:[#allocation25 + $0x158] sm:$0xff]
          %v8302 = vld [vmem:[#allocation25 + $0x160] sm:$0xff]
          %v8303 = vld [vmem:[#allocation25 + $0x168] sm:$0xff]
          %v8304 = vld [vmem:[#allocation25 + $0x170] sm:$0xff]
          %v8305 = vld [vmem:[#allocation25 + $0x178] sm:$0xff]
          %v8306 = vld [vmem:[#allocation25 + $0x180] sm:$0xff]
          %v8307 = vld [vmem:[#allocation25 + $0x188] sm:$0xff]
          %v8308 = vld [vmem:[#allocation25 + $0x190] sm:$0xff]
          %v8309 = vld [vmem:[#allocation25 + $0x198] sm:$0xff]
          %v8310 = vld [vmem:[#allocation25 + $0x1a0] sm:$0xff]
          %v8311 = vld [vmem:[#allocation25 + $0x1a8] sm:$0xff]
          %v8312 = vld [vmem:[#allocation25 + $0x1b0] sm:$0xff]
          %v8313 = vld [vmem:[#allocation25 + $0x1b8] sm:$0xff]
          %v8314 = vld [vmem:[#allocation25 + $0x1c0] sm:$0xff]
          %v8315 = vld [vmem:[#allocation25 + $0x1c8] sm:$0xff]
          %v8316 = vld [vmem:[#allocation25 + $0x1d0] sm:$0xff]
          %v8317 = vld [vmem:[#allocation25 + $0x1d8] sm:$0xff]
          %v8318 = vld [vmem:[#allocation25 + $0x1e0] sm:$0xff]
          %v8319 = vld [vmem:[#allocation25 + $0x1e8] sm:$0xff]
          %v8320 = vld [vmem:[#allocation25 + $0x1f0] sm:$0xff]
          %v8321 = vld [vmem:[#allocation25 + $0x1f8] sm:$0xff]
          %v8322 = vld [vmem:[#allocation26] sm:$0x3]
          %v8324 = vlaneseq
          %v8325 = vshrl.u32 %v8324, 7
          %v8326 = vsub.s32 0, %v8325
          %v8327 = vrot.slane %v8322, %v8326
          %v8328 = vlaneseq
          %v8329 = vshrl.u32 %v8328, 7
          %v8330 = vsub.s32 1, %v8329
          %v8331 = vrot.slane %v8322, %v8330
          %v8398 = vunpack.c.l.b16 %v8258
          %v8399 = vunpack.c.h.b16 %v8258
          %v8400 = vunpack.c.l.b16 %v8259
          %v8401 = vunpack.c.h.b16 %v8259
          %v8402 = vunpack.c.l.b16 %v8260
          %v8403 = vunpack.c.h.b16 %v8260
          %v8404 = vunpack.c.l.b16 %v8261
          %v8405 = vunpack.c.h.b16 %v8261
          %v8406 = vunpack.c.l.b16 %v8262
          %v8407 = vunpack.c.h.b16 %v8262
          %v8408 = vunpack.c.l.b16 %v8263
          %v8409 = vunpack.c.h.b16 %v8263
          %v8410 = vunpack.c.l.b16 %v8264
          %v8411 = vunpack.c.h.b16 %v8264
          %v8412 = vunpack.c.l.b16 %v8265
          %v8413 = vunpack.c.h.b16 %v8265
          %v8414 = vunpack.c.l.b16 %v8266
          %v8415 = vunpack.c.h.b16 %v8266
          %v8416 = vunpack.c.l.b16 %v8267
          %v8417 = vunpack.c.h.b16 %v8267
          %v8418 = vunpack.c.l.b16 %v8268
          %v8419 = vunpack.c.h.b16 %v8268
          %v8420 = vunpack.c.l.b16 %v8269
          %v8421 = vunpack.c.h.b16 %v8269
          %v8422 = vunpack.c.l.b16 %v8270
          %v8423 = vunpack.c.h.b16 %v8270
          %v8424 = vunpack.c.l.b16 %v8271
          %v8425 = vunpack.c.h.b16 %v8271
          %v8426 = vunpack.c.l.b16 %v8272
          %v8427 = vunpack.c.h.b16 %v8272
          %v8428 = vunpack.c.l.b16 %v8273
          %v8429 = vunpack.c.h.b16 %v8273
          %v8430 = vunpack.c.l.b16 %v8274
          %v8431 = vunpack.c.h.b16 %v8274
          %v8432 = vunpack.c.l.b16 %v8275
          %v8433 = vunpack.c.h.b16 %v8275
          %v8434 = vunpack.c.l.b16 %v8276
          %v8435 = vunpack.c.h.b16 %v8276
          %v8436 = vunpack.c.l.b16 %v8277
          %v8437 = vunpack.c.h.b16 %v8277
          %v8438 = vunpack.c.l.b16 %v8278
          %v8439 = vunpack.c.h.b16 %v8278
          %v8440 = vunpack.c.l.b16 %v8279
          %v8441 = vunpack.c.h.b16 %v8279
          %v8442 = vunpack.c.l.b16 %v8280
          %v8443 = vunpack.c.h.b16 %v8280
          %v8444 = vunpack.c.l.b16 %v8281
          %v8445 = vunpack.c.h.b16 %v8281
          %v8446 = vunpack.c.l.b16 %v8282
          %v8447 = vunpack.c.h.b16 %v8282
          %v8448 = vunpack.c.l.b16 %v8283
          %v8449 = vunpack.c.h.b16 %v8283
          %v8450 = vunpack.c.l.b16 %v8284
          %v8451 = vunpack.c.h.b16 %v8284
          %v8452 = vunpack.c.l.b16 %v8285
          %v8453 = vunpack.c.h.b16 %v8285
          %v8454 = vunpack.c.l.b16 %v8286
          %v8455 = vunpack.c.h.b16 %v8286
          %v8456 = vunpack.c.l.b16 %v8287
          %v8457 = vunpack.c.h.b16 %v8287
          %v8458 = vunpack.c.l.b16 %v8288
          %v8459 = vunpack.c.h.b16 %v8288
          %v8460 = vunpack.c.l.b16 %v8289
          %v8461 = vunpack.c.h.b16 %v8289
          %v8462 = vunpack.c.l.b16 %v8290
          %v8463 = vunpack.c.h.b16 %v8290
          %v8464 = vunpack.c.l.b16 %v8291
          %v8465 = vunpack.c.h.b16 %v8291
          %v8466 = vunpack.c.l.b16 %v8292
          %v8467 = vunpack.c.h.b16 %v8292
          %v8468 = vunpack.c.l.b16 %v8293
          %v8469 = vunpack.c.h.b16 %v8293
          %v8470 = vunpack.c.l.b16 %v8294
          %v8471 = vunpack.c.h.b16 %v8294
          %v8472 = vunpack.c.l.b16 %v8295
          %v8473 = vunpack.c.h.b16 %v8295
          %v8474 = vunpack.c.l.b16 %v8296
          %v8475 = vunpack.c.h.b16 %v8296
          %v8476 = vunpack.c.l.b16 %v8297
          %v8477 = vunpack.c.h.b16 %v8297
          %v8478 = vunpack.c.l.b16 %v8298
          %v8479 = vunpack.c.h.b16 %v8298
          %v8480 = vunpack.c.l.b16 %v8299
          %v8481 = vunpack.c.h.b16 %v8299
          %v8482 = vunpack.c.l.b16 %v8300
          %v8483 = vunpack.c.h.b16 %v8300
          %v8484 = vunpack.c.l.b16 %v8301
          %v8485 = vunpack.c.h.b16 %v8301
          %v8486 = vunpack.c.l.b16 %v8302
          %v8487 = vunpack.c.h.b16 %v8302
          %v8488 = vunpack.c.l.b16 %v8303
          %v8489 = vunpack.c.h.b16 %v8303
          %v8490 = vunpack.c.l.b16 %v8304
          %v8491 = vunpack.c.h.b16 %v8304
          %v8492 = vunpack.c.l.b16 %v8305
          %v8493 = vunpack.c.h.b16 %v8305
          %v8494 = vunpack.c.l.b16 %v8306
          %v8495 = vunpack.c.h.b16 %v8306
          %v8496 = vunpack.c.l.b16 %v8307
          %v8497 = vunpack.c.h.b16 %v8307
          %v8498 = vunpack.c.l.b16 %v8308
          %v8499 = vunpack.c.h.b16 %v8308
          %v8500 = vunpack.c.l.b16 %v8309
          %v8501 = vunpack.c.h.b16 %v8309
          %v8502 = vunpack.c.l.b16 %v8310
          %v8503 = vunpack.c.h.b16 %v8310
          %v8504 = vunpack.c.l.b16 %v8311
          %v8505 = vunpack.c.h.b16 %v8311
          %v8506 = vunpack.c.l.b16 %v8312
          %v8507 = vunpack.c.h.b16 %v8312
          %v8508 = vunpack.c.l.b16 %v8313
          %v8509 = vunpack.c.h.b16 %v8313
          %v8510 = vunpack.c.l.b16 %v8314
          %v8511 = vunpack.c.h.b16 %v8314
          %v8512 = vunpack.c.l.b16 %v8315
          %v8513 = vunpack.c.h.b16 %v8315
          %v8514 = vunpack.c.l.b16 %v8316
          %v8515 = vunpack.c.h.b16 %v8316
          %v8516 = vunpack.c.l.b16 %v8317
          %v8517 = vunpack.c.h.b16 %v8317
          %v8518 = vunpack.c.l.b16 %v8318
          %v8519 = vunpack.c.h.b16 %v8318
          %v8520 = vunpack.c.l.b16 %v8319
          %v8521 = vunpack.c.h.b16 %v8319
          %v8522 = vunpack.c.l.b16 %v8320
          %v8523 = vunpack.c.h.b16 %v8320
          %v8524 = vunpack.c.l.b16 %v8321
          %v8525 = vunpack.c.h.b16 %v8321
          %v8526 = vpack.c.b16 %v8400, %v8398
          %v8527 = vpack.c.b16 %v8401, %v8399
          %v8528 = vpack.c.b16 %v8404, %v8402
          %v8529 = vpack.c.b16 %v8405, %v8403
          %v8530 = vpack.c.b16 %v8408, %v8406
          %v8531 = vpack.c.b16 %v8409, %v8407
          %v8532 = vpack.c.b16 %v8412, %v8410
          %v8533 = vpack.c.b16 %v8413, %v8411
          %v8534 = vpack.c.b16 %v8416, %v8414
          %v8535 = vpack.c.b16 %v8417, %v8415
          %v8536 = vpack.c.b16 %v8420, %v8418
          %v8537 = vpack.c.b16 %v8421, %v8419
          %v8538 = vpack.c.b16 %v8424, %v8422
          %v8539 = vpack.c.b16 %v8425, %v8423
          %v8540 = vpack.c.b16 %v8428, %v8426
          %v8541 = vpack.c.b16 %v8429, %v8427
          %v8542 = vpack.c.b16 %v8432, %v8430
          %v8543 = vpack.c.b16 %v8433, %v8431
          %v8544 = vpack.c.b16 %v8436, %v8434
          %v8545 = vpack.c.b16 %v8437, %v8435
          %v8546 = vpack.c.b16 %v8440, %v8438
          %v8547 = vpack.c.b16 %v8441, %v8439
          %v8548 = vpack.c.b16 %v8444, %v8442
          %v8549 = vpack.c.b16 %v8445, %v8443
          %v8550 = vpack.c.b16 %v8448, %v8446
          %v8551 = vpack.c.b16 %v8449, %v8447
          %v8552 = vpack.c.b16 %v8452, %v8450
          %v8553 = vpack.c.b16 %v8453, %v8451
          %v8554 = vpack.c.b16 %v8456, %v8454
          %v8555 = vpack.c.b16 %v8457, %v8455
          %v8556 = vpack.c.b16 %v8460, %v8458
          %v8557 = vpack.c.b16 %v8461, %v8459
          %v8558 = vpack.c.b16 %v8464, %v8462
          %v8559 = vpack.c.b16 %v8465, %v8463
          %v8560 = vpack.c.b16 %v8468, %v8466
          %v8561 = vpack.c.b16 %v8469, %v8467
          %v8562 = vpack.c.b16 %v8472, %v8470
          %v8563 = vpack.c.b16 %v8473, %v8471
          %v8564 = vpack.c.b16 %v8476, %v8474
          %v8565 = vpack.c.b16 %v8477, %v8475
          %v8566 = vpack.c.b16 %v8480, %v8478
          %v8567 = vpack.c.b16 %v8481, %v8479
          %v8568 = vpack.c.b16 %v8484, %v8482
          %v8569 = vpack.c.b16 %v8485, %v8483
          %v8570 = vpack.c.b16 %v8488, %v8486
          %v8571 = vpack.c.b16 %v8489, %v8487
          %v8572 = vpack.c.b16 %v8492, %v8490
          %v8573 = vpack.c.b16 %v8493, %v8491
          %v8574 = vpack.c.b16 %v8496, %v8494
          %v8575 = vpack.c.b16 %v8497, %v8495
          %v8576 = vpack.c.b16 %v8500, %v8498
          %v8577 = vpack.c.b16 %v8501, %v8499
          %v8578 = vpack.c.b16 %v8504, %v8502
          %v8579 = vpack.c.b16 %v8505, %v8503
          %v8580 = vpack.c.b16 %v8508, %v8506
          %v8581 = vpack.c.b16 %v8509, %v8507
          %v8582 = vpack.c.b16 %v8512, %v8510
          %v8583 = vpack.c.b16 %v8513, %v8511
          %v8584 = vpack.c.b16 %v8516, %v8514
          %v8585 = vpack.c.b16 %v8517, %v8515
          %v8586 = vpack.c.b16 %v8520, %v8518
          %v8587 = vpack.c.b16 %v8521, %v8519
          %v8588 = vpack.c.b16 %v8524, %v8522
          %v8589 = vpack.c.b16 %v8525, %v8523
          %8654 = vmatprep.subr.bf16.mxu0 %v8541
          %8655 = vmatpush1.bf16.msra.mxu0 %v8540
          %8656 = vmatprep.subr.bf16.mxu0 %v8539
          %8657 = vmatpush1.bf16.msra.mxu0 %v8538
          %8658 = vmatprep.subr.bf16.mxu0 %v8537
          %8659 = vmatpush1.bf16.msra.mxu0 %v8536
          %8660 = vmatprep.subr.bf16.mxu0 %v8535
          %8661 = vmatpush1.bf16.msra.mxu0 %v8534
          %8662 = vmatprep.subr.bf16.mxu0 %v8533
          %8663 = vmatpush1.bf16.msra.mxu0 %v8532
          %8664 = vmatprep.subr.bf16.mxu0 %v8531
          %8665 = vmatpush1.bf16.msra.mxu0 %v8530
          %8666 = vmatprep.subr.bf16.mxu0 %v8529
          %8667 = vmatpush1.bf16.msra.mxu0 %v8528
          %8668 = vmatprep.subr.bf16.mxu0 %v8527
          %8669 = vmatpush1.bf16.msra.mxu0 %v8526
          %8670 = vmatprep.subr.bf16.mxu0 %v8557
          %8671 = vmatpush2.bf16.msra.mxu0 %v8556
          %8672 = vmatprep.subr.bf16.mxu0 %v8555
          %8673 = vmatpush2.bf16.msra.mxu0 %v8554
          %8674 = vmatprep.subr.bf16.mxu0 %v8553
          %8675 = vmatpush2.bf16.msra.mxu0 %v8552
          %8676 = vmatprep.subr.bf16.mxu0 %v8551
          %8677 = vmatpush2.bf16.msra.mxu0 %v8550
          %8678 = vmatprep.subr.bf16.mxu0 %v8549
          %8679 = vmatpush2.bf16.msra.mxu0 %v8548
          %8680 = vmatprep.subr.bf16.mxu0 %v8547
          %8681 = vmatpush2.bf16.msra.mxu0 %v8546
          %8682 = vmatprep.subr.bf16.mxu0 %v8545
          %8683 = vmatpush2.bf16.msra.mxu0 %v8544
          %8684 = vmatprep.subr.bf16.mxu0 %v8543
          %8685 = vmatpush2.bf16.msra.mxu0 %v8542
          %8686 = vmatprep.mubr.bf16.mxu0 %v8255
          %8687 = vmatmul.mubr.bf16.gmra.mxu0 %v8254
          %v8688 = vpop.f32.mrf.mxu0
          %v8689 = vadd.f32 %v8327, %v8688
          %v8690 = vpop.f32.mrf.mxu0
          %v8691 = vadd.f32 %v8331, %v8690
          %v8692 = vpop.f32.mrf.mxu0
          %v8693 = vpop.f32.mrf.mxu0
          %8694 = vdwg.mxu0
          %8695 = vmatprep.subr.bf16.mxu0 %v8573
          %8696 = vmatpush1.bf16.msra.mxu0 %v8572
          %8697 = vmatprep.subr.bf16.mxu0 %v8571
          %8698 = vmatpush1.bf16.msra.mxu0 %v8570
          %8699 = vmatprep.subr.bf16.mxu0 %v8569
          %8700 = vmatpush1.bf16.msra.mxu0 %v8568
          %8701 = vmatprep.subr.bf16.mxu0 %v8567
          %8702 = vmatpush1.bf16.msra.mxu0 %v8566
          %8703 = vmatprep.subr.bf16.mxu0 %v8565
          %8704 = vmatpush1.bf16.msra.mxu0 %v8564
          %8705 = vmatprep.subr.bf16.mxu0 %v8563
          %8706 = vmatpush1.bf16.msra.mxu0 %v8562
          %8707 = vmatprep.subr.bf16.mxu0 %v8561
          %8708 = vmatpush1.bf16.msra.mxu0 %v8560
          %8709 = vmatprep.subr.bf16.mxu0 %v8559
          %8710 = vmatpush1.bf16.msra.mxu0 %v8558
          %8711 = vmatprep.subr.bf16.mxu0 %v8589
          %8712 = vmatpush2.bf16.msra.mxu0 %v8588
          %8713 = vmatprep.subr.bf16.mxu0 %v8587
          %8714 = vmatpush2.bf16.msra.mxu0 %v8586
          %8715 = vmatprep.subr.bf16.mxu0 %v8585
          %8716 = vmatpush2.bf16.msra.mxu0 %v8584
          %8717 = vmatprep.subr.bf16.mxu0 %v8583
          %8718 = vmatpush2.bf16.msra.mxu0 %v8582
          %8719 = vmatprep.subr.bf16.mxu0 %v8581
          %8720 = vmatpush2.bf16.msra.mxu0 %v8580
          %8721 = vmatprep.subr.bf16.mxu0 %v8579
          %8722 = vmatpush2.bf16.msra.mxu0 %v8578
          %8723 = vmatprep.subr.bf16.mxu0 %v8577
          %8724 = vmatpush2.bf16.msra.mxu0 %v8576
          %8725 = vmatprep.subr.bf16.mxu0 %v8575
          %8726 = vmatpush2.bf16.msra.mxu0 %v8574
          %8727 = vmatprep.mubr.bf16.mxu0 %v8257
          %8728 = vmatmul.mubr.bf16.gmra.mxu0 %v8256
          %v8729 = vpop.f32.mrf.mxu0
          %v8730 = vadd.f32 %v8689, %v8729
          %v8731 = vpop.f32.mrf.mxu0
          %v8732 = vadd.f32 %v8691, %v8731
          %v8733 = vpop.f32.mrf.mxu0
          %v8734 = vpop.f32.mrf.mxu0
          %8735 = vdwg.mxu0
          %v8736 = vmax.f32 %v8730, 0.0
          %v8737 = vmax.f32 %v8732, 0.0
          %v8738 = vpack.c.bf16 %v8736, %v8736
          %v8739 = vpack.c.bf16 %v8737, %v8737
          %v8740 = vld [vmem:[#allocation28] sm:$0xf]
          %v8741 = vld [vmem:[#allocation28 + $0x4] sm:$0xf]
          %v8742 = vld [vmem:[#allocation28 + $0x8] sm:$0xf]
          %v8743 = vld [vmem:[#allocation28 + $0xc] sm:$0xf]
          %v8744 = vld [vmem:[#allocation28 + $0x10] sm:$0xf]
          %v8745 = vld [vmem:[#allocation28 + $0x14] sm:$0xf]
          %v8746 = vld [vmem:[#allocation28 + $0x18] sm:$0xf]
          %v8747 = vld [vmem:[#allocation28 + $0x1c] sm:$0xf]
          %v8748 = vld [vmem:[#allocation28 + $0x20] sm:$0xf]
          %v8749 = vld [vmem:[#allocation28 + $0x24] sm:$0xf]
          %v8750 = vld [vmem:[#allocation28 + $0x28] sm:$0xf]
          %v8751 = vld [vmem:[#allocation28 + $0x2c] sm:$0xf]
          %v8752 = vld [vmem:[#allocation28 + $0x30] sm:$0xf]
          %v8753 = vld [vmem:[#allocation28 + $0x34] sm:$0xf]
          %v8754 = vld [vmem:[#allocation28 + $0x38] sm:$0xf]
          %v8755 = vld [vmem:[#allocation28 + $0x3c] sm:$0xf]
          %v8756 = vld [vmem:[#allocation28 + $0x40] sm:$0xf]
          %v8757 = vld [vmem:[#allocation28 + $0x44] sm:$0xf]
          %v8758 = vld [vmem:[#allocation28 + $0x48] sm:$0xf]
          %v8759 = vld [vmem:[#allocation28 + $0x4c] sm:$0xf]
          %v8760 = vld [vmem:[#allocation28 + $0x50] sm:$0xf]
          %v8761 = vld [vmem:[#allocation28 + $0x54] sm:$0xf]
          %v8762 = vld [vmem:[#allocation28 + $0x58] sm:$0xf]
          %v8763 = vld [vmem:[#allocation28 + $0x5c] sm:$0xf]
          %v8764 = vld [vmem:[#allocation28 + $0x60] sm:$0xf]
          %v8765 = vld [vmem:[#allocation28 + $0x64] sm:$0xf]
          %v8766 = vld [vmem:[#allocation28 + $0x68] sm:$0xf]
          %v8767 = vld [vmem:[#allocation28 + $0x6c] sm:$0xf]
          %v8768 = vld [vmem:[#allocation28 + $0x70] sm:$0xf]
          %v8769 = vld [vmem:[#allocation28 + $0x74] sm:$0xf]
          %v8770 = vld [vmem:[#allocation28 + $0x78] sm:$0xf]
          %v8771 = vld [vmem:[#allocation28 + $0x7c] sm:$0xf]
          %v8772 = vld [vmem:[#allocation29] sm:$0x1]
          %v8774 = vlaneseq
          %v8775 = vshrl.u32 %v8774, 7
          %v8776 = vsub.s32 0, %v8775
          %v8777 = vrot.slane %v8772, %v8776
          %v8811 = vunpack.c.l.b16 %v8740
          %v8812 = vunpack.c.l.b16 %v8741
          %v8813 = vunpack.c.l.b16 %v8742
          %v8814 = vunpack.c.l.b16 %v8743
          %v8815 = vunpack.c.l.b16 %v8744
          %v8816 = vunpack.c.l.b16 %v8745
          %v8817 = vunpack.c.l.b16 %v8746
          %v8818 = vunpack.c.l.b16 %v8747
          %v8819 = vunpack.c.l.b16 %v8748
          %v8820 = vunpack.c.l.b16 %v8749
          %v8821 = vunpack.c.l.b16 %v8750
          %v8822 = vunpack.c.l.b16 %v8751
          %v8823 = vunpack.c.l.b16 %v8752
          %v8824 = vunpack.c.l.b16 %v8753
          %v8825 = vunpack.c.l.b16 %v8754
          %v8826 = vunpack.c.l.b16 %v8755
          %v8827 = vunpack.c.l.b16 %v8756
          %v8828 = vunpack.c.l.b16 %v8757
          %v8829 = vunpack.c.l.b16 %v8758
          %v8830 = vunpack.c.l.b16 %v8759
          %v8831 = vunpack.c.l.b16 %v8760
          %v8832 = vunpack.c.l.b16 %v8761
          %v8833 = vunpack.c.l.b16 %v8762
          %v8834 = vunpack.c.l.b16 %v8763
          %v8835 = vunpack.c.l.b16 %v8764
          %v8836 = vunpack.c.l.b16 %v8765
          %v8837 = vunpack.c.l.b16 %v8766
          %v8838 = vunpack.c.l.b16 %v8767
          %v8839 = vunpack.c.l.b16 %v8768
          %v8840 = vunpack.c.l.b16 %v8769
          %v8841 = vunpack.c.l.b16 %v8770
          %v8842 = vunpack.c.l.b16 %v8771
          %v8843 = vpack.c.b16 %v8812, %v8811
          %v8844 = vpack.c.b16 %v8814, %v8813
          %v8845 = vpack.c.b16 %v8816, %v8815
          %v8846 = vpack.c.b16 %v8818, %v8817
          %v8847 = vpack.c.b16 %v8820, %v8819
          %v8848 = vpack.c.b16 %v8822, %v8821
          %v8849 = vpack.c.b16 %v8824, %v8823
          %v8850 = vpack.c.b16 %v8826, %v8825
          %v8851 = vpack.c.b16 %v8828, %v8827
          %v8852 = vpack.c.b16 %v8830, %v8829
          %v8853 = vpack.c.b16 %v8832, %v8831
          %v8854 = vpack.c.b16 %v8834, %v8833
          %v8855 = vpack.c.b16 %v8836, %v8835
          %v8856 = vpack.c.b16 %v8838, %v8837
          %v8857 = vpack.c.b16 %v8840, %v8839
          %v8858 = vpack.c.b16 %v8842, %v8841
          %8875 = vmatprep.subr.bf16.mxu0 0
          %8876 = vmatpush1.bf16.msra.mxu0 %v8850
          %8877 = vmatprep.subr.bf16.mxu0 0
          %8878 = vmatpush1.bf16.msra.mxu0 %v8849
          %8879 = vmatprep.subr.bf16.mxu0 0
          %8880 = vmatpush1.bf16.msra.mxu0 %v8848
          %8881 = vmatprep.subr.bf16.mxu0 0
          %8882 = vmatpush1.bf16.msra.mxu0 %v8847
          %8883 = vmatprep.subr.bf16.mxu0 0
          %8884 = vmatpush1.bf16.msra.mxu0 %v8846
          %8885 = vmatprep.subr.bf16.mxu0 0
          %8886 = vmatpush1.bf16.msra.mxu0 %v8845
          %8887 = vmatprep.subr.bf16.mxu0 0
          %8888 = vmatpush1.bf16.msra.mxu0 %v8844
          %8889 = vmatprep.subr.bf16.mxu0 0
          %8890 = vmatpush1.bf16.msra.mxu0 %v8843
          %8891 = vmatprep.subr.bf16.mxu0 0
          %8892 = vmatpush2.bf16.msra.mxu0 %v8858
          %8893 = vmatprep.subr.bf16.mxu0 0
          %8894 = vmatpush2.bf16.msra.mxu0 %v8857
          %8895 = vmatprep.subr.bf16.mxu0 0
          %8896 = vmatpush2.bf16.msra.mxu0 %v8856
          %8897 = vmatprep.subr.bf16.mxu0 0
          %8898 = vmatpush2.bf16.msra.mxu0 %v8855
          %8899 = vmatprep.subr.bf16.mxu0 0
          %8900 = vmatpush2.bf16.msra.mxu0 %v8854
          %8901 = vmatprep.subr.bf16.mxu0 0
          %8902 = vmatpush2.bf16.msra.mxu0 %v8853
          %8903 = vmatprep.subr.bf16.mxu0 0
          %8904 = vmatpush2.bf16.msra.mxu0 %v8852
          %8905 = vmatprep.subr.bf16.mxu0 0
          %8906 = vmatpush2.bf16.msra.mxu0 %v8851
          %8907 = vmatprep.mubr.bf16.mxu0 %v8739
          %8908 = vmatmul.mubr.bf16.gmra.mxu0 %v8738
          %v8909 = vpop.f32.mrf.mxu0
          %v8910 = vadd.f32 %v8777, %v8909
          %v8911 = vpop.f32.mrf.mxu0
          %v8912 = vpop.f32.mrf.mxu0
          %v8913 = vpop.f32.mrf.mxu0
          %8914 = vdwg.mxu0
          %8915 = vst [vmem:[#allocation31] sm:$0xff] %v8910
        $region160: #{attention_model_forward.1} parent=87 // pred_fallthru
          _
        // Predicated region
        $region161: #{attention_model_forward.1} parent=87 // pred_check
          %p8916 = pneg %p465
        $region162: #{attention_model_forward.1} parent=87 // pred_check_branch
          %8918 = sbr.rel (%p8916) target = $region164
        $region163: #{attention_model_forward.1} parent=87 // pred_region
          %s8920 = ssub.s32 128, 128
          %8921 = vsyncadd [#allocation7], %s8920
          %s8923 = sshll.u32 [#allocation31], 4
          %s8924 = int_to_ptr.vmem [resolvable:$true] %s8923
          %8926 = dma.vmem_to_hbm [thread:$0]  %s8924, 128, %s17, [#allocation7]
        $region164: #{attention_model_forward.1} parent=87 // pred_fallthru
          _
        // Predicated region
        $region165: #{attention_model_forward.1} parent=87 // pred_check
          %p8927 = pneg %p486
        $region166: #{attention_model_forward.1} parent=87 // pred_check_branch
          %8929 = sbr.rel (%p8927) target = $region168
        $region167: #{attention_model_forward.1} parent=87 // pred_region
          _
        $region168: #{attention_model_forward.1} parent=87 // pred_fallthru
          _
        // Predicated region
        $region169: #{attention_model_forward.1} parent=87 // pred_check
          %p8930 = pneg %p465
        $region170: #{attention_model_forward.1} parent=87 // pred_check_branch
          %8932 = sbr.rel (%p8930) target = $region172
        $region171: #{attention_model_forward.1} parent=87 // pred_region
          %8933 = dma.done [#allocation7], 128
        $region172: #{attention_model_forward.1} parent=87 // pred_fallthru
          _
        // Predicated region
        $region173: #{attention_model_forward.1} parent=87 // pred_check
          %p8934 = pneg %p486
        $region174: #{attention_model_forward.1} parent=87 // pred_check_branch
          %8936 = sbr.rel (%p8934) target = $region176
        $region175: #{attention_model_forward.1} parent=87 // pred_region
          _
        $region176: #{attention_model_forward.1} parent=87 // pred_fallthru
          _
      $region88: #{attention_model_forward.1} parent=5 // pred_fallthru
        _
      %p8937 = scmp.le.s32.totalorder 2, %s45
      // Predicated region
      $region177: #{attention_model_forward.1} parent=5 // pred_check
        %p8938 = pneg %p8937
      $region178: #{attention_model_forward.1} parent=5 // pred_check_branch
        %8940 = sbr.rel (%p8938) target = $region180
      $region179: #{attention_model_forward.1} parent=5 // pred_region
        %s8941 = ssub.s32 %s45, 2
      $region180: #{attention_model_forward.1} parent=5 // pred_fallthru
        _
    $region6: #{attention_model_forward.1} parent=1 // loop_footer
      %s49 = sadd.s32 1, %s45
    $region7: #{attention_model_forward.1} parent=1 // loop_footer_branch
      %44 = sbr.rel target = $region3
    $region8: #{attention_model_forward.1} parent=1 // loop_exit
      _
    %8942 = vsyncpa [#allocation6], 1
    %s8943 = scalar_lea.sflag [#allocation6], 1
    %8944 = vsyncpa %s8943, 1
    %8945 = vsyncpa [#allocation9], 1
    %s8946 = scalar_lea.sflag [#allocation9], 1
    %8947 = vsyncpa %s8946, 1
    %8948 = vsyncpa [#allocation12], 1
    %s8949 = scalar_lea.sflag [#allocation12], 1
    %8950 = vsyncpa %s8949, 1
    %8951 = vsyncpa [#allocation15], 1
    %s8952 = scalar_lea.sflag [#allocation15], 1
    %8953 = vsyncpa %s8952, 1
    %8954 = vsyncpa [#allocation18], 1
    %s8955 = scalar_lea.sflag [#allocation18], 1
    %8956 = vsyncpa %s8955, 1
    %8957 = vsyncpa [#allocation21], 1
    %8958 = vsyncpa [#allocation24], 1
    %8959 = vsyncpa [#allocation27], 1
    %8960 = vsyncpa [#allocation30], 1
    %8961 = vsyncpa [#allocation7], 1
    %s8962 = scalar_lea.sflag [#allocation7], 1
    %8963 = vsyncpa %s8962, 1

</llo_original>
